<compile_context>
chip_gen: v6e
topology: v6e:2x2x1
jax: 0.10.0
libtpu: 0.0.40
codegen_flags: <defaults>
</compile_context>

<pallas_src>
import numpy as np

import jax
import jax.numpy as jnp
from jax.experimental import pallas as pl
from jax.experimental.pallas import tpu as pltpu

EPS = 1e-5
F32 = jnp.float32
BF16 = jnp.bfloat16


# ------------------------------ fused kernel ---------------------------------

def _make_resnet_kernel(n, h, w, num_stages, stage_size):
    """Builds the whole-network kernel.  Ref order must match
    _flatten_kernel_params(): [x, masks, pool, <flattened params>, out, scratch]."""
    hw = h * w
    m = n * hw

    def kernel(*refs):
        out_ref = refs[-2]
        res_ref = refs[-1]                      # VMEM scratch for the residual
        it = iter(refs[:-2])
        nxt = lambda: next(it)

        x_ref, masks_ref, pool_ref = nxt(), nxt(), nxt()

        def conv1x1(x, w_ref, b_ref, relu):
            # (Cout, Cin) @ (Cin, M) on the MXU, bf16 operands, f32 accumulation.
            y = jnp.dot(w_ref[...], x.astype(BF16),
                        preferred_element_type=jnp.float32) + b_ref[...]
            return jnp.maximum(y, 0.0) if relu else y

        def tap_slabs(x):
            # 9 shifted copies of the (Cin, M) slab; out-of-image pixels masked.
            taps = []
            for k in range(9):
                dy, dx = k // 3 - 1, k % 3 - 1
                off = dy * w + dx               # shifted[m'] = x[m' + off]
                if off == 0:
                    taps.append(x.astype(BF16))             # mask is all-ones
                else:
                    xs = pltpu.roll(x, (-off) % m, 1)
                    taps.append((xs * masks_ref[k]).astype(BF16))
            return taps

        def conv3x3(x, w_ref, b_ref, relu):
            taps = tap_slabs(x)
            if w_ref.ndim == 2:
                # Fused path: weights are (Cout, 9*Cin); stack the 9 taps on
                # the sublane axis and do ONE deep MXU contraction (K = 9*Cin).
                slab = jnp.concatenate(taps, axis=0)         # (9*Cin, M) bf16
                y = jnp.dot(w_ref[...], slab,
                            preferred_element_type=jnp.float32)
            else:
                # Small / misaligned Cin fallback: weights (9, Cout, Cin),
                # per-tap accumulate (identical to the previous working kernel).
                cout = w_ref.shape[1]
                y = jnp.zeros((cout, m), jnp.float32)
                for k in range(9):
                    y = y + jnp.dot(w_ref[k], taps[k],
                                    preferred_element_type=jnp.float32)
            y = y + b_ref[...]
            return jnp.maximum(y, 0.0) if relu else y

        def bn_relu(x, s_ref, t_ref):
            return jnp.maximum(x * s_ref[...] + t_ref[...], 0.0)

        # in_block: Conv3x3 (BN folded) -> ReLU
        a = conv3x3(x_ref[...], nxt(), nxt(), relu=True)

        for _ in range(num_stages):
            cin = a.shape[0]
            # block0: Conv1x1 -> BN,ReLU -> Conv3x3 -> BN,ReLU -> Conv1x1 (+ expand_match)
            hid = conv1x1(a, nxt(), nxt(), relu=True)
            hid = conv3x3(hid, nxt(), nxt(), relu=True)
            if cin % 16 == 0:
                # Fused c3 + expand_match: [W3 | We] @ [hid; a], K = 2*Cin.
                w_ref, b_ref = nxt(), nxt()
                xcat = jnp.concatenate([hid, a], axis=0).astype(BF16)
                a = jnp.dot(w_ref[...], xcat,
                            preferred_element_type=jnp.float32) + b_ref[...]
            else:
                hid = conv1x1(hid, nxt(), nxt(), relu=False)
                shortcut = conv1x1(a, nxt(), nxt(), relu=False)
                a = hid + shortcut
            cout = a.shape[0]

            # Park the residual in VMEM so it does not occupy vregs (C=256 is
            # 32 vregs) across the whole block body.
            res_ref[0:cout, :] = a
            # block1..block{size-1}: BN,ReLU,1x1 -> BN,ReLU,3x3 -> BN,ReLU,1x1 (+y)
            for _ in range(stage_size - 1):
                hid = bn_relu(res_ref[0:cout, :], nxt(), nxt())
                hid = conv1x1(hid, nxt(), nxt(), relu=True)
                hid = conv3x3(hid, nxt(), nxt(), relu=True)
                hid = conv1x1(hid, nxt(), nxt(), relu=False)
                res_ref[0:cout, :] = res_ref[0:cout, :] + hid
            a = res_ref[0:cout, :]

        # head: final BN -> ReLU -> Linear-over-channels -> AvgPool(H, W)
        act = bn_relu(a, nxt(), nxt())                                   # (C, M)
        lw_ref, lb_ref = nxt(), nxt()
        logits_m = jnp.dot(lw_ref[...], act.astype(BF16),
                           preferred_element_type=jnp.float32)           # (NC, M) lane-dense
        out_ref[...] = jnp.dot(logits_m, pool_ref[...],
                               preferred_element_type=jnp.float32) + lb_ref[...]

        leftover = object()          # trace-time sanity check on arg ordering
        assert next(it, leftover) is leftover, "param/ref order mismatch"

    return kernel


# ------------------------------ wrapper (host) --------------------------------

def _fold_post_bn(conv, bn):
    """Fold inference BN (scale, shift) applied AFTER a conv into the conv:
    (W x + b) * s + t == (W * s) x + (b * s + t)."""
    wgt, b = conv
    s, t = bn
    sc = s.reshape((1,) * (wgt.ndim - 2) + (s.shape[0], 1))
    return wgt * sc, b * s + t


def _col(v):
    # per-channel vector -> (C, 1) f32 column (broadcast along the lane/M dim)
    return v.reshape(-1, 1).astype(F32)


def _flatten_kernel_params(params):
    """Kernel-ready flat arg list (eager: BN folding, bf16 conversion, weight
    re-layout happen once here).  Order MUST match _make_resnet_kernel()."""
    flat = []

    def add_1x1(conv, bn=None):
        wgt, b = _fold_post_bn(conv, bn) if bn is not None else conv
        flat.append(wgt.astype(BF16))
        flat.append(_col(b))

    def add_3x3(conv, bn=None):
        wgt, b = _fold_post_bn(conv, bn) if bn is not None else conv
        _, cout, cin = wgt.shape
        if cin % 16 == 0:
            # tap-major contraction layout for the single-dot path
            wgt = jnp.transpose(wgt, (1, 0, 2)).reshape(cout, 9 * cin)
        flat.append(wgt.astype(BF16))
        flat.append(_col(b))

    add_3x3(params["in_conv"], params["in_bn"])
    for sp in params["stages"]:
        add_1x1(sp["b0_c1"], sp["b0_bn1"])
        add_3x3(sp["b0_c2"], sp["b0_bn2"])
        w3, b3 = sp["b0_c3"]
        we, be = sp["em"]
        if w3.shape[1] % 16 == 0:
            flat.append(jnp.concatenate([w3, we], axis=1).astype(BF16))
            flat.append(_col(b3 + be))
        else:
            flat.append(w3.astype(BF16)); flat.append(_col(b3))
            flat.append(we.astype(BF16)); flat.append(_col(be))
        for blk in sp["blocks"]:
            s, t = blk["bn0"]
            flat.append(_col(s)); flat.append(_col(t))
            add_1x1(blk["c1"], blk["bn1"])
            add_3x3(blk["c2"], blk["bn2"])
            add_1x1(blk["c3"])
    s, t = params["final_bn"]
    flat.append(_col(s)); flat.append(_col(t))
    lw, lb = params["linear"]
    flat.append(lw.astype(BF16))
    flat.append(_col(lb))
    return flat


def _make_constants(n, h, w):
    """Shape-only constants built with numpy (no traced ops, no HBM writes)."""
    hw = h * w
    m = n * hw
    midx = np.arange(m)
    hi = (midx % hw) // w
    wi = midx % w
    rows = []
    for k in range(9):
        dy, dx = k // 3 - 1, k % 3 - 1
        valid = (hi + dy >= 0) & (hi + dy < h) & (wi + dx >= 0) & (wi + dx < w)
        rows.append(valid.astype(np.float32))
    masks = np.stack(rows, axis=0).reshape(9, 1, m)
    # Global average pool as an (M, N) matrix so the head is one MXU matmul.
    pool = ((midx[:, None] // hw) == np.arange(n)[None, :]).astype(np.float32)
    pool = pool / float(hw)
    return masks, pool


def make_resnet_forward(input_chw, batch, num_classes, num_stages, stage_size,
                        first_expansion):
    c, h, w = input_chw
    n = batch
    hw = h * w
    m = n * hw
    c_final = first_expansion * (4 ** num_stages)
    masks_np, pool_np = _make_constants(n, h, w)
    kernel = _make_resnet_kernel(n, h, w, num_stages, stage_size)

    def forward(flat_params, x_nchw):
        # NCHW -> channel-major (C, N*H*W): lane dim is M = 128 (lane-dense).
        x_cm = jnp.transpose(x_nchw.astype(F32), (1, 0, 2, 3)).reshape(c, m)
        args = [x_cm, jnp.asarray(masks_np), jnp.asarray(pool_np)] + list(flat_params)
        out_cn = pl.pallas_call(
            kernel,
            out_shape=jax.ShapeDtypeStruct((num_classes, n), F32),
            in_specs=[pl.BlockSpec(memory_space=pltpu.MemorySpace.VMEM)] * len(args),
            out_specs=pl.BlockSpec(memory_space=pltpu.MemorySpace.VMEM),
            scratch_shapes=[pltpu.VMEM((c_final, m), F32)],   # residual parking
        )(*args)
        return out_cn.T                                        # (N, num_classes)

    return forward


# -------------------------- deterministic parameters --------------------------

class KeyGen:
    def __init__(self, key):
        self._key = key

    def __call__(self):
        self._key, sub = jax.random.split(self._key)
        return sub


def _bn_params(key, c):
    """Inference-mode BatchNorm folded to per-channel (scale, shift)."""
    k1, k2, k3, k4 = jax.random.split(key, 4)
    gamma = jax.random.uniform(k1, (c,), F32, 0.5, 1.5)
    beta = 0.1 * jax.random.normal(k2, (c,), F32)
    mean = 0.1 * jax.random.normal(k3, (c,), F32)
    var = jax.random.uniform(k4, (c,), F32, 0.5, 1.5)
    scale = gamma / jnp.sqrt(var + EPS)
    shift = beta - mean * scale
    return scale, shift


def _conv1x1_params(key, cin, cout):
    kw, kb = jax.random.split(key)
    w = jax.random.normal(kw, (cout, cin), F32) * jnp.sqrt(2.0 / cin)   # kaiming
    b = 0.01 * jax.random.normal(kb, (cout,), F32)
    return w, b


def _conv3x3_params(key, cin, cout):
    kw, kb = jax.random.split(key)
    # tap-major layout, k = 3*kh + kw == (dy+1)*3 + (dx+1): (9, Cout, Cin)
    w = jax.random.normal(kw, (9, cout, cin), F32) * jnp.sqrt(2.0 / (9 * cin))
    b = 0.01 * jax.random.normal(kb, (cout,), F32)
    return w, b


def init_stage_params(kg, cin, size):
    """ResnetStage(first=True): stride 1, padding 0 on the 1x1s, out = 4*cin."""
    cout = cin * 4
    p = {
        "b0_c1": _conv1x1_params(kg(), cin, cin),
        "b0_bn1": _bn_params(kg(), cin),
        "b0_c2": _conv3x3_params(kg(), cin, cin),
        "b0_bn2": _bn_params(kg(), cin),
        "b0_c3": _conv1x1_params(kg(), cin, cout),
        "em": _conv1x1_params(kg(), cin, cout),
        "blocks": [],
    }
    for _ in range(size - 1):
        p["blocks"].append({
            "bn0": _bn_params(kg(), cout),
            "c1": _conv1x1_params(kg(), cout, cin),
            "bn1": _bn_params(kg(), cin),
            "c2": _conv3x3_params(kg(), cin, cin),
            "bn2": _bn_params(kg(), cin),
            "c3": _conv1x1_params(kg(), cin, cout),
        })
    return p, cout


def init_params(key, in_channels, num_classes, stage_size, first_expansion):
    kg = KeyGen(key)
    params = {
        "in_conv": _conv3x3_params(kg(), in_channels, first_expansion),
        "in_bn": _bn_params(kg(), first_expansion),
        "stages": [],
    }
    c = first_expansion
    for _ in range(3):                        # stage0, stage1, stage2
        sp, c = init_stage_params(kg, c, stage_size)
        params["stages"].append(sp)
    params["final_bn"] = _bn_params(kg(), c)
    lw = jax.random.normal(kg(), (num_classes, c), F32) * jnp.sqrt(2.0 / c)
    lb = 0.01 * jax.random.normal(kg(), (num_classes,), F32)
    params["linear"] = (lw, lb)
    return params


# ----------------------------------- main -------------------------------------

if __name__ == "__main__":
    N, C, H, W = 2, 3, 8, 8          # module input_shape = (3, 8, 8)
    NUM_CLASSES = 10
    NUM_STAGES = 3
    STAGE_SIZE = 2
    FIRST_EXPANSION = 4              # channels: 4 -> 16 -> 64 -> 256

    root = jax.random.PRNGKey(0)
    pkey, xkey = jax.random.split(root)
    params = init_params(pkey, C, NUM_CLASSES, STAGE_SIZE, FIRST_EXPANSION)
    x = jax.random.normal(xkey, (N, C, H, W), F32)

    # Fold BN, fuse c3+expand_match, re-layout 3x3 weights, cast to bf16: once,
    # eagerly, outside jit.
    flat_params = _flatten_kernel_params(params)

    fwd = jax.jit(make_resnet_forward((C, H, W), N, NUM_CLASSES, NUM_STAGES,
                                      STAGE_SIZE, FIRST_EXPANSION))
    out = jax.block_until_ready(fwd(flat_params, x))
    assert out.shape == (N, NUM_CLASSES), out.shape
    assert bool(jnp.all(jnp.isfinite(out)))
    print("KERNEL_OK")
</pallas_src>

<mosaic_0001>
module attributes {stable_mosaic.version = 11 : i64} {
  func.func @kernel(%arg0: memref<3x128xf32, #tpu.memory_space<vmem>>, %arg1: memref<9x1x128xf32, #tpu.memory_space<vmem>>, %arg2: memref<128x2xf32, #tpu.memory_space<vmem>>, %arg3: memref<9x4x3xbf16, #tpu.memory_space<vmem>>, %arg4: memref<4x1xf32, #tpu.memory_space<vmem>>, %arg5: memref<4x4xbf16, #tpu.memory_space<vmem>>, %arg6: memref<4x1xf32, #tpu.memory_space<vmem>>, %arg7: memref<9x4x4xbf16, #tpu.memory_space<vmem>>, %arg8: memref<4x1xf32, #tpu.memory_space<vmem>>, %arg9: memref<16x4xbf16, #tpu.memory_space<vmem>>, %arg10: memref<16x1xf32, #tpu.memory_space<vmem>>, %arg11: memref<16x4xbf16, #tpu.memory_space<vmem>>, %arg12: memref<16x1xf32, #tpu.memory_space<vmem>>, %arg13: memref<16x1xf32, #tpu.memory_space<vmem>>, %arg14: memref<16x1xf32, #tpu.memory_space<vmem>>, %arg15: memref<4x16xbf16, #tpu.memory_space<vmem>>, %arg16: memref<4x1xf32, #tpu.memory_space<vmem>>, %arg17: memref<9x4x4xbf16, #tpu.memory_space<vmem>>, %arg18: memref<4x1xf32, #tpu.memory_space<vmem>>, %arg19: memref<16x4xbf16, #tpu.memory_space<vmem>>, %arg20: memref<16x1xf32, #tpu.memory_space<vmem>>, %arg21: memref<16x16xbf16, #tpu.memory_space<vmem>>, %arg22: memref<16x1xf32, #tpu.memory_space<vmem>>, %arg23: memref<16x144xbf16, #tpu.memory_space<vmem>>, %arg24: memref<16x1xf32, #tpu.memory_space<vmem>>, %arg25: memref<64x32xbf16, #tpu.memory_space<vmem>>, %arg26: memref<64x1xf32, #tpu.memory_space<vmem>>, %arg27: memref<64x1xf32, #tpu.memory_space<vmem>>, %arg28: memref<64x1xf32, #tpu.memory_space<vmem>>, %arg29: memref<16x64xbf16, #tpu.memory_space<vmem>>, %arg30: memref<16x1xf32, #tpu.memory_space<vmem>>, %arg31: memref<16x144xbf16, #tpu.memory_space<vmem>>, %arg32: memref<16x1xf32, #tpu.memory_space<vmem>>, %arg33: memref<64x16xbf16, #tpu.memory_space<vmem>>, %arg34: memref<64x1xf32, #tpu.memory_space<vmem>>, %arg35: memref<64x64xbf16, #tpu.memory_space<vmem>>, %arg36: memref<64x1xf32, #tpu.memory_space<vmem>>, %arg37: memref<64x576xbf16, #tpu.memory_space<vmem>>, %arg38: memref<64x1xf32, #tpu.memory_space<vmem>>, %arg39: memref<256x128xbf16, #tpu.memory_space<vmem>>, %arg40: memref<256x1xf32, #tpu.memory_space<vmem>>, %arg41: memref<256x1xf32, #tpu.memory_space<vmem>>, %arg42: memref<256x1xf32, #tpu.memory_space<vmem>>, %arg43: memref<64x256xbf16, #tpu.memory_space<vmem>>, %arg44: memref<64x1xf32, #tpu.memory_space<vmem>>, %arg45: memref<64x576xbf16, #tpu.memory_space<vmem>>, %arg46: memref<64x1xf32, #tpu.memory_space<vmem>>, %arg47: memref<256x64xbf16, #tpu.memory_space<vmem>>, %arg48: memref<256x1xf32, #tpu.memory_space<vmem>>, %arg49: memref<256x1xf32, #tpu.memory_space<vmem>>, %arg50: memref<256x1xf32, #tpu.memory_space<vmem>>, %arg51: memref<10x256xbf16, #tpu.memory_space<vmem>>, %arg52: memref<10x1xf32, #tpu.memory_space<vmem>>, %arg53: memref<10x2xf32, #tpu.memory_space<vmem>>, %arg54: memref<256x128xf32, #tpu.memory_space<vmem>>) attributes {dimension_semantics = [], scalar_prefetch = 0 : i64, scratch_operands = 1 : i64, tpu.core_type = #tpu.core_type<tc>} {
    %c0 = arith.constant 0 : index
    %c0_0 = arith.constant 0 : index
    %0 = vector.load %arg0[%c0, %c0_0] : memref<3x128xf32, #tpu.memory_space<vmem>>, vector<3x128xf32>
    %c9_i32 = arith.constant 9 : i32
    %1 = tpu.dynamic_rotate %0 by %c9_i32 dim 1 : vector<3x128xf32>, i32 -> vector<3x128xf32>
    %c0_1 = arith.constant 0 : index
    %c0_2 = arith.constant 0 : index
    %c0_3 = arith.constant 0 : index
    %2 = vector.load %arg1[%c0_1, %c0_2, %c0_3] : memref<9x1x128xf32, #tpu.memory_space<vmem>>, vector<1x1x128xf32>
    %3 = vector.shape_cast %2 : vector<1x1x128xf32> to vector<1x128xf32>
    %4 = vector.broadcast %3 : vector<1x128xf32> to vector<3x128xf32>
    %5 = arith.mulf %1, %4 : vector<3x128xf32>
    %6 = arith.truncf %5 : vector<3x128xf32> to vector<3x128xbf16>
    %c8_i32 = arith.constant 8 : i32
    %7 = tpu.dynamic_rotate %0 by %c8_i32 dim 1 : vector<3x128xf32>, i32 -> vector<3x128xf32>
    %c1 = arith.constant 1 : index
    %c0_4 = arith.constant 0 : index
    %c0_5 = arith.constant 0 : index
    %8 = vector.load %arg1[%c1, %c0_4, %c0_5] : memref<9x1x128xf32, #tpu.memory_space<vmem>>, vector<1x1x128xf32>
    %9 = vector.shape_cast %8 : vector<1x1x128xf32> to vector<1x128xf32>
    %10 = vector.broadcast %9 : vector<1x128xf32> to vector<3x128xf32>
    %11 = arith.mulf %7, %10 : vector<3x128xf32>
    %12 = arith.truncf %11 : vector<3x128xf32> to vector<3x128xbf16>
    %c7_i32 = arith.constant 7 : i32
    %13 = tpu.dynamic_rotate %0 by %c7_i32 dim 1 : vector<3x128xf32>, i32 -> vector<3x128xf32>
    %c2 = arith.constant 2 : index
    %c0_6 = arith.constant 0 : index
    %c0_7 = arith.constant 0 : index
    %14 = vector.load %arg1[%c2, %c0_6, %c0_7] : memref<9x1x128xf32, #tpu.memory_space<vmem>>, vector<1x1x128xf32>
    %15 = vector.shape_cast %14 : vector<1x1x128xf32> to vector<1x128xf32>
    %16 = vector.broadcast %15 : vector<1x128xf32> to vector<3x128xf32>
    %17 = arith.mulf %13, %16 : vector<3x128xf32>
    %18 = arith.truncf %17 : vector<3x128xf32> to vector<3x128xbf16>
    %c1_i32 = arith.constant 1 : i32
    %19 = tpu.dynamic_rotate %0 by %c1_i32 dim 1 : vector<3x128xf32>, i32 -> vector<3x128xf32>
    %c3 = arith.constant 3 : index
    %c0_8 = arith.constant 0 : index
    %c0_9 = arith.constant 0 : index
    %20 = vector.load %arg1[%c3, %c0_8, %c0_9] : memref<9x1x128xf32, #tpu.memory_space<vmem>>, vector<1x1x128xf32>
    %21 = vector.shape_cast %20 : vector<1x1x128xf32> to vector<1x128xf32>
    %22 = vector.broadcast %21 : vector<1x128xf32> to vector<3x128xf32>
    %23 = arith.mulf %19, %22 : vector<3x128xf32>
    %24 = arith.truncf %23 : vector<3x128xf32> to vector<3x128xbf16>
    %25 = arith.truncf %0 : vector<3x128xf32> to vector<3x128xbf16>
    %c127_i32 = arith.constant 127 : i32
    %26 = tpu.dynamic_rotate %0 by %c127_i32 dim 1 : vector<3x128xf32>, i32 -> vector<3x128xf32>
    %c5 = arith.constant 5 : index
    %c0_10 = arith.constant 0 : index
    %c0_11 = arith.constant 0 : index
    %27 = vector.load %arg1[%c5, %c0_10, %c0_11] : memref<9x1x128xf32, #tpu.memory_space<vmem>>, vector<1x1x128xf32>
    %28 = vector.shape_cast %27 : vector<1x1x128xf32> to vector<1x128xf32>
    %29 = vector.broadcast %28 : vector<1x128xf32> to vector<3x128xf32>
    %30 = arith.mulf %26, %29 : vector<3x128xf32>
    %31 = arith.truncf %30 : vector<3x128xf32> to vector<3x128xbf16>
    %c121_i32 = arith.constant 121 : i32
    %32 = tpu.dynamic_rotate %0 by %c121_i32 dim 1 : vector<3x128xf32>, i32 -> vector<3x128xf32>
    %c6 = arith.constant 6 : index
    %c0_12 = arith.constant 0 : index
    %c0_13 = arith.constant 0 : index
    %33 = vector.load %arg1[%c6, %c0_12, %c0_13] : memref<9x1x128xf32, #tpu.memory_space<vmem>>, vector<1x1x128xf32>
    %34 = vector.shape_cast %33 : vector<1x1x128xf32> to vector<1x128xf32>
    %35 = vector.broadcast %34 : vector<1x128xf32> to vector<3x128xf32>
    %36 = arith.mulf %32, %35 : vector<3x128xf32>
    %37 = arith.truncf %36 : vector<3x128xf32> to vector<3x128xbf16>
    %c120_i32 = arith.constant 120 : i32
    %38 = tpu.dynamic_rotate %0 by %c120_i32 dim 1 : vector<3x128xf32>, i32 -> vector<3x128xf32>
    %c7 = arith.constant 7 : index
    %c0_14 = arith.constant 0 : index
    %c0_15 = arith.constant 0 : index
    %39 = vector.load %arg1[%c7, %c0_14, %c0_15] : memref<9x1x128xf32, #tpu.memory_space<vmem>>, vector<1x1x128xf32>
    %40 = vector.shape_cast %39 : vector<1x1x128xf32> to vector<1x128xf32>
    %41 = vector.broadcast %40 : vector<1x128xf32> to vector<3x128xf32>
    %42 = arith.mulf %38, %41 : vector<3x128xf32>
    %43 = arith.truncf %42 : vector<3x128xf32> to vector<3x128xbf16>
    %c119_i32 = arith.constant 119 : i32
    %44 = tpu.dynamic_rotate %0 by %c119_i32 dim 1 : vector<3x128xf32>, i32 -> vector<3x128xf32>
    %c8 = arith.constant 8 : index
    %c0_16 = arith.constant 0 : index
    %c0_17 = arith.constant 0 : index
    %45 = vector.load %arg1[%c8, %c0_16, %c0_17] : memref<9x1x128xf32, #tpu.memory_space<vmem>>, vector<1x1x128xf32>
    %46 = vector.shape_cast %45 : vector<1x1x128xf32> to vector<1x128xf32>
    %47 = vector.broadcast %46 : vector<1x128xf32> to vector<3x128xf32>
    %48 = arith.mulf %44, %47 : vector<3x128xf32>
    %49 = arith.truncf %48 : vector<3x128xf32> to vector<3x128xbf16>
    %cst = arith.constant 0.000000e+00 : f32
    %50 = vector.broadcast %cst : f32 to vector<4x128xf32>
    %c0_18 = arith.constant 0 : index
    %c0_19 = arith.constant 0 : index
    %c0_20 = arith.constant 0 : index
    %51 = vector.load %arg3[%c0_18, %c0_19, %c0_20] : memref<9x4x3xbf16, #tpu.memory_space<vmem>>, vector<1x4x3xbf16>
    %52 = vector.shape_cast %51 : vector<1x4x3xbf16> to vector<4x3xbf16>
    %cst_21 = arith.constant dense<0.000000e+00> : vector<4x128xf32>
    %53 = tpu.matmul %52, %6, %cst_21 {dimension_numbers = #tpu.dot_dimension_numbers<[1], [0], [0], [1], [0, 0, 1, 1], [], []>} : vector<4x3xbf16>, vector<3x128xbf16>, vector<4x128xf32> -> vector<4x128xf32>
    %54 = arith.addf %50, %53 : vector<4x128xf32>
    %c1_22 = arith.constant 1 : index
    %c0_23 = arith.constant 0 : index
    %c0_24 = arith.constant 0 : index
    %55 = vector.load %arg3[%c1_22, %c0_23, %c0_24] : memref<9x4x3xbf16, #tpu.memory_space<vmem>>, vector<1x4x3xbf16>
    %56 = vector.shape_cast %55 : vector<1x4x3xbf16> to vector<4x3xbf16>
    %cst_25 = arith.constant dense<0.000000e+00> : vector<4x128xf32>
    %57 = tpu.matmul %56, %12, %cst_25 {dimension_numbers = #tpu.dot_dimension_numbers<[1], [0], [0], [1], [0, 0, 1, 1], [], []>} : vector<4x3xbf16>, vector<3x128xbf16>, vector<4x128xf32> -> vector<4x128xf32>
    %58 = arith.addf %54, %57 : vector<4x128xf32>
    %c2_26 = arith.constant 2 : index
    %c0_27 = arith.constant 0 : index
    %c0_28 = arith.constant 0 : index
    %59 = vector.load %arg3[%c2_26, %c0_27, %c0_28] : memref<9x4x3xbf16, #tpu.memory_space<vmem>>, vector<1x4x3xbf16>
    %60 = vector.shape_cast %59 : vector<1x4x3xbf16> to vector<4x3xbf16>
    %cst_29 = arith.constant dense<0.000000e+00> : vector<4x128xf32>
    %61 = tpu.matmul %60, %18, %cst_29 {dimension_numbers = #tpu.dot_dimension_numbers<[1], [0], [0], [1], [0, 0, 1, 1], [], []>} : vector<4x3xbf16>, vector<3x128xbf16>, vector<4x128xf32> -> vector<4x128xf32>
    %62 = arith.addf %58, %61 : vector<4x128xf32>
    %c3_30 = arith.constant 3 : index
    %c0_31 = arith.constant 0 : index
    %c0_32 = arith.constant 0 : index
    %63 = vector.load %arg3[%c3_30, %c0_31, %c0_32] : memref<9x4x3xbf16, #tpu.memory_space<vmem>>, vector<1x4x3xbf16>
    %64 = vector.shape_cast %63 : vector<1x4x3xbf16> to vector<4x3xbf16>
    %cst_33 = arith.constant dense<0.000000e+00> : vector<4x128xf32>
    %65 = tpu.matmul %64, %24, %cst_33 {dimension_numbers = #tpu.dot_dimension_numbers<[1], [0], [0], [1], [0, 0, 1, 1], [], []>} : vector<4x3xbf16>, vector<3x128xbf16>, vector<4x128xf32> -> vector<4x128xf32>
    %66 = arith.addf %62, %65 : vector<4x128xf32>
    %c4 = arith.constant 4 : index
    %c0_34 = arith.constant 0 : index
    %c0_35 = arith.constant 0 : index
    %67 = vector.load %arg3[%c4, %c0_34, %c0_35] : memref<9x4x3xbf16, #tpu.memory_space<vmem>>, vector<1x4x3xbf16>
    %68 = vector.shape_cast %67 : vector<1x4x3xbf16> to vector<4x3xbf16>
    %cst_36 = arith.constant dense<0.000000e+00> : vector<4x128xf32>
    %69 = tpu.matmul %68, %25, %cst_36 {dimension_numbers = #tpu.dot_dimension_numbers<[1], [0], [0], [1], [0, 0, 1, 1], [], []>} : vector<4x3xbf16>, vector<3x128xbf16>, vector<4x128xf32> -> vector<4x128xf32>
    %70 = arith.addf %66, %69 : vector<4x128xf32>
    %c5_37 = arith.constant 5 : index
    %c0_38 = arith.constant 0 : index
    %c0_39 = arith.constant 0 : index
    %71 = vector.load %arg3[%c5_37, %c0_38, %c0_39] : memref<9x4x3xbf16, #tpu.memory_space<vmem>>, vector<1x4x3xbf16>
    %72 = vector.shape_cast %71 : vector<1x4x3xbf16> to vector<4x3xbf16>
    %cst_40 = arith.constant dense<0.000000e+00> : vector<4x128xf32>
    %73 = tpu.matmul %72, %31, %cst_40 {dimension_numbers = #tpu.dot_dimension_numbers<[1], [0], [0], [1], [0, 0, 1, 1], [], []>} : vector<4x3xbf16>, vector<3x128xbf16>, vector<4x128xf32> -> vector<4x128xf32>
    %74 = arith.addf %70, %73 : vector<4x128xf32>
    %c6_41 = arith.constant 6 : index
    %c0_42 = arith.constant 0 : index
    %c0_43 = arith.constant 0 : index
    %75 = vector.load %arg3[%c6_41, %c0_42, %c0_43] : memref<9x4x3xbf16, #tpu.memory_space<vmem>>, vector<1x4x3xbf16>
    %76 = vector.shape_cast %75 : vector<1x4x3xbf16> to vector<4x3xbf16>
    %cst_44 = arith.constant dense<0.000000e+00> : vector<4x128xf32>
    %77 = tpu.matmul %76, %37, %cst_44 {dimension_numbers = #tpu.dot_dimension_numbers<[1], [0], [0], [1], [0, 0, 1, 1], [], []>} : vector<4x3xbf16>, vector<3x128xbf16>, vector<4x128xf32> -> vector<4x128xf32>
    %78 = arith.addf %74, %77 : vector<4x128xf32>
    %c7_45 = arith.constant 7 : index
    %c0_46 = arith.constant 0 : index
    %c0_47 = arith.constant 0 : index
    %79 = vector.load %arg3[%c7_45, %c0_46, %c0_47] : memref<9x4x3xbf16, #tpu.memory_space<vmem>>, vector<1x4x3xbf16>
    %80 = vector.shape_cast %79 : vector<1x4x3xbf16> to vector<4x3xbf16>
    %cst_48 = arith.constant dense<0.000000e+00> : vector<4x128xf32>
    %81 = tpu.matmul %80, %43, %cst_48 {dimension_numbers = #tpu.dot_dimension_numbers<[1], [0], [0], [1], [0, 0, 1, 1], [], []>} : vector<4x3xbf16>, vector<3x128xbf16>, vector<4x128xf32> -> vector<4x128xf32>
    %82 = arith.addf %78, %81 : vector<4x128xf32>
    %c8_49 = arith.constant 8 : index
    %c0_50 = arith.constant 0 : index
    %c0_51 = arith.constant 0 : index
    %83 = vector.load %arg3[%c8_49, %c0_50, %c0_51] : memref<9x4x3xbf16, #tpu.memory_space<vmem>>, vector<1x4x3xbf16>
    %84 = vector.shape_cast %83 : vector<1x4x3xbf16> to vector<4x3xbf16>
    %cst_52 = arith.constant dense<0.000000e+00> : vector<4x128xf32>
    %85 = tpu.matmul %84, %49, %cst_52 {dimension_numbers = #tpu.dot_dimension_numbers<[1], [0], [0], [1], [0, 0, 1, 1], [], []>} : vector<4x3xbf16>, vector<3x128xbf16>, vector<4x128xf32> -> vector<4x128xf32>
    %86 = arith.addf %82, %85 : vector<4x128xf32>
    %c0_53 = arith.constant 0 : index
    %c0_54 = arith.constant 0 : index
    %87 = vector.load %arg4[%c0_53, %c0_54] : memref<4x1xf32, #tpu.memory_space<vmem>>, vector<4x1xf32>
    %88 = vector.broadcast %87 : vector<4x1xf32> to vector<4x128xf32>
    %89 = arith.addf %86, %88 : vector<4x128xf32>
    %cst_55 = arith.constant 0.000000e+00 : f32
    %90 = vector.broadcast %cst_55 : f32 to vector<4x128xf32>
    %91 = arith.maximumf %89, %90 : vector<4x128xf32>
    %c0_56 = arith.constant 0 : index
    %c0_57 = arith.constant 0 : index
    %92 = vector.load %arg5[%c0_56, %c0_57] : memref<4x4xbf16, #tpu.memory_space<vmem>>, vector<4x4xbf16>
    %93 = arith.truncf %91 : vector<4x128xf32> to vector<4x128xbf16>
    %cst_58 = arith.constant dense<0.000000e+00> : vector<4x128xf32>
    %94 = tpu.matmul %92, %93, %cst_58 {dimension_numbers = #tpu.dot_dimension_numbers<[1], [0], [0], [1], [0, 0, 1, 1], [], []>} : vector<4x4xbf16>, vector<4x128xbf16>, vector<4x128xf32> -> vector<4x128xf32>
    %c0_59 = arith.constant 0 : index
    %c0_60 = arith.constant 0 : index
    %95 = vector.load %arg6[%c0_59, %c0_60] : memref<4x1xf32, #tpu.memory_space<vmem>>, vector<4x1xf32>
    %96 = vector.broadcast %95 : vector<4x1xf32> to vector<4x128xf32>
    %97 = arith.addf %94, %96 : vector<4x128xf32>
    %cst_61 = arith.constant 0.000000e+00 : f32
    %98 = vector.broadcast %cst_61 : f32 to vector<4x128xf32>
    %99 = arith.maximumf %97, %98 : vector<4x128xf32>
    %c9_i32_62 = arith.constant 9 : i32
    %100 = tpu.dynamic_rotate %99 by %c9_i32_62 dim 1 : vector<4x128xf32>, i32 -> vector<4x128xf32>
    %c0_63 = arith.constant 0 : index
    %c0_64 = arith.constant 0 : index
    %c0_65 = arith.constant 0 : index
    %101 = vector.load %arg1[%c0_63, %c0_64, %c0_65] : memref<9x1x128xf32, #tpu.memory_space<vmem>>, vector<1x1x128xf32>
    %102 = vector.shape_cast %101 : vector<1x1x128xf32> to vector<1x128xf32>
    %103 = vector.broadcast %102 : vector<1x128xf32> to vector<4x128xf32>
    %104 = arith.mulf %100, %103 : vector<4x128xf32>
    %105 = arith.truncf %104 : vector<4x128xf32> to vector<4x128xbf16>
    %c8_i32_66 = arith.constant 8 : i32
    %106 = tpu.dynamic_rotate %99 by %c8_i32_66 dim 1 : vector<4x128xf32>, i32 -> vector<4x128xf32>
    %c1_67 = arith.constant 1 : index
    %c0_68 = arith.constant 0 : index
    %c0_69 = arith.constant 0 : index
    %107 = vector.load %arg1[%c1_67, %c0_68, %c0_69] : memref<9x1x128xf32, #tpu.memory_space<vmem>>, vector<1x1x128xf32>
    %108 = vector.shape_cast %107 : vector<1x1x128xf32> to vector<1x128xf32>
    %109 = vector.broadcast %108 : vector<1x128xf32> to vector<4x128xf32>
    %110 = arith.mulf %106, %109 : vector<4x128xf32>
    %111 = arith.truncf %110 : vector<4x128xf32> to vector<4x128xbf16>
    %c7_i32_70 = arith.constant 7 : i32
    %112 = tpu.dynamic_rotate %99 by %c7_i32_70 dim 1 : vector<4x128xf32>, i32 -> vector<4x128xf32>
    %c2_71 = arith.constant 2 : index
    %c0_72 = arith.constant 0 : index
    %c0_73 = arith.constant 0 : index
    %113 = vector.load %arg1[%c2_71, %c0_72, %c0_73] : memref<9x1x128xf32, #tpu.memory_space<vmem>>, vector<1x1x128xf32>
    %114 = vector.shape_cast %113 : vector<1x1x128xf32> to vector<1x128xf32>
    %115 = vector.broadcast %114 : vector<1x128xf32> to vector<4x128xf32>
    %116 = arith.mulf %112, %115 : vector<4x128xf32>
    %117 = arith.truncf %116 : vector<4x128xf32> to vector<4x128xbf16>
    %c1_i32_74 = arith.constant 1 : i32
    %118 = tpu.dynamic_rotate %99 by %c1_i32_74 dim 1 : vector<4x128xf32>, i32 -> vector<4x128xf32>
    %c3_75 = arith.constant 3 : index
    %c0_76 = arith.constant 0 : index
    %c0_77 = arith.constant 0 : index
    %119 = vector.load %arg1[%c3_75, %c0_76, %c0_77] : memref<9x1x128xf32, #tpu.memory_space<vmem>>, vector<1x1x128xf32>
    %120 = vector.shape_cast %119 : vector<1x1x128xf32> to vector<1x128xf32>
    %121 = vector.broadcast %120 : vector<1x128xf32> to vector<4x128xf32>
    %122 = arith.mulf %118, %121 : vector<4x128xf32>
    %123 = arith.truncf %122 : vector<4x128xf32> to vector<4x128xbf16>
    %124 = arith.truncf %99 : vector<4x128xf32> to vector<4x128xbf16>
    %c127_i32_78 = arith.constant 127 : i32
    %125 = tpu.dynamic_rotate %99 by %c127_i32_78 dim 1 : vector<4x128xf32>, i32 -> vector<4x128xf32>
    %c5_79 = arith.constant 5 : index
    %c0_80 = arith.constant 0 : index
    %c0_81 = arith.constant 0 : index
    %126 = vector.load %arg1[%c5_79, %c0_80, %c0_81] : memref<9x1x128xf32, #tpu.memory_space<vmem>>, vector<1x1x128xf32>
    %127 = vector.shape_cast %126 : vector<1x1x128xf32> to vector<1x128xf32>
    %128 = vector.broadcast %127 : vector<1x128xf32> to vector<4x128xf32>
    %129 = arith.mulf %125, %128 : vector<4x128xf32>
    %130 = arith.truncf %129 : vector<4x128xf32> to vector<4x128xbf16>
    %c121_i32_82 = arith.constant 121 : i32
    %131 = tpu.dynamic_rotate %99 by %c121_i32_82 dim 1 : vector<4x128xf32>, i32 -> vector<4x128xf32>
    %c6_83 = arith.constant 6 : index
    %c0_84 = arith.constant 0 : index
    %c0_85 = arith.constant 0 : index
    %132 = vector.load %arg1[%c6_83, %c0_84, %c0_85] : memref<9x1x128xf32, #tpu.memory_space<vmem>>, vector<1x1x128xf32>
    %133 = vector.shape_cast %132 : vector<1x1x128xf32> to vector<1x128xf32>
    %134 = vector.broadcast %133 : vector<1x128xf32> to vector<4x128xf32>
    %135 = arith.mulf %131, %134 : vector<4x128xf32>
    %136 = arith.truncf %135 : vector<4x128xf32> to vector<4x128xbf16>
    %c120_i32_86 = arith.constant 120 : i32
    %137 = tpu.dynamic_rotate %99 by %c120_i32_86 dim 1 : vector<4x128xf32>, i32 -> vector<4x128xf32>
    %c7_87 = arith.constant 7 : index
    %c0_88 = arith.constant 0 : index
    %c0_89 = arith.constant 0 : index
    %138 = vector.load %arg1[%c7_87, %c0_88, %c0_89] : memref<9x1x128xf32, #tpu.memory_space<vmem>>, vector<1x1x128xf32>
    %139 = vector.shape_cast %138 : vector<1x1x128xf32> to vector<1x128xf32>
    %140 = vector.broadcast %139 : vector<1x128xf32> to vector<4x128xf32>
    %141 = arith.mulf %137, %140 : vector<4x128xf32>
    %142 = arith.truncf %141 : vector<4x128xf32> to vector<4x128xbf16>
    %c119_i32_90 = arith.constant 119 : i32
    %143 = tpu.dynamic_rotate %99 by %c119_i32_90 dim 1 : vector<4x128xf32>, i32 -> vector<4x128xf32>
    %c8_91 = arith.constant 8 : index
    %c0_92 = arith.constant 0 : index
    %c0_93 = arith.constant 0 : index
    %144 = vector.load %arg1[%c8_91, %c0_92, %c0_93] : memref<9x1x128xf32, #tpu.memory_space<vmem>>, vector<1x1x128xf32>
    %145 = vector.shape_cast %144 : vector<1x1x128xf32> to vector<1x128xf32>
    %146 = vector.broadcast %145 : vector<1x128xf32> to vector<4x128xf32>
    %147 = arith.mulf %143, %146 : vector<4x128xf32>
    %148 = arith.truncf %147 : vector<4x128xf32> to vector<4x128xbf16>
    %cst_94 = arith.constant 0.000000e+00 : f32
    %149 = vector.broadcast %cst_94 : f32 to vector<4x128xf32>
    %c0_95 = arith.constant 0 : index
    %c0_96 = arith.constant 0 : index
    %c0_97 = arith.constant 0 : index
    %150 = vector.load %arg7[%c0_95, %c0_96, %c0_97] : memref<9x4x4xbf16, #tpu.memory_space<vmem>>, vector<1x4x4xbf16>
    %151 = vector.shape_cast %150 : vector<1x4x4xbf16> to vector<4x4xbf16>
    %cst_98 = arith.constant dense<0.000000e+00> : vector<4x128xf32>
    %152 = tpu.matmul %151, %105, %cst_98 {dimension_numbers = #tpu.dot_dimension_numbers<[1], [0], [0], [1], [0, 0, 1, 1], [], []>} : vector<4x4xbf16>, vector<4x128xbf16>, vector<4x128xf32> -> vector<4x128xf32>
    %153 = arith.addf %149, %152 : vector<4x128xf32>
    %c1_99 = arith.constant 1 : index
    %c0_100 = arith.constant 0 : index
    %c0_101 = arith.constant 0 : index
    %154 = vector.load %arg7[%c1_99, %c0_100, %c0_101] : memref<9x4x4xbf16, #tpu.memory_space<vmem>>, vector<1x4x4xbf16>
    %155 = vector.shape_cast %154 : vector<1x4x4xbf16> to vector<4x4xbf16>
    %cst_102 = arith.constant dense<0.000000e+00> : vector<4x128xf32>
    %156 = tpu.matmul %155, %111, %cst_102 {dimension_numbers = #tpu.dot_dimension_numbers<[1], [0], [0], [1], [0, 0, 1, 1], [], []>} : vector<4x4xbf16>, vector<4x128xbf16>, vector<4x128xf32> -> vector<4x128xf32>
    %157 = arith.addf %153, %156 : vector<4x128xf32>
    %c2_103 = arith.constant 2 : index
    %c0_104 = arith.constant 0 : index
    %c0_105 = arith.constant 0 : index
    %158 = vector.load %arg7[%c2_103, %c0_104, %c0_105] : memref<9x4x4xbf16, #tpu.memory_space<vmem>>, vector<1x4x4xbf16>
    %159 = vector.shape_cast %158 : vector<1x4x4xbf16> to vector<4x4xbf16>
    %cst_106 = arith.constant dense<0.000000e+00> : vector<4x128xf32>
    %160 = tpu.matmul %159, %117, %cst_106 {dimension_numbers = #tpu.dot_dimension_numbers<[1], [0], [0], [1], [0, 0, 1, 1], [], []>} : vector<4x4xbf16>, vector<4x128xbf16>, vector<4x128xf32> -> vector<4x128xf32>
    %161 = arith.addf %157, %160 : vector<4x128xf32>
    %c3_107 = arith.constant 3 : index
    %c0_108 = arith.constant 0 : index
    %c0_109 = arith.constant 0 : index
    %162 = vector.load %arg7[%c3_107, %c0_108, %c0_109] : memref<9x4x4xbf16, #tpu.memory_space<vmem>>, vector<1x4x4xbf16>
    %163 = vector.shape_cast %162 : vector<1x4x4xbf16> to vector<4x4xbf16>
    %cst_110 = arith.constant dense<0.000000e+00> : vector<4x128xf32>
    %164 = tpu.matmul %163, %123, %cst_110 {dimension_numbers = #tpu.dot_dimension_numbers<[1], [0], [0], [1], [0, 0, 1, 1], [], []>} : vector<4x4xbf16>, vector<4x128xbf16>, vector<4x128xf32> -> vector<4x128xf32>
    %165 = arith.addf %161, %164 : vector<4x128xf32>
    %c4_111 = arith.constant 4 : index
    %c0_112 = arith.constant 0 : index
    %c0_113 = arith.constant 0 : index
    %166 = vector.load %arg7[%c4_111, %c0_112, %c0_113] : memref<9x4x4xbf16, #tpu.memory_space<vmem>>, vector<1x4x4xbf16>
    %167 = vector.shape_cast %166 : vector<1x4x4xbf16> to vector<4x4xbf16>
    %cst_114 = arith.constant dense<0.000000e+00> : vector<4x128xf32>
    %168 = tpu.matmul %167, %124, %cst_114 {dimension_numbers = #tpu.dot_dimension_numbers<[1], [0], [0], [1], [0, 0, 1, 1], [], []>} : vector<4x4xbf16>, vector<4x128xbf16>, vector<4x128xf32> -> vector<4x128xf32>
    %169 = arith.addf %165, %168 : vector<4x128xf32>
    %c5_115 = arith.constant 5 : index
    %c0_116 = arith.constant 0 : index
    %c0_117 = arith.constant 0 : index
    %170 = vector.load %arg7[%c5_115, %c0_116, %c0_117] : memref<9x4x4xbf16, #tpu.memory_space<vmem>>, vector<1x4x4xbf16>
    %171 = vector.shape_cast %170 : vector<1x4x4xbf16> to vector<4x4xbf16>
    %cst_118 = arith.constant dense<0.000000e+00> : vector<4x128xf32>
    %172 = tpu.matmul %171, %130, %cst_118 {dimension_numbers = #tpu.dot_dimension_numbers<[1], [0], [0], [1], [0, 0, 1, 1], [], []>} : vector<4x4xbf16>, vector<4x128xbf16>, vector<4x128xf32> -> vector<4x128xf32>
    %173 = arith.addf %169, %172 : vector<4x128xf32>
    %c6_119 = arith.constant 6 : index
    %c0_120 = arith.constant 0 : index
    %c0_121 = arith.constant 0 : index
    %174 = vector.load %arg7[%c6_119, %c0_120, %c0_121] : memref<9x4x4xbf16, #tpu.memory_space<vmem>>, vector<1x4x4xbf16>
    %175 = vector.shape_cast %174 : vector<1x4x4xbf16> to vector<4x4xbf16>
    %cst_122 = arith.constant dense<0.000000e+00> : vector<4x128xf32>
    %176 = tpu.matmul %175, %136, %cst_122 {dimension_numbers = #tpu.dot_dimension_numbers<[1], [0], [0], [1], [0, 0, 1, 1], [], []>} : vector<4x4xbf16>, vector<4x128xbf16>, vector<4x128xf32> -> vector<4x128xf32>
    %177 = arith.addf %173, %176 : vector<4x128xf32>
    %c7_123 = arith.constant 7 : index
    %c0_124 = arith.constant 0 : index
    %c0_125 = arith.constant 0 : index
    %178 = vector.load %arg7[%c7_123, %c0_124, %c0_125] : memref<9x4x4xbf16, #tpu.memory_space<vmem>>, vector<1x4x4xbf16>
    %179 = vector.shape_cast %178 : vector<1x4x4xbf16> to vector<4x4xbf16>
    %cst_126 = arith.constant dense<0.000000e+00> : vector<4x128xf32>
    %180 = tpu.matmul %179, %142, %cst_126 {dimension_numbers = #tpu.dot_dimension_numbers<[1], [0], [0], [1], [0, 0, 1, 1], [], []>} : vector<4x4xbf16>, vector<4x128xbf16>, vector<4x128xf32> -> vector<4x128xf32>
    %181 = arith.addf %177, %180 : vector<4x128xf32>
    %c8_127 = arith.constant 8 : index
    %c0_128 = arith.constant 0 : index
    %c0_129 = arith.constant 0 : index
    %182 = vector.load %arg7[%c8_127, %c0_128, %c0_129] : memref<9x4x4xbf16, #tpu.memory_space<vmem>>, vector<1x4x4xbf16>
    %183 = vector.shape_cast %182 : vector<1x4x4xbf16> to vector<4x4xbf16>
    %cst_130 = arith.constant dense<0.000000e+00> : vector<4x128xf32>
    %184 = tpu.matmul %183, %148, %cst_130 {dimension_numbers = #tpu.dot_dimension_numbers<[1], [0], [0], [1], [0, 0, 1, 1], [], []>} : vector<4x4xbf16>, vector<4x128xbf16>, vector<4x128xf32> -> vector<4x128xf32>
    %185 = arith.addf %181, %184 : vector<4x128xf32>
    %c0_131 = arith.constant 0 : index
    %c0_132 = arith.constant 0 : index
    %186 = vector.load %arg8[%c0_131, %c0_132] : memref<4x1xf32, #tpu.memory_space<vmem>>, vector<4x1xf32>
    %187 = vector.broadcast %186 : vector<4x1xf32> to vector<4x128xf32>
    %188 = arith.addf %185, %187 : vector<4x128xf32>
    %cst_133 = arith.constant 0.000000e+00 : f32
    %189 = vector.broadcast %cst_133 : f32 to vector<4x128xf32>
    %190 = arith.maximumf %188, %189 : vector<4x128xf32>
    %c0_134 = arith.constant 0 : index
    %c0_135 = arith.constant 0 : index
    %191 = vector.load %arg9[%c0_134, %c0_135] : memref<16x4xbf16, #tpu.memory_space<vmem>>, vector<16x4xbf16>
    %192 = arith.truncf %190 : vector<4x128xf32> to vector<4x128xbf16>
    %cst_136 = arith.constant dense<0.000000e+00> : vector<16x128xf32>
    %193 = tpu.matmul %191, %192, %cst_136 {dimension_numbers = #tpu.dot_dimension_numbers<[1], [0], [0], [1], [0, 0, 1, 1], [], []>} : vector<16x4xbf16>, vector<4x128xbf16>, vector<16x128xf32> -> vector<16x128xf32>
    %c0_137 = arith.constant 0 : index
    %c0_138 = arith.constant 0 : index
    %194 = vector.load %arg10[%c0_137, %c0_138] : memref<16x1xf32, #tpu.memory_space<vmem>>, vector<16x1xf32>
    %195 = vector.broadcast %194 : vector<16x1xf32> to vector<16x128xf32>
    %196 = arith.addf %193, %195 : vector<16x128xf32>
    %c0_139 = arith.constant 0 : index
    %c0_140 = arith.constant 0 : index
    %197 = vector.load %arg11[%c0_139, %c0_140] : memref<16x4xbf16, #tpu.memory_space<vmem>>, vector<16x4xbf16>
    %198 = arith.truncf %91 : vector<4x128xf32> to vector<4x128xbf16>
    %cst_141 = arith.constant dense<0.000000e+00> : vector<16x128xf32>
    %199 = tpu.matmul %197, %198, %cst_141 {dimension_numbers = #tpu.dot_dimension_numbers<[1], [0], [0], [1], [0, 0, 1, 1], [], []>} : vector<16x4xbf16>, vector<4x128xbf16>, vector<16x128xf32> -> vector<16x128xf32>
    %c0_142 = arith.constant 0 : index
    %c0_143 = arith.constant 0 : index
    %200 = vector.load %arg12[%c0_142, %c0_143] : memref<16x1xf32, #tpu.memory_space<vmem>>, vector<16x1xf32>
    %201 = vector.broadcast %200 : vector<16x1xf32> to vector<16x128xf32>
    %202 = arith.addf %199, %201 : vector<16x128xf32>
    %203 = arith.addf %196, %202 : vector<16x128xf32>
    %c0_144 = arith.constant 0 : index
    %c0_145 = arith.constant 0 : index
    %204 = vector.load %arg54[%c0_144, %c0_145] : memref<256x128xf32, #tpu.memory_space<vmem>>, vector<16x128xf32>
    tpu.vector_store %arg54[%c0_144, %c0_145], %203 {strides = array<i32>} : memref<256x128xf32, #tpu.memory_space<vmem>>, vector<16x128xf32>,
    %c0_146 = arith.constant 0 : index
    %c0_147 = arith.constant 0 : index
    %205 = vector.load %arg54[%c0_146, %c0_147] : memref<256x128xf32, #tpu.memory_space<vmem>>, vector<16x128xf32>
    %c0_148 = arith.constant 0 : index
    %c0_149 = arith.constant 0 : index
    %206 = vector.load %arg13[%c0_148, %c0_149] : memref<16x1xf32, #tpu.memory_space<vmem>>, vector<16x1xf32>
    %207 = vector.broadcast %206 : vector<16x1xf32> to vector<16x128xf32>
    %208 = arith.mulf %205, %207 : vector<16x128xf32>
    %c0_150 = arith.constant 0 : index
    %c0_151 = arith.constant 0 : index
    %209 = vector.load %arg14[%c0_150, %c0_151] : memref<16x1xf32, #tpu.memory_space<vmem>>, vector<16x1xf32>
    %210 = vector.broadcast %209 : vector<16x1xf32> to vector<16x128xf32>
    %211 = arith.addf %208, %210 : vector<16x128xf32>
    %cst_152 = arith.constant 0.000000e+00 : f32
    %212 = vector.broadcast %cst_152 : f32 to vector<16x128xf32>
    %213 = arith.maximumf %211, %212 : vector<16x128xf32>
    %c0_153 = arith.constant 0 : index
    %c0_154 = arith.constant 0 : index
    %214 = vector.load %arg15[%c0_153, %c0_154] : memref<4x16xbf16, #tpu.memory_space<vmem>>, vector<4x16xbf16>
    %215 = arith.truncf %213 : vector<16x128xf32> to vector<16x128xbf16>
    %cst_155 = arith.constant dense<0.000000e+00> : vector<4x128xf32>
    %216 = tpu.matmul %214, %215, %cst_155 {dimension_numbers = #tpu.dot_dimension_numbers<[1], [0], [0], [1], [0, 0, 1, 1], [], []>} : vector<4x16xbf16>, vector<16x128xbf16>, vector<4x128xf32> -> vector<4x128xf32>
    %c0_156 = arith.constant 0 : index
    %c0_157 = arith.constant 0 : index
    %217 = vector.load %arg16[%c0_156, %c0_157] : memref<4x1xf32, #tpu.memory_space<vmem>>, vector<4x1xf32>
    %218 = vector.broadcast %217 : vector<4x1xf32> to vector<4x128xf32>
    %219 = arith.addf %216, %218 : vector<4x128xf32>
    %cst_158 = arith.constant 0.000000e+00 : f32
    %220 = vector.broadcast %cst_158 : f32 to vector<4x128xf32>
    %221 = arith.maximumf %219, %220 : vector<4x128xf32>
    %c9_i32_159 = arith.constant 9 : i32
    %222 = tpu.dynamic_rotate %221 by %c9_i32_159 dim 1 : vector<4x128xf32>, i32 -> vector<4x128xf32>
    %c0_160 = arith.constant 0 : index
    %c0_161 = arith.constant 0 : index
    %c0_162 = arith.constant 0 : index
    %223 = vector.load %arg1[%c0_160, %c0_161, %c0_162] : memref<9x1x128xf32, #tpu.memory_space<vmem>>, vector<1x1x128xf32>
    %224 = vector.shape_cast %223 : vector<1x1x128xf32> to vector<1x128xf32>
    %225 = vector.broadcast %224 : vector<1x128xf32> to vector<4x128xf32>
    %226 = arith.mulf %222, %225 : vector<4x128xf32>
    %227 = arith.truncf %226 : vector<4x128xf32> to vector<4x128xbf16>
    %c8_i32_163 = arith.constant 8 : i32
    %228 = tpu.dynamic_rotate %221 by %c8_i32_163 dim 1 : vector<4x128xf32>, i32 -> vector<4x128xf32>
    %c1_164 = arith.constant 1 : index
    %c0_165 = arith.constant 0 : index
    %c0_166 = arith.constant 0 : index
    %229 = vector.load %arg1[%c1_164, %c0_165, %c0_166] : memref<9x1x128xf32, #tpu.memory_space<vmem>>, vector<1x1x128xf32>
    %230 = vector.shape_cast %229 : vector<1x1x128xf32> to vector<1x128xf32>
    %231 = vector.broadcast %230 : vector<1x128xf32> to vector<4x128xf32>
    %232 = arith.mulf %228, %231 : vector<4x128xf32>
    %233 = arith.truncf %232 : vector<4x128xf32> to vector<4x128xbf16>
    %c7_i32_167 = arith.constant 7 : i32
    %234 = tpu.dynamic_rotate %221 by %c7_i32_167 dim 1 : vector<4x128xf32>, i32 -> vector<4x128xf32>
    %c2_168 = arith.constant 2 : index
    %c0_169 = arith.constant 0 : index
    %c0_170 = arith.constant 0 : index
    %235 = vector.load %arg1[%c2_168, %c0_169, %c0_170] : memref<9x1x128xf32, #tpu.memory_space<vmem>>, vector<1x1x128xf32>
    %236 = vector.shape_cast %235 : vector<1x1x128xf32> to vector<1x128xf32>
    %237 = vector.broadcast %236 : vector<1x128xf32> to vector<4x128xf32>
    %238 = arith.mulf %234, %237 : vector<4x128xf32>
    %239 = arith.truncf %238 : vector<4x128xf32> to vector<4x128xbf16>
    %c1_i32_171 = arith.constant 1 : i32
    %240 = tpu.dynamic_rotate %221 by %c1_i32_171 dim 1 : vector<4x128xf32>, i32 -> vector<4x128xf32>
    %c3_172 = arith.constant 3 : index
    %c0_173 = arith.constant 0 : index
    %c0_174 = arith.constant 0 : index
    %241 = vector.load %arg1[%c3_172, %c0_173, %c0_174] : memref<9x1x128xf32, #tpu.memory_space<vmem>>, vector<1x1x128xf32>
    %242 = vector.shape_cast %241 : vector<1x1x128xf32> to vector<1x128xf32>
    %243 = vector.broadcast %242 : vector<1x128xf32> to vector<4x128xf32>
    %244 = arith.mulf %240, %243 : vector<4x128xf32>
    %245 = arith.truncf %244 : vector<4x128xf32> to vector<4x128xbf16>
    %246 = arith.truncf %221 : vector<4x128xf32> to vector<4x128xbf16>
    %c127_i32_175 = arith.constant 127 : i32
    %247 = tpu.dynamic_rotate %221 by %c127_i32_175 dim 1 : vector<4x128xf32>, i32 -> vector<4x128xf32>
    %c5_176 = arith.constant 5 : index
    %c0_177 = arith.constant 0 : index
    %c0_178 = arith.constant 0 : index
    %248 = vector.load %arg1[%c5_176, %c0_177, %c0_178] : memref<9x1x128xf32, #tpu.memory_space<vmem>>, vector<1x1x128xf32>
    %249 = vector.shape_cast %248 : vector<1x1x128xf32> to vector<1x128xf32>
    %250 = vector.broadcast %249 : vector<1x128xf32> to vector<4x128xf32>
    %251 = arith.mulf %247, %250 : vector<4x128xf32>
    %252 = arith.truncf %251 : vector<4x128xf32> to vector<4x128xbf16>
    %c121_i32_179 = arith.constant 121 : i32
    %253 = tpu.dynamic_rotate %221 by %c121_i32_179 dim 1 : vector<4x128xf32>, i32 -> vector<4x128xf32>
    %c6_180 = arith.constant 6 : index
    %c0_181 = arith.constant 0 : index
    %c0_182 = arith.constant 0 : index
    %254 = vector.load %arg1[%c6_180, %c0_181, %c0_182] : memref<9x1x128xf32, #tpu.memory_space<vmem>>, vector<1x1x128xf32>
    %255 = vector.shape_cast %254 : vector<1x1x128xf32> to vector<1x128xf32>
    %256 = vector.broadcast %255 : vector<1x128xf32> to vector<4x128xf32>
    %257 = arith.mulf %253, %256 : vector<4x128xf32>
    %258 = arith.truncf %257 : vector<4x128xf32> to vector<4x128xbf16>
    %c120_i32_183 = arith.constant 120 : i32
    %259 = tpu.dynamic_rotate %221 by %c120_i32_183 dim 1 : vector<4x128xf32>, i32 -> vector<4x128xf32>
    %c7_184 = arith.constant 7 : index
    %c0_185 = arith.constant 0 : index
    %c0_186 = arith.constant 0 : index
    %260 = vector.load %arg1[%c7_184, %c0_185, %c0_186] : memref<9x1x128xf32, #tpu.memory_space<vmem>>, vector<1x1x128xf32>
    %261 = vector.shape_cast %260 : vector<1x1x128xf32> to vector<1x128xf32>
    %262 = vector.broadcast %261 : vector<1x128xf32> to vector<4x128xf32>
    %263 = arith.mulf %259, %262 : vector<4x128xf32>
    %264 = arith.truncf %263 : vector<4x128xf32> to vector<4x128xbf16>
    %c119_i32_187 = arith.constant 119 : i32
    %265 = tpu.dynamic_rotate %221 by %c119_i32_187 dim 1 : vector<4x128xf32>, i32 -> vector<4x128xf32>
    %c8_188 = arith.constant 8 : index
    %c0_189 = arith.constant 0 : index
    %c0_190 = arith.constant 0 : index
    %266 = vector.load %arg1[%c8_188, %c0_189, %c0_190] : memref<9x1x128xf32, #tpu.memory_space<vmem>>, vector<1x1x128xf32>
    %267 = vector.shape_cast %266 : vector<1x1x128xf32> to vector<1x128xf32>
    %268 = vector.broadcast %267 : vector<1x128xf32> to vector<4x128xf32>
    %269 = arith.mulf %265, %268 : vector<4x128xf32>
    %270 = arith.truncf %269 : vector<4x128xf32> to vector<4x128xbf16>
    %cst_191 = arith.constant 0.000000e+00 : f32
    %271 = vector.broadcast %cst_191 : f32 to vector<4x128xf32>
    %c0_192 = arith.constant 0 : index
    %c0_193 = arith.constant 0 : index
    %c0_194 = arith.constant 0 : index
    %272 = vector.load %arg17[%c0_192, %c0_193, %c0_194] : memref<9x4x4xbf16, #tpu.memory_space<vmem>>, vector<1x4x4xbf16>
    %273 = vector.shape_cast %272 : vector<1x4x4xbf16> to vector<4x4xbf16>
    %cst_195 = arith.constant dense<0.000000e+00> : vector<4x128xf32>
    %274 = tpu.matmul %273, %227, %cst_195 {dimension_numbers = #tpu.dot_dimension_numbers<[1], [0], [0], [1], [0, 0, 1, 1], [], []>} : vector<4x4xbf16>, vector<4x128xbf16>, vector<4x128xf32> -> vector<4x128xf32>
    %275 = arith.addf %271, %274 : vector<4x128xf32>
    %c1_196 = arith.constant 1 : index
    %c0_197 = arith.constant 0 : index
    %c0_198 = arith.constant 0 : index
    %276 = vector.load %arg17[%c1_196, %c0_197, %c0_198] : memref<9x4x4xbf16, #tpu.memory_space<vmem>>, vector<1x4x4xbf16>
    %277 = vector.shape_cast %276 : vector<1x4x4xbf16> to vector<4x4xbf16>
    %cst_199 = arith.constant dense<0.000000e+00> : vector<4x128xf32>
    %278 = tpu.matmul %277, %233, %cst_199 {dimension_numbers = #tpu.dot_dimension_numbers<[1], [0], [0], [1], [0, 0, 1, 1], [], []>} : vector<4x4xbf16>, vector<4x128xbf16>, vector<4x128xf32> -> vector<4x128xf32>
    %279 = arith.addf %275, %278 : vector<4x128xf32>
    %c2_200 = arith.constant 2 : index
    %c0_201 = arith.constant 0 : index
    %c0_202 = arith.constant 0 : index
    %280 = vector.load %arg17[%c2_200, %c0_201, %c0_202] : memref<9x4x4xbf16, #tpu.memory_space<vmem>>, vector<1x4x4xbf16>
    %281 = vector.shape_cast %280 : vector<1x4x4xbf16> to vector<4x4xbf16>
    %cst_203 = arith.constant dense<0.000000e+00> : vector<4x128xf32>
    %282 = tpu.matmul %281, %239, %cst_203 {dimension_numbers = #tpu.dot_dimension_numbers<[1], [0], [0], [1], [0, 0, 1, 1], [], []>} : vector<4x4xbf16>, vector<4x128xbf16>, vector<4x128xf32> -> vector<4x128xf32>
    %283 = arith.addf %279, %282 : vector<4x128xf32>
    %c3_204 = arith.constant 3 : index
    %c0_205 = arith.constant 0 : index
    %c0_206 = arith.constant 0 : index
    %284 = vector.load %arg17[%c3_204, %c0_205, %c0_206] : memref<9x4x4xbf16, #tpu.memory_space<vmem>>, vector<1x4x4xbf16>
    %285 = vector.shape_cast %284 : vector<1x4x4xbf16> to vector<4x4xbf16>
    %cst_207 = arith.constant dense<0.000000e+00> : vector<4x128xf32>
    %286 = tpu.matmul %285, %245, %cst_207 {dimension_numbers = #tpu.dot_dimension_numbers<[1], [0], [0], [1], [0, 0, 1, 1], [], []>} : vector<4x4xbf16>, vector<4x128xbf16>, vector<4x128xf32> -> vector<4x128xf32>
    %287 = arith.addf %283, %286 : vector<4x128xf32>
    %c4_208 = arith.constant 4 : index
    %c0_209 = arith.constant 0 : index
    %c0_210 = arith.constant 0 : index
    %288 = vector.load %arg17[%c4_208, %c0_209, %c0_210] : memref<9x4x4xbf16, #tpu.memory_space<vmem>>, vector<1x4x4xbf16>
    %289 = vector.shape_cast %288 : vector<1x4x4xbf16> to vector<4x4xbf16>
    %cst_211 = arith.constant dense<0.000000e+00> : vector<4x128xf32>
    %290 = tpu.matmul %289, %246, %cst_211 {dimension_numbers = #tpu.dot_dimension_numbers<[1], [0], [0], [1], [0, 0, 1, 1], [], []>} : vector<4x4xbf16>, vector<4x128xbf16>, vector<4x128xf32> -> vector<4x128xf32>
    %291 = arith.addf %287, %290 : vector<4x128xf32>
    %c5_212 = arith.constant 5 : index
    %c0_213 = arith.constant 0 : index
    %c0_214 = arith.constant 0 : index
    %292 = vector.load %arg17[%c5_212, %c0_213, %c0_214] : memref<9x4x4xbf16, #tpu.memory_space<vmem>>, vector<1x4x4xbf16>
    %293 = vector.shape_cast %292 : vector<1x4x4xbf16> to vector<4x4xbf16>
    %cst_215 = arith.constant dense<0.000000e+00> : vector<4x128xf32>
    %294 = tpu.matmul %293, %252, %cst_215 {dimension_numbers = #tpu.dot_dimension_numbers<[1], [0], [0], [1], [0, 0, 1, 1], [], []>} : vector<4x4xbf16>, vector<4x128xbf16>, vector<4x128xf32> -> vector<4x128xf32>
    %295 = arith.addf %291, %294 : vector<4x128xf32>
    %c6_216 = arith.constant 6 : index
    %c0_217 = arith.constant 0 : index
    %c0_218 = arith.constant 0 : index
    %296 = vector.load %arg17[%c6_216, %c0_217, %c0_218] : memref<9x4x4xbf16, #tpu.memory_space<vmem>>, vector<1x4x4xbf16>
    %297 = vector.shape_cast %296 : vector<1x4x4xbf16> to vector<4x4xbf16>
    %cst_219 = arith.constant dense<0.000000e+00> : vector<4x128xf32>
    %298 = tpu.matmul %297, %258, %cst_219 {dimension_numbers = #tpu.dot_dimension_numbers<[1], [0], [0], [1], [0, 0, 1, 1], [], []>} : vector<4x4xbf16>, vector<4x128xbf16>, vector<4x128xf32> -> vector<4x128xf32>
    %299 = arith.addf %295, %298 : vector<4x128xf32>
    %c7_220 = arith.constant 7 : index
    %c0_221 = arith.constant 0 : index
    %c0_222 = arith.constant 0 : index
    %300 = vector.load %arg17[%c7_220, %c0_221, %c0_222] : memref<9x4x4xbf16, #tpu.memory_space<vmem>>, vector<1x4x4xbf16>
    %301 = vector.shape_cast %300 : vector<1x4x4xbf16> to vector<4x4xbf16>
    %cst_223 = arith.constant dense<0.000000e+00> : vector<4x128xf32>
    %302 = tpu.matmul %301, %264, %cst_223 {dimension_numbers = #tpu.dot_dimension_numbers<[1], [0], [0], [1], [0, 0, 1, 1], [], []>} : vector<4x4xbf16>, vector<4x128xbf16>, vector<4x128xf32> -> vector<4x128xf32>
    %303 = arith.addf %299, %302 : vector<4x128xf32>
    %c8_224 = arith.constant 8 : index
    %c0_225 = arith.constant 0 : index
    %c0_226 = arith.constant 0 : index
    %304 = vector.load %arg17[%c8_224, %c0_225, %c0_226] : memref<9x4x4xbf16, #tpu.memory_space<vmem>>, vector<1x4x4xbf16>
    %305 = vector.shape_cast %304 : vector<1x4x4xbf16> to vector<4x4xbf16>
    %cst_227 = arith.constant dense<0.000000e+00> : vector<4x128xf32>
    %306 = tpu.matmul %305, %270, %cst_227 {dimension_numbers = #tpu.dot_dimension_numbers<[1], [0], [0], [1], [0, 0, 1, 1], [], []>} : vector<4x4xbf16>, vector<4x128xbf16>, vector<4x128xf32> -> vector<4x128xf32>
    %307 = arith.addf %303, %306 : vector<4x128xf32>
    %c0_228 = arith.constant 0 : index
    %c0_229 = arith.constant 0 : index
    %308 = vector.load %arg18[%c0_228, %c0_229] : memref<4x1xf32, #tpu.memory_space<vmem>>, vector<4x1xf32>
    %309 = vector.broadcast %308 : vector<4x1xf32> to vector<4x128xf32>
    %310 = arith.addf %307, %309 : vector<4x128xf32>
    %cst_230 = arith.constant 0.000000e+00 : f32
    %311 = vector.broadcast %cst_230 : f32 to vector<4x128xf32>
    %312 = arith.maximumf %310, %311 : vector<4x128xf32>
    %c0_231 = arith.constant 0 : index
    %c0_232 = arith.constant 0 : index
    %313 = vector.load %arg19[%c0_231, %c0_232] : memref<16x4xbf16, #tpu.memory_space<vmem>>, vector<16x4xbf16>
    %314 = arith.truncf %312 : vector<4x128xf32> to vector<4x128xbf16>
    %cst_233 = arith.constant dense<0.000000e+00> : vector<16x128xf32>
    %315 = tpu.matmul %313, %314, %cst_233 {dimension_numbers = #tpu.dot_dimension_numbers<[1], [0], [0], [1], [0, 0, 1, 1], [], []>} : vector<16x4xbf16>, vector<4x128xbf16>, vector<16x128xf32> -> vector<16x128xf32>
    %c0_234 = arith.constant 0 : index
    %c0_235 = arith.constant 0 : index
    %316 = vector.load %arg20[%c0_234, %c0_235] : memref<16x1xf32, #tpu.memory_space<vmem>>, vector<16x1xf32>
    %317 = vector.broadcast %316 : vector<16x1xf32> to vector<16x128xf32>
    %318 = arith.addf %315, %317 : vector<16x128xf32>
    %c0_236 = arith.constant 0 : index
    %c0_237 = arith.constant 0 : index
    %319 = vector.load %arg54[%c0_236, %c0_237] : memref<256x128xf32, #tpu.memory_space<vmem>>, vector<16x128xf32>
    %320 = arith.addf %319, %318 : vector<16x128xf32>
    %c0_238 = arith.constant 0 : index
    %c0_239 = arith.constant 0 : index
    %321 = vector.load %arg54[%c0_238, %c0_239] : memref<256x128xf32, #tpu.memory_space<vmem>>, vector<16x128xf32>
    tpu.vector_store %arg54[%c0_238, %c0_239], %320 {strides = array<i32>} : memref<256x128xf32, #tpu.memory_space<vmem>>, vector<16x128xf32>,
    %c0_240 = arith.constant 0 : index
    %c0_241 = arith.constant 0 : index
    %322 = vector.load %arg54[%c0_240, %c0_241] : memref<256x128xf32, #tpu.memory_space<vmem>>, vector<16x128xf32>
    %c0_242 = arith.constant 0 : index
    %c0_243 = arith.constant 0 : index
    %323 = vector.load %arg21[%c0_242, %c0_243] : memref<16x16xbf16, #tpu.memory_space<vmem>>, vector<16x16xbf16>
    %324 = arith.truncf %322 : vector<16x128xf32> to vector<16x128xbf16>
    %cst_244 = arith.constant dense<0.000000e+00> : vector<16x128xf32>
    %325 = tpu.matmul %323, %324, %cst_244 {dimension_numbers = #tpu.dot_dimension_numbers<[1], [0], [0], [1], [0, 0, 1, 1], [], []>} : vector<16x16xbf16>, vector<16x128xbf16>, vector<16x128xf32> -> vector<16x128xf32>
    %c0_245 = arith.constant 0 : index
    %c0_246 = arith.constant 0 : index
    %326 = vector.load %arg22[%c0_245, %c0_246] : memref<16x1xf32, #tpu.memory_space<vmem>>, vector<16x1xf32>
    %327 = vector.broadcast %326 : vector<16x1xf32> to vector<16x128xf32>
    %328 = arith.addf %325, %327 : vector<16x128xf32>
    %cst_247 = arith.constant 0.000000e+00 : f32
    %329 = vector.broadcast %cst_247 : f32 to vector<16x128xf32>
    %330 = arith.maximumf %328, %329 : vector<16x128xf32>
    %c9_i32_248 = arith.constant 9 : i32
    %331 = tpu.dynamic_rotate %330 by %c9_i32_248 dim 1 : vector<16x128xf32>, i32 -> vector<16x128xf32>
    %c0_249 = arith.constant 0 : index
    %c0_250 = arith.constant 0 : index
    %c0_251 = arith.constant 0 : index
    %332 = vector.load %arg1[%c0_249, %c0_250, %c0_251] : memref<9x1x128xf32, #tpu.memory_space<vmem>>, vector<1x1x128xf32>
    %333 = vector.shape_cast %332 : vector<1x1x128xf32> to vector<1x128xf32>
    %334 = vector.broadcast %333 : vector<1x128xf32> to vector<16x128xf32>
    %335 = arith.mulf %331, %334 : vector<16x128xf32>
    %336 = arith.truncf %335 : vector<16x128xf32> to vector<16x128xbf16>
    %c8_i32_252 = arith.constant 8 : i32
    %337 = tpu.dynamic_rotate %330 by %c8_i32_252 dim 1 : vector<16x128xf32>, i32 -> vector<16x128xf32>
    %c1_253 = arith.constant 1 : index
    %c0_254 = arith.constant 0 : index
    %c0_255 = arith.constant 0 : index
    %338 = vector.load %arg1[%c1_253, %c0_254, %c0_255] : memref<9x1x128xf32, #tpu.memory_space<vmem>>, vector<1x1x128xf32>
    %339 = vector.shape_cast %338 : vector<1x1x128xf32> to vector<1x128xf32>
    %340 = vector.broadcast %339 : vector<1x128xf32> to vector<16x128xf32>
    %341 = arith.mulf %337, %340 : vector<16x128xf32>
    %342 = arith.truncf %341 : vector<16x128xf32> to vector<16x128xbf16>
    %c7_i32_256 = arith.constant 7 : i32
    %343 = tpu.dynamic_rotate %330 by %c7_i32_256 dim 1 : vector<16x128xf32>, i32 -> vector<16x128xf32>
    %c2_257 = arith.constant 2 : index
    %c0_258 = arith.constant 0 : index
    %c0_259 = arith.constant 0 : index
    %344 = vector.load %arg1[%c2_257, %c0_258, %c0_259] : memref<9x1x128xf32, #tpu.memory_space<vmem>>, vector<1x1x128xf32>
    %345 = vector.shape_cast %344 : vector<1x1x128xf32> to vector<1x128xf32>
    %346 = vector.broadcast %345 : vector<1x128xf32> to vector<16x128xf32>
    %347 = arith.mulf %343, %346 : vector<16x128xf32>
    %348 = arith.truncf %347 : vector<16x128xf32> to vector<16x128xbf16>
    %c1_i32_260 = arith.constant 1 : i32
    %349 = tpu.dynamic_rotate %330 by %c1_i32_260 dim 1 : vector<16x128xf32>, i32 -> vector<16x128xf32>
    %c3_261 = arith.constant 3 : index
    %c0_262 = arith.constant 0 : index
    %c0_263 = arith.constant 0 : index
    %350 = vector.load %arg1[%c3_261, %c0_262, %c0_263] : memref<9x1x128xf32, #tpu.memory_space<vmem>>, vector<1x1x128xf32>
    %351 = vector.shape_cast %350 : vector<1x1x128xf32> to vector<1x128xf32>
    %352 = vector.broadcast %351 : vector<1x128xf32> to vector<16x128xf32>
    %353 = arith.mulf %349, %352 : vector<16x128xf32>
    %354 = arith.truncf %353 : vector<16x128xf32> to vector<16x128xbf16>
    %355 = arith.truncf %330 : vector<16x128xf32> to vector<16x128xbf16>
    %c127_i32_264 = arith.constant 127 : i32
    %356 = tpu.dynamic_rotate %330 by %c127_i32_264 dim 1 : vector<16x128xf32>, i32 -> vector<16x128xf32>
    %c5_265 = arith.constant 5 : index
    %c0_266 = arith.constant 0 : index
    %c0_267 = arith.constant 0 : index
    %357 = vector.load %arg1[%c5_265, %c0_266, %c0_267] : memref<9x1x128xf32, #tpu.memory_space<vmem>>, vector<1x1x128xf32>
    %358 = vector.shape_cast %357 : vector<1x1x128xf32> to vector<1x128xf32>
    %359 = vector.broadcast %358 : vector<1x128xf32> to vector<16x128xf32>
    %360 = arith.mulf %356, %359 : vector<16x128xf32>
    %361 = arith.truncf %360 : vector<16x128xf32> to vector<16x128xbf16>
    %c121_i32_268 = arith.constant 121 : i32
    %362 = tpu.dynamic_rotate %330 by %c121_i32_268 dim 1 : vector<16x128xf32>, i32 -> vector<16x128xf32>
    %c6_269 = arith.constant 6 : index
    %c0_270 = arith.constant 0 : index
    %c0_271 = arith.constant 0 : index
    %363 = vector.load %arg1[%c6_269, %c0_270, %c0_271] : memref<9x1x128xf32, #tpu.memory_space<vmem>>, vector<1x1x128xf32>
    %364 = vector.shape_cast %363 : vector<1x1x128xf32> to vector<1x128xf32>
    %365 = vector.broadcast %364 : vector<1x128xf32> to vector<16x128xf32>
    %366 = arith.mulf %362, %365 : vector<16x128xf32>
    %367 = arith.truncf %366 : vector<16x128xf32> to vector<16x128xbf16>
    %c120_i32_272 = arith.constant 120 : i32
    %368 = tpu.dynamic_rotate %330 by %c120_i32_272 dim 1 : vector<16x128xf32>, i32 -> vector<16x128xf32>
    %c7_273 = arith.constant 7 : index
    %c0_274 = arith.constant 0 : index
    %c0_275 = arith.constant 0 : index
    %369 = vector.load %arg1[%c7_273, %c0_274, %c0_275] : memref<9x1x128xf32, #tpu.memory_space<vmem>>, vector<1x1x128xf32>
    %370 = vector.shape_cast %369 : vector<1x1x128xf32> to vector<1x128xf32>
    %371 = vector.broadcast %370 : vector<1x128xf32> to vector<16x128xf32>
    %372 = arith.mulf %368, %371 : vector<16x128xf32>
    %373 = arith.truncf %372 : vector<16x128xf32> to vector<16x128xbf16>
    %c119_i32_276 = arith.constant 119 : i32
    %374 = tpu.dynamic_rotate %330 by %c119_i32_276 dim 1 : vector<16x128xf32>, i32 -> vector<16x128xf32>
    %c8_277 = arith.constant 8 : index
    %c0_278 = arith.constant 0 : index
    %c0_279 = arith.constant 0 : index
    %375 = vector.load %arg1[%c8_277, %c0_278, %c0_279] : memref<9x1x128xf32, #tpu.memory_space<vmem>>, vector<1x1x128xf32>
    %376 = vector.shape_cast %375 : vector<1x1x128xf32> to vector<1x128xf32>
    %377 = vector.broadcast %376 : vector<1x128xf32> to vector<16x128xf32>
    %378 = arith.mulf %374, %377 : vector<16x128xf32>
    %379 = arith.truncf %378 : vector<16x128xf32> to vector<16x128xbf16>
    %380 = tpu.concatenate %336, %342, %348, %354, %355, %361, %367, %373, %379 in 0 : vector<16x128xbf16>, vector<16x128xbf16>, vector<16x128xbf16>, vector<16x128xbf16>, vector<16x128xbf16>, vector<16x128xbf16>, vector<16x128xbf16>, vector<16x128xbf16>, vector<16x128xbf16> -> vector<144x128xbf16>
    %c0_280 = arith.constant 0 : index
    %c0_281 = arith.constant 0 : index
    %381 = vector.load %arg23[%c0_280, %c0_281] : memref<16x144xbf16, #tpu.memory_space<vmem>>, vector<16x144xbf16>
    %cst_282 = arith.constant dense<0.000000e+00> : vector<16x128xf32>
    %382 = tpu.matmul %381, %380, %cst_282 {dimension_numbers = #tpu.dot_dimension_numbers<[1], [0], [0], [1], [0, 0, 1, 1], [], []>} : vector<16x144xbf16>, vector<144x128xbf16>, vector<16x128xf32> -> vector<16x128xf32>
    %c0_283 = arith.constant 0 : index
    %c0_284 = arith.constant 0 : index
    %383 = vector.load %arg24[%c0_283, %c0_284] : memref<16x1xf32, #tpu.memory_space<vmem>>, vector<16x1xf32>
    %384 = vector.broadcast %383 : vector<16x1xf32> to vector<16x128xf32>
    %385 = arith.addf %382, %384 : vector<16x128xf32>
    %cst_285 = arith.constant 0.000000e+00 : f32
    %386 = vector.broadcast %cst_285 : f32 to vector<16x128xf32>
    %387 = arith.maximumf %385, %386 : vector<16x128xf32>
    %388 = tpu.concatenate %387, %322 in 0 : vector<16x128xf32>, vector<16x128xf32> -> vector<32x128xf32>
    %389 = arith.truncf %388 : vector<32x128xf32> to vector<32x128xbf16>
    %c0_286 = arith.constant 0 : index
    %c0_287 = arith.constant 0 : index
    %390 = vector.load %arg25[%c0_286, %c0_287] : memref<64x32xbf16, #tpu.memory_space<vmem>>, vector<64x32xbf16>
    %cst_288 = arith.constant dense<0.000000e+00> : vector<64x128xf32>
    %391 = tpu.matmul %390, %389, %cst_288 {dimension_numbers = #tpu.dot_dimension_numbers<[1], [0], [0], [1], [0, 0, 1, 1], [], []>} : vector<64x32xbf16>, vector<32x128xbf16>, vector<64x128xf32> -> vector<64x128xf32>
    %c0_289 = arith.constant 0 : index
    %c0_290 = arith.constant 0 : index
    %392 = vector.load %arg26[%c0_289, %c0_290] : memref<64x1xf32, #tpu.memory_space<vmem>>, vector<64x1xf32>
    %393 = vector.broadcast %392 : vector<64x1xf32> to vector<64x128xf32>
    %394 = arith.addf %391, %393 : vector<64x128xf32>
    %c0_291 = arith.constant 0 : index
    %c0_292 = arith.constant 0 : index
    %395 = vector.load %arg54[%c0_291, %c0_292] : memref<256x128xf32, #tpu.memory_space<vmem>>, vector<64x128xf32>
    tpu.vector_store %arg54[%c0_291, %c0_292], %394 {strides = array<i32>} : memref<256x128xf32, #tpu.memory_space<vmem>>, vector<64x128xf32>,
    %c0_293 = arith.constant 0 : index
    %c0_294 = arith.constant 0 : index
    %396 = vector.load %arg54[%c0_293, %c0_294] : memref<256x128xf32, #tpu.memory_space<vmem>>, vector<64x128xf32>
    %c0_295 = arith.constant 0 : index
    %c0_296 = arith.constant 0 : index
    %397 = vector.load %arg27[%c0_295, %c0_296] : memref<64x1xf32, #tpu.memory_space<vmem>>, vector<64x1xf32>
    %398 = vector.broadcast %397 : vector<64x1xf32> to vector<64x128xf32>
    %399 = arith.mulf %396, %398 : vector<64x128xf32>
    %c0_297 = arith.constant 0 : index
    %c0_298 = arith.constant 0 : index
    %400 = vector.load %arg28[%c0_297, %c0_298] : memref<64x1xf32, #tpu.memory_space<vmem>>, vector<64x1xf32>
    %401 = vector.broadcast %400 : vector<64x1xf32> to vector<64x128xf32>
    %402 = arith.addf %399, %401 : vector<64x128xf32>
    %cst_299 = arith.constant 0.000000e+00 : f32
    %403 = vector.broadcast %cst_299 : f32 to vector<64x128xf32>
    %404 = arith.maximumf %402, %403 : vector<64x128xf32>
    %c0_300 = arith.constant 0 : index
    %c0_301 = arith.constant 0 : index
    %405 = vector.load %arg29[%c0_300, %c0_301] : memref<16x64xbf16, #tpu.memory_space<vmem>>, vector<16x64xbf16>
    %406 = arith.truncf %404 : vector<64x128xf32> to vector<64x128xbf16>
    %cst_302 = arith.constant dense<0.000000e+00> : vector<16x128xf32>
    %407 = tpu.matmul %405, %406, %cst_302 {dimension_numbers = #tpu.dot_dimension_numbers<[1], [0], [0], [1], [0, 0, 1, 1], [], []>} : vector<16x64xbf16>, vector<64x128xbf16>, vector<16x128xf32> -> vector<16x128xf32>
    %c0_303 = arith.constant 0 : index
    %c0_304 = arith.constant 0 : index
    %408 = vector.load %arg30[%c0_303, %c0_304] : memref<16x1xf32, #tpu.memory_space<vmem>>, vector<16x1xf32>
    %409 = vector.broadcast %408 : vector<16x1xf32> to vector<16x128xf32>
    %410 = arith.addf %407, %409 : vector<16x128xf32>
    %cst_305 = arith.constant 0.000000e+00 : f32
    %411 = vector.broadcast %cst_305 : f32 to vector<16x128xf32>
    %412 = arith.maximumf %410, %411 : vector<16x128xf32>
    %c9_i32_306 = arith.constant 9 : i32
    %413 = tpu.dynamic_rotate %412 by %c9_i32_306 dim 1 : vector<16x128xf32>, i32 -> vector<16x128xf32>
    %c0_307 = arith.constant 0 : index
    %c0_308 = arith.constant 0 : index
    %c0_309 = arith.constant 0 : index
    %414 = vector.load %arg1[%c0_307, %c0_308, %c0_309] : memref<9x1x128xf32, #tpu.memory_space<vmem>>, vector<1x1x128xf32>
    %415 = vector.shape_cast %414 : vector<1x1x128xf32> to vector<1x128xf32>
    %416 = vector.broadcast %415 : vector<1x128xf32> to vector<16x128xf32>
    %417 = arith.mulf %413, %416 : vector<16x128xf32>
    %418 = arith.truncf %417 : vector<16x128xf32> to vector<16x128xbf16>
    %c8_i32_310 = arith.constant 8 : i32
    %419 = tpu.dynamic_rotate %412 by %c8_i32_310 dim 1 : vector<16x128xf32>, i32 -> vector<16x128xf32>
    %c1_311 = arith.constant 1 : index
    %c0_312 = arith.constant 0 : index
    %c0_313 = arith.constant 0 : index
    %420 = vector.load %arg1[%c1_311, %c0_312, %c0_313] : memref<9x1x128xf32, #tpu.memory_space<vmem>>, vector<1x1x128xf32>
    %421 = vector.shape_cast %420 : vector<1x1x128xf32> to vector<1x128xf32>
    %422 = vector.broadcast %421 : vector<1x128xf32> to vector<16x128xf32>
    %423 = arith.mulf %419, %422 : vector<16x128xf32>
    %424 = arith.truncf %423 : vector<16x128xf32> to vector<16x128xbf16>
    %c7_i32_314 = arith.constant 7 : i32
    %425 = tpu.dynamic_rotate %412 by %c7_i32_314 dim 1 : vector<16x128xf32>, i32 -> vector<16x128xf32>
    %c2_315 = arith.constant 2 : index
    %c0_316 = arith.constant 0 : index
    %c0_317 = arith.constant 0 : index
    %426 = vector.load %arg1[%c2_315, %c0_316, %c0_317] : memref<9x1x128xf32, #tpu.memory_space<vmem>>, vector<1x1x128xf32>
    %427 = vector.shape_cast %426 : vector<1x1x128xf32> to vector<1x128xf32>
    %428 = vector.broadcast %427 : vector<1x128xf32> to vector<16x128xf32>
    %429 = arith.mulf %425, %428 : vector<16x128xf32>
    %430 = arith.truncf %429 : vector<16x128xf32> to vector<16x128xbf16>
    %c1_i32_318 = arith.constant 1 : i32
    %431 = tpu.dynamic_rotate %412 by %c1_i32_318 dim 1 : vector<16x128xf32>, i32 -> vector<16x128xf32>
    %c3_319 = arith.constant 3 : index
    %c0_320 = arith.constant 0 : index
    %c0_321 = arith.constant 0 : index
    %432 = vector.load %arg1[%c3_319, %c0_320, %c0_321] : memref<9x1x128xf32, #tpu.memory_space<vmem>>, vector<1x1x128xf32>
    %433 = vector.shape_cast %432 : vector<1x1x128xf32> to vector<1x128xf32>
    %434 = vector.broadcast %433 : vector<1x128xf32> to vector<16x128xf32>
    %435 = arith.mulf %431, %434 : vector<16x128xf32>
    %436 = arith.truncf %435 : vector<16x128xf32> to vector<16x128xbf16>
    %437 = arith.truncf %412 : vector<16x128xf32> to vector<16x128xbf16>
    %c127_i32_322 = arith.constant 127 : i32
    %438 = tpu.dynamic_rotate %412 by %c127_i32_322 dim 1 : vector<16x128xf32>, i32 -> vector<16x128xf32>
    %c5_323 = arith.constant 5 : index
    %c0_324 = arith.constant 0 : index
    %c0_325 = arith.constant 0 : index
    %439 = vector.load %arg1[%c5_323, %c0_324, %c0_325] : memref<9x1x128xf32, #tpu.memory_space<vmem>>, vector<1x1x128xf32>
    %440 = vector.shape_cast %439 : vector<1x1x128xf32> to vector<1x128xf32>
    %441 = vector.broadcast %440 : vector<1x128xf32> to vector<16x128xf32>
    %442 = arith.mulf %438, %441 : vector<16x128xf32>
    %443 = arith.truncf %442 : vector<16x128xf32> to vector<16x128xbf16>
    %c121_i32_326 = arith.constant 121 : i32
    %444 = tpu.dynamic_rotate %412 by %c121_i32_326 dim 1 : vector<16x128xf32>, i32 -> vector<16x128xf32>
    %c6_327 = arith.constant 6 : index
    %c0_328 = arith.constant 0 : index
    %c0_329 = arith.constant 0 : index
    %445 = vector.load %arg1[%c6_327, %c0_328, %c0_329] : memref<9x1x128xf32, #tpu.memory_space<vmem>>, vector<1x1x128xf32>
    %446 = vector.shape_cast %445 : vector<1x1x128xf32> to vector<1x128xf32>
    %447 = vector.broadcast %446 : vector<1x128xf32> to vector<16x128xf32>
    %448 = arith.mulf %444, %447 : vector<16x128xf32>
    %449 = arith.truncf %448 : vector<16x128xf32> to vector<16x128xbf16>
    %c120_i32_330 = arith.constant 120 : i32
    %450 = tpu.dynamic_rotate %412 by %c120_i32_330 dim 1 : vector<16x128xf32>, i32 -> vector<16x128xf32>
    %c7_331 = arith.constant 7 : index
    %c0_332 = arith.constant 0 : index
    %c0_333 = arith.constant 0 : index
    %451 = vector.load %arg1[%c7_331, %c0_332, %c0_333] : memref<9x1x128xf32, #tpu.memory_space<vmem>>, vector<1x1x128xf32>
    %452 = vector.shape_cast %451 : vector<1x1x128xf32> to vector<1x128xf32>
    %453 = vector.broadcast %452 : vector<1x128xf32> to vector<16x128xf32>
    %454 = arith.mulf %450, %453 : vector<16x128xf32>
    %455 = arith.truncf %454 : vector<16x128xf32> to vector<16x128xbf16>
    %c119_i32_334 = arith.constant 119 : i32
    %456 = tpu.dynamic_rotate %412 by %c119_i32_334 dim 1 : vector<16x128xf32>, i32 -> vector<16x128xf32>
    %c8_335 = arith.constant 8 : index
    %c0_336 = arith.constant 0 : index
    %c0_337 = arith.constant 0 : index
    %457 = vector.load %arg1[%c8_335, %c0_336, %c0_337] : memref<9x1x128xf32, #tpu.memory_space<vmem>>, vector<1x1x128xf32>
    %458 = vector.shape_cast %457 : vector<1x1x128xf32> to vector<1x128xf32>
    %459 = vector.broadcast %458 : vector<1x128xf32> to vector<16x128xf32>
    %460 = arith.mulf %456, %459 : vector<16x128xf32>
    %461 = arith.truncf %460 : vector<16x128xf32> to vector<16x128xbf16>
    %462 = tpu.concatenate %418, %424, %430, %436, %437, %443, %449, %455, %461 in 0 : vector<16x128xbf16>, vector<16x128xbf16>, vector<16x128xbf16>, vector<16x128xbf16>, vector<16x128xbf16>, vector<16x128xbf16>, vector<16x128xbf16>, vector<16x128xbf16>, vector<16x128xbf16> -> vector<144x128xbf16>
    %c0_338 = arith.constant 0 : index
    %c0_339 = arith.constant 0 : index
    %463 = vector.load %arg31[%c0_338, %c0_339] : memref<16x144xbf16, #tpu.memory_space<vmem>>, vector<16x144xbf16>
    %cst_340 = arith.constant dense<0.000000e+00> : vector<16x128xf32>
    %464 = tpu.matmul %463, %462, %cst_340 {dimension_numbers = #tpu.dot_dimension_numbers<[1], [0], [0], [1], [0, 0, 1, 1], [], []>} : vector<16x144xbf16>, vector<144x128xbf16>, vector<16x128xf32> -> vector<16x128xf32>
    %c0_341 = arith.constant 0 : index
    %c0_342 = arith.constant 0 : index
    %465 = vector.load %arg32[%c0_341, %c0_342] : memref<16x1xf32, #tpu.memory_space<vmem>>, vector<16x1xf32>
    %466 = vector.broadcast %465 : vector<16x1xf32> to vector<16x128xf32>
    %467 = arith.addf %464, %466 : vector<16x128xf32>
    %cst_343 = arith.constant 0.000000e+00 : f32
    %468 = vector.broadcast %cst_343 : f32 to vector<16x128xf32>
    %469 = arith.maximumf %467, %468 : vector<16x128xf32>
    %c0_344 = arith.constant 0 : index
    %c0_345 = arith.constant 0 : index
    %470 = vector.load %arg33[%c0_344, %c0_345] : memref<64x16xbf16, #tpu.memory_space<vmem>>, vector<64x16xbf16>
    %471 = arith.truncf %469 : vector<16x128xf32> to vector<16x128xbf16>
    %cst_346 = arith.constant dense<0.000000e+00> : vector<64x128xf32>
    %472 = tpu.matmul %470, %471, %cst_346 {dimension_numbers = #tpu.dot_dimension_numbers<[1], [0], [0], [1], [0, 0, 1, 1], [], []>} : vector<64x16xbf16>, vector<16x128xbf16>, vector<64x128xf32> -> vector<64x128xf32>
    %c0_347 = arith.constant 0 : index
    %c0_348 = arith.constant 0 : index
    %473 = vector.load %arg34[%c0_347, %c0_348] : memref<64x1xf32, #tpu.memory_space<vmem>>, vector<64x1xf32>
    %474 = vector.broadcast %473 : vector<64x1xf32> to vector<64x128xf32>
    %475 = arith.addf %472, %474 : vector<64x128xf32>
    %c0_349 = arith.constant 0 : index
    %c0_350 = arith.constant 0 : index
    %476 = vector.load %arg54[%c0_349, %c0_350] : memref<256x128xf32, #tpu.memory_space<vmem>>, vector<64x128xf32>
    %477 = arith.addf %476, %475 : vector<64x128xf32>
    %c0_351 = arith.constant 0 : index
    %c0_352 = arith.constant 0 : index
    %478 = vector.load %arg54[%c0_351, %c0_352] : memref<256x128xf32, #tpu.memory_space<vmem>>, vector<64x128xf32>
    tpu.vector_store %arg54[%c0_351, %c0_352], %477 {strides = array<i32>} : memref<256x128xf32, #tpu.memory_space<vmem>>, vector<64x128xf32>,
    %c0_353 = arith.constant 0 : index
    %c0_354 = arith.constant 0 : index
    %479 = vector.load %arg54[%c0_353, %c0_354] : memref<256x128xf32, #tpu.memory_space<vmem>>, vector<64x128xf32>
    %c0_355 = arith.constant 0 : index
    %c0_356 = arith.constant 0 : index
    %480 = vector.load %arg35[%c0_355, %c0_356] : memref<64x64xbf16, #tpu.memory_space<vmem>>, vector<64x64xbf16>
    %481 = arith.truncf %479 : vector<64x128xf32> to vector<64x128xbf16>
    %cst_357 = arith.constant dense<0.000000e+00> : vector<64x128xf32>
    %482 = tpu.matmul %480, %481, %cst_357 {dimension_numbers = #tpu.dot_dimension_numbers<[1], [0], [0], [1], [0, 0, 1, 1], [], []>} : vector<64x64xbf16>, vector<64x128xbf16>, vector<64x128xf32> -> vector<64x128xf32>
    %c0_358 = arith.constant 0 : index
    %c0_359 = arith.constant 0 : index
    %483 = vector.load %arg36[%c0_358, %c0_359] : memref<64x1xf32, #tpu.memory_space<vmem>>, vector<64x1xf32>
    %484 = vector.broadcast %483 : vector<64x1xf32> to vector<64x128xf32>
    %485 = arith.addf %482, %484 : vector<64x128xf32>
    %cst_360 = arith.constant 0.000000e+00 : f32
    %486 = vector.broadcast %cst_360 : f32 to vector<64x128xf32>
    %487 = arith.maximumf %485, %486 : vector<64x128xf32>
    %c9_i32_361 = arith.constant 9 : i32
    %488 = tpu.dynamic_rotate %487 by %c9_i32_361 dim 1 : vector<64x128xf32>, i32 -> vector<64x128xf32>
    %c0_362 = arith.constant 0 : index
    %c0_363 = arith.constant 0 : index
    %c0_364 = arith.constant 0 : index
    %489 = vector.load %arg1[%c0_362, %c0_363, %c0_364] : memref<9x1x128xf32, #tpu.memory_space<vmem>>, vector<1x1x128xf32>
    %490 = vector.shape_cast %489 : vector<1x1x128xf32> to vector<1x128xf32>
    %491 = vector.broadcast %490 : vector<1x128xf32> to vector<64x128xf32>
    %492 = arith.mulf %488, %491 : vector<64x128xf32>
    %493 = arith.truncf %492 : vector<64x128xf32> to vector<64x128xbf16>
    %c8_i32_365 = arith.constant 8 : i32
    %494 = tpu.dynamic_rotate %487 by %c8_i32_365 dim 1 : vector<64x128xf32>, i32 -> vector<64x128xf32>
    %c1_366 = arith.constant 1 : index
    %c0_367 = arith.constant 0 : index
    %c0_368 = arith.constant 0 : index
    %495 = vector.load %arg1[%c1_366, %c0_367, %c0_368] : memref<9x1x128xf32, #tpu.memory_space<vmem>>, vector<1x1x128xf32>
    %496 = vector.shape_cast %495 : vector<1x1x128xf32> to vector<1x128xf32>
    %497 = vector.broadcast %496 : vector<1x128xf32> to vector<64x128xf32>
    %498 = arith.mulf %494, %497 : vector<64x128xf32>
    %499 = arith.truncf %498 : vector<64x128xf32> to vector<64x128xbf16>
    %c7_i32_369 = arith.constant 7 : i32
    %500 = tpu.dynamic_rotate %487 by %c7_i32_369 dim 1 : vector<64x128xf32>, i32 -> vector<64x128xf32>
    %c2_370 = arith.constant 2 : index
    %c0_371 = arith.constant 0 : index
    %c0_372 = arith.constant 0 : index
    %501 = vector.load %arg1[%c2_370, %c0_371, %c0_372] : memref<9x1x128xf32, #tpu.memory_space<vmem>>, vector<1x1x128xf32>
    %502 = vector.shape_cast %501 : vector<1x1x128xf32> to vector<1x128xf32>
    %503 = vector.broadcast %502 : vector<1x128xf32> to vector<64x128xf32>
    %504 = arith.mulf %500, %503 : vector<64x128xf32>
    %505 = arith.truncf %504 : vector<64x128xf32> to vector<64x128xbf16>
    %c1_i32_373 = arith.constant 1 : i32
    %506 = tpu.dynamic_rotate %487 by %c1_i32_373 dim 1 : vector<64x128xf32>, i32 -> vector<64x128xf32>
    %c3_374 = arith.constant 3 : index
    %c0_375 = arith.constant 0 : index
    %c0_376 = arith.constant 0 : index
    %507 = vector.load %arg1[%c3_374, %c0_375, %c0_376] : memref<9x1x128xf32, #tpu.memory_space<vmem>>, vector<1x1x128xf32>
    %508 = vector.shape_cast %507 : vector<1x1x128xf32> to vector<1x128xf32>
    %509 = vector.broadcast %508 : vector<1x128xf32> to vector<64x128xf32>
    %510 = arith.mulf %506, %509 : vector<64x128xf32>
    %511 = arith.truncf %510 : vector<64x128xf32> to vector<64x128xbf16>
    %512 = arith.truncf %487 : vector<64x128xf32> to vector<64x128xbf16>
    %c127_i32_377 = arith.constant 127 : i32
    %513 = tpu.dynamic_rotate %487 by %c127_i32_377 dim 1 : vector<64x128xf32>, i32 -> vector<64x128xf32>
    %c5_378 = arith.constant 5 : index
    %c0_379 = arith.constant 0 : index
    %c0_380 = arith.constant 0 : index
    %514 = vector.load %arg1[%c5_378, %c0_379, %c0_380] : memref<9x1x128xf32, #tpu.memory_space<vmem>>, vector<1x1x128xf32>
    %515 = vector.shape_cast %514 : vector<1x1x128xf32> to vector<1x128xf32>
    %516 = vector.broadcast %515 : vector<1x128xf32> to vector<64x128xf32>
    %517 = arith.mulf %513, %516 : vector<64x128xf32>
    %518 = arith.truncf %517 : vector<64x128xf32> to vector<64x128xbf16>
    %c121_i32_381 = arith.constant 121 : i32
    %519 = tpu.dynamic_rotate %487 by %c121_i32_381 dim 1 : vector<64x128xf32>, i32 -> vector<64x128xf32>
    %c6_382 = arith.constant 6 : index
    %c0_383 = arith.constant 0 : index
    %c0_384 = arith.constant 0 : index
    %520 = vector.load %arg1[%c6_382, %c0_383, %c0_384] : memref<9x1x128xf32, #tpu.memory_space<vmem>>, vector<1x1x128xf32>
    %521 = vector.shape_cast %520 : vector<1x1x128xf32> to vector<1x128xf32>
    %522 = vector.broadcast %521 : vector<1x128xf32> to vector<64x128xf32>
    %523 = arith.mulf %519, %522 : vector<64x128xf32>
    %524 = arith.truncf %523 : vector<64x128xf32> to vector<64x128xbf16>
    %c120_i32_385 = arith.constant 120 : i32
    %525 = tpu.dynamic_rotate %487 by %c120_i32_385 dim 1 : vector<64x128xf32>, i32 -> vector<64x128xf32>
    %c7_386 = arith.constant 7 : index
    %c0_387 = arith.constant 0 : index
    %c0_388 = arith.constant 0 : index
    %526 = vector.load %arg1[%c7_386, %c0_387, %c0_388] : memref<9x1x128xf32, #tpu.memory_space<vmem>>, vector<1x1x128xf32>
    %527 = vector.shape_cast %526 : vector<1x1x128xf32> to vector<1x128xf32>
    %528 = vector.broadcast %527 : vector<1x128xf32> to vector<64x128xf32>
    %529 = arith.mulf %525, %528 : vector<64x128xf32>
    %530 = arith.truncf %529 : vector<64x128xf32> to vector<64x128xbf16>
    %c119_i32_389 = arith.constant 119 : i32
    %531 = tpu.dynamic_rotate %487 by %c119_i32_389 dim 1 : vector<64x128xf32>, i32 -> vector<64x128xf32>
    %c8_390 = arith.constant 8 : index
    %c0_391 = arith.constant 0 : index
    %c0_392 = arith.constant 0 : index
    %532 = vector.load %arg1[%c8_390, %c0_391, %c0_392] : memref<9x1x128xf32, #tpu.memory_space<vmem>>, vector<1x1x128xf32>
    %533 = vector.shape_cast %532 : vector<1x1x128xf32> to vector<1x128xf32>
    %534 = vector.broadcast %533 : vector<1x128xf32> to vector<64x128xf32>
    %535 = arith.mulf %531, %534 : vector<64x128xf32>
    %536 = arith.truncf %535 : vector<64x128xf32> to vector<64x128xbf16>
    %537 = tpu.concatenate %493, %499, %505, %511, %512, %518, %524, %530, %536 in 0 : vector<64x128xbf16>, vector<64x128xbf16>, vector<64x128xbf16>, vector<64x128xbf16>, vector<64x128xbf16>, vector<64x128xbf16>, vector<64x128xbf16>, vector<64x128xbf16>, vector<64x128xbf16> -> vector<576x128xbf16>
    %c0_393 = arith.constant 0 : index
    %c0_394 = arith.constant 0 : index
    %538 = vector.load %arg37[%c0_393, %c0_394] : memref<64x576xbf16, #tpu.memory_space<vmem>>, vector<64x576xbf16>
    %cst_395 = arith.constant dense<0.000000e+00> : vector<64x128xf32>
    %539 = tpu.matmul %538, %537, %cst_395 {dimension_numbers = #tpu.dot_dimension_numbers<[1], [0], [0], [1], [0, 0, 1, 1], [], []>} : vector<64x576xbf16>, vector<576x128xbf16>, vector<64x128xf32> -> vector<64x128xf32>
    %c0_396 = arith.constant 0 : index
    %c0_397 = arith.constant 0 : index
    %540 = vector.load %arg38[%c0_396, %c0_397] : memref<64x1xf32, #tpu.memory_space<vmem>>, vector<64x1xf32>
    %541 = vector.broadcast %540 : vector<64x1xf32> to vector<64x128xf32>
    %542 = arith.addf %539, %541 : vector<64x128xf32>
    %cst_398 = arith.constant 0.000000e+00 : f32
    %543 = vector.broadcast %cst_398 : f32 to vector<64x128xf32>
    %544 = arith.maximumf %542, %543 : vector<64x128xf32>
    %545 = tpu.concatenate %544, %479 in 0 : vector<64x128xf32>, vector<64x128xf32> -> vector<128x128xf32>
    %546 = arith.truncf %545 : vector<128x128xf32> to vector<128x128xbf16>
    %c0_399 = arith.constant 0 : index
    %c0_400 = arith.constant 0 : index
    %547 = vector.load %arg39[%c0_399, %c0_400] : memref<256x128xbf16, #tpu.memory_space<vmem>>, vector<256x128xbf16>
    %cst_401 = arith.constant dense<0.000000e+00> : vector<256x128xf32>
    %548 = tpu.matmul %547, %546, %cst_401 {dimension_numbers = #tpu.dot_dimension_numbers<[1], [0], [0], [1], [0, 0, 1, 1], [], []>} : vector<256x128xbf16>, vector<128x128xbf16>, vector<256x128xf32> -> vector<256x128xf32>
    %c0_402 = arith.constant 0 : index
    %c0_403 = arith.constant 0 : index
    %549 = vector.load %arg40[%c0_402, %c0_403] : memref<256x1xf32, #tpu.memory_space<vmem>>, vector<256x1xf32>
    %550 = vector.broadcast %549 : vector<256x1xf32> to vector<256x128xf32>
    %551 = arith.addf %548, %550 : vector<256x128xf32>
    %c0_404 = arith.constant 0 : index
    %c0_405 = arith.constant 0 : index
    %552 = vector.load %arg54[%c0_404, %c0_405] : memref<256x128xf32, #tpu.memory_space<vmem>>, vector<256x128xf32>
    tpu.vector_store %arg54[%c0_404, %c0_405], %551 {strides = array<i32>} : memref<256x128xf32, #tpu.memory_space<vmem>>, vector<256x128xf32>,
    %c0_406 = arith.constant 0 : index
    %c0_407 = arith.constant 0 : index
    %553 = vector.load %arg54[%c0_406, %c0_407] : memref<256x128xf32, #tpu.memory_space<vmem>>, vector<256x128xf32>
    %c0_408 = arith.constant 0 : index
    %c0_409 = arith.constant 0 : index
    %554 = vector.load %arg41[%c0_408, %c0_409] : memref<256x1xf32, #tpu.memory_space<vmem>>, vector<256x1xf32>
    %555 = vector.broadcast %554 : vector<256x1xf32> to vector<256x128xf32>
    %556 = arith.mulf %553, %555 : vector<256x128xf32>
    %c0_410 = arith.constant 0 : index
    %c0_411 = arith.constant 0 : index
    %557 = vector.load %arg42[%c0_410, %c0_411] : memref<256x1xf32, #tpu.memory_space<vmem>>, vector<256x1xf32>
    %558 = vector.broadcast %557 : vector<256x1xf32> to vector<256x128xf32>
    %559 = arith.addf %556, %558 : vector<256x128xf32>
    %cst_412 = arith.constant 0.000000e+00 : f32
    %560 = vector.broadcast %cst_412 : f32 to vector<256x128xf32>
    %561 = arith.maximumf %559, %560 : vector<256x128xf32>
    %c0_413 = arith.constant 0 : index
    %c0_414 = arith.constant 0 : index
    %562 = vector.load %arg43[%c0_413, %c0_414] : memref<64x256xbf16, #tpu.memory_space<vmem>>, vector<64x256xbf16>
    %563 = arith.truncf %561 : vector<256x128xf32> to vector<256x128xbf16>
    %cst_415 = arith.constant dense<0.000000e+00> : vector<64x128xf32>
    %564 = tpu.matmul %562, %563, %cst_415 {dimension_numbers = #tpu.dot_dimension_numbers<[1], [0], [0], [1], [0, 0, 1, 1], [], []>} : vector<64x256xbf16>, vector<256x128xbf16>, vector<64x128xf32> -> vector<64x128xf32>
    %c0_416 = arith.constant 0 : index
    %c0_417 = arith.constant 0 : index
    %565 = vector.load %arg44[%c0_416, %c0_417] : memref<64x1xf32, #tpu.memory_space<vmem>>, vector<64x1xf32>
    %566 = vector.broadcast %565 : vector<64x1xf32> to vector<64x128xf32>
    %567 = arith.addf %564, %566 : vector<64x128xf32>
    %cst_418 = arith.constant 0.000000e+00 : f32
    %568 = vector.broadcast %cst_418 : f32 to vector<64x128xf32>
    %569 = arith.maximumf %567, %568 : vector<64x128xf32>
    %c9_i32_419 = arith.constant 9 : i32
    %570 = tpu.dynamic_rotate %569 by %c9_i32_419 dim 1 : vector<64x128xf32>, i32 -> vector<64x128xf32>
    %c0_420 = arith.constant 0 : index
    %c0_421 = arith.constant 0 : index
    %c0_422 = arith.constant 0 : index
    %571 = vector.load %arg1[%c0_420, %c0_421, %c0_422] : memref<9x1x128xf32, #tpu.memory_space<vmem>>, vector<1x1x128xf32>
    %572 = vector.shape_cast %571 : vector<1x1x128xf32> to vector<1x128xf32>
    %573 = vector.broadcast %572 : vector<1x128xf32> to vector<64x128xf32>
    %574 = arith.mulf %570, %573 : vector<64x128xf32>
    %575 = arith.truncf %574 : vector<64x128xf32> to vector<64x128xbf16>
    %c8_i32_423 = arith.constant 8 : i32
    %576 = tpu.dynamic_rotate %569 by %c8_i32_423 dim 1 : vector<64x128xf32>, i32 -> vector<64x128xf32>
    %c1_424 = arith.constant 1 : index
    %c0_425 = arith.constant 0 : index
    %c0_426 = arith.constant 0 : index
    %577 = vector.load %arg1[%c1_424, %c0_425, %c0_426] : memref<9x1x128xf32, #tpu.memory_space<vmem>>, vector<1x1x128xf32>
    %578 = vector.shape_cast %577 : vector<1x1x128xf32> to vector<1x128xf32>
    %579 = vector.broadcast %578 : vector<1x128xf32> to vector<64x128xf32>
    %580 = arith.mulf %576, %579 : vector<64x128xf32>
    %581 = arith.truncf %580 : vector<64x128xf32> to vector<64x128xbf16>
    %c7_i32_427 = arith.constant 7 : i32
    %582 = tpu.dynamic_rotate %569 by %c7_i32_427 dim 1 : vector<64x128xf32>, i32 -> vector<64x128xf32>
    %c2_428 = arith.constant 2 : index
    %c0_429 = arith.constant 0 : index
    %c0_430 = arith.constant 0 : index
    %583 = vector.load %arg1[%c2_428, %c0_429, %c0_430] : memref<9x1x128xf32, #tpu.memory_space<vmem>>, vector<1x1x128xf32>
    %584 = vector.shape_cast %583 : vector<1x1x128xf32> to vector<1x128xf32>
    %585 = vector.broadcast %584 : vector<1x128xf32> to vector<64x128xf32>
    %586 = arith.mulf %582, %585 : vector<64x128xf32>
    %587 = arith.truncf %586 : vector<64x128xf32> to vector<64x128xbf16>
    %c1_i32_431 = arith.constant 1 : i32
    %588 = tpu.dynamic_rotate %569 by %c1_i32_431 dim 1 : vector<64x128xf32>, i32 -> vector<64x128xf32>
    %c3_432 = arith.constant 3 : index
    %c0_433 = arith.constant 0 : index
    %c0_434 = arith.constant 0 : index
    %589 = vector.load %arg1[%c3_432, %c0_433, %c0_434] : memref<9x1x128xf32, #tpu.memory_space<vmem>>, vector<1x1x128xf32>
    %590 = vector.shape_cast %589 : vector<1x1x128xf32> to vector<1x128xf32>
    %591 = vector.broadcast %590 : vector<1x128xf32> to vector<64x128xf32>
    %592 = arith.mulf %588, %591 : vector<64x128xf32>
    %593 = arith.truncf %592 : vector<64x128xf32> to vector<64x128xbf16>
    %594 = arith.truncf %569 : vector<64x128xf32> to vector<64x128xbf16>
    %c127_i32_435 = arith.constant 127 : i32
    %595 = tpu.dynamic_rotate %569 by %c127_i32_435 dim 1 : vector<64x128xf32>, i32 -> vector<64x128xf32>
    %c5_436 = arith.constant 5 : index
    %c0_437 = arith.constant 0 : index
    %c0_438 = arith.constant 0 : index
    %596 = vector.load %arg1[%c5_436, %c0_437, %c0_438] : memref<9x1x128xf32, #tpu.memory_space<vmem>>, vector<1x1x128xf32>
    %597 = vector.shape_cast %596 : vector<1x1x128xf32> to vector<1x128xf32>
    %598 = vector.broadcast %597 : vector<1x128xf32> to vector<64x128xf32>
    %599 = arith.mulf %595, %598 : vector<64x128xf32>
    %600 = arith.truncf %599 : vector<64x128xf32> to vector<64x128xbf16>
    %c121_i32_439 = arith.constant 121 : i32
    %601 = tpu.dynamic_rotate %569 by %c121_i32_439 dim 1 : vector<64x128xf32>, i32 -> vector<64x128xf32>
    %c6_440 = arith.constant 6 : index
    %c0_441 = arith.constant 0 : index
    %c0_442 = arith.constant 0 : index
    %602 = vector.load %arg1[%c6_440, %c0_441, %c0_442] : memref<9x1x128xf32, #tpu.memory_space<vmem>>, vector<1x1x128xf32>
    %603 = vector.shape_cast %602 : vector<1x1x128xf32> to vector<1x128xf32>
    %604 = vector.broadcast %603 : vector<1x128xf32> to vector<64x128xf32>
    %605 = arith.mulf %601, %604 : vector<64x128xf32>
    %606 = arith.truncf %605 : vector<64x128xf32> to vector<64x128xbf16>
    %c120_i32_443 = arith.constant 120 : i32
    %607 = tpu.dynamic_rotate %569 by %c120_i32_443 dim 1 : vector<64x128xf32>, i32 -> vector<64x128xf32>
    %c7_444 = arith.constant 7 : index
    %c0_445 = arith.constant 0 : index
    %c0_446 = arith.constant 0 : index
    %608 = vector.load %arg1[%c7_444, %c0_445, %c0_446] : memref<9x1x128xf32, #tpu.memory_space<vmem>>, vector<1x1x128xf32>
    %609 = vector.shape_cast %608 : vector<1x1x128xf32> to vector<1x128xf32>
    %610 = vector.broadcast %609 : vector<1x128xf32> to vector<64x128xf32>
    %611 = arith.mulf %607, %610 : vector<64x128xf32>
    %612 = arith.truncf %611 : vector<64x128xf32> to vector<64x128xbf16>
    %c119_i32_447 = arith.constant 119 : i32
    %613 = tpu.dynamic_rotate %569 by %c119_i32_447 dim 1 : vector<64x128xf32>, i32 -> vector<64x128xf32>
    %c8_448 = arith.constant 8 : index
    %c0_449 = arith.constant 0 : index
    %c0_450 = arith.constant 0 : index
    %614 = vector.load %arg1[%c8_448, %c0_449, %c0_450] : memref<9x1x128xf32, #tpu.memory_space<vmem>>, vector<1x1x128xf32>
    %615 = vector.shape_cast %614 : vector<1x1x128xf32> to vector<1x128xf32>
    %616 = vector.broadcast %615 : vector<1x128xf32> to vector<64x128xf32>
    %617 = arith.mulf %613, %616 : vector<64x128xf32>
    %618 = arith.truncf %617 : vector<64x128xf32> to vector<64x128xbf16>
    %619 = tpu.concatenate %575, %581, %587, %593, %594, %600, %606, %612, %618 in 0 : vector<64x128xbf16>, vector<64x128xbf16>, vector<64x128xbf16>, vector<64x128xbf16>, vector<64x128xbf16>, vector<64x128xbf16>, vector<64x128xbf16>, vector<64x128xbf16>, vector<64x128xbf16> -> vector<576x128xbf16>
    %c0_451 = arith.constant 0 : index
    %c0_452 = arith.constant 0 : index
    %620 = vector.load %arg45[%c0_451, %c0_452] : memref<64x576xbf16, #tpu.memory_space<vmem>>, vector<64x576xbf16>
    %cst_453 = arith.constant dense<0.000000e+00> : vector<64x128xf32>
    %621 = tpu.matmul %620, %619, %cst_453 {dimension_numbers = #tpu.dot_dimension_numbers<[1], [0], [0], [1], [0, 0, 1, 1], [], []>} : vector<64x576xbf16>, vector<576x128xbf16>, vector<64x128xf32> -> vector<64x128xf32>
    %c0_454 = arith.constant 0 : index
    %c0_455 = arith.constant 0 : index
    %622 = vector.load %arg46[%c0_454, %c0_455] : memref<64x1xf32, #tpu.memory_space<vmem>>, vector<64x1xf32>
    %623 = vector.broadcast %622 : vector<64x1xf32> to vector<64x128xf32>
    %624 = arith.addf %621, %623 : vector<64x128xf32>
    %cst_456 = arith.constant 0.000000e+00 : f32
    %625 = vector.broadcast %cst_456 : f32 to vector<64x128xf32>
    %626 = arith.maximumf %624, %625 : vector<64x128xf32>
    %c0_457 = arith.constant 0 : index
    %c0_458 = arith.constant 0 : index
    %627 = vector.load %arg47[%c0_457, %c0_458] : memref<256x64xbf16, #tpu.memory_space<vmem>>, vector<256x64xbf16>
    %628 = arith.truncf %626 : vector<64x128xf32> to vector<64x128xbf16>
    %cst_459 = arith.constant dense<0.000000e+00> : vector<256x128xf32>
    %629 = tpu.matmul %627, %628, %cst_459 {dimension_numbers = #tpu.dot_dimension_numbers<[1], [0], [0], [1], [0, 0, 1, 1], [], []>} : vector<256x64xbf16>, vector<64x128xbf16>, vector<256x128xf32> -> vector<256x128xf32>
    %c0_460 = arith.constant 0 : index
    %c0_461 = arith.constant 0 : index
    %630 = vector.load %arg48[%c0_460, %c0_461] : memref<256x1xf32, #tpu.memory_space<vmem>>, vector<256x1xf32>
    %631 = vector.broadcast %630 : vector<256x1xf32> to vector<256x128xf32>
    %632 = arith.addf %629, %631 : vector<256x128xf32>
    %c0_462 = arith.constant 0 : index
    %c0_463 = arith.constant 0 : index
    %633 = vector.load %arg54[%c0_462, %c0_463] : memref<256x128xf32, #tpu.memory_space<vmem>>, vector<256x128xf32>
    %634 = arith.addf %633, %632 : vector<256x128xf32>
    %c0_464 = arith.constant 0 : index
    %c0_465 = arith.constant 0 : index
    %635 = vector.load %arg54[%c0_464, %c0_465] : memref<256x128xf32, #tpu.memory_space<vmem>>, vector<256x128xf32>
    tpu.vector_store %arg54[%c0_464, %c0_465], %634 {strides = array<i32>} : memref<256x128xf32, #tpu.memory_space<vmem>>, vector<256x128xf32>,
    %c0_466 = arith.constant 0 : index
    %c0_467 = arith.constant 0 : index
    %636 = vector.load %arg54[%c0_466, %c0_467] : memref<256x128xf32, #tpu.memory_space<vmem>>, vector<256x128xf32>
    %c0_468 = arith.constant 0 : index
    %c0_469 = arith.constant 0 : index
    %637 = vector.load %arg49[%c0_468, %c0_469] : memref<256x1xf32, #tpu.memory_space<vmem>>, vector<256x1xf32>
    %638 = vector.broadcast %637 : vector<256x1xf32> to vector<256x128xf32>
    %639 = arith.mulf %636, %638 : vector<256x128xf32>
    %c0_470 = arith.constant 0 : index
    %c0_471 = arith.constant 0 : index
    %640 = vector.load %arg50[%c0_470, %c0_471] : memref<256x1xf32, #tpu.memory_space<vmem>>, vector<256x1xf32>
    %641 = vector.broadcast %640 : vector<256x1xf32> to vector<256x128xf32>
    %642 = arith.addf %639, %641 : vector<256x128xf32>
    %cst_472 = arith.constant 0.000000e+00 : f32
    %643 = vector.broadcast %cst_472 : f32 to vector<256x128xf32>
    %644 = arith.maximumf %642, %643 : vector<256x128xf32>
    %c0_473 = arith.constant 0 : index
    %c0_474 = arith.constant 0 : index
    %645 = vector.load %arg51[%c0_473, %c0_474] : memref<10x256xbf16, #tpu.memory_space<vmem>>, vector<10x256xbf16>
    %646 = arith.truncf %644 : vector<256x128xf32> to vector<256x128xbf16>
    %cst_475 = arith.constant dense<0.000000e+00> : vector<10x128xf32>
    %647 = tpu.matmul %645, %646, %cst_475 {dimension_numbers = #tpu.dot_dimension_numbers<[1], [0], [0], [1], [0, 0, 1, 1], [], []>} : vector<10x256xbf16>, vector<256x128xbf16>, vector<10x128xf32> -> vector<10x128xf32>
    %c0_476 = arith.constant 0 : index
    %c0_477 = arith.constant 0 : index
    %648 = vector.load %arg2[%c0_476, %c0_477] : memref<128x2xf32, #tpu.memory_space<vmem>>, vector<128x2xf32>
    %cst_478 = arith.constant dense<0.000000e+00> : vector<10x2xf32>
    %649 = tpu.matmul %647, %648, %cst_478 {dimension_numbers = #tpu.dot_dimension_numbers<[1], [0], [0], [1], [0, 0, 1, 1], [], []>} : vector<10x128xf32>, vector<128x2xf32>, vector<10x2xf32> -> vector<10x2xf32>
    %c0_479 = arith.constant 0 : index
    %c0_480 = arith.constant 0 : index
    %650 = vector.load %arg52[%c0_479, %c0_480] : memref<10x1xf32, #tpu.memory_space<vmem>>, vector<10x1xf32>
    %651 = vector.broadcast %650 : vector<10x1xf32> to vector<10x2xf32>
    %652 = arith.addf %649, %651 : vector<10x2xf32>
    %c0_481 = arith.constant 0 : index
    %c0_482 = arith.constant 0 : index
    %653 = vector.load %arg53[%c0_481, %c0_482] : memref<10x2xf32, #tpu.memory_space<vmem>>, vector<10x2xf32>
    tpu.vector_store %arg53[%c0_481, %c0_482], %652 {strides = array<i32>} : memref<10x2xf32, #tpu.memory_space<vmem>>, vector<10x2xf32>,
    return
  }
}

</mosaic_0001>

<llo_original>
// kernel: forward.1
$region0: #{forward.1}
  #allocation0 [shape = 'u32[]', space=smem, size = 0x4, offset = 0x4, fixed_abs, tag = 'smem constant byte address 0x4 - core index']
  #allocation1 [shape = 'u32[144,128]{1,0:T(1,128)}', space=vmem, size = 0x12000, scoped, tag = 'internal scratch']
  #allocation2 [shape = 'f32[256,128]{1,0:T(8,128)}', space=vmem, size = 0x20000, scoped, tag = 'scratch operand']
  %s0 = inlined_call_operand.smem [shape: u32[54], index: -1, kind: input, shape index: {}]
  %s1 = sld [smem:[%s0]]
  %s2 = scalar_lea.smem %s0, 1
  %s3 = sld [smem:[%s2]]
  %s4 = scalar_lea.smem %s0, 2
  %s5 = sld [smem:[%s4]]
  %s6 = scalar_lea.smem %s0, 3
  %s7 = sld [smem:[%s6]]
  %s8 = scalar_lea.smem %s0, 4
  %s9 = sld [smem:[%s8]]
  %s10 = scalar_lea.smem %s0, 5
  %s11 = sld [smem:[%s10]]
  %s12 = scalar_lea.smem %s0, 6
  %s13 = sld [smem:[%s12]]
  %s14 = scalar_lea.smem %s0, 7
  %s15 = sld [smem:[%s14]]
  %s16 = scalar_lea.smem %s0, 8
  %s17 = sld [smem:[%s16]]
  %s18 = scalar_lea.smem %s0, 9
  %s19 = sld [smem:[%s18]]
  %s20 = scalar_lea.smem %s0, 10
  %s21 = sld [smem:[%s20]]
  %s22 = scalar_lea.smem %s0, 11
  %s23 = sld [smem:[%s22]]
  %s24 = scalar_lea.smem %s0, 12
  %s25 = sld [smem:[%s24]]
  %s26 = scalar_lea.smem %s0, 13
  %s27 = sld [smem:[%s26]]
  %s28 = scalar_lea.smem %s0, 14
  %s29 = sld [smem:[%s28]]
  %s30 = scalar_lea.smem %s0, 15
  %s31 = sld [smem:[%s30]]
  %s32 = scalar_lea.smem %s0, 16
  %s33 = sld [smem:[%s32]]
  %s34 = scalar_lea.smem %s0, 17
  %s35 = sld [smem:[%s34]]
  %s36 = scalar_lea.smem %s0, 18
  %s37 = sld [smem:[%s36]]
  %s38 = scalar_lea.smem %s0, 19
  %s39 = sld [smem:[%s38]]
  %s40 = scalar_lea.smem %s0, 20
  %s41 = sld [smem:[%s40]]
  %s42 = scalar_lea.smem %s0, 21
  %s43 = sld [smem:[%s42]]
  %s44 = scalar_lea.smem %s0, 22
  %s45 = sld [smem:[%s44]]
  %s46 = scalar_lea.smem %s0, 23
  %s47 = sld [smem:[%s46]]
  %s48 = scalar_lea.smem %s0, 24
  %s49 = sld [smem:[%s48]]
  %s50 = scalar_lea.smem %s0, 25
  %s51 = sld [smem:[%s50]]
  %s52 = scalar_lea.smem %s0, 26
  %s53 = sld [smem:[%s52]]
  %s54 = scalar_lea.smem %s0, 27
  %s55 = sld [smem:[%s54]]
  %s56 = scalar_lea.smem %s0, 28
  %s57 = sld [smem:[%s56]]
  %s58 = scalar_lea.smem %s0, 29
  %s59 = sld [smem:[%s58]]
  %s60 = scalar_lea.smem %s0, 30
  %s61 = sld [smem:[%s60]]
  %s62 = scalar_lea.smem %s0, 31
  %s63 = sld [smem:[%s62]]
  %s64 = scalar_lea.smem %s0, 32
  %s65 = sld [smem:[%s64]]
  %s66 = scalar_lea.smem %s0, 33
  %s67 = sld [smem:[%s66]]
  %s68 = scalar_lea.smem %s0, 34
  %s69 = sld [smem:[%s68]]
  %s70 = scalar_lea.smem %s0, 35
  %s71 = sld [smem:[%s70]]
  %s72 = scalar_lea.smem %s0, 36
  %s73 = sld [smem:[%s72]]
  %s74 = scalar_lea.smem %s0, 37
  %s75 = sld [smem:[%s74]]
  %s76 = scalar_lea.smem %s0, 38
  %s77 = sld [smem:[%s76]]
  %s78 = scalar_lea.smem %s0, 39
  %s79 = sld [smem:[%s78]]
  %s80 = scalar_lea.smem %s0, 40
  %s81 = sld [smem:[%s80]]
  %s82 = scalar_lea.smem %s0, 41
  %s83 = sld [smem:[%s82]]
  %s84 = scalar_lea.smem %s0, 42
  %s85 = sld [smem:[%s84]]
  %s86 = scalar_lea.smem %s0, 43
  %s87 = sld [smem:[%s86]]
  %s88 = scalar_lea.smem %s0, 44
  %s89 = sld [smem:[%s88]]
  %s90 = scalar_lea.smem %s0, 45
  %s91 = sld [smem:[%s90]]
  %s92 = scalar_lea.smem %s0, 46
  %s93 = sld [smem:[%s92]]
  %s94 = scalar_lea.smem %s0, 47
  %s95 = sld [smem:[%s94]]
  %s96 = scalar_lea.smem %s0, 48
  %s97 = sld [smem:[%s96]]
  %s98 = scalar_lea.smem %s0, 49
  %s99 = sld [smem:[%s98]]
  %s100 = scalar_lea.smem %s0, 50
  %s101 = sld [smem:[%s100]]
  %s102 = scalar_lea.smem %s0, 51
  %s103 = sld [smem:[%s102]]
  %s104 = scalar_lea.smem %s0, 52
  %s105 = sld [smem:[%s104]]
  %s106 = scalar_lea.smem %s0, 53
  %s107 = sld [smem:[%s106]]
  %s108 = sld [smem:[#allocation0]]
  $region222: #{forward.1} parent=0
    _
  %s110 = ssub.s32 1, %s108
  %s111 = scalar_select 0, %s110, %s108
  // Predicated region
  $region2: #{forward.1} parent=0 // pred_check
    _
  $region3: #{forward.1} parent=0 // pred_check_branch
    %113 = sbr.rel (0) target = $region5
  $region4: #{forward.1} parent=0 // pred_region
    _
  $region5: #{forward.1} parent=0 // pred_fallthru
    _
  // Predicated region
  $region6: #{forward.1} parent=0 // pred_check
    _
  $region7: #{forward.1} parent=0 // pred_check_branch
    %115 = sbr.rel (0) target = $region9
  $region8: #{forward.1} parent=0 // pred_region
    _
  $region9: #{forward.1} parent=0 // pred_fallthru
    _
  // Predicated region
  $region10: #{forward.1} parent=0 // pred_check
    _
  $region11: #{forward.1} parent=0 // pred_check_branch
    %117 = sbr.rel (0) target = $region13
  $region12: #{forward.1} parent=0 // pred_region
    _
  $region13: #{forward.1} parent=0 // pred_fallthru
    _
  // Predicated region
  $region14: #{forward.1} parent=0 // pred_check
    _
  $region15: #{forward.1} parent=0 // pred_check_branch
    %119 = sbr.rel (0) target = $region17
  $region16: #{forward.1} parent=0 // pred_region
    _
  $region17: #{forward.1} parent=0 // pred_fallthru
    _
  // Predicated region
  $region18: #{forward.1} parent=0 // pred_check
    _
  $region19: #{forward.1} parent=0 // pred_check_branch
    %121 = sbr.rel (0) target = $region21
  $region20: #{forward.1} parent=0 // pred_region
    _
  $region21: #{forward.1} parent=0 // pred_fallthru
    _
  // Predicated region
  $region22: #{forward.1} parent=0 // pred_check
    _
  $region23: #{forward.1} parent=0 // pred_check_branch
    %123 = sbr.rel (0) target = $region25
  $region24: #{forward.1} parent=0 // pred_region
    _
  $region25: #{forward.1} parent=0 // pred_fallthru
    _
  // Predicated region
  $region26: #{forward.1} parent=0 // pred_check
    _
  $region27: #{forward.1} parent=0 // pred_check_branch
    %125 = sbr.rel (0) target = $region29
  $region28: #{forward.1} parent=0 // pred_region
    _
  $region29: #{forward.1} parent=0 // pred_fallthru
    _
  // Predicated region
  $region30: #{forward.1} parent=0 // pred_check
    _
  $region31: #{forward.1} parent=0 // pred_check_branch
    %127 = sbr.rel (0) target = $region33
  $region32: #{forward.1} parent=0 // pred_region
    _
  $region33: #{forward.1} parent=0 // pred_fallthru
    _
  // Predicated region
  $region34: #{forward.1} parent=0 // pred_check
    _
  $region35: #{forward.1} parent=0 // pred_check_branch
    %129 = sbr.rel (0) target = $region37
  $region36: #{forward.1} parent=0 // pred_region
    _
  $region37: #{forward.1} parent=0 // pred_fallthru
    _
  // Predicated region
  $region38: #{forward.1} parent=0 // pred_check
    _
  $region39: #{forward.1} parent=0 // pred_check_branch
    %131 = sbr.rel (0) target = $region41
  $region40: #{forward.1} parent=0 // pred_region
    _
  $region41: #{forward.1} parent=0 // pred_fallthru
    _
  // Predicated region
  $region42: #{forward.1} parent=0 // pred_check
    _
  $region43: #{forward.1} parent=0 // pred_check_branch
    %133 = sbr.rel (0) target = $region45
  $region44: #{forward.1} parent=0 // pred_region
    _
  $region45: #{forward.1} parent=0 // pred_fallthru
    _
  // Predicated region
  $region46: #{forward.1} parent=0 // pred_check
    _
  $region47: #{forward.1} parent=0 // pred_check_branch
    %135 = sbr.rel (0) target = $region49
  $region48: #{forward.1} parent=0 // pred_region
    _
  $region49: #{forward.1} parent=0 // pred_fallthru
    _
  // Predicated region
  $region50: #{forward.1} parent=0 // pred_check
    _
  $region51: #{forward.1} parent=0 // pred_check_branch
    %137 = sbr.rel (0) target = $region53
  $region52: #{forward.1} parent=0 // pred_region
    _
  $region53: #{forward.1} parent=0 // pred_fallthru
    _
  // Predicated region
  $region54: #{forward.1} parent=0 // pred_check
    _
  $region55: #{forward.1} parent=0 // pred_check_branch
    %139 = sbr.rel (0) target = $region57
  $region56: #{forward.1} parent=0 // pred_region
    _
  $region57: #{forward.1} parent=0 // pred_fallthru
    _
  // Predicated region
  $region58: #{forward.1} parent=0 // pred_check
    _
  $region59: #{forward.1} parent=0 // pred_check_branch
    %141 = sbr.rel (0) target = $region61
  $region60: #{forward.1} parent=0 // pred_region
    _
  $region61: #{forward.1} parent=0 // pred_fallthru
    _
  // Predicated region
  $region62: #{forward.1} parent=0 // pred_check
    _
  $region63: #{forward.1} parent=0 // pred_check_branch
    %143 = sbr.rel (0) target = $region65
  $region64: #{forward.1} parent=0 // pred_region
    _
  $region65: #{forward.1} parent=0 // pred_fallthru
    _
  // Predicated region
  $region66: #{forward.1} parent=0 // pred_check
    _
  $region67: #{forward.1} parent=0 // pred_check_branch
    %145 = sbr.rel (0) target = $region69
  $region68: #{forward.1} parent=0 // pred_region
    _
  $region69: #{forward.1} parent=0 // pred_fallthru
    _
  // Predicated region
  $region70: #{forward.1} parent=0 // pred_check
    _
  $region71: #{forward.1} parent=0 // pred_check_branch
    %147 = sbr.rel (0) target = $region73
  $region72: #{forward.1} parent=0 // pred_region
    _
  $region73: #{forward.1} parent=0 // pred_fallthru
    _
  // Predicated region
  $region74: #{forward.1} parent=0 // pred_check
    _
  $region75: #{forward.1} parent=0 // pred_check_branch
    %149 = sbr.rel (0) target = $region77
  $region76: #{forward.1} parent=0 // pred_region
    _
  $region77: #{forward.1} parent=0 // pred_fallthru
    _
  // Predicated region
  $region78: #{forward.1} parent=0 // pred_check
    _
  $region79: #{forward.1} parent=0 // pred_check_branch
    %151 = sbr.rel (0) target = $region81
  $region80: #{forward.1} parent=0 // pred_region
    _
  $region81: #{forward.1} parent=0 // pred_fallthru
    _
  // Predicated region
  $region82: #{forward.1} parent=0 // pred_check
    _
  $region83: #{forward.1} parent=0 // pred_check_branch
    %153 = sbr.rel (0) target = $region85
  $region84: #{forward.1} parent=0 // pred_region
    _
  $region85: #{forward.1} parent=0 // pred_fallthru
    _
  // Predicated region
  $region86: #{forward.1} parent=0 // pred_check
    _
  $region87: #{forward.1} parent=0 // pred_check_branch
    %155 = sbr.rel (0) target = $region89
  $region88: #{forward.1} parent=0 // pred_region
    _
  $region89: #{forward.1} parent=0 // pred_fallthru
    _
  // Predicated region
  $region90: #{forward.1} parent=0 // pred_check
    _
  $region91: #{forward.1} parent=0 // pred_check_branch
    %157 = sbr.rel (0) target = $region93
  $region92: #{forward.1} parent=0 // pred_region
    _
  $region93: #{forward.1} parent=0 // pred_fallthru
    _
  // Predicated region
  $region94: #{forward.1} parent=0 // pred_check
    _
  $region95: #{forward.1} parent=0 // pred_check_branch
    %159 = sbr.rel (0) target = $region97
  $region96: #{forward.1} parent=0 // pred_region
    _
  $region97: #{forward.1} parent=0 // pred_fallthru
    _
  // Predicated region
  $region98: #{forward.1} parent=0 // pred_check
    _
  $region99: #{forward.1} parent=0 // pred_check_branch
    %161 = sbr.rel (0) target = $region101
  $region100: #{forward.1} parent=0 // pred_region
    _
  $region101: #{forward.1} parent=0 // pred_fallthru
    _
  // Predicated region
  $region102: #{forward.1} parent=0 // pred_check
    _
  $region103: #{forward.1} parent=0 // pred_check_branch
    %163 = sbr.rel (0) target = $region105
  $region104: #{forward.1} parent=0 // pred_region
    _
  $region105: #{forward.1} parent=0 // pred_fallthru
    _
  // Predicated region
  $region106: #{forward.1} parent=0 // pred_check
    _
  $region107: #{forward.1} parent=0 // pred_check_branch
    %165 = sbr.rel (0) target = $region109
  $region108: #{forward.1} parent=0 // pred_region
    _
  $region109: #{forward.1} parent=0 // pred_fallthru
    _
  // Predicated region
  $region110: #{forward.1} parent=0 // pred_check
    _
  $region111: #{forward.1} parent=0 // pred_check_branch
    %167 = sbr.rel (0) target = $region113
  $region112: #{forward.1} parent=0 // pred_region
    _
  $region113: #{forward.1} parent=0 // pred_fallthru
    _
  // Predicated region
  $region114: #{forward.1} parent=0 // pred_check
    _
  $region115: #{forward.1} parent=0 // pred_check_branch
    %169 = sbr.rel (0) target = $region117
  $region116: #{forward.1} parent=0 // pred_region
    _
  $region117: #{forward.1} parent=0 // pred_fallthru
    _
  // Predicated region
  $region118: #{forward.1} parent=0 // pred_check
    _
  $region119: #{forward.1} parent=0 // pred_check_branch
    %171 = sbr.rel (0) target = $region121
  $region120: #{forward.1} parent=0 // pred_region
    _
  $region121: #{forward.1} parent=0 // pred_fallthru
    _
  // Predicated region
  $region122: #{forward.1} parent=0 // pred_check
    _
  $region123: #{forward.1} parent=0 // pred_check_branch
    %173 = sbr.rel (0) target = $region125
  $region124: #{forward.1} parent=0 // pred_region
    _
  $region125: #{forward.1} parent=0 // pred_fallthru
    _
  // Predicated region
  $region126: #{forward.1} parent=0 // pred_check
    _
  $region127: #{forward.1} parent=0 // pred_check_branch
    %175 = sbr.rel (0) target = $region129
  $region128: #{forward.1} parent=0 // pred_region
    _
  $region129: #{forward.1} parent=0 // pred_fallthru
    _
  // Predicated region
  $region130: #{forward.1} parent=0 // pred_check
    _
  $region131: #{forward.1} parent=0 // pred_check_branch
    %177 = sbr.rel (0) target = $region133
  $region132: #{forward.1} parent=0 // pred_region
    _
  $region133: #{forward.1} parent=0 // pred_fallthru
    _
  // Predicated region
  $region134: #{forward.1} parent=0 // pred_check
    _
  $region135: #{forward.1} parent=0 // pred_check_branch
    %179 = sbr.rel (0) target = $region137
  $region136: #{forward.1} parent=0 // pred_region
    _
  $region137: #{forward.1} parent=0 // pred_fallthru
    _
  // Predicated region
  $region138: #{forward.1} parent=0 // pred_check
    _
  $region139: #{forward.1} parent=0 // pred_check_branch
    %181 = sbr.rel (0) target = $region141
  $region140: #{forward.1} parent=0 // pred_region
    _
  $region141: #{forward.1} parent=0 // pred_fallthru
    _
  // Predicated region
  $region142: #{forward.1} parent=0 // pred_check
    _
  $region143: #{forward.1} parent=0 // pred_check_branch
    %183 = sbr.rel (0) target = $region145
  $region144: #{forward.1} parent=0 // pred_region
    _
  $region145: #{forward.1} parent=0 // pred_fallthru
    _
  // Predicated region
  $region146: #{forward.1} parent=0 // pred_check
    _
  $region147: #{forward.1} parent=0 // pred_check_branch
    %185 = sbr.rel (0) target = $region149
  $region148: #{forward.1} parent=0 // pred_region
    _
  $region149: #{forward.1} parent=0 // pred_fallthru
    _
  // Predicated region
  $region150: #{forward.1} parent=0 // pred_check
    _
  $region151: #{forward.1} parent=0 // pred_check_branch
    %187 = sbr.rel (0) target = $region153
  $region152: #{forward.1} parent=0 // pred_region
    _
  $region153: #{forward.1} parent=0 // pred_fallthru
    _
  // Predicated region
  $region154: #{forward.1} parent=0 // pred_check
    _
  $region155: #{forward.1} parent=0 // pred_check_branch
    %189 = sbr.rel (0) target = $region157
  $region156: #{forward.1} parent=0 // pred_region
    _
  $region157: #{forward.1} parent=0 // pred_fallthru
    _
  // Predicated region
  $region158: #{forward.1} parent=0 // pred_check
    _
  $region159: #{forward.1} parent=0 // pred_check_branch
    %191 = sbr.rel (0) target = $region161
  $region160: #{forward.1} parent=0 // pred_region
    _
  $region161: #{forward.1} parent=0 // pred_fallthru
    _
  // Predicated region
  $region162: #{forward.1} parent=0 // pred_check
    _
  $region163: #{forward.1} parent=0 // pred_check_branch
    %193 = sbr.rel (0) target = $region165
  $region164: #{forward.1} parent=0 // pred_region
    _
  $region165: #{forward.1} parent=0 // pred_fallthru
    _
  // Predicated region
  $region166: #{forward.1} parent=0 // pred_check
    _
  $region167: #{forward.1} parent=0 // pred_check_branch
    %195 = sbr.rel (0) target = $region169
  $region168: #{forward.1} parent=0 // pred_region
    _
  $region169: #{forward.1} parent=0 // pred_fallthru
    _
  // Predicated region
  $region170: #{forward.1} parent=0 // pred_check
    _
  $region171: #{forward.1} parent=0 // pred_check_branch
    %197 = sbr.rel (0) target = $region173
  $region172: #{forward.1} parent=0 // pred_region
    _
  $region173: #{forward.1} parent=0 // pred_fallthru
    _
  // Predicated region
  $region174: #{forward.1} parent=0 // pred_check
    _
  $region175: #{forward.1} parent=0 // pred_check_branch
    %199 = sbr.rel (0) target = $region177
  $region176: #{forward.1} parent=0 // pred_region
    _
  $region177: #{forward.1} parent=0 // pred_fallthru
    _
  // Predicated region
  $region178: #{forward.1} parent=0 // pred_check
    _
  $region179: #{forward.1} parent=0 // pred_check_branch
    %201 = sbr.rel (0) target = $region181
  $region180: #{forward.1} parent=0 // pred_region
    _
  $region181: #{forward.1} parent=0 // pred_fallthru
    _
  // Predicated region
  $region182: #{forward.1} parent=0 // pred_check
    _
  $region183: #{forward.1} parent=0 // pred_check_branch
    %203 = sbr.rel (0) target = $region185
  $region184: #{forward.1} parent=0 // pred_region
    _
  $region185: #{forward.1} parent=0 // pred_fallthru
    _
  // Predicated region
  $region186: #{forward.1} parent=0 // pred_check
    _
  $region187: #{forward.1} parent=0 // pred_check_branch
    %205 = sbr.rel (0) target = $region189
  $region188: #{forward.1} parent=0 // pred_region
    _
  $region189: #{forward.1} parent=0 // pred_fallthru
    _
  // Predicated region
  $region190: #{forward.1} parent=0 // pred_check
    _
  $region191: #{forward.1} parent=0 // pred_check_branch
    %207 = sbr.rel (0) target = $region193
  $region192: #{forward.1} parent=0 // pred_region
    _
  $region193: #{forward.1} parent=0 // pred_fallthru
    _
  // Predicated region
  $region194: #{forward.1} parent=0 // pred_check
    _
  $region195: #{forward.1} parent=0 // pred_check_branch
    %209 = sbr.rel (0) target = $region197
  $region196: #{forward.1} parent=0 // pred_region
    _
  $region197: #{forward.1} parent=0 // pred_fallthru
    _
  // Predicated region
  $region198: #{forward.1} parent=0 // pred_check
    _
  $region199: #{forward.1} parent=0 // pred_check_branch
    %211 = sbr.rel (0) target = $region201
  $region200: #{forward.1} parent=0 // pred_region
    _
  $region201: #{forward.1} parent=0 // pred_fallthru
    _
  // Predicated region
  $region202: #{forward.1} parent=0 // pred_check
    _
  $region203: #{forward.1} parent=0 // pred_check_branch
    %213 = sbr.rel (0) target = $region205
  $region204: #{forward.1} parent=0 // pred_region
    _
  $region205: #{forward.1} parent=0 // pred_fallthru
    _
  // Predicated region
  $region206: #{forward.1} parent=0 // pred_check
    _
  $region207: #{forward.1} parent=0 // pred_check_branch
    %215 = sbr.rel (0) target = $region209
  $region208: #{forward.1} parent=0 // pred_region
    _
  $region209: #{forward.1} parent=0 // pred_fallthru
    _
  // Predicated region
  $region210: #{forward.1} parent=0 // pred_check
    _
  $region211: #{forward.1} parent=0 // pred_check_branch
    %217 = sbr.rel (0) target = $region213
  $region212: #{forward.1} parent=0 // pred_region
    _
  $region213: #{forward.1} parent=0 // pred_fallthru
    _
  %v219 = vld [vmem:[%s1] sm:$0x7]
  %220 = vrot.lane.b32.xlu0 %v219, 9
  %v221 = vpop.permute.xlu0 %220
  %v222 = vld [vmem:[%s3] sm:$0x1]
  %v224 = vlaneseq
  %v225 = vshrl.u32 %v224, 7
  %v226 = vsub.s32 0, %v225
  %v227 = vrot.slane %v222, %v226
  %v229 = vmul.f32 %v221, %v227
  %v230 = vpack.c.bf16 %v229, %v229
  %231 = vrot.lane.b32.xlu0 %v219, 8
  %v232 = vpop.permute.xlu0 %231
  %s233 = scalar_lea.vmem %s3, 1
  %v234 = vld [vmem:[%s233] sm:$0x1]
  %v236 = vlaneseq
  %v237 = vshrl.u32 %v236, 7
  %v238 = vsub.s32 0, %v237
  %v239 = vrot.slane %v234, %v238
  %v241 = vmul.f32 %v232, %v239
  %v242 = vpack.c.bf16 %v241, %v241
  %243 = vrot.lane.b32.xlu0 %v219, 7
  %v244 = vpop.permute.xlu0 %243
  %s245 = scalar_lea.vmem %s3, 2
  %v246 = vld [vmem:[%s245] sm:$0x1]
  %v248 = vlaneseq
  %v249 = vshrl.u32 %v248, 7
  %v250 = vsub.s32 0, %v249
  %v251 = vrot.slane %v246, %v250
  %v253 = vmul.f32 %v244, %v251
  %v254 = vpack.c.bf16 %v253, %v253
  %255 = vrot.lane.b32.xlu0 %v219, 1
  %v256 = vpop.permute.xlu0 %255
  %s257 = scalar_lea.vmem %s3, 3
  %v258 = vld [vmem:[%s257] sm:$0x1]
  %v260 = vlaneseq
  %v261 = vshrl.u32 %v260, 7
  %v262 = vsub.s32 0, %v261
  %v263 = vrot.slane %v258, %v262
  %v265 = vmul.f32 %v256, %v263
  %v266 = vpack.c.bf16 %v265, %v265
  %v267 = vpack.c.bf16 %v219, %v219
  %268 = vrot.lane.b32.xlu0 %v219, 127
  %v269 = vpop.permute.xlu0 %268
  %s270 = scalar_lea.vmem %s3, 5
  %v271 = vld [vmem:[%s270] sm:$0x1]
  %v273 = vlaneseq
  %v274 = vshrl.u32 %v273, 7
  %v275 = vsub.s32 0, %v274
  %v276 = vrot.slane %v271, %v275
  %v278 = vmul.f32 %v269, %v276
  %v279 = vpack.c.bf16 %v278, %v278
  %280 = vrot.lane.b32.xlu0 %v219, 121
  %v281 = vpop.permute.xlu0 %280
  %s282 = scalar_lea.vmem %s3, 6
  %v283 = vld [vmem:[%s282] sm:$0x1]
  %v285 = vlaneseq
  %v286 = vshrl.u32 %v285, 7
  %v287 = vsub.s32 0, %v286
  %v288 = vrot.slane %v283, %v287
  %v290 = vmul.f32 %v281, %v288
  %v291 = vpack.c.bf16 %v290, %v290
  %292 = vrot.lane.b32.xlu0 %v219, 120
  %v293 = vpop.permute.xlu0 %292
  %s294 = scalar_lea.vmem %s3, 7
  %v295 = vld [vmem:[%s294] sm:$0x1]
  %v297 = vlaneseq
  %v298 = vshrl.u32 %v297, 7
  %v299 = vsub.s32 0, %v298
  %v300 = vrot.slane %v295, %v299
  %v302 = vmul.f32 %v293, %v300
  %v303 = vpack.c.bf16 %v302, %v302
  %304 = vrot.lane.b32.xlu0 %v219, 119
  %v305 = vpop.permute.xlu0 %304
  %s306 = scalar_lea.vmem %s3, 8
  %v307 = vld [vmem:[%s306] sm:$0x1]
  %v309 = vlaneseq
  %v310 = vshrl.u32 %v309, 7
  %v311 = vsub.s32 0, %v310
  %v312 = vrot.slane %v307, %v311
  %v314 = vmul.f32 %v305, %v312
  %v315 = vpack.c.bf16 %v314, %v314
  %v316 = vld [vmem:[%s7] sm:$0x3]
  %s317 = scalar_lea.vmem %s7, 2
  %v318 = vld [vmem:[%s317] sm:$0x3]
  %vm319 = vcmask 23552
  %v321 = vsel %vm319, %v318, 0
  %vm323 = vcmask 1040384
  %vm324 = vcmask 1041408
  %v325 = vsel %vm323, 4294967295, 65535
  %v326 = vsel %vm324, %v325, 0
  %v328 = vand.u32 %v242, %v326
  %330 = vmatprep.subr.bf16.mxu0 0
  %331 = vmatpush1.bf16.msra.mxu0 0
  %332 = vmatprep.subr.bf16.mxu0 0
  %333 = vmatpush1.bf16.msra.mxu0 0
  %334 = vmatprep.subr.bf16.mxu0 0
  %335 = vmatpush1.bf16.msra.mxu0 0
  %336 = vmatprep.subr.bf16.mxu0 0
  %337 = vmatpush1.bf16.msra.mxu0 0
  %338 = vmatprep.subr.bf16.mxu0 0
  %339 = vmatpush1.bf16.msra.mxu0 0
  %340 = vmatprep.subr.bf16.mxu0 0
  %341 = vmatpush1.bf16.msra.mxu0 0
  %342 = vmatprep.subr.bf16.mxu0 0
  %343 = vmatpush1.bf16.msra.mxu0 0
  %344 = vmatprep.subr.bf16.mxu0 0
  %345 = vmatpush1.bf16.msra.mxu0 %v328
  %346 = vmatprep.subr.bf16.mxu0 0
  %347 = vmatpush2.bf16.msra.mxu0 0
  %348 = vmatprep.subr.bf16.mxu0 0
  %349 = vmatpush2.bf16.msra.mxu0 0
  %350 = vmatprep.subr.bf16.mxu0 0
  %351 = vmatpush2.bf16.msra.mxu0 0
  %352 = vmatprep.subr.bf16.mxu0 0
  %353 = vmatpush2.bf16.msra.mxu0 0
  %354 = vmatprep.subr.bf16.mxu0 0
  %355 = vmatpush2.bf16.msra.mxu0 0
  %356 = vmatprep.subr.bf16.mxu0 0
  %357 = vmatpush2.bf16.msra.mxu0 0
  %358 = vmatprep.subr.bf16.mxu0 0
  %359 = vmatpush2.bf16.msra.mxu0 0
  %360 = vmatprep.subr.bf16.mxu0 0
  %361 = vmatpush2.bf16.msra.mxu0 0
  %362 = vmatprep.mubr.bf16.mxu0 0
  %363 = vmatmul.mubr.bf16.gmra.mxu0 %v321
  %v364 = vpop.f32.mrf.mxu0
  %v365 = vadd.f32 0.0, %v364
  %v366 = vpop.f32.mrf.mxu0
  %v367 = vpop.f32.mrf.mxu0
  %v368 = vpop.f32.mrf.mxu0
  %369 = vdwg.mxu0
  %v371 = vsel %vm319, %v316, 0
  %v374 = vand.u32 %v230, %v326
  %376 = vmatprep.subr.bf16.mxu0 0
  %377 = vmatpush1.bf16.msra.mxu0 0
  %378 = vmatprep.subr.bf16.mxu0 0
  %379 = vmatpush1.bf16.msra.mxu0 0
  %380 = vmatprep.subr.bf16.mxu0 0
  %381 = vmatpush1.bf16.msra.mxu0 0
  %382 = vmatprep.subr.bf16.mxu0 0
  %383 = vmatpush1.bf16.msra.mxu0 0
  %384 = vmatprep.subr.bf16.mxu0 0
  %385 = vmatpush1.bf16.msra.mxu0 0
  %386 = vmatprep.subr.bf16.mxu0 0
  %387 = vmatpush1.bf16.msra.mxu0 0
  %388 = vmatprep.subr.bf16.mxu0 0
  %389 = vmatpush1.bf16.msra.mxu0 0
  %390 = vmatprep.subr.bf16.mxu0 0
  %391 = vmatpush1.bf16.msra.mxu0 %v374
  %392 = vmatprep.subr.bf16.mxu0 0
  %393 = vmatpush2.bf16.msra.mxu0 0
  %394 = vmatprep.subr.bf16.mxu0 0
  %395 = vmatpush2.bf16.msra.mxu0 0
  %396 = vmatprep.subr.bf16.mxu0 0
  %397 = vmatpush2.bf16.msra.mxu0 0
  %398 = vmatprep.subr.bf16.mxu0 0
  %399 = vmatpush2.bf16.msra.mxu0 0
  %400 = vmatprep.subr.bf16.mxu0 0
  %401 = vmatpush2.bf16.msra.mxu0 0
  %402 = vmatprep.subr.bf16.mxu0 0
  %403 = vmatpush2.bf16.msra.mxu0 0
  %404 = vmatprep.subr.bf16.mxu0 0
  %405 = vmatpush2.bf16.msra.mxu0 0
  %406 = vmatprep.subr.bf16.mxu0 0
  %407 = vmatpush2.bf16.msra.mxu0 0
  %408 = vmatprep.mubr.bf16.mxu0 0
  %409 = vmatmul.mubr.bf16.gmra.mxu0 %v371
  %v410 = vpop.f32.mrf.mxu0
  %v411 = vadd.f32 %v365, %v410
  %v412 = vpop.f32.mrf.mxu0
  %v413 = vpop.f32.mrf.mxu0
  %v414 = vpop.f32.mrf.mxu0
  %415 = vdwg.mxu0
  %s416 = scalar_lea.vmem %s7, 4
  %v417 = vld [vmem:[%s416] sm:$0x3]
  %v419 = vsel %vm319, %v417, 0
  %v422 = vand.u32 %v254, %v326
  %424 = vmatprep.subr.bf16.mxu0 0
  %425 = vmatpush1.bf16.msra.mxu0 0
  %426 = vmatprep.subr.bf16.mxu0 0
  %427 = vmatpush1.bf16.msra.mxu0 0
  %428 = vmatprep.subr.bf16.mxu0 0
  %429 = vmatpush1.bf16.msra.mxu0 0
  %430 = vmatprep.subr.bf16.mxu0 0
  %431 = vmatpush1.bf16.msra.mxu0 0
  %432 = vmatprep.subr.bf16.mxu0 0
  %433 = vmatpush1.bf16.msra.mxu0 0
  %434 = vmatprep.subr.bf16.mxu0 0
  %435 = vmatpush1.bf16.msra.mxu0 0
  %436 = vmatprep.subr.bf16.mxu0 0
  %437 = vmatpush1.bf16.msra.mxu0 0
  %438 = vmatprep.subr.bf16.mxu0 0
  %439 = vmatpush1.bf16.msra.mxu0 %v422
  %440 = vmatprep.subr.bf16.mxu0 0
  %441 = vmatpush2.bf16.msra.mxu0 0
  %442 = vmatprep.subr.bf16.mxu0 0
  %443 = vmatpush2.bf16.msra.mxu0 0
  %444 = vmatprep.subr.bf16.mxu0 0
  %445 = vmatpush2.bf16.msra.mxu0 0
  %446 = vmatprep.subr.bf16.mxu0 0
  %447 = vmatpush2.bf16.msra.mxu0 0
  %448 = vmatprep.subr.bf16.mxu0 0
  %449 = vmatpush2.bf16.msra.mxu0 0
  %450 = vmatprep.subr.bf16.mxu0 0
  %451 = vmatpush2.bf16.msra.mxu0 0
  %452 = vmatprep.subr.bf16.mxu0 0
  %453 = vmatpush2.bf16.msra.mxu0 0
  %454 = vmatprep.subr.bf16.mxu0 0
  %455 = vmatpush2.bf16.msra.mxu0 0
  %456 = vmatprep.mubr.bf16.mxu0 0
  %457 = vmatmul.mubr.bf16.gmra.mxu0 %v419
  %v458 = vpop.f32.mrf.mxu0
  %v459 = vadd.f32 0.0, %v458
  %v460 = vpop.f32.mrf.mxu0
  %v461 = vpop.f32.mrf.mxu0
  %v462 = vpop.f32.mrf.mxu0
  %463 = vdwg.mxu0
  %v464 = vadd.f32 %v411, %v459
  %s465 = scalar_lea.vmem %s7, 6
  %v466 = vld [vmem:[%s465] sm:$0x3]
  %v468 = vsel %vm319, %v466, 0
  %v471 = vand.u32 %v266, %v326
  %473 = vmatprep.subr.bf16.mxu0 0
  %474 = vmatpush1.bf16.msra.mxu0 0
  %475 = vmatprep.subr.bf16.mxu0 0
  %476 = vmatpush1.bf16.msra.mxu0 0
  %477 = vmatprep.subr.bf16.mxu0 0
  %478 = vmatpush1.bf16.msra.mxu0 0
  %479 = vmatprep.subr.bf16.mxu0 0
  %480 = vmatpush1.bf16.msra.mxu0 0
  %481 = vmatprep.subr.bf16.mxu0 0
  %482 = vmatpush1.bf16.msra.mxu0 0
  %483 = vmatprep.subr.bf16.mxu0 0
  %484 = vmatpush1.bf16.msra.mxu0 0
  %485 = vmatprep.subr.bf16.mxu0 0
  %486 = vmatpush1.bf16.msra.mxu0 0
  %487 = vmatprep.subr.bf16.mxu0 0
  %488 = vmatpush1.bf16.msra.mxu0 %v471
  %489 = vmatprep.subr.bf16.mxu0 0
  %490 = vmatpush2.bf16.msra.mxu0 0
  %491 = vmatprep.subr.bf16.mxu0 0
  %492 = vmatpush2.bf16.msra.mxu0 0
  %493 = vmatprep.subr.bf16.mxu0 0
  %494 = vmatpush2.bf16.msra.mxu0 0
  %495 = vmatprep.subr.bf16.mxu0 0
  %496 = vmatpush2.bf16.msra.mxu0 0
  %497 = vmatprep.subr.bf16.mxu0 0
  %498 = vmatpush2.bf16.msra.mxu0 0
  %499 = vmatprep.subr.bf16.mxu0 0
  %500 = vmatpush2.bf16.msra.mxu0 0
  %501 = vmatprep.subr.bf16.mxu0 0
  %502 = vmatpush2.bf16.msra.mxu0 0
  %503 = vmatprep.subr.bf16.mxu0 0
  %504 = vmatpush2.bf16.msra.mxu0 0
  %505 = vmatprep.mubr.bf16.mxu0 0
  %506 = vmatmul.mubr.bf16.gmra.mxu0 %v468
  %v507 = vpop.f32.mrf.mxu0
  %v508 = vadd.f32 0.0, %v507
  %v509 = vpop.f32.mrf.mxu0
  %v510 = vpop.f32.mrf.mxu0
  %v511 = vpop.f32.mrf.mxu0
  %512 = vdwg.mxu0
  %v513 = vadd.f32 %v464, %v508
  %s514 = scalar_lea.vmem %s7, 8
  %v515 = vld [vmem:[%s514] sm:$0x3]
  %v517 = vsel %vm319, %v515, 0
  %v520 = vand.u32 %v267, %v326
  %522 = vmatprep.subr.bf16.mxu0 0
  %523 = vmatpush1.bf16.msra.mxu0 0
  %524 = vmatprep.subr.bf16.mxu0 0
  %525 = vmatpush1.bf16.msra.mxu0 0
  %526 = vmatprep.subr.bf16.mxu0 0
  %527 = vmatpush1.bf16.msra.mxu0 0
  %528 = vmatprep.subr.bf16.mxu0 0
  %529 = vmatpush1.bf16.msra.mxu0 0
  %530 = vmatprep.subr.bf16.mxu0 0
  %531 = vmatpush1.bf16.msra.mxu0 0
  %532 = vmatprep.subr.bf16.mxu0 0
  %533 = vmatpush1.bf16.msra.mxu0 0
  %534 = vmatprep.subr.bf16.mxu0 0
  %535 = vmatpush1.bf16.msra.mxu0 0
  %536 = vmatprep.subr.bf16.mxu0 0
  %537 = vmatpush1.bf16.msra.mxu0 %v520
  %538 = vmatprep.subr.bf16.mxu0 0
  %539 = vmatpush2.bf16.msra.mxu0 0
  %540 = vmatprep.subr.bf16.mxu0 0
  %541 = vmatpush2.bf16.msra.mxu0 0
  %542 = vmatprep.subr.bf16.mxu0 0
  %543 = vmatpush2.bf16.msra.mxu0 0
  %544 = vmatprep.subr.bf16.mxu0 0
  %545 = vmatpush2.bf16.msra.mxu0 0
  %546 = vmatprep.subr.bf16.mxu0 0
  %547 = vmatpush2.bf16.msra.mxu0 0
  %548 = vmatprep.subr.bf16.mxu0 0
  %549 = vmatpush2.bf16.msra.mxu0 0
  %550 = vmatprep.subr.bf16.mxu0 0
  %551 = vmatpush2.bf16.msra.mxu0 0
  %552 = vmatprep.subr.bf16.mxu0 0
  %553 = vmatpush2.bf16.msra.mxu0 0
  %554 = vmatprep.mubr.bf16.mxu0 0
  %555 = vmatmul.mubr.bf16.gmra.mxu0 %v517
  %v556 = vpop.f32.mrf.mxu0
  %v557 = vadd.f32 0.0, %v556
  %v558 = vpop.f32.mrf.mxu0
  %v559 = vpop.f32.mrf.mxu0
  %v560 = vpop.f32.mrf.mxu0
  %561 = vdwg.mxu0
  %v562 = vadd.f32 %v513, %v557
  %s563 = scalar_lea.vmem %s7, 10
  %v564 = vld [vmem:[%s563] sm:$0x3]
  %v566 = vsel %vm319, %v564, 0
  %v569 = vand.u32 %v279, %v326
  %571 = vmatprep.subr.bf16.mxu0 0
  %572 = vmatpush1.bf16.msra.mxu0 0
  %573 = vmatprep.subr.bf16.mxu0 0
  %574 = vmatpush1.bf16.msra.mxu0 0
  %575 = vmatprep.subr.bf16.mxu0 0
  %576 = vmatpush1.bf16.msra.mxu0 0
  %577 = vmatprep.subr.bf16.mxu0 0
  %578 = vmatpush1.bf16.msra.mxu0 0
  %579 = vmatprep.subr.bf16.mxu0 0
  %580 = vmatpush1.bf16.msra.mxu0 0
  %581 = vmatprep.subr.bf16.mxu0 0
  %582 = vmatpush1.bf16.msra.mxu0 0
  %583 = vmatprep.subr.bf16.mxu0 0
  %584 = vmatpush1.bf16.msra.mxu0 0
  %585 = vmatprep.subr.bf16.mxu0 0
  %586 = vmatpush1.bf16.msra.mxu0 %v569
  %587 = vmatprep.subr.bf16.mxu0 0
  %588 = vmatpush2.bf16.msra.mxu0 0
  %589 = vmatprep.subr.bf16.mxu0 0
  %590 = vmatpush2.bf16.msra.mxu0 0
  %591 = vmatprep.subr.bf16.mxu0 0
  %592 = vmatpush2.bf16.msra.mxu0 0
  %593 = vmatprep.subr.bf16.mxu0 0
  %594 = vmatpush2.bf16.msra.mxu0 0
  %595 = vmatprep.subr.bf16.mxu0 0
  %596 = vmatpush2.bf16.msra.mxu0 0
  %597 = vmatprep.subr.bf16.mxu0 0
  %598 = vmatpush2.bf16.msra.mxu0 0
  %599 = vmatprep.subr.bf16.mxu0 0
  %600 = vmatpush2.bf16.msra.mxu0 0
  %601 = vmatprep.subr.bf16.mxu0 0
  %602 = vmatpush2.bf16.msra.mxu0 0
  %603 = vmatprep.mubr.bf16.mxu0 0
  %604 = vmatmul.mubr.bf16.gmra.mxu0 %v566
  %v605 = vpop.f32.mrf.mxu0
  %v606 = vadd.f32 0.0, %v605
  %v607 = vpop.f32.mrf.mxu0
  %v608 = vpop.f32.mrf.mxu0
  %v609 = vpop.f32.mrf.mxu0
  %610 = vdwg.mxu0
  %v611 = vadd.f32 %v562, %v606
  %s612 = scalar_lea.vmem %s7, 12
  %v613 = vld [vmem:[%s612] sm:$0x3]
  %v615 = vsel %vm319, %v613, 0
  %v618 = vand.u32 %v291, %v326
  %620 = vmatprep.subr.bf16.mxu0 0
  %621 = vmatpush1.bf16.msra.mxu0 0
  %622 = vmatprep.subr.bf16.mxu0 0
  %623 = vmatpush1.bf16.msra.mxu0 0
  %624 = vmatprep.subr.bf16.mxu0 0
  %625 = vmatpush1.bf16.msra.mxu0 0
  %626 = vmatprep.subr.bf16.mxu0 0
  %627 = vmatpush1.bf16.msra.mxu0 0
  %628 = vmatprep.subr.bf16.mxu0 0
  %629 = vmatpush1.bf16.msra.mxu0 0
  %630 = vmatprep.subr.bf16.mxu0 0
  %631 = vmatpush1.bf16.msra.mxu0 0
  %632 = vmatprep.subr.bf16.mxu0 0
  %633 = vmatpush1.bf16.msra.mxu0 0
  %634 = vmatprep.subr.bf16.mxu0 0
  %635 = vmatpush1.bf16.msra.mxu0 %v618
  %636 = vmatprep.subr.bf16.mxu0 0
  %637 = vmatpush2.bf16.msra.mxu0 0
  %638 = vmatprep.subr.bf16.mxu0 0
  %639 = vmatpush2.bf16.msra.mxu0 0
  %640 = vmatprep.subr.bf16.mxu0 0
  %641 = vmatpush2.bf16.msra.mxu0 0
  %642 = vmatprep.subr.bf16.mxu0 0
  %643 = vmatpush2.bf16.msra.mxu0 0
  %644 = vmatprep.subr.bf16.mxu0 0
  %645 = vmatpush2.bf16.msra.mxu0 0
  %646 = vmatprep.subr.bf16.mxu0 0
  %647 = vmatpush2.bf16.msra.mxu0 0
  %648 = vmatprep.subr.bf16.mxu0 0
  %649 = vmatpush2.bf16.msra.mxu0 0
  %650 = vmatprep.subr.bf16.mxu0 0
  %651 = vmatpush2.bf16.msra.mxu0 0
  %652 = vmatprep.mubr.bf16.mxu0 0
  %653 = vmatmul.mubr.bf16.gmra.mxu0 %v615
  %v654 = vpop.f32.mrf.mxu0
  %v655 = vadd.f32 0.0, %v654
  %v656 = vpop.f32.mrf.mxu0
  %v657 = vpop.f32.mrf.mxu0
  %v658 = vpop.f32.mrf.mxu0
  %659 = vdwg.mxu0
  %v660 = vadd.f32 %v611, %v655
  %s661 = scalar_lea.vmem %s7, 14
  %v662 = vld [vmem:[%s661] sm:$0x3]
  %v664 = vsel %vm319, %v662, 0
  %v667 = vand.u32 %v303, %v326
  %669 = vmatprep.subr.bf16.mxu0 0
  %670 = vmatpush1.bf16.msra.mxu0 0
  %671 = vmatprep.subr.bf16.mxu0 0
  %672 = vmatpush1.bf16.msra.mxu0 0
  %673 = vmatprep.subr.bf16.mxu0 0
  %674 = vmatpush1.bf16.msra.mxu0 0
  %675 = vmatprep.subr.bf16.mxu0 0
  %676 = vmatpush1.bf16.msra.mxu0 0
  %677 = vmatprep.subr.bf16.mxu0 0
  %678 = vmatpush1.bf16.msra.mxu0 0
  %679 = vmatprep.subr.bf16.mxu0 0
  %680 = vmatpush1.bf16.msra.mxu0 0
  %681 = vmatprep.subr.bf16.mxu0 0
  %682 = vmatpush1.bf16.msra.mxu0 0
  %683 = vmatprep.subr.bf16.mxu0 0
  %684 = vmatpush1.bf16.msra.mxu0 %v667
  %685 = vmatprep.subr.bf16.mxu0 0
  %686 = vmatpush2.bf16.msra.mxu0 0
  %687 = vmatprep.subr.bf16.mxu0 0
  %688 = vmatpush2.bf16.msra.mxu0 0
  %689 = vmatprep.subr.bf16.mxu0 0
  %690 = vmatpush2.bf16.msra.mxu0 0
  %691 = vmatprep.subr.bf16.mxu0 0
  %692 = vmatpush2.bf16.msra.mxu0 0
  %693 = vmatprep.subr.bf16.mxu0 0
  %694 = vmatpush2.bf16.msra.mxu0 0
  %695 = vmatprep.subr.bf16.mxu0 0
  %696 = vmatpush2.bf16.msra.mxu0 0
  %697 = vmatprep.subr.bf16.mxu0 0
  %698 = vmatpush2.bf16.msra.mxu0 0
  %699 = vmatprep.subr.bf16.mxu0 0
  %700 = vmatpush2.bf16.msra.mxu0 0
  %701 = vmatprep.mubr.bf16.mxu0 0
  %702 = vmatmul.mubr.bf16.gmra.mxu0 %v664
  %v703 = vpop.f32.mrf.mxu0
  %v704 = vadd.f32 0.0, %v703
  %v705 = vpop.f32.mrf.mxu0
  %v706 = vpop.f32.mrf.mxu0
  %v707 = vpop.f32.mrf.mxu0
  %708 = vdwg.mxu0
  %v709 = vadd.f32 %v660, %v704
  %s710 = scalar_lea.vmem %s7, 16
  %v711 = vld [vmem:[%s710] sm:$0x3]
  %v713 = vsel %vm319, %v711, 0
  %v716 = vand.u32 %v315, %v326
  %718 = vmatprep.subr.bf16.mxu0 0
  %719 = vmatpush1.bf16.msra.mxu0 0
  %720 = vmatprep.subr.bf16.mxu0 0
  %721 = vmatpush1.bf16.msra.mxu0 0
  %722 = vmatprep.subr.bf16.mxu0 0
  %723 = vmatpush1.bf16.msra.mxu0 0
  %724 = vmatprep.subr.bf16.mxu0 0
  %725 = vmatpush1.bf16.msra.mxu0 0
  %726 = vmatprep.subr.bf16.mxu0 0
  %727 = vmatpush1.bf16.msra.mxu0 0
  %728 = vmatprep.subr.bf16.mxu0 0
  %729 = vmatpush1.bf16.msra.mxu0 0
  %730 = vmatprep.subr.bf16.mxu0 0
  %731 = vmatpush1.bf16.msra.mxu0 0
  %732 = vmatprep.subr.bf16.mxu0 0
  %733 = vmatpush1.bf16.msra.mxu0 %v716
  %734 = vmatprep.subr.bf16.mxu0 0
  %735 = vmatpush2.bf16.msra.mxu0 0
  %736 = vmatprep.subr.bf16.mxu0 0
  %737 = vmatpush2.bf16.msra.mxu0 0
  %738 = vmatprep.subr.bf16.mxu0 0
  %739 = vmatpush2.bf16.msra.mxu0 0
  %740 = vmatprep.subr.bf16.mxu0 0
  %741 = vmatpush2.bf16.msra.mxu0 0
  %742 = vmatprep.subr.bf16.mxu0 0
  %743 = vmatpush2.bf16.msra.mxu0 0
  %744 = vmatprep.subr.bf16.mxu0 0
  %745 = vmatpush2.bf16.msra.mxu0 0
  %746 = vmatprep.subr.bf16.mxu0 0
  %747 = vmatpush2.bf16.msra.mxu0 0
  %748 = vmatprep.subr.bf16.mxu0 0
  %749 = vmatpush2.bf16.msra.mxu0 0
  %750 = vmatprep.mubr.bf16.mxu0 0
  %751 = vmatmul.mubr.bf16.gmra.mxu0 %v713
  %v752 = vpop.f32.mrf.mxu0
  %v753 = vadd.f32 0.0, %v752
  %v754 = vpop.f32.mrf.mxu0
  %v755 = vpop.f32.mrf.mxu0
  %v756 = vpop.f32.mrf.mxu0
  %757 = vdwg.mxu0
  %v758 = vadd.f32 %v709, %v753
  %v759 = vld [vmem:[%s9] sm:$0xf]
  %761 = vset.pattern.permute.xlu0 0
  %762 = vperm.xlu0 %761, %v759
  %v763 = vpop.permute.xlu0 %762
  %v765 = vadd.f32 %v758, %v763
  %v766 = vmax.f32 %v765, 0.0
  %v767 = vld [vmem:[%s11] sm:$0x3]
  %v768 = vpack.c.bf16 %v766, %v766
  %v769 = vld [vmem:[%s13] sm:$0xf]
  %771 = vset.pattern.permute.xlu0 0
  %772 = vperm.xlu0 %771, %v769
  %v773 = vpop.permute.xlu0 %772
  %vm775 = vcmask 31744
  %v777 = vsel %vm775, %v767, 0
  %v780 = vsel %vm324, %v768, 0
  %782 = vmatprep.subr.bf16.mxu0 0
  %783 = vmatpush1.bf16.msra.mxu0 0
  %784 = vmatprep.subr.bf16.mxu0 0
  %785 = vmatpush1.bf16.msra.mxu0 0
  %786 = vmatprep.subr.bf16.mxu0 0
  %787 = vmatpush1.bf16.msra.mxu0 0
  %788 = vmatprep.subr.bf16.mxu0 0
  %789 = vmatpush1.bf16.msra.mxu0 0
  %790 = vmatprep.subr.bf16.mxu0 0
  %791 = vmatpush1.bf16.msra.mxu0 0
  %792 = vmatprep.subr.bf16.mxu0 0
  %793 = vmatpush1.bf16.msra.mxu0 0
  %794 = vmatprep.subr.bf16.mxu0 0
  %795 = vmatpush1.bf16.msra.mxu0 0
  %796 = vmatprep.subr.bf16.mxu0 0
  %797 = vmatpush1.bf16.msra.mxu0 %v780
  %798 = vmatprep.subr.bf16.mxu0 0
  %799 = vmatpush2.bf16.msra.mxu0 0
  %800 = vmatprep.subr.bf16.mxu0 0
  %801 = vmatpush2.bf16.msra.mxu0 0
  %802 = vmatprep.subr.bf16.mxu0 0
  %803 = vmatpush2.bf16.msra.mxu0 0
  %804 = vmatprep.subr.bf16.mxu0 0
  %805 = vmatpush2.bf16.msra.mxu0 0
  %806 = vmatprep.subr.bf16.mxu0 0
  %807 = vmatpush2.bf16.msra.mxu0 0
  %808 = vmatprep.subr.bf16.mxu0 0
  %809 = vmatpush2.bf16.msra.mxu0 0
  %810 = vmatprep.subr.bf16.mxu0 0
  %811 = vmatpush2.bf16.msra.mxu0 0
  %812 = vmatprep.subr.bf16.mxu0 0
  %813 = vmatpush2.bf16.msra.mxu0 0
  %814 = vmatprep.mubr.bf16.mxu0 0
  %815 = vmatmul.mubr.bf16.gmra.mxu0 %v777
  %v816 = vpop.f32.mrf.mxu0
  %v817 = vadd.f32 %v773, %v816
  %v818 = vpop.f32.mrf.mxu0
  %v819 = vpop.f32.mrf.mxu0
  %v820 = vpop.f32.mrf.mxu0
  %821 = vdwg.mxu0
  %v822 = vmax.f32 %v817, 0.0
  %823 = vrot.lane.b32.xlu0 %v822, 9
  %v824 = vpop.permute.xlu0 %823
  %v825 = vmul.f32 %v824, %v227
  %v826 = vpack.c.bf16 %v825, %v825
  %827 = vrot.lane.b32.xlu0 %v822, 8
  %v828 = vpop.permute.xlu0 %827
  %v829 = vmul.f32 %v828, %v239
  %v830 = vpack.c.bf16 %v829, %v829
  %831 = vrot.lane.b32.xlu0 %v822, 7
  %v832 = vpop.permute.xlu0 %831
  %v833 = vmul.f32 %v832, %v251
  %v834 = vpack.c.bf16 %v833, %v833
  %835 = vrot.lane.b32.xlu0 %v822, 1
  %v836 = vpop.permute.xlu0 %835
  %v837 = vmul.f32 %v836, %v263
  %v838 = vpack.c.bf16 %v837, %v837
  %v839 = vpack.c.bf16 %v822, %v822
  %840 = vrot.lane.b32.xlu0 %v822, 127
  %v841 = vpop.permute.xlu0 %840
  %v842 = vmul.f32 %v841, %v276
  %v843 = vpack.c.bf16 %v842, %v842
  %844 = vrot.lane.b32.xlu0 %v822, 121
  %v845 = vpop.permute.xlu0 %844
  %v846 = vmul.f32 %v845, %v288
  %v847 = vpack.c.bf16 %v846, %v846
  %848 = vrot.lane.b32.xlu0 %v822, 120
  %v849 = vpop.permute.xlu0 %848
  %v850 = vmul.f32 %v849, %v300
  %v851 = vpack.c.bf16 %v850, %v850
  %852 = vrot.lane.b32.xlu0 %v822, 119
  %v853 = vpop.permute.xlu0 %852
  %v854 = vmul.f32 %v853, %v312
  %v855 = vpack.c.bf16 %v854, %v854
  %v856 = vld [vmem:[%s15] sm:$0x3]
  %s857 = scalar_lea.vmem %s15, 2
  %v858 = vld [vmem:[%s857] sm:$0x3]
  %v860 = vsel %vm775, %v858, 0
  %v863 = vsel %vm324, %v830, 0
  %865 = vmatprep.subr.bf16.mxu0 0
  %866 = vmatpush1.bf16.msra.mxu0 0
  %867 = vmatprep.subr.bf16.mxu0 0
  %868 = vmatpush1.bf16.msra.mxu0 0
  %869 = vmatprep.subr.bf16.mxu0 0
  %870 = vmatpush1.bf16.msra.mxu0 0
  %871 = vmatprep.subr.bf16.mxu0 0
  %872 = vmatpush1.bf16.msra.mxu0 0
  %873 = vmatprep.subr.bf16.mxu0 0
  %874 = vmatpush1.bf16.msra.mxu0 0
  %875 = vmatprep.subr.bf16.mxu0 0
  %876 = vmatpush1.bf16.msra.mxu0 0
  %877 = vmatprep.subr.bf16.mxu0 0
  %878 = vmatpush1.bf16.msra.mxu0 0
  %879 = vmatprep.subr.bf16.mxu0 0
  %880 = vmatpush1.bf16.msra.mxu0 %v863
  %881 = vmatprep.subr.bf16.mxu0 0
  %882 = vmatpush2.bf16.msra.mxu0 0
  %883 = vmatprep.subr.bf16.mxu0 0
  %884 = vmatpush2.bf16.msra.mxu0 0
  %885 = vmatprep.subr.bf16.mxu0 0
  %886 = vmatpush2.bf16.msra.mxu0 0
  %887 = vmatprep.subr.bf16.mxu0 0
  %888 = vmatpush2.bf16.msra.mxu0 0
  %889 = vmatprep.subr.bf16.mxu0 0
  %890 = vmatpush2.bf16.msra.mxu0 0
  %891 = vmatprep.subr.bf16.mxu0 0
  %892 = vmatpush2.bf16.msra.mxu0 0
  %893 = vmatprep.subr.bf16.mxu0 0
  %894 = vmatpush2.bf16.msra.mxu0 0
  %895 = vmatprep.subr.bf16.mxu0 0
  %896 = vmatpush2.bf16.msra.mxu0 0
  %897 = vmatprep.mubr.bf16.mxu0 0
  %898 = vmatmul.mubr.bf16.gmra.mxu0 %v860
  %v899 = vpop.f32.mrf.mxu0
  %v900 = vadd.f32 0.0, %v899
  %v901 = vpop.f32.mrf.mxu0
  %v902 = vpop.f32.mrf.mxu0
  %v903 = vpop.f32.mrf.mxu0
  %904 = vdwg.mxu0
  %v906 = vsel %vm775, %v856, 0
  %v909 = vsel %vm324, %v826, 0
  %911 = vmatprep.subr.bf16.mxu0 0
  %912 = vmatpush1.bf16.msra.mxu0 0
  %913 = vmatprep.subr.bf16.mxu0 0
  %914 = vmatpush1.bf16.msra.mxu0 0
  %915 = vmatprep.subr.bf16.mxu0 0
  %916 = vmatpush1.bf16.msra.mxu0 0
  %917 = vmatprep.subr.bf16.mxu0 0
  %918 = vmatpush1.bf16.msra.mxu0 0
  %919 = vmatprep.subr.bf16.mxu0 0
  %920 = vmatpush1.bf16.msra.mxu0 0
  %921 = vmatprep.subr.bf16.mxu0 0
  %922 = vmatpush1.bf16.msra.mxu0 0
  %923 = vmatprep.subr.bf16.mxu0 0
  %924 = vmatpush1.bf16.msra.mxu0 0
  %925 = vmatprep.subr.bf16.mxu0 0
  %926 = vmatpush1.bf16.msra.mxu0 %v909
  %927 = vmatprep.subr.bf16.mxu0 0
  %928 = vmatpush2.bf16.msra.mxu0 0
  %929 = vmatprep.subr.bf16.mxu0 0
  %930 = vmatpush2.bf16.msra.mxu0 0
  %931 = vmatprep.subr.bf16.mxu0 0
  %932 = vmatpush2.bf16.msra.mxu0 0
  %933 = vmatprep.subr.bf16.mxu0 0
  %934 = vmatpush2.bf16.msra.mxu0 0
  %935 = vmatprep.subr.bf16.mxu0 0
  %936 = vmatpush2.bf16.msra.mxu0 0
  %937 = vmatprep.subr.bf16.mxu0 0
  %938 = vmatpush2.bf16.msra.mxu0 0
  %939 = vmatprep.subr.bf16.mxu0 0
  %940 = vmatpush2.bf16.msra.mxu0 0
  %941 = vmatprep.subr.bf16.mxu0 0
  %942 = vmatpush2.bf16.msra.mxu0 0
  %943 = vmatprep.mubr.bf16.mxu0 0
  %944 = vmatmul.mubr.bf16.gmra.mxu0 %v906
  %v945 = vpop.f32.mrf.mxu0
  %v946 = vadd.f32 %v900, %v945
  %v947 = vpop.f32.mrf.mxu0
  %v948 = vpop.f32.mrf.mxu0
  %v949 = vpop.f32.mrf.mxu0
  %950 = vdwg.mxu0
  %s951 = scalar_lea.vmem %s15, 4
  %v952 = vld [vmem:[%s951] sm:$0x3]
  %v954 = vsel %vm775, %v952, 0
  %v957 = vsel %vm324, %v834, 0
  %959 = vmatprep.subr.bf16.mxu0 0
  %960 = vmatpush1.bf16.msra.mxu0 0
  %961 = vmatprep.subr.bf16.mxu0 0
  %962 = vmatpush1.bf16.msra.mxu0 0
  %963 = vmatprep.subr.bf16.mxu0 0
  %964 = vmatpush1.bf16.msra.mxu0 0
  %965 = vmatprep.subr.bf16.mxu0 0
  %966 = vmatpush1.bf16.msra.mxu0 0
  %967 = vmatprep.subr.bf16.mxu0 0
  %968 = vmatpush1.bf16.msra.mxu0 0
  %969 = vmatprep.subr.bf16.mxu0 0
  %970 = vmatpush1.bf16.msra.mxu0 0
  %971 = vmatprep.subr.bf16.mxu0 0
  %972 = vmatpush1.bf16.msra.mxu0 0
  %973 = vmatprep.subr.bf16.mxu0 0
  %974 = vmatpush1.bf16.msra.mxu0 %v957
  %975 = vmatprep.subr.bf16.mxu0 0
  %976 = vmatpush2.bf16.msra.mxu0 0
  %977 = vmatprep.subr.bf16.mxu0 0
  %978 = vmatpush2.bf16.msra.mxu0 0
  %979 = vmatprep.subr.bf16.mxu0 0
  %980 = vmatpush2.bf16.msra.mxu0 0
  %981 = vmatprep.subr.bf16.mxu0 0
  %982 = vmatpush2.bf16.msra.mxu0 0
  %983 = vmatprep.subr.bf16.mxu0 0
  %984 = vmatpush2.bf16.msra.mxu0 0
  %985 = vmatprep.subr.bf16.mxu0 0
  %986 = vmatpush2.bf16.msra.mxu0 0
  %987 = vmatprep.subr.bf16.mxu0 0
  %988 = vmatpush2.bf16.msra.mxu0 0
  %989 = vmatprep.subr.bf16.mxu0 0
  %990 = vmatpush2.bf16.msra.mxu0 0
  %991 = vmatprep.mubr.bf16.mxu0 0
  %992 = vmatmul.mubr.bf16.gmra.mxu0 %v954
  %v993 = vpop.f32.mrf.mxu0
  %v994 = vadd.f32 0.0, %v993
  %v995 = vpop.f32.mrf.mxu0
  %v996 = vpop.f32.mrf.mxu0
  %v997 = vpop.f32.mrf.mxu0
  %998 = vdwg.mxu0
  %v999 = vadd.f32 %v946, %v994
  %s1000 = scalar_lea.vmem %s15, 6
  %v1001 = vld [vmem:[%s1000] sm:$0x3]
  %v1003 = vsel %vm775, %v1001, 0
  %v1006 = vsel %vm324, %v838, 0
  %1008 = vmatprep.subr.bf16.mxu0 0
  %1009 = vmatpush1.bf16.msra.mxu0 0
  %1010 = vmatprep.subr.bf16.mxu0 0
  %1011 = vmatpush1.bf16.msra.mxu0 0
  %1012 = vmatprep.subr.bf16.mxu0 0
  %1013 = vmatpush1.bf16.msra.mxu0 0
  %1014 = vmatprep.subr.bf16.mxu0 0
  %1015 = vmatpush1.bf16.msra.mxu0 0
  %1016 = vmatprep.subr.bf16.mxu0 0
  %1017 = vmatpush1.bf16.msra.mxu0 0
  %1018 = vmatprep.subr.bf16.mxu0 0
  %1019 = vmatpush1.bf16.msra.mxu0 0
  %1020 = vmatprep.subr.bf16.mxu0 0
  %1021 = vmatpush1.bf16.msra.mxu0 0
  %1022 = vmatprep.subr.bf16.mxu0 0
  %1023 = vmatpush1.bf16.msra.mxu0 %v1006
  %1024 = vmatprep.subr.bf16.mxu0 0
  %1025 = vmatpush2.bf16.msra.mxu0 0
  %1026 = vmatprep.subr.bf16.mxu0 0
  %1027 = vmatpush2.bf16.msra.mxu0 0
  %1028 = vmatprep.subr.bf16.mxu0 0
  %1029 = vmatpush2.bf16.msra.mxu0 0
  %1030 = vmatprep.subr.bf16.mxu0 0
  %1031 = vmatpush2.bf16.msra.mxu0 0
  %1032 = vmatprep.subr.bf16.mxu0 0
  %1033 = vmatpush2.bf16.msra.mxu0 0
  %1034 = vmatprep.subr.bf16.mxu0 0
  %1035 = vmatpush2.bf16.msra.mxu0 0
  %1036 = vmatprep.subr.bf16.mxu0 0
  %1037 = vmatpush2.bf16.msra.mxu0 0
  %1038 = vmatprep.subr.bf16.mxu0 0
  %1039 = vmatpush2.bf16.msra.mxu0 0
  %1040 = vmatprep.mubr.bf16.mxu0 0
  %1041 = vmatmul.mubr.bf16.gmra.mxu0 %v1003
  %v1042 = vpop.f32.mrf.mxu0
  %v1043 = vadd.f32 0.0, %v1042
  %v1044 = vpop.f32.mrf.mxu0
  %v1045 = vpop.f32.mrf.mxu0
  %v1046 = vpop.f32.mrf.mxu0
  %1047 = vdwg.mxu0
  %v1048 = vadd.f32 %v999, %v1043
  %s1049 = scalar_lea.vmem %s15, 8
  %v1050 = vld [vmem:[%s1049] sm:$0x3]
  %v1052 = vsel %vm775, %v1050, 0
  %v1055 = vsel %vm324, %v839, 0
  %1057 = vmatprep.subr.bf16.mxu0 0
  %1058 = vmatpush1.bf16.msra.mxu0 0
  %1059 = vmatprep.subr.bf16.mxu0 0
  %1060 = vmatpush1.bf16.msra.mxu0 0
  %1061 = vmatprep.subr.bf16.mxu0 0
  %1062 = vmatpush1.bf16.msra.mxu0 0
  %1063 = vmatprep.subr.bf16.mxu0 0
  %1064 = vmatpush1.bf16.msra.mxu0 0
  %1065 = vmatprep.subr.bf16.mxu0 0
  %1066 = vmatpush1.bf16.msra.mxu0 0
  %1067 = vmatprep.subr.bf16.mxu0 0
  %1068 = vmatpush1.bf16.msra.mxu0 0
  %1069 = vmatprep.subr.bf16.mxu0 0
  %1070 = vmatpush1.bf16.msra.mxu0 0
  %1071 = vmatprep.subr.bf16.mxu0 0
  %1072 = vmatpush1.bf16.msra.mxu0 %v1055
  %1073 = vmatprep.subr.bf16.mxu0 0
  %1074 = vmatpush2.bf16.msra.mxu0 0
  %1075 = vmatprep.subr.bf16.mxu0 0
  %1076 = vmatpush2.bf16.msra.mxu0 0
  %1077 = vmatprep.subr.bf16.mxu0 0
  %1078 = vmatpush2.bf16.msra.mxu0 0
  %1079 = vmatprep.subr.bf16.mxu0 0
  %1080 = vmatpush2.bf16.msra.mxu0 0
  %1081 = vmatprep.subr.bf16.mxu0 0
  %1082 = vmatpush2.bf16.msra.mxu0 0
  %1083 = vmatprep.subr.bf16.mxu0 0
  %1084 = vmatpush2.bf16.msra.mxu0 0
  %1085 = vmatprep.subr.bf16.mxu0 0
  %1086 = vmatpush2.bf16.msra.mxu0 0
  %1087 = vmatprep.subr.bf16.mxu0 0
  %1088 = vmatpush2.bf16.msra.mxu0 0
  %1089 = vmatprep.mubr.bf16.mxu0 0
  %1090 = vmatmul.mubr.bf16.gmra.mxu0 %v1052
  %v1091 = vpop.f32.mrf.mxu0
  %v1092 = vadd.f32 0.0, %v1091
  %v1093 = vpop.f32.mrf.mxu0
  %v1094 = vpop.f32.mrf.mxu0
  %v1095 = vpop.f32.mrf.mxu0
  %1096 = vdwg.mxu0
  %v1097 = vadd.f32 %v1048, %v1092
  %s1098 = scalar_lea.vmem %s15, 10
  %v1099 = vld [vmem:[%s1098] sm:$0x3]
  %v1101 = vsel %vm775, %v1099, 0
  %v1104 = vsel %vm324, %v843, 0
  %1106 = vmatprep.subr.bf16.mxu0 0
  %1107 = vmatpush1.bf16.msra.mxu0 0
  %1108 = vmatprep.subr.bf16.mxu0 0
  %1109 = vmatpush1.bf16.msra.mxu0 0
  %1110 = vmatprep.subr.bf16.mxu0 0
  %1111 = vmatpush1.bf16.msra.mxu0 0
  %1112 = vmatprep.subr.bf16.mxu0 0
  %1113 = vmatpush1.bf16.msra.mxu0 0
  %1114 = vmatprep.subr.bf16.mxu0 0
  %1115 = vmatpush1.bf16.msra.mxu0 0
  %1116 = vmatprep.subr.bf16.mxu0 0
  %1117 = vmatpush1.bf16.msra.mxu0 0
  %1118 = vmatprep.subr.bf16.mxu0 0
  %1119 = vmatpush1.bf16.msra.mxu0 0
  %1120 = vmatprep.subr.bf16.mxu0 0
  %1121 = vmatpush1.bf16.msra.mxu0 %v1104
  %1122 = vmatprep.subr.bf16.mxu0 0
  %1123 = vmatpush2.bf16.msra.mxu0 0
  %1124 = vmatprep.subr.bf16.mxu0 0
  %1125 = vmatpush2.bf16.msra.mxu0 0
  %1126 = vmatprep.subr.bf16.mxu0 0
  %1127 = vmatpush2.bf16.msra.mxu0 0
  %1128 = vmatprep.subr.bf16.mxu0 0
  %1129 = vmatpush2.bf16.msra.mxu0 0
  %1130 = vmatprep.subr.bf16.mxu0 0
  %1131 = vmatpush2.bf16.msra.mxu0 0
  %1132 = vmatprep.subr.bf16.mxu0 0
  %1133 = vmatpush2.bf16.msra.mxu0 0
  %1134 = vmatprep.subr.bf16.mxu0 0
  %1135 = vmatpush2.bf16.msra.mxu0 0
  %1136 = vmatprep.subr.bf16.mxu0 0
  %1137 = vmatpush2.bf16.msra.mxu0 0
  %1138 = vmatprep.mubr.bf16.mxu0 0
  %1139 = vmatmul.mubr.bf16.gmra.mxu0 %v1101
  %v1140 = vpop.f32.mrf.mxu0
  %v1141 = vadd.f32 0.0, %v1140
  %v1142 = vpop.f32.mrf.mxu0
  %v1143 = vpop.f32.mrf.mxu0
  %v1144 = vpop.f32.mrf.mxu0
  %1145 = vdwg.mxu0
  %v1146 = vadd.f32 %v1097, %v1141
  %s1147 = scalar_lea.vmem %s15, 12
  %v1148 = vld [vmem:[%s1147] sm:$0x3]
  %v1150 = vsel %vm775, %v1148, 0
  %v1153 = vsel %vm324, %v847, 0
  %1155 = vmatprep.subr.bf16.mxu0 0
  %1156 = vmatpush1.bf16.msra.mxu0 0
  %1157 = vmatprep.subr.bf16.mxu0 0
  %1158 = vmatpush1.bf16.msra.mxu0 0
  %1159 = vmatprep.subr.bf16.mxu0 0
  %1160 = vmatpush1.bf16.msra.mxu0 0
  %1161 = vmatprep.subr.bf16.mxu0 0
  %1162 = vmatpush1.bf16.msra.mxu0 0
  %1163 = vmatprep.subr.bf16.mxu0 0
  %1164 = vmatpush1.bf16.msra.mxu0 0
  %1165 = vmatprep.subr.bf16.mxu0 0
  %1166 = vmatpush1.bf16.msra.mxu0 0
  %1167 = vmatprep.subr.bf16.mxu0 0
  %1168 = vmatpush1.bf16.msra.mxu0 0
  %1169 = vmatprep.subr.bf16.mxu0 0
  %1170 = vmatpush1.bf16.msra.mxu0 %v1153
  %1171 = vmatprep.subr.bf16.mxu0 0
  %1172 = vmatpush2.bf16.msra.mxu0 0
  %1173 = vmatprep.subr.bf16.mxu0 0
  %1174 = vmatpush2.bf16.msra.mxu0 0
  %1175 = vmatprep.subr.bf16.mxu0 0
  %1176 = vmatpush2.bf16.msra.mxu0 0
  %1177 = vmatprep.subr.bf16.mxu0 0
  %1178 = vmatpush2.bf16.msra.mxu0 0
  %1179 = vmatprep.subr.bf16.mxu0 0
  %1180 = vmatpush2.bf16.msra.mxu0 0
  %1181 = vmatprep.subr.bf16.mxu0 0
  %1182 = vmatpush2.bf16.msra.mxu0 0
  %1183 = vmatprep.subr.bf16.mxu0 0
  %1184 = vmatpush2.bf16.msra.mxu0 0
  %1185 = vmatprep.subr.bf16.mxu0 0
  %1186 = vmatpush2.bf16.msra.mxu0 0
  %1187 = vmatprep.mubr.bf16.mxu0 0
  %1188 = vmatmul.mubr.bf16.gmra.mxu0 %v1150
  %v1189 = vpop.f32.mrf.mxu0
  %v1190 = vadd.f32 0.0, %v1189
  %v1191 = vpop.f32.mrf.mxu0
  %v1192 = vpop.f32.mrf.mxu0
  %v1193 = vpop.f32.mrf.mxu0
  %1194 = vdwg.mxu0
  %v1195 = vadd.f32 %v1146, %v1190
  %s1196 = scalar_lea.vmem %s15, 14
  %v1197 = vld [vmem:[%s1196] sm:$0x3]
  %v1199 = vsel %vm775, %v1197, 0
  %v1202 = vsel %vm324, %v851, 0
  %1204 = vmatprep.subr.bf16.mxu0 0
  %1205 = vmatpush1.bf16.msra.mxu0 0
  %1206 = vmatprep.subr.bf16.mxu0 0
  %1207 = vmatpush1.bf16.msra.mxu0 0
  %1208 = vmatprep.subr.bf16.mxu0 0
  %1209 = vmatpush1.bf16.msra.mxu0 0
  %1210 = vmatprep.subr.bf16.mxu0 0
  %1211 = vmatpush1.bf16.msra.mxu0 0
  %1212 = vmatprep.subr.bf16.mxu0 0
  %1213 = vmatpush1.bf16.msra.mxu0 0
  %1214 = vmatprep.subr.bf16.mxu0 0
  %1215 = vmatpush1.bf16.msra.mxu0 0
  %1216 = vmatprep.subr.bf16.mxu0 0
  %1217 = vmatpush1.bf16.msra.mxu0 0
  %1218 = vmatprep.subr.bf16.mxu0 0
  %1219 = vmatpush1.bf16.msra.mxu0 %v1202
  %1220 = vmatprep.subr.bf16.mxu0 0
  %1221 = vmatpush2.bf16.msra.mxu0 0
  %1222 = vmatprep.subr.bf16.mxu0 0
  %1223 = vmatpush2.bf16.msra.mxu0 0
  %1224 = vmatprep.subr.bf16.mxu0 0
  %1225 = vmatpush2.bf16.msra.mxu0 0
  %1226 = vmatprep.subr.bf16.mxu0 0
  %1227 = vmatpush2.bf16.msra.mxu0 0
  %1228 = vmatprep.subr.bf16.mxu0 0
  %1229 = vmatpush2.bf16.msra.mxu0 0
  %1230 = vmatprep.subr.bf16.mxu0 0
  %1231 = vmatpush2.bf16.msra.mxu0 0
  %1232 = vmatprep.subr.bf16.mxu0 0
  %1233 = vmatpush2.bf16.msra.mxu0 0
  %1234 = vmatprep.subr.bf16.mxu0 0
  %1235 = vmatpush2.bf16.msra.mxu0 0
  %1236 = vmatprep.mubr.bf16.mxu0 0
  %1237 = vmatmul.mubr.bf16.gmra.mxu0 %v1199
  %v1238 = vpop.f32.mrf.mxu0
  %v1239 = vadd.f32 0.0, %v1238
  %v1240 = vpop.f32.mrf.mxu0
  %v1241 = vpop.f32.mrf.mxu0
  %v1242 = vpop.f32.mrf.mxu0
  %1243 = vdwg.mxu0
  %v1244 = vadd.f32 %v1195, %v1239
  %s1245 = scalar_lea.vmem %s15, 16
  %v1246 = vld [vmem:[%s1245] sm:$0x3]
  %v1248 = vsel %vm775, %v1246, 0
  %v1251 = vsel %vm324, %v855, 0
  %1253 = vmatprep.subr.bf16.mxu0 0
  %1254 = vmatpush1.bf16.msra.mxu0 0
  %1255 = vmatprep.subr.bf16.mxu0 0
  %1256 = vmatpush1.bf16.msra.mxu0 0
  %1257 = vmatprep.subr.bf16.mxu0 0
  %1258 = vmatpush1.bf16.msra.mxu0 0
  %1259 = vmatprep.subr.bf16.mxu0 0
  %1260 = vmatpush1.bf16.msra.mxu0 0
  %1261 = vmatprep.subr.bf16.mxu0 0
  %1262 = vmatpush1.bf16.msra.mxu0 0
  %1263 = vmatprep.subr.bf16.mxu0 0
  %1264 = vmatpush1.bf16.msra.mxu0 0
  %1265 = vmatprep.subr.bf16.mxu0 0
  %1266 = vmatpush1.bf16.msra.mxu0 0
  %1267 = vmatprep.subr.bf16.mxu0 0
  %1268 = vmatpush1.bf16.msra.mxu0 %v1251
  %1269 = vmatprep.subr.bf16.mxu0 0
  %1270 = vmatpush2.bf16.msra.mxu0 0
  %1271 = vmatprep.subr.bf16.mxu0 0
  %1272 = vmatpush2.bf16.msra.mxu0 0
  %1273 = vmatprep.subr.bf16.mxu0 0
  %1274 = vmatpush2.bf16.msra.mxu0 0
  %1275 = vmatprep.subr.bf16.mxu0 0
  %1276 = vmatpush2.bf16.msra.mxu0 0
  %1277 = vmatprep.subr.bf16.mxu0 0
  %1278 = vmatpush2.bf16.msra.mxu0 0
  %1279 = vmatprep.subr.bf16.mxu0 0
  %1280 = vmatpush2.bf16.msra.mxu0 0
  %1281 = vmatprep.subr.bf16.mxu0 0
  %1282 = vmatpush2.bf16.msra.mxu0 0
  %1283 = vmatprep.subr.bf16.mxu0 0
  %1284 = vmatpush2.bf16.msra.mxu0 0
  %1285 = vmatprep.mubr.bf16.mxu0 0
  %1286 = vmatmul.mubr.bf16.gmra.mxu0 %v1248
  %v1287 = vpop.f32.mrf.mxu0
  %v1288 = vadd.f32 0.0, %v1287
  %v1289 = vpop.f32.mrf.mxu0
  %v1290 = vpop.f32.mrf.mxu0
  %v1291 = vpop.f32.mrf.mxu0
  %1292 = vdwg.mxu0
  %v1293 = vadd.f32 %v1244, %v1288
  %v1294 = vld [vmem:[%s17] sm:$0xf]
  %1296 = vset.pattern.permute.xlu0 0
  %1297 = vperm.xlu0 %1296, %v1294
  %v1298 = vpop.permute.xlu0 %1297
  %v1300 = vadd.f32 %v1293, %v1298
  %v1301 = vmax.f32 %v1300, 0.0
  %v1302 = vld [vmem:[%s19] sm:$0xf]
  %v1303 = vld [vmem:[%s19 + $0x4] sm:$0xf]
  %v1304 = vpack.c.bf16 %v1301, %v1301
  %v1305 = vld [vmem:[%s21] sm:$0xff]
  %v1306 = vld [vmem:[%s21 + $0x8] sm:$0xff]
  %1308 = vset.pattern.permute.xlu0 0
  %1309 = vperm.xlu0 %1308, %v1305
  %v1310 = vpop.permute.xlu0 %1309
  %1313 = vset.pattern.permute.xlu0 0
  %1314 = vperm.xlu0 %1313, %v1306
  %v1315 = vpop.permute.xlu0 %1314
  %v1319 = vunpack.c.l.b16 %v1302
  %v1320 = vunpack.c.l.b16 %v1303
  %v1321 = vpack.c.b16 %v1320, %v1319
  %v1323 = vsel %vm775, %v1321, 0
  %v1326 = vsel %vm324, %v1304, 0
  %1328 = vmatprep.subr.bf16.mxu0 0
  %1329 = vmatpush1.bf16.msra.mxu0 0
  %1330 = vmatprep.subr.bf16.mxu0 0
  %1331 = vmatpush1.bf16.msra.mxu0 0
  %1332 = vmatprep.subr.bf16.mxu0 0
  %1333 = vmatpush1.bf16.msra.mxu0 0
  %1334 = vmatprep.subr.bf16.mxu0 0
  %1335 = vmatpush1.bf16.msra.mxu0 0
  %1336 = vmatprep.subr.bf16.mxu0 0
  %1337 = vmatpush1.bf16.msra.mxu0 0
  %1338 = vmatprep.subr.bf16.mxu0 0
  %1339 = vmatpush1.bf16.msra.mxu0 0
  %1340 = vmatprep.subr.bf16.mxu0 0
  %1341 = vmatpush1.bf16.msra.mxu0 0
  %1342 = vmatprep.subr.bf16.mxu0 0
  %1343 = vmatpush1.bf16.msra.mxu0 %v1326
  %1344 = vmatprep.subr.bf16.mxu0 0
  %1345 = vmatpush2.bf16.msra.mxu0 0
  %1346 = vmatprep.subr.bf16.mxu0 0
  %1347 = vmatpush2.bf16.msra.mxu0 0
  %1348 = vmatprep.subr.bf16.mxu0 0
  %1349 = vmatpush2.bf16.msra.mxu0 0
  %1350 = vmatprep.subr.bf16.mxu0 0
  %1351 = vmatpush2.bf16.msra.mxu0 0
  %1352 = vmatprep.subr.bf16.mxu0 0
  %1353 = vmatpush2.bf16.msra.mxu0 0
  %1354 = vmatprep.subr.bf16.mxu0 0
  %1355 = vmatpush2.bf16.msra.mxu0 0
  %1356 = vmatprep.subr.bf16.mxu0 0
  %1357 = vmatpush2.bf16.msra.mxu0 0
  %1358 = vmatprep.subr.bf16.mxu0 0
  %1359 = vmatpush2.bf16.msra.mxu0 0
  %1360 = vmatprep.mubr.bf16.mxu0 0
  %1361 = vmatmul.mubr.bf16.gmra.mxu0 %v1323
  %v1362 = vpop.f32.mrf.mxu0
  %v1363 = vadd.f32 %v1310, %v1362
  %v1364 = vpop.f32.mrf.mxu0
  %v1365 = vpop.f32.mrf.mxu0
  %v1366 = vadd.f32 %v1315, %v1365
  %v1367 = vpop.f32.mrf.mxu0
  %1368 = vdwg.mxu0
  %v1369 = vld [vmem:[%s23] sm:$0xf]
  %v1370 = vld [vmem:[%s23 + $0x4] sm:$0xf]
  %v1371 = vld [vmem:[%s25] sm:$0xff]
  %v1372 = vld [vmem:[%s25 + $0x8] sm:$0xff]
  %1374 = vset.pattern.permute.xlu0 0
  %1375 = vperm.xlu0 %1374, %v1371
  %v1376 = vpop.permute.xlu0 %1375
  %1379 = vset.pattern.permute.xlu0 0
  %1380 = vperm.xlu0 %1379, %v1372
  %v1381 = vpop.permute.xlu0 %1380
  %v1385 = vunpack.c.l.b16 %v1369
  %v1386 = vunpack.c.l.b16 %v1370
  %v1387 = vpack.c.b16 %v1386, %v1385
  %v1389 = vsel %vm775, %v1387, 0
  %1391 = vmatprep.subr.bf16.mxu0 0
  %1392 = vmatpush1.bf16.msra.mxu0 0
  %1393 = vmatprep.subr.bf16.mxu0 0
  %1394 = vmatpush1.bf16.msra.mxu0 0
  %1395 = vmatprep.subr.bf16.mxu0 0
  %1396 = vmatpush1.bf16.msra.mxu0 0
  %1397 = vmatprep.subr.bf16.mxu0 0
  %1398 = vmatpush1.bf16.msra.mxu0 0
  %1399 = vmatprep.subr.bf16.mxu0 0
  %1400 = vmatpush1.bf16.msra.mxu0 0
  %1401 = vmatprep.subr.bf16.mxu0 0
  %1402 = vmatpush1.bf16.msra.mxu0 0
  %1403 = vmatprep.subr.bf16.mxu0 0
  %1404 = vmatpush1.bf16.msra.mxu0 0
  %1405 = vmatprep.subr.bf16.mxu0 0
  %1406 = vmatpush1.bf16.msra.mxu0 %v780
  %1407 = vmatprep.subr.bf16.mxu0 0
  %1408 = vmatpush2.bf16.msra.mxu0 0
  %1409 = vmatprep.subr.bf16.mxu0 0
  %1410 = vmatpush2.bf16.msra.mxu0 0
  %1411 = vmatprep.subr.bf16.mxu0 0
  %1412 = vmatpush2.bf16.msra.mxu0 0
  %1413 = vmatprep.subr.bf16.mxu0 0
  %1414 = vmatpush2.bf16.msra.mxu0 0
  %1415 = vmatprep.subr.bf16.mxu0 0
  %1416 = vmatpush2.bf16.msra.mxu0 0
  %1417 = vmatprep.subr.bf16.mxu0 0
  %1418 = vmatpush2.bf16.msra.mxu0 0
  %1419 = vmatprep.subr.bf16.mxu0 0
  %1420 = vmatpush2.bf16.msra.mxu0 0
  %1421 = vmatprep.subr.bf16.mxu0 0
  %1422 = vmatpush2.bf16.msra.mxu0 0
  %1423 = vmatprep.mubr.bf16.mxu0 0
  %1424 = vmatmul.mubr.bf16.gmra.mxu0 %v1389
  %v1425 = vpop.f32.mrf.mxu0
  %v1426 = vadd.f32 %v1376, %v1425
  %v1427 = vpop.f32.mrf.mxu0
  %v1428 = vpop.f32.mrf.mxu0
  %v1429 = vadd.f32 %v1381, %v1428
  %v1430 = vpop.f32.mrf.mxu0
  %1431 = vdwg.mxu0
  %v1432 = vadd.f32 %v1363, %v1426
  %v1433 = vadd.f32 %v1366, %v1429
  %1434 = vst [vmem:[#allocation2] sm:$0xff] %v1432
  %1435 = vst [vmem:[#allocation2 + $0x8] sm:$0xff] %v1433
  %v1436 = vld [vmem:[#allocation2] sm:$0xff]
  %v1437 = vld [vmem:[#allocation2 + $0x8] sm:$0xff]
  %v1438 = vld [vmem:[%s27] sm:$0xff]
  %v1439 = vld [vmem:[%s27 + $0x8] sm:$0xff]
  %1441 = vset.pattern.permute.xlu0 0
  %1442 = vperm.xlu0 %1441, %v1438
  %v1443 = vpop.permute.xlu0 %1442
  %1446 = vset.pattern.permute.xlu0 0
  %1447 = vperm.xlu0 %1446, %v1439
  %v1448 = vpop.permute.xlu0 %1447
  %v1450 = vmul.f32 %v1436, %v1443
  %v1451 = vmul.f32 %v1437, %v1448
  %v1452 = vld [vmem:[%s29] sm:$0xff]
  %v1453 = vld [vmem:[%s29 + $0x8] sm:$0xff]
  %1455 = vset.pattern.permute.xlu0 0
  %1456 = vperm.xlu0 %1455, %v1452
  %v1457 = vpop.permute.xlu0 %1456
  %1460 = vset.pattern.permute.xlu0 0
  %1461 = vperm.xlu0 %1460, %v1453
  %v1462 = vpop.permute.xlu0 %1461
  %v1464 = vadd.f32 %v1450, %v1457
  %v1465 = vadd.f32 %v1451, %v1462
  %v1466 = vmax.f32 %v1464, 0.0
  %v1467 = vmax.f32 %v1465, 0.0
  %v1468 = vld [vmem:[%s31] sm:$0x3]
  %v1469 = vpack.c.bf16 %v1467, %v1466
  %v1470 = vld [vmem:[%s33] sm:$0xf]
  %1472 = vset.pattern.permute.xlu0 0
  %1473 = vperm.xlu0 %1472, %v1470
  %v1474 = vpop.permute.xlu0 %1473
  %vm1476 = vcmask 130048
  %v1478 = vsel %vm1476, %v1468, 0
  %1480 = vmatprep.subr.bf16.mxu0 0
  %1481 = vmatpush1.bf16.msra.mxu0 0
  %1482 = vmatprep.subr.bf16.mxu0 0
  %1483 = vmatpush1.bf16.msra.mxu0 0
  %1484 = vmatprep.subr.bf16.mxu0 0
  %1485 = vmatpush1.bf16.msra.mxu0 0
  %1486 = vmatprep.subr.bf16.mxu0 0
  %1487 = vmatpush1.bf16.msra.mxu0 0
  %1488 = vmatprep.subr.bf16.mxu0 0
  %1489 = vmatpush1.bf16.msra.mxu0 0
  %1490 = vmatprep.subr.bf16.mxu0 0
  %1491 = vmatpush1.bf16.msra.mxu0 0
  %1492 = vmatprep.subr.bf16.mxu0 0
  %1493 = vmatpush1.bf16.msra.mxu0 0
  %1494 = vmatprep.subr.bf16.mxu0 0
  %1495 = vmatpush1.bf16.msra.mxu0 %v1469
  %1496 = vmatprep.subr.bf16.mxu0 0
  %1497 = vmatpush2.bf16.msra.mxu0 0
  %1498 = vmatprep.subr.bf16.mxu0 0
  %1499 = vmatpush2.bf16.msra.mxu0 0
  %1500 = vmatprep.subr.bf16.mxu0 0
  %1501 = vmatpush2.bf16.msra.mxu0 0
  %1502 = vmatprep.subr.bf16.mxu0 0
  %1503 = vmatpush2.bf16.msra.mxu0 0
  %1504 = vmatprep.subr.bf16.mxu0 0
  %1505 = vmatpush2.bf16.msra.mxu0 0
  %1506 = vmatprep.subr.bf16.mxu0 0
  %1507 = vmatpush2.bf16.msra.mxu0 0
  %1508 = vmatprep.subr.bf16.mxu0 0
  %1509 = vmatpush2.bf16.msra.mxu0 0
  %1510 = vmatprep.subr.bf16.mxu0 0
  %1511 = vmatpush2.bf16.msra.mxu0 0
  %1512 = vmatprep.mubr.bf16.mxu0 0
  %1513 = vmatmul.mubr.bf16.gmra.mxu0 %v1478
  %v1514 = vpop.f32.mrf.mxu0
  %v1515 = vadd.f32 %v1474, %v1514
  %v1516 = vpop.f32.mrf.mxu0
  %v1517 = vpop.f32.mrf.mxu0
  %v1518 = vpop.f32.mrf.mxu0
  %1519 = vdwg.mxu0
  %v1520 = vmax.f32 %v1515, 0.0
  %1521 = vrot.lane.b32.xlu0 %v1520, 9
  %v1522 = vpop.permute.xlu0 %1521
  %v1523 = vld [vmem:[%s3] sm:$0x1]
  %v1525 = vlaneseq
  %v1526 = vshrl.u32 %v1525, 7
  %v1527 = vsub.s32 0, %v1526
  %v1528 = vrot.slane %v1523, %v1527
  %v1530 = vmul.f32 %v1522, %v1528
  %v1531 = vpack.c.bf16 %v1530, %v1530
  %1532 = vrot.lane.b32.xlu0 %v1520, 8
  %v1533 = vpop.permute.xlu0 %1532
  %v1534 = vld [vmem:[%s233] sm:$0x1]
  %v1536 = vlaneseq
  %v1537 = vshrl.u32 %v1536, 7
  %v1538 = vsub.s32 0, %v1537
  %v1539 = vrot.slane %v1534, %v1538
  %v1541 = vmul.f32 %v1533, %v1539
  %v1542 = vpack.c.bf16 %v1541, %v1541
  %1543 = vrot.lane.b32.xlu0 %v1520, 7
  %v1544 = vpop.permute.xlu0 %1543
  %v1545 = vld [vmem:[%s245] sm:$0x1]
  %v1547 = vlaneseq
  %v1548 = vshrl.u32 %v1547, 7
  %v1549 = vsub.s32 0, %v1548
  %v1550 = vrot.slane %v1545, %v1549
  %v1552 = vmul.f32 %v1544, %v1550
  %v1553 = vpack.c.bf16 %v1552, %v1552
  %1554 = vrot.lane.b32.xlu0 %v1520, 1
  %v1555 = vpop.permute.xlu0 %1554
  %v1556 = vld [vmem:[%s257] sm:$0x1]
  %v1558 = vlaneseq
  %v1559 = vshrl.u32 %v1558, 7
  %v1560 = vsub.s32 0, %v1559
  %v1561 = vrot.slane %v1556, %v1560
  %v1563 = vmul.f32 %v1555, %v1561
  %v1564 = vpack.c.bf16 %v1563, %v1563
  %v1565 = vpack.c.bf16 %v1520, %v1520
  %1566 = vrot.lane.b32.xlu0 %v1520, 127
  %v1567 = vpop.permute.xlu0 %1566
  %v1568 = vld [vmem:[%s270] sm:$0x1]
  %v1570 = vlaneseq
  %v1571 = vshrl.u32 %v1570, 7
  %v1572 = vsub.s32 0, %v1571
  %v1573 = vrot.slane %v1568, %v1572
  %v1575 = vmul.f32 %v1567, %v1573
  %v1576 = vpack.c.bf16 %v1575, %v1575
  %1577 = vrot.lane.b32.xlu0 %v1520, 121
  %v1578 = vpop.permute.xlu0 %1577
  %v1579 = vld [vmem:[%s282] sm:$0x1]
  %v1581 = vlaneseq
  %v1582 = vshrl.u32 %v1581, 7
  %v1583 = vsub.s32 0, %v1582
  %v1584 = vrot.slane %v1579, %v1583
  %v1586 = vmul.f32 %v1578, %v1584
  %v1587 = vpack.c.bf16 %v1586, %v1586
  %1588 = vrot.lane.b32.xlu0 %v1520, 120
  %v1589 = vpop.permute.xlu0 %1588
  %v1590 = vld [vmem:[%s294] sm:$0x1]
  %v1592 = vlaneseq
  %v1593 = vshrl.u32 %v1592, 7
  %v1594 = vsub.s32 0, %v1593
  %v1595 = vrot.slane %v1590, %v1594
  %v1597 = vmul.f32 %v1589, %v1595
  %v1598 = vpack.c.bf16 %v1597, %v1597
  %1599 = vrot.lane.b32.xlu0 %v1520, 119
  %v1600 = vpop.permute.xlu0 %1599
  %v1601 = vld [vmem:[%s306] sm:$0x1]
  %v1603 = vlaneseq
  %v1604 = vshrl.u32 %v1603, 7
  %v1605 = vsub.s32 0, %v1604
  %v1606 = vrot.slane %v1601, %v1605
  %v1608 = vmul.f32 %v1600, %v1606
  %v1609 = vpack.c.bf16 %v1608, %v1608
  %v1610 = vld [vmem:[%s35] sm:$0x3]
  %s1611 = scalar_lea.vmem %s35, 2
  %v1612 = vld [vmem:[%s1611] sm:$0x3]
  %v1614 = vsel %vm775, %v1612, 0
  %v1617 = vsel %vm324, %v1542, 0
  %1619 = vmatprep.subr.bf16.mxu0 0
  %1620 = vmatpush1.bf16.msra.mxu0 0
  %1621 = vmatprep.subr.bf16.mxu0 0
  %1622 = vmatpush1.bf16.msra.mxu0 0
  %1623 = vmatprep.subr.bf16.mxu0 0
  %1624 = vmatpush1.bf16.msra.mxu0 0
  %1625 = vmatprep.subr.bf16.mxu0 0
  %1626 = vmatpush1.bf16.msra.mxu0 0
  %1627 = vmatprep.subr.bf16.mxu0 0
  %1628 = vmatpush1.bf16.msra.mxu0 0
  %1629 = vmatprep.subr.bf16.mxu0 0
  %1630 = vmatpush1.bf16.msra.mxu0 0
  %1631 = vmatprep.subr.bf16.mxu0 0
  %1632 = vmatpush1.bf16.msra.mxu0 0
  %1633 = vmatprep.subr.bf16.mxu0 0
  %1634 = vmatpush1.bf16.msra.mxu0 %v1617
  %1635 = vmatprep.subr.bf16.mxu0 0
  %1636 = vmatpush2.bf16.msra.mxu0 0
  %1637 = vmatprep.subr.bf16.mxu0 0
  %1638 = vmatpush2.bf16.msra.mxu0 0
  %1639 = vmatprep.subr.bf16.mxu0 0
  %1640 = vmatpush2.bf16.msra.mxu0 0
  %1641 = vmatprep.subr.bf16.mxu0 0
  %1642 = vmatpush2.bf16.msra.mxu0 0
  %1643 = vmatprep.subr.bf16.mxu0 0
  %1644 = vmatpush2.bf16.msra.mxu0 0
  %1645 = vmatprep.subr.bf16.mxu0 0
  %1646 = vmatpush2.bf16.msra.mxu0 0
  %1647 = vmatprep.subr.bf16.mxu0 0
  %1648 = vmatpush2.bf16.msra.mxu0 0
  %1649 = vmatprep.subr.bf16.mxu0 0
  %1650 = vmatpush2.bf16.msra.mxu0 0
  %1651 = vmatprep.mubr.bf16.mxu0 0
  %1652 = vmatmul.mubr.bf16.gmra.mxu0 %v1614
  %v1653 = vpop.f32.mrf.mxu0
  %v1654 = vadd.f32 0.0, %v1653
  %v1655 = vpop.f32.mrf.mxu0
  %v1656 = vpop.f32.mrf.mxu0
  %v1657 = vpop.f32.mrf.mxu0
  %1658 = vdwg.mxu0
  %v1660 = vsel %vm775, %v1610, 0
  %v1663 = vsel %vm324, %v1531, 0
  %1665 = vmatprep.subr.bf16.mxu0 0
  %1666 = vmatpush1.bf16.msra.mxu0 0
  %1667 = vmatprep.subr.bf16.mxu0 0
  %1668 = vmatpush1.bf16.msra.mxu0 0
  %1669 = vmatprep.subr.bf16.mxu0 0
  %1670 = vmatpush1.bf16.msra.mxu0 0
  %1671 = vmatprep.subr.bf16.mxu0 0
  %1672 = vmatpush1.bf16.msra.mxu0 0
  %1673 = vmatprep.subr.bf16.mxu0 0
  %1674 = vmatpush1.bf16.msra.mxu0 0
  %1675 = vmatprep.subr.bf16.mxu0 0
  %1676 = vmatpush1.bf16.msra.mxu0 0
  %1677 = vmatprep.subr.bf16.mxu0 0
  %1678 = vmatpush1.bf16.msra.mxu0 0
  %1679 = vmatprep.subr.bf16.mxu0 0
  %1680 = vmatpush1.bf16.msra.mxu0 %v1663
  %1681 = vmatprep.subr.bf16.mxu0 0
  %1682 = vmatpush2.bf16.msra.mxu0 0
  %1683 = vmatprep.subr.bf16.mxu0 0
  %1684 = vmatpush2.bf16.msra.mxu0 0
  %1685 = vmatprep.subr.bf16.mxu0 0
  %1686 = vmatpush2.bf16.msra.mxu0 0
  %1687 = vmatprep.subr.bf16.mxu0 0
  %1688 = vmatpush2.bf16.msra.mxu0 0
  %1689 = vmatprep.subr.bf16.mxu0 0
  %1690 = vmatpush2.bf16.msra.mxu0 0
  %1691 = vmatprep.subr.bf16.mxu0 0
  %1692 = vmatpush2.bf16.msra.mxu0 0
  %1693 = vmatprep.subr.bf16.mxu0 0
  %1694 = vmatpush2.bf16.msra.mxu0 0
  %1695 = vmatprep.subr.bf16.mxu0 0
  %1696 = vmatpush2.bf16.msra.mxu0 0
  %1697 = vmatprep.mubr.bf16.mxu0 0
  %1698 = vmatmul.mubr.bf16.gmra.mxu0 %v1660
  %v1699 = vpop.f32.mrf.mxu0
  %v1700 = vadd.f32 %v1654, %v1699
  %v1701 = vpop.f32.mrf.mxu0
  %v1702 = vpop.f32.mrf.mxu0
  %v1703 = vpop.f32.mrf.mxu0
  %1704 = vdwg.mxu0
  %s1705 = scalar_lea.vmem %s35, 4
  %v1706 = vld [vmem:[%s1705] sm:$0x3]
  %v1708 = vsel %vm775, %v1706, 0
  %v1711 = vsel %vm324, %v1553, 0
  %1713 = vmatprep.subr.bf16.mxu0 0
  %1714 = vmatpush1.bf16.msra.mxu0 0
  %1715 = vmatprep.subr.bf16.mxu0 0
  %1716 = vmatpush1.bf16.msra.mxu0 0
  %1717 = vmatprep.subr.bf16.mxu0 0
  %1718 = vmatpush1.bf16.msra.mxu0 0
  %1719 = vmatprep.subr.bf16.mxu0 0
  %1720 = vmatpush1.bf16.msra.mxu0 0
  %1721 = vmatprep.subr.bf16.mxu0 0
  %1722 = vmatpush1.bf16.msra.mxu0 0
  %1723 = vmatprep.subr.bf16.mxu0 0
  %1724 = vmatpush1.bf16.msra.mxu0 0
  %1725 = vmatprep.subr.bf16.mxu0 0
  %1726 = vmatpush1.bf16.msra.mxu0 0
  %1727 = vmatprep.subr.bf16.mxu0 0
  %1728 = vmatpush1.bf16.msra.mxu0 %v1711
  %1729 = vmatprep.subr.bf16.mxu0 0
  %1730 = vmatpush2.bf16.msra.mxu0 0
  %1731 = vmatprep.subr.bf16.mxu0 0
  %1732 = vmatpush2.bf16.msra.mxu0 0
  %1733 = vmatprep.subr.bf16.mxu0 0
  %1734 = vmatpush2.bf16.msra.mxu0 0
  %1735 = vmatprep.subr.bf16.mxu0 0
  %1736 = vmatpush2.bf16.msra.mxu0 0
  %1737 = vmatprep.subr.bf16.mxu0 0
  %1738 = vmatpush2.bf16.msra.mxu0 0
  %1739 = vmatprep.subr.bf16.mxu0 0
  %1740 = vmatpush2.bf16.msra.mxu0 0
  %1741 = vmatprep.subr.bf16.mxu0 0
  %1742 = vmatpush2.bf16.msra.mxu0 0
  %1743 = vmatprep.subr.bf16.mxu0 0
  %1744 = vmatpush2.bf16.msra.mxu0 0
  %1745 = vmatprep.mubr.bf16.mxu0 0
  %1746 = vmatmul.mubr.bf16.gmra.mxu0 %v1708
  %v1747 = vpop.f32.mrf.mxu0
  %v1748 = vadd.f32 0.0, %v1747
  %v1749 = vpop.f32.mrf.mxu0
  %v1750 = vpop.f32.mrf.mxu0
  %v1751 = vpop.f32.mrf.mxu0
  %1752 = vdwg.mxu0
  %v1753 = vadd.f32 %v1700, %v1748
  %s1754 = scalar_lea.vmem %s35, 6
  %v1755 = vld [vmem:[%s1754] sm:$0x3]
  %v1757 = vsel %vm775, %v1755, 0
  %v1760 = vsel %vm324, %v1564, 0
  %1762 = vmatprep.subr.bf16.mxu0 0
  %1763 = vmatpush1.bf16.msra.mxu0 0
  %1764 = vmatprep.subr.bf16.mxu0 0
  %1765 = vmatpush1.bf16.msra.mxu0 0
  %1766 = vmatprep.subr.bf16.mxu0 0
  %1767 = vmatpush1.bf16.msra.mxu0 0
  %1768 = vmatprep.subr.bf16.mxu0 0
  %1769 = vmatpush1.bf16.msra.mxu0 0
  %1770 = vmatprep.subr.bf16.mxu0 0
  %1771 = vmatpush1.bf16.msra.mxu0 0
  %1772 = vmatprep.subr.bf16.mxu0 0
  %1773 = vmatpush1.bf16.msra.mxu0 0
  %1774 = vmatprep.subr.bf16.mxu0 0
  %1775 = vmatpush1.bf16.msra.mxu0 0
  %1776 = vmatprep.subr.bf16.mxu0 0
  %1777 = vmatpush1.bf16.msra.mxu0 %v1760
  %1778 = vmatprep.subr.bf16.mxu0 0
  %1779 = vmatpush2.bf16.msra.mxu0 0
  %1780 = vmatprep.subr.bf16.mxu0 0
  %1781 = vmatpush2.bf16.msra.mxu0 0
  %1782 = vmatprep.subr.bf16.mxu0 0
  %1783 = vmatpush2.bf16.msra.mxu0 0
  %1784 = vmatprep.subr.bf16.mxu0 0
  %1785 = vmatpush2.bf16.msra.mxu0 0
  %1786 = vmatprep.subr.bf16.mxu0 0
  %1787 = vmatpush2.bf16.msra.mxu0 0
  %1788 = vmatprep.subr.bf16.mxu0 0
  %1789 = vmatpush2.bf16.msra.mxu0 0
  %1790 = vmatprep.subr.bf16.mxu0 0
  %1791 = vmatpush2.bf16.msra.mxu0 0
  %1792 = vmatprep.subr.bf16.mxu0 0
  %1793 = vmatpush2.bf16.msra.mxu0 0
  %1794 = vmatprep.mubr.bf16.mxu0 0
  %1795 = vmatmul.mubr.bf16.gmra.mxu0 %v1757
  %v1796 = vpop.f32.mrf.mxu0
  %v1797 = vadd.f32 0.0, %v1796
  %v1798 = vpop.f32.mrf.mxu0
  %v1799 = vpop.f32.mrf.mxu0
  %v1800 = vpop.f32.mrf.mxu0
  %1801 = vdwg.mxu0
  %v1802 = vadd.f32 %v1753, %v1797
  %s1803 = scalar_lea.vmem %s35, 8
  %v1804 = vld [vmem:[%s1803] sm:$0x3]
  %v1806 = vsel %vm775, %v1804, 0
  %v1809 = vsel %vm324, %v1565, 0
  %1811 = vmatprep.subr.bf16.mxu0 0
  %1812 = vmatpush1.bf16.msra.mxu0 0
  %1813 = vmatprep.subr.bf16.mxu0 0
  %1814 = vmatpush1.bf16.msra.mxu0 0
  %1815 = vmatprep.subr.bf16.mxu0 0
  %1816 = vmatpush1.bf16.msra.mxu0 0
  %1817 = vmatprep.subr.bf16.mxu0 0
  %1818 = vmatpush1.bf16.msra.mxu0 0
  %1819 = vmatprep.subr.bf16.mxu0 0
  %1820 = vmatpush1.bf16.msra.mxu0 0
  %1821 = vmatprep.subr.bf16.mxu0 0
  %1822 = vmatpush1.bf16.msra.mxu0 0
  %1823 = vmatprep.subr.bf16.mxu0 0
  %1824 = vmatpush1.bf16.msra.mxu0 0
  %1825 = vmatprep.subr.bf16.mxu0 0
  %1826 = vmatpush1.bf16.msra.mxu0 %v1809
  %1827 = vmatprep.subr.bf16.mxu0 0
  %1828 = vmatpush2.bf16.msra.mxu0 0
  %1829 = vmatprep.subr.bf16.mxu0 0
  %1830 = vmatpush2.bf16.msra.mxu0 0
  %1831 = vmatprep.subr.bf16.mxu0 0
  %1832 = vmatpush2.bf16.msra.mxu0 0
  %1833 = vmatprep.subr.bf16.mxu0 0
  %1834 = vmatpush2.bf16.msra.mxu0 0
  %1835 = vmatprep.subr.bf16.mxu0 0
  %1836 = vmatpush2.bf16.msra.mxu0 0
  %1837 = vmatprep.subr.bf16.mxu0 0
  %1838 = vmatpush2.bf16.msra.mxu0 0
  %1839 = vmatprep.subr.bf16.mxu0 0
  %1840 = vmatpush2.bf16.msra.mxu0 0
  %1841 = vmatprep.subr.bf16.mxu0 0
  %1842 = vmatpush2.bf16.msra.mxu0 0
  %1843 = vmatprep.mubr.bf16.mxu0 0
  %1844 = vmatmul.mubr.bf16.gmra.mxu0 %v1806
  %v1845 = vpop.f32.mrf.mxu0
  %v1846 = vadd.f32 0.0, %v1845
  %v1847 = vpop.f32.mrf.mxu0
  %v1848 = vpop.f32.mrf.mxu0
  %v1849 = vpop.f32.mrf.mxu0
  %1850 = vdwg.mxu0
  %v1851 = vadd.f32 %v1802, %v1846
  %s1852 = scalar_lea.vmem %s35, 10
  %v1853 = vld [vmem:[%s1852] sm:$0x3]
  %v1855 = vsel %vm775, %v1853, 0
  %v1858 = vsel %vm324, %v1576, 0
  %1860 = vmatprep.subr.bf16.mxu0 0
  %1861 = vmatpush1.bf16.msra.mxu0 0
  %1862 = vmatprep.subr.bf16.mxu0 0
  %1863 = vmatpush1.bf16.msra.mxu0 0
  %1864 = vmatprep.subr.bf16.mxu0 0
  %1865 = vmatpush1.bf16.msra.mxu0 0
  %1866 = vmatprep.subr.bf16.mxu0 0
  %1867 = vmatpush1.bf16.msra.mxu0 0
  %1868 = vmatprep.subr.bf16.mxu0 0
  %1869 = vmatpush1.bf16.msra.mxu0 0
  %1870 = vmatprep.subr.bf16.mxu0 0
  %1871 = vmatpush1.bf16.msra.mxu0 0
  %1872 = vmatprep.subr.bf16.mxu0 0
  %1873 = vmatpush1.bf16.msra.mxu0 0
  %1874 = vmatprep.subr.bf16.mxu0 0
  %1875 = vmatpush1.bf16.msra.mxu0 %v1858
  %1876 = vmatprep.subr.bf16.mxu0 0
  %1877 = vmatpush2.bf16.msra.mxu0 0
  %1878 = vmatprep.subr.bf16.mxu0 0
  %1879 = vmatpush2.bf16.msra.mxu0 0
  %1880 = vmatprep.subr.bf16.mxu0 0
  %1881 = vmatpush2.bf16.msra.mxu0 0
  %1882 = vmatprep.subr.bf16.mxu0 0
  %1883 = vmatpush2.bf16.msra.mxu0 0
  %1884 = vmatprep.subr.bf16.mxu0 0
  %1885 = vmatpush2.bf16.msra.mxu0 0
  %1886 = vmatprep.subr.bf16.mxu0 0
  %1887 = vmatpush2.bf16.msra.mxu0 0
  %1888 = vmatprep.subr.bf16.mxu0 0
  %1889 = vmatpush2.bf16.msra.mxu0 0
  %1890 = vmatprep.subr.bf16.mxu0 0
  %1891 = vmatpush2.bf16.msra.mxu0 0
  %1892 = vmatprep.mubr.bf16.mxu0 0
  %1893 = vmatmul.mubr.bf16.gmra.mxu0 %v1855
  %v1894 = vpop.f32.mrf.mxu0
  %v1895 = vadd.f32 0.0, %v1894
  %v1896 = vpop.f32.mrf.mxu0
  %v1897 = vpop.f32.mrf.mxu0
  %v1898 = vpop.f32.mrf.mxu0
  %1899 = vdwg.mxu0
  %v1900 = vadd.f32 %v1851, %v1895
  %s1901 = scalar_lea.vmem %s35, 12
  %v1902 = vld [vmem:[%s1901] sm:$0x3]
  %v1904 = vsel %vm775, %v1902, 0
  %v1907 = vsel %vm324, %v1587, 0
  %1909 = vmatprep.subr.bf16.mxu0 0
  %1910 = vmatpush1.bf16.msra.mxu0 0
  %1911 = vmatprep.subr.bf16.mxu0 0
  %1912 = vmatpush1.bf16.msra.mxu0 0
  %1913 = vmatprep.subr.bf16.mxu0 0
  %1914 = vmatpush1.bf16.msra.mxu0 0
  %1915 = vmatprep.subr.bf16.mxu0 0
  %1916 = vmatpush1.bf16.msra.mxu0 0
  %1917 = vmatprep.subr.bf16.mxu0 0
  %1918 = vmatpush1.bf16.msra.mxu0 0
  %1919 = vmatprep.subr.bf16.mxu0 0
  %1920 = vmatpush1.bf16.msra.mxu0 0
  %1921 = vmatprep.subr.bf16.mxu0 0
  %1922 = vmatpush1.bf16.msra.mxu0 0
  %1923 = vmatprep.subr.bf16.mxu0 0
  %1924 = vmatpush1.bf16.msra.mxu0 %v1907
  %1925 = vmatprep.subr.bf16.mxu0 0
  %1926 = vmatpush2.bf16.msra.mxu0 0
  %1927 = vmatprep.subr.bf16.mxu0 0
  %1928 = vmatpush2.bf16.msra.mxu0 0
  %1929 = vmatprep.subr.bf16.mxu0 0
  %1930 = vmatpush2.bf16.msra.mxu0 0
  %1931 = vmatprep.subr.bf16.mxu0 0
  %1932 = vmatpush2.bf16.msra.mxu0 0
  %1933 = vmatprep.subr.bf16.mxu0 0
  %1934 = vmatpush2.bf16.msra.mxu0 0
  %1935 = vmatprep.subr.bf16.mxu0 0
  %1936 = vmatpush2.bf16.msra.mxu0 0
  %1937 = vmatprep.subr.bf16.mxu0 0
  %1938 = vmatpush2.bf16.msra.mxu0 0
  %1939 = vmatprep.subr.bf16.mxu0 0
  %1940 = vmatpush2.bf16.msra.mxu0 0
  %1941 = vmatprep.mubr.bf16.mxu0 0
  %1942 = vmatmul.mubr.bf16.gmra.mxu0 %v1904
  %v1943 = vpop.f32.mrf.mxu0
  %v1944 = vadd.f32 0.0, %v1943
  %v1945 = vpop.f32.mrf.mxu0
  %v1946 = vpop.f32.mrf.mxu0
  %v1947 = vpop.f32.mrf.mxu0
  %1948 = vdwg.mxu0
  %v1949 = vadd.f32 %v1900, %v1944
  %s1950 = scalar_lea.vmem %s35, 14
  %v1951 = vld [vmem:[%s1950] sm:$0x3]
  %v1953 = vsel %vm775, %v1951, 0
  %v1956 = vsel %vm324, %v1598, 0
  %1958 = vmatprep.subr.bf16.mxu0 0
  %1959 = vmatpush1.bf16.msra.mxu0 0
  %1960 = vmatprep.subr.bf16.mxu0 0
  %1961 = vmatpush1.bf16.msra.mxu0 0
  %1962 = vmatprep.subr.bf16.mxu0 0
  %1963 = vmatpush1.bf16.msra.mxu0 0
  %1964 = vmatprep.subr.bf16.mxu0 0
  %1965 = vmatpush1.bf16.msra.mxu0 0
  %1966 = vmatprep.subr.bf16.mxu0 0
  %1967 = vmatpush1.bf16.msra.mxu0 0
  %1968 = vmatprep.subr.bf16.mxu0 0
  %1969 = vmatpush1.bf16.msra.mxu0 0
  %1970 = vmatprep.subr.bf16.mxu0 0
  %1971 = vmatpush1.bf16.msra.mxu0 0
  %1972 = vmatprep.subr.bf16.mxu0 0
  %1973 = vmatpush1.bf16.msra.mxu0 %v1956
  %1974 = vmatprep.subr.bf16.mxu0 0
  %1975 = vmatpush2.bf16.msra.mxu0 0
  %1976 = vmatprep.subr.bf16.mxu0 0
  %1977 = vmatpush2.bf16.msra.mxu0 0
  %1978 = vmatprep.subr.bf16.mxu0 0
  %1979 = vmatpush2.bf16.msra.mxu0 0
  %1980 = vmatprep.subr.bf16.mxu0 0
  %1981 = vmatpush2.bf16.msra.mxu0 0
  %1982 = vmatprep.subr.bf16.mxu0 0
  %1983 = vmatpush2.bf16.msra.mxu0 0
  %1984 = vmatprep.subr.bf16.mxu0 0
  %1985 = vmatpush2.bf16.msra.mxu0 0
  %1986 = vmatprep.subr.bf16.mxu0 0
  %1987 = vmatpush2.bf16.msra.mxu0 0
  %1988 = vmatprep.subr.bf16.mxu0 0
  %1989 = vmatpush2.bf16.msra.mxu0 0
  %1990 = vmatprep.mubr.bf16.mxu0 0
  %1991 = vmatmul.mubr.bf16.gmra.mxu0 %v1953
  %v1992 = vpop.f32.mrf.mxu0
  %v1993 = vadd.f32 0.0, %v1992
  %v1994 = vpop.f32.mrf.mxu0
  %v1995 = vpop.f32.mrf.mxu0
  %v1996 = vpop.f32.mrf.mxu0
  %1997 = vdwg.mxu0
  %v1998 = vadd.f32 %v1949, %v1993
  %s1999 = scalar_lea.vmem %s35, 16
  %v2000 = vld [vmem:[%s1999] sm:$0x3]
  %v2002 = vsel %vm775, %v2000, 0
  %v2005 = vsel %vm324, %v1609, 0
  %2007 = vmatprep.subr.bf16.mxu0 0
  %2008 = vmatpush1.bf16.msra.mxu0 0
  %2009 = vmatprep.subr.bf16.mxu0 0
  %2010 = vmatpush1.bf16.msra.mxu0 0
  %2011 = vmatprep.subr.bf16.mxu0 0
  %2012 = vmatpush1.bf16.msra.mxu0 0
  %2013 = vmatprep.subr.bf16.mxu0 0
  %2014 = vmatpush1.bf16.msra.mxu0 0
  %2015 = vmatprep.subr.bf16.mxu0 0
  %2016 = vmatpush1.bf16.msra.mxu0 0
  %2017 = vmatprep.subr.bf16.mxu0 0
  %2018 = vmatpush1.bf16.msra.mxu0 0
  %2019 = vmatprep.subr.bf16.mxu0 0
  %2020 = vmatpush1.bf16.msra.mxu0 0
  %2021 = vmatprep.subr.bf16.mxu0 0
  %2022 = vmatpush1.bf16.msra.mxu0 %v2005
  %2023 = vmatprep.subr.bf16.mxu0 0
  %2024 = vmatpush2.bf16.msra.mxu0 0
  %2025 = vmatprep.subr.bf16.mxu0 0
  %2026 = vmatpush2.bf16.msra.mxu0 0
  %2027 = vmatprep.subr.bf16.mxu0 0
  %2028 = vmatpush2.bf16.msra.mxu0 0
  %2029 = vmatprep.subr.bf16.mxu0 0
  %2030 = vmatpush2.bf16.msra.mxu0 0
  %2031 = vmatprep.subr.bf16.mxu0 0
  %2032 = vmatpush2.bf16.msra.mxu0 0
  %2033 = vmatprep.subr.bf16.mxu0 0
  %2034 = vmatpush2.bf16.msra.mxu0 0
  %2035 = vmatprep.subr.bf16.mxu0 0
  %2036 = vmatpush2.bf16.msra.mxu0 0
  %2037 = vmatprep.subr.bf16.mxu0 0
  %2038 = vmatpush2.bf16.msra.mxu0 0
  %2039 = vmatprep.mubr.bf16.mxu0 0
  %2040 = vmatmul.mubr.bf16.gmra.mxu0 %v2002
  %v2041 = vpop.f32.mrf.mxu0
  %v2042 = vadd.f32 0.0, %v2041
  %v2043 = vpop.f32.mrf.mxu0
  %v2044 = vpop.f32.mrf.mxu0
  %v2045 = vpop.f32.mrf.mxu0
  %2046 = vdwg.mxu0
  %v2047 = vadd.f32 %v1998, %v2042
  %v2048 = vld [vmem:[%s37] sm:$0xf]
  %2050 = vset.pattern.permute.xlu0 0
  %2051 = vperm.xlu0 %2050, %v2048
  %v2052 = vpop.permute.xlu0 %2051
  %v2054 = vadd.f32 %v2047, %v2052
  %v2055 = vmax.f32 %v2054, 0.0
  %v2056 = vld [vmem:[%s39] sm:$0xf]
  %v2057 = vld [vmem:[%s39 + $0x4] sm:$0xf]
  %v2058 = vpack.c.bf16 %v2055, %v2055
  %v2059 = vld [vmem:[%s41] sm:$0xff]
  %v2060 = vld [vmem:[%s41 + $0x8] sm:$0xff]
  %2062 = vset.pattern.permute.xlu0 0
  %2063 = vperm.xlu0 %2062, %v2059
  %v2064 = vpop.permute.xlu0 %2063
  %2067 = vset.pattern.permute.xlu0 0
  %2068 = vperm.xlu0 %2067, %v2060
  %v2069 = vpop.permute.xlu0 %2068
  %v2073 = vunpack.c.l.b16 %v2056
  %v2074 = vunpack.c.l.b16 %v2057
  %v2075 = vpack.c.b16 %v2074, %v2073
  %v2077 = vsel %vm775, %v2075, 0
  %v2080 = vsel %vm324, %v2058, 0
  %2082 = vmatprep.subr.bf16.mxu0 0
  %2083 = vmatpush1.bf16.msra.mxu0 0
  %2084 = vmatprep.subr.bf16.mxu0 0
  %2085 = vmatpush1.bf16.msra.mxu0 0
  %2086 = vmatprep.subr.bf16.mxu0 0
  %2087 = vmatpush1.bf16.msra.mxu0 0
  %2088 = vmatprep.subr.bf16.mxu0 0
  %2089 = vmatpush1.bf16.msra.mxu0 0
  %2090 = vmatprep.subr.bf16.mxu0 0
  %2091 = vmatpush1.bf16.msra.mxu0 0
  %2092 = vmatprep.subr.bf16.mxu0 0
  %2093 = vmatpush1.bf16.msra.mxu0 0
  %2094 = vmatprep.subr.bf16.mxu0 0
  %2095 = vmatpush1.bf16.msra.mxu0 0
  %2096 = vmatprep.subr.bf16.mxu0 0
  %2097 = vmatpush1.bf16.msra.mxu0 %v2080
  %2098 = vmatprep.subr.bf16.mxu0 0
  %2099 = vmatpush2.bf16.msra.mxu0 0
  %2100 = vmatprep.subr.bf16.mxu0 0
  %2101 = vmatpush2.bf16.msra.mxu0 0
  %2102 = vmatprep.subr.bf16.mxu0 0
  %2103 = vmatpush2.bf16.msra.mxu0 0
  %2104 = vmatprep.subr.bf16.mxu0 0
  %2105 = vmatpush2.bf16.msra.mxu0 0
  %2106 = vmatprep.subr.bf16.mxu0 0
  %2107 = vmatpush2.bf16.msra.mxu0 0
  %2108 = vmatprep.subr.bf16.mxu0 0
  %2109 = vmatpush2.bf16.msra.mxu0 0
  %2110 = vmatprep.subr.bf16.mxu0 0
  %2111 = vmatpush2.bf16.msra.mxu0 0
  %2112 = vmatprep.subr.bf16.mxu0 0
  %2113 = vmatpush2.bf16.msra.mxu0 0
  %2114 = vmatprep.mubr.bf16.mxu0 0
  %2115 = vmatmul.mubr.bf16.gmra.mxu0 %v2077
  %v2116 = vpop.f32.mrf.mxu0
  %v2117 = vadd.f32 %v2064, %v2116
  %v2118 = vpop.f32.mrf.mxu0
  %v2119 = vpop.f32.mrf.mxu0
  %v2120 = vadd.f32 %v2069, %v2119
  %v2121 = vpop.f32.mrf.mxu0
  %2122 = vdwg.mxu0
  %v2123 = vadd.f32 %v1436, %v2117
  %v2124 = vadd.f32 %v1437, %v2120
  %2125 = vst [vmem:[#allocation2] sm:$0xff] %v2123
  %2126 = vst [vmem:[#allocation2 + $0x8] sm:$0xff] %v2124
  %v2127 = vld [vmem:[#allocation2] sm:$0xff]
  %v2128 = vld [vmem:[#allocation2 + $0x8] sm:$0xff]
  %v2129 = vld [vmem:[%s43] sm:$0xf]
  %v2130 = vld [vmem:[%s43 + $0x4] sm:$0xf]
  %v2131 = vpack.c.bf16 %v2128, %v2127
  %v2132 = vld [vmem:[%s45] sm:$0xff]
  %v2133 = vld [vmem:[%s45 + $0x8] sm:$0xff]
  %2135 = vset.pattern.permute.xlu0 0
  %2136 = vperm.xlu0 %2135, %v2132
  %v2137 = vpop.permute.xlu0 %2136
  %2140 = vset.pattern.permute.xlu0 0
  %2141 = vperm.xlu0 %2140, %v2133
  %v2142 = vpop.permute.xlu0 %2141
  %v2146 = vunpack.c.l.b16 %v2129
  %v2147 = vunpack.c.l.b16 %v2130
  %v2148 = vpack.c.b16 %v2147, %v2146
  %v2150 = vsel %vm1476, %v2148, 0
  %2152 = vmatprep.subr.bf16.mxu0 0
  %2153 = vmatpush1.bf16.msra.mxu0 0
  %2154 = vmatprep.subr.bf16.mxu0 0
  %2155 = vmatpush1.bf16.msra.mxu0 0
  %2156 = vmatprep.subr.bf16.mxu0 0
  %2157 = vmatpush1.bf16.msra.mxu0 0
  %2158 = vmatprep.subr.bf16.mxu0 0
  %2159 = vmatpush1.bf16.msra.mxu0 0
  %2160 = vmatprep.subr.bf16.mxu0 0
  %2161 = vmatpush1.bf16.msra.mxu0 0
  %2162 = vmatprep.subr.bf16.mxu0 0
  %2163 = vmatpush1.bf16.msra.mxu0 0
  %2164 = vmatprep.subr.bf16.mxu0 0
  %2165 = vmatpush1.bf16.msra.mxu0 0
  %2166 = vmatprep.subr.bf16.mxu0 0
  %2167 = vmatpush1.bf16.msra.mxu0 %v2131
  %2168 = vmatprep.subr.bf16.mxu0 0
  %2169 = vmatpush2.bf16.msra.mxu0 0
  %2170 = vmatprep.subr.bf16.mxu0 0
  %2171 = vmatpush2.bf16.msra.mxu0 0
  %2172 = vmatprep.subr.bf16.mxu0 0
  %2173 = vmatpush2.bf16.msra.mxu0 0
  %2174 = vmatprep.subr.bf16.mxu0 0
  %2175 = vmatpush2.bf16.msra.mxu0 0
  %2176 = vmatprep.subr.bf16.mxu0 0
  %2177 = vmatpush2.bf16.msra.mxu0 0
  %2178 = vmatprep.subr.bf16.mxu0 0
  %2179 = vmatpush2.bf16.msra.mxu0 0
  %2180 = vmatprep.subr.bf16.mxu0 0
  %2181 = vmatpush2.bf16.msra.mxu0 0
  %2182 = vmatprep.subr.bf16.mxu0 0
  %2183 = vmatpush2.bf16.msra.mxu0 0
  %2184 = vmatprep.mubr.bf16.mxu0 0
  %2185 = vmatmul.mubr.bf16.gmra.mxu0 %v2150
  %v2186 = vpop.f32.mrf.mxu0
  %v2187 = vadd.f32 %v2137, %v2186
  %v2188 = vpop.f32.mrf.mxu0
  %v2189 = vpop.f32.mrf.mxu0
  %v2190 = vadd.f32 %v2142, %v2189
  %v2191 = vpop.f32.mrf.mxu0
  %2192 = vdwg.mxu0
  %v2193 = vmax.f32 %v2187, 0.0
  %v2194 = vmax.f32 %v2190, 0.0
  %2195 = vrot.lane.b32.xlu0 %v2193, 9
  %v2196 = vpop.permute.xlu0 %2195
  %2197 = vrot.lane.b32.xlu0 %v2194, 9
  %v2198 = vpop.permute.xlu0 %2197
  %v2199 = vld [vmem:[%s3] sm:$0x1]
  %v2201 = vlaneseq
  %v2202 = vshrl.u32 %v2201, 7
  %v2203 = vsub.s32 0, %v2202
  %v2204 = vrot.slane %v2199, %v2203
  %v2206 = vmul.f32 %v2196, %v2204
  %v2207 = vmul.f32 %v2198, %v2204
  %v2208 = vpack.c.bf16 %v2207, %v2206
  %2209 = vrot.lane.b32.xlu0 %v2193, 8
  %v2210 = vpop.permute.xlu0 %2209
  %2211 = vrot.lane.b32.xlu0 %v2194, 8
  %v2212 = vpop.permute.xlu0 %2211
  %v2213 = vld [vmem:[%s233] sm:$0x1]
  %v2215 = vlaneseq
  %v2216 = vshrl.u32 %v2215, 7
  %v2217 = vsub.s32 0, %v2216
  %v2218 = vrot.slane %v2213, %v2217
  %v2220 = vmul.f32 %v2210, %v2218
  %v2221 = vmul.f32 %v2212, %v2218
  %v2222 = vpack.c.bf16 %v2221, %v2220
  %2223 = vrot.lane.b32.xlu0 %v2193, 7
  %v2224 = vpop.permute.xlu0 %2223
  %2225 = vrot.lane.b32.xlu0 %v2194, 7
  %v2226 = vpop.permute.xlu0 %2225
  %v2227 = vld [vmem:[%s245] sm:$0x1]
  %v2229 = vlaneseq
  %v2230 = vshrl.u32 %v2229, 7
  %v2231 = vsub.s32 0, %v2230
  %v2232 = vrot.slane %v2227, %v2231
  %v2234 = vmul.f32 %v2224, %v2232
  %v2235 = vmul.f32 %v2226, %v2232
  %v2236 = vpack.c.bf16 %v2235, %v2234
  %2237 = vrot.lane.b32.xlu0 %v2193, 1
  %v2238 = vpop.permute.xlu0 %2237
  %2239 = vrot.lane.b32.xlu0 %v2194, 1
  %v2240 = vpop.permute.xlu0 %2239
  %v2241 = vld [vmem:[%s257] sm:$0x1]
  %v2243 = vlaneseq
  %v2244 = vshrl.u32 %v2243, 7
  %v2245 = vsub.s32 0, %v2244
  %v2246 = vrot.slane %v2241, %v2245
  %v2248 = vmul.f32 %v2238, %v2246
  %v2249 = vmul.f32 %v2240, %v2246
  %v2250 = vpack.c.bf16 %v2249, %v2248
  %v2251 = vpack.c.bf16 %v2194, %v2193
  %2252 = vrot.lane.b32.xlu0 %v2193, 127
  %v2253 = vpop.permute.xlu0 %2252
  %2254 = vrot.lane.b32.xlu0 %v2194, 127
  %v2255 = vpop.permute.xlu0 %2254
  %v2256 = vld [vmem:[%s270] sm:$0x1]
  %v2258 = vlaneseq
  %v2259 = vshrl.u32 %v2258, 7
  %v2260 = vsub.s32 0, %v2259
  %v2261 = vrot.slane %v2256, %v2260
  %v2263 = vmul.f32 %v2253, %v2261
  %v2264 = vmul.f32 %v2255, %v2261
  %v2265 = vpack.c.bf16 %v2264, %v2263
  %2266 = vrot.lane.b32.xlu0 %v2193, 121
  %v2267 = vpop.permute.xlu0 %2266
  %2268 = vrot.lane.b32.xlu0 %v2194, 121
  %v2269 = vpop.permute.xlu0 %2268
  %v2270 = vld [vmem:[%s282] sm:$0x1]
  %v2272 = vlaneseq
  %v2273 = vshrl.u32 %v2272, 7
  %v2274 = vsub.s32 0, %v2273
  %v2275 = vrot.slane %v2270, %v2274
  %v2277 = vmul.f32 %v2267, %v2275
  %v2278 = vmul.f32 %v2269, %v2275
  %v2279 = vpack.c.bf16 %v2278, %v2277
  %2280 = vrot.lane.b32.xlu0 %v2193, 120
  %v2281 = vpop.permute.xlu0 %2280
  %2282 = vrot.lane.b32.xlu0 %v2194, 120
  %v2283 = vpop.permute.xlu0 %2282
  %v2284 = vld [vmem:[%s294] sm:$0x1]
  %v2286 = vlaneseq
  %v2287 = vshrl.u32 %v2286, 7
  %v2288 = vsub.s32 0, %v2287
  %v2289 = vrot.slane %v2284, %v2288
  %v2291 = vmul.f32 %v2281, %v2289
  %v2292 = vmul.f32 %v2283, %v2289
  %v2293 = vpack.c.bf16 %v2292, %v2291
  %2294 = vrot.lane.b32.xlu0 %v2193, 119
  %v2295 = vpop.permute.xlu0 %2294
  %2296 = vrot.lane.b32.xlu0 %v2194, 119
  %v2297 = vpop.permute.xlu0 %2296
  %v2298 = vld [vmem:[%s306] sm:$0x1]
  %v2300 = vlaneseq
  %v2301 = vshrl.u32 %v2300, 7
  %v2302 = vsub.s32 0, %v2301
  %v2303 = vrot.slane %v2298, %v2302
  %v2305 = vmul.f32 %v2295, %v2303
  %v2306 = vmul.f32 %v2297, %v2303
  %v2307 = vpack.c.bf16 %v2306, %v2305
  %v2308 = vld [vmem:[%s47] sm:$0xff]
  %v2309 = vld [vmem:[%s47 + $0x8] sm:$0xff]
  %v2310 = vld [vmem:[%s49] sm:$0xff]
  %v2311 = vld [vmem:[%s49 + $0x8] sm:$0xff]
  %2313 = vset.pattern.permute.xlu0 0
  %2314 = vperm.xlu0 %2313, %v2310
  %v2315 = vpop.permute.xlu0 %2314
  %2318 = vset.pattern.permute.xlu0 0
  %2319 = vperm.xlu0 %2318, %v2311
  %v2320 = vpop.permute.xlu0 %2319
  %v2324 = vunpack.c.l.b16 %v2308
  %v2325 = vunpack.c.h.b16 %v2308
  %v2326 = vunpack.c.l.b16 %v2309
  %v2327 = vunpack.c.h.b16 %v2309
  %v2328 = vpack.c.b16 %v2326, %v2324
  %v2329 = vpack.c.b16 %v2327, %v2325
  %v2332 = vsel %vm1476, %v2329, 0
  %2334 = vmatprep.subr.bf16.mxu0 0
  %2335 = vmatpush1.bf16.msra.mxu0 %v2293
  %2336 = vmatprep.subr.bf16.mxu0 0
  %2337 = vmatpush1.bf16.msra.mxu0 %v2279
  %2338 = vmatprep.subr.bf16.mxu0 0
  %2339 = vmatpush1.bf16.msra.mxu0 %v2265
  %2340 = vmatprep.subr.bf16.mxu0 0
  %2341 = vmatpush1.bf16.msra.mxu0 %v2251
  %2342 = vmatprep.subr.bf16.mxu0 0
  %2343 = vmatpush1.bf16.msra.mxu0 %v2250
  %2344 = vmatprep.subr.bf16.mxu0 0
  %2345 = vmatpush1.bf16.msra.mxu0 %v2236
  %2346 = vmatprep.subr.bf16.mxu0 0
  %2347 = vmatpush1.bf16.msra.mxu0 %v2222
  %2348 = vmatprep.subr.bf16.mxu0 0
  %2349 = vmatpush1.bf16.msra.mxu0 %v2208
  %2350 = vmatprep.subr.bf16.mxu0 0
  %2351 = vmatpush2.bf16.msra.mxu0 0
  %2352 = vmatprep.subr.bf16.mxu0 0
  %2353 = vmatpush2.bf16.msra.mxu0 0
  %2354 = vmatprep.subr.bf16.mxu0 0
  %2355 = vmatpush2.bf16.msra.mxu0 0
  %2356 = vmatprep.subr.bf16.mxu0 0
  %2357 = vmatpush2.bf16.msra.mxu0 0
  %2358 = vmatprep.subr.bf16.mxu0 0
  %2359 = vmatpush2.bf16.msra.mxu0 0
  %2360 = vmatprep.subr.bf16.mxu0 0
  %2361 = vmatpush2.bf16.msra.mxu0 0
  %2362 = vmatprep.subr.bf16.mxu0 0
  %2363 = vmatpush2.bf16.msra.mxu0 0
  %2364 = vmatprep.subr.bf16.mxu0 0
  %2365 = vmatpush2.bf16.msra.mxu0 %v2307
  %2366 = vmatprep.mubr.bf16.mxu0 %v2332
  %2367 = vmatmul.mubr.bf16.gmra.mxu0 %v2328
  %v2368 = vpop.f32.mrf.mxu0
  %v2369 = vadd.f32 %v2315, %v2368
  %v2370 = vpop.f32.mrf.mxu0
  %v2371 = vpop.f32.mrf.mxu0
  %v2372 = vadd.f32 %v2320, %v2371
  %v2373 = vpop.f32.mrf.mxu0
  %2374 = vdwg.mxu0
  %v2375 = vmax.f32 %v2369, 0.0
  %v2376 = vmax.f32 %v2372, 0.0
  %v2377 = vpack.c.bf16 %v2376, %v2375
  %v2378 = vld [vmem:[%s51] sm:$0xf]
  %v2379 = vld [vmem:[%s51 + $0x4] sm:$0xf]
  %v2380 = vld [vmem:[%s51 + $0x8] sm:$0xf]
  %v2381 = vld [vmem:[%s51 + $0xc] sm:$0xf]
  %v2382 = vld [vmem:[%s51 + $0x10] sm:$0xf]
  %v2383 = vld [vmem:[%s51 + $0x14] sm:$0xf]
  %v2384 = vld [vmem:[%s51 + $0x18] sm:$0xf]
  %v2385 = vld [vmem:[%s51 + $0x1c] sm:$0xf]
  %v2386 = vld [vmem:[%s53] sm:$0xff]
  %v2387 = vld [vmem:[%s53 + $0x8] sm:$0xff]
  %v2388 = vld [vmem:[%s53 + $0x10] sm:$0xff]
  %v2389 = vld [vmem:[%s53 + $0x18] sm:$0xff]
  %v2390 = vld [vmem:[%s53 + $0x20] sm:$0xff]
  %v2391 = vld [vmem:[%s53 + $0x28] sm:$0xff]
  %v2392 = vld [vmem:[%s53 + $0x30] sm:$0xff]
  %v2393 = vld [vmem:[%s53 + $0x38] sm:$0xff]
  %2395 = vset.pattern.permute.xlu0 0
  %2396 = vperm.xlu0 %2395, %v2386
  %v2397 = vpop.permute.xlu0 %2396
  %2400 = vset.pattern.permute.xlu0 0
  %2401 = vperm.xlu0 %2400, %v2387
  %v2402 = vpop.permute.xlu0 %2401
  %2405 = vset.pattern.permute.xlu0 0
  %2406 = vperm.xlu0 %2405, %v2388
  %v2407 = vpop.permute.xlu0 %2406
  %2410 = vset.pattern.permute.xlu0 0
  %2411 = vperm.xlu0 %2410, %v2389
  %v2412 = vpop.permute.xlu0 %2411
  %2415 = vset.pattern.permute.xlu0 0
  %2416 = vperm.xlu0 %2415, %v2390
  %v2417 = vpop.permute.xlu0 %2416
  %2420 = vset.pattern.permute.xlu0 0
  %2421 = vperm.xlu0 %2420, %v2391
  %v2422 = vpop.permute.xlu0 %2421
  %2425 = vset.pattern.permute.xlu0 0
  %2426 = vperm.xlu0 %2425, %v2392
  %v2427 = vpop.permute.xlu0 %2426
  %2430 = vset.pattern.permute.xlu0 0
  %2431 = vperm.xlu0 %2430, %v2393
  %v2432 = vpop.permute.xlu0 %2431
  %v2442 = vunpack.c.l.b16 %v2378
  %v2443 = vunpack.c.l.b16 %v2379
  %v2444 = vunpack.c.l.b16 %v2380
  %v2445 = vunpack.c.l.b16 %v2381
  %v2446 = vunpack.c.l.b16 %v2382
  %v2447 = vunpack.c.l.b16 %v2383
  %v2448 = vunpack.c.l.b16 %v2384
  %v2449 = vunpack.c.l.b16 %v2385
  %v2450 = vpack.c.b16 %v2443, %v2442
  %v2451 = vpack.c.b16 %v2445, %v2444
  %v2452 = vpack.c.b16 %v2447, %v2446
  %v2453 = vpack.c.b16 %v2449, %v2448
  %vm2454 = vcmask 261120
  %v2456 = vsel %vm2454, %v2450, 0
  %v2459 = vsel %vm2454, %v2451, 0
  %v2462 = vsel %vm2454, %v2452, 0
  %v2465 = vsel %vm2454, %v2453, 0
  %2467 = vmatprep.subr.bf16.mxu0 0
  %2468 = vmatpush1.bf16.msra.mxu0 0
  %2469 = vmatprep.subr.bf16.mxu0 0
  %2470 = vmatpush1.bf16.msra.mxu0 0
  %2471 = vmatprep.subr.bf16.mxu0 0
  %2472 = vmatpush1.bf16.msra.mxu0 0
  %2473 = vmatprep.subr.bf16.mxu0 0
  %2474 = vmatpush1.bf16.msra.mxu0 0
  %2475 = vmatprep.subr.bf16.mxu0 0
  %2476 = vmatpush1.bf16.msra.mxu0 0
  %2477 = vmatprep.subr.bf16.mxu0 0
  %2478 = vmatpush1.bf16.msra.mxu0 0
  %2479 = vmatprep.subr.bf16.mxu0 0
  %2480 = vmatpush1.bf16.msra.mxu0 %v2131
  %2481 = vmatprep.subr.bf16.mxu0 0
  %2482 = vmatpush1.bf16.msra.mxu0 %v2377
  %2483 = vmatprep.subr.bf16.mxu0 0
  %2484 = vmatpush2.bf16.msra.mxu0 0
  %2485 = vmatprep.subr.bf16.mxu0 0
  %2486 = vmatpush2.bf16.msra.mxu0 0
  %2487 = vmatprep.subr.bf16.mxu0 0
  %2488 = vmatpush2.bf16.msra.mxu0 0
  %2489 = vmatprep.subr.bf16.mxu0 0
  %2490 = vmatpush2.bf16.msra.mxu0 0
  %2491 = vmatprep.subr.bf16.mxu0 0
  %2492 = vmatpush2.bf16.msra.mxu0 0
  %2493 = vmatprep.subr.bf16.mxu0 0
  %2494 = vmatpush2.bf16.msra.mxu0 0
  %2495 = vmatprep.subr.bf16.mxu0 0
  %2496 = vmatpush2.bf16.msra.mxu0 0
  %2497 = vmatprep.subr.bf16.mxu0 0
  %2498 = vmatpush2.bf16.msra.mxu0 0
  %2499 = vmatprep.mubr.bf16.mxu0 0
  %2500 = vmatmul.mubr.bf16.gmra.mxu0 %v2456
  %v2501 = vpop.f32.mrf.mxu0
  %v2502 = vadd.f32 %v2397, %v2501
  %v2503 = vpop.f32.mrf.mxu0
  %v2504 = vpop.f32.mrf.mxu0
  %v2505 = vadd.f32 %v2402, %v2504
  %v2506 = vpop.f32.mrf.mxu0
  %2507 = vmatprep.mubr.bf16.mxu0 0
  %2508 = vmatmul.mubr.bf16.gmra.mxu0 %v2459
  %v2509 = vpop.f32.mrf.mxu0
  %v2510 = vadd.f32 %v2407, %v2509
  %v2511 = vpop.f32.mrf.mxu0
  %v2512 = vpop.f32.mrf.mxu0
  %v2513 = vadd.f32 %v2412, %v2512
  %v2514 = vpop.f32.mrf.mxu0
  %2515 = vmatprep.mubr.bf16.mxu0 0
  %2516 = vmatmul.mubr.bf16.gmra.mxu0 %v2462
  %v2517 = vpop.f32.mrf.mxu0
  %v2518 = vadd.f32 %v2417, %v2517
  %v2519 = vpop.f32.mrf.mxu0
  %v2520 = vpop.f32.mrf.mxu0
  %v2521 = vadd.f32 %v2422, %v2520
  %v2522 = vpop.f32.mrf.mxu0
  %2523 = vmatprep.mubr.bf16.mxu0 0
  %2524 = vmatmul.mubr.bf16.gmra.mxu0 %v2465
  %v2525 = vpop.f32.mrf.mxu0
  %v2526 = vadd.f32 %v2427, %v2525
  %v2527 = vpop.f32.mrf.mxu0
  %v2528 = vpop.f32.mrf.mxu0
  %v2529 = vadd.f32 %v2432, %v2528
  %v2530 = vpop.f32.mrf.mxu0
  %2531 = vdwg.mxu0
  %2532 = vst [vmem:[#allocation2] sm:$0xff] %v2502
  %2533 = vst [vmem:[#allocation2 + $0x8] sm:$0xff] %v2505
  %2534 = vst [vmem:[#allocation2 + $0x10] sm:$0xff] %v2510
  %2535 = vst [vmem:[#allocation2 + $0x18] sm:$0xff] %v2513
  %2536 = vst [vmem:[#allocation2 + $0x20] sm:$0xff] %v2518
  %2537 = vst [vmem:[#allocation2 + $0x28] sm:$0xff] %v2521
  %2538 = vst [vmem:[#allocation2 + $0x30] sm:$0xff] %v2526
  %2539 = vst [vmem:[#allocation2 + $0x38] sm:$0xff] %v2529
  %v2540 = vld [vmem:[#allocation2] sm:$0xff]
  %v2541 = vld [vmem:[#allocation2 + $0x8] sm:$0xff]
  %v2542 = vld [vmem:[#allocation2 + $0x10] sm:$0xff]
  %v2543 = vld [vmem:[#allocation2 + $0x18] sm:$0xff]
  %v2544 = vld [vmem:[#allocation2 + $0x20] sm:$0xff]
  %v2545 = vld [vmem:[#allocation2 + $0x28] sm:$0xff]
  %v2546 = vld [vmem:[#allocation2 + $0x30] sm:$0xff]
  %v2547 = vld [vmem:[#allocation2 + $0x38] sm:$0xff]
  %v2548 = vld [vmem:[%s55] sm:$0xff]
  %v2549 = vld [vmem:[%s55 + $0x8] sm:$0xff]
  %v2550 = vld [vmem:[%s55 + $0x10] sm:$0xff]
  %v2551 = vld [vmem:[%s55 + $0x18] sm:$0xff]
  %v2552 = vld [vmem:[%s55 + $0x20] sm:$0xff]
  %v2553 = vld [vmem:[%s55 + $0x28] sm:$0xff]
  %v2554 = vld [vmem:[%s55 + $0x30] sm:$0xff]
  %v2555 = vld [vmem:[%s55 + $0x38] sm:$0xff]
  %2557 = vset.pattern.permute.xlu0 0
  %2558 = vperm.xlu0 %2557, %v2548
  %v2559 = vpop.permute.xlu0 %2558
  %2562 = vset.pattern.permute.xlu0 0
  %2563 = vperm.xlu0 %2562, %v2549
  %v2564 = vpop.permute.xlu0 %2563
  %2567 = vset.pattern.permute.xlu0 0
  %2568 = vperm.xlu0 %2567, %v2550
  %v2569 = vpop.permute.xlu0 %2568
  %2572 = vset.pattern.permute.xlu0 0
  %2573 = vperm.xlu0 %2572, %v2551
  %v2574 = vpop.permute.xlu0 %2573
  %2577 = vset.pattern.permute.xlu0 0
  %2578 = vperm.xlu0 %2577, %v2552
  %v2579 = vpop.permute.xlu0 %2578
  %2582 = vset.pattern.permute.xlu0 0
  %2583 = vperm.xlu0 %2582, %v2553
  %v2584 = vpop.permute.xlu0 %2583
  %2587 = vset.pattern.permute.xlu0 0
  %2588 = vperm.xlu0 %2587, %v2554
  %v2589 = vpop.permute.xlu0 %2588
  %2592 = vset.pattern.permute.xlu0 0
  %2593 = vperm.xlu0 %2592, %v2555
  %v2594 = vpop.permute.xlu0 %2593
  %v2596 = vmul.f32 %v2540, %v2559
  %v2597 = vmul.f32 %v2541, %v2564
  %v2598 = vmul.f32 %v2542, %v2569
  %v2599 = vmul.f32 %v2543, %v2574
  %v2600 = vmul.f32 %v2544, %v2579
  %v2601 = vmul.f32 %v2545, %v2584
  %v2602 = vmul.f32 %v2546, %v2589
  %v2603 = vmul.f32 %v2547, %v2594
  %v2604 = vld [vmem:[%s57] sm:$0xff]
  %v2605 = vld [vmem:[%s57 + $0x8] sm:$0xff]
  %v2606 = vld [vmem:[%s57 + $0x10] sm:$0xff]
  %v2607 = vld [vmem:[%s57 + $0x18] sm:$0xff]
  %v2608 = vld [vmem:[%s57 + $0x20] sm:$0xff]
  %v2609 = vld [vmem:[%s57 + $0x28] sm:$0xff]
  %v2610 = vld [vmem:[%s57 + $0x30] sm:$0xff]
  %v2611 = vld [vmem:[%s57 + $0x38] sm:$0xff]
  %2613 = vset.pattern.permute.xlu0 0
  %2614 = vperm.xlu0 %2613, %v2604
  %v2615 = vpop.permute.xlu0 %2614
  %2618 = vset.pattern.permute.xlu0 0
  %2619 = vperm.xlu0 %2618, %v2605
  %v2620 = vpop.permute.xlu0 %2619
  %2623 = vset.pattern.permute.xlu0 0
  %2624 = vperm.xlu0 %2623, %v2606
  %v2625 = vpop.permute.xlu0 %2624
  %2628 = vset.pattern.permute.xlu0 0
  %2629 = vperm.xlu0 %2628, %v2607
  %v2630 = vpop.permute.xlu0 %2629
  %2633 = vset.pattern.permute.xlu0 0
  %2634 = vperm.xlu0 %2633, %v2608
  %v2635 = vpop.permute.xlu0 %2634
  %2638 = vset.pattern.permute.xlu0 0
  %2639 = vperm.xlu0 %2638, %v2609
  %v2640 = vpop.permute.xlu0 %2639
  %2643 = vset.pattern.permute.xlu0 0
  %2644 = vperm.xlu0 %2643, %v2610
  %v2645 = vpop.permute.xlu0 %2644
  %2648 = vset.pattern.permute.xlu0 0
  %2649 = vperm.xlu0 %2648, %v2611
  %v2650 = vpop.permute.xlu0 %2649
  %v2652 = vadd.f32 %v2596, %v2615
  %v2653 = vadd.f32 %v2597, %v2620
  %v2654 = vadd.f32 %v2598, %v2625
  %v2655 = vadd.f32 %v2599, %v2630
  %v2656 = vadd.f32 %v2600, %v2635
  %v2657 = vadd.f32 %v2601, %v2640
  %v2658 = vadd.f32 %v2602, %v2645
  %v2659 = vadd.f32 %v2603, %v2650
  %v2660 = vmax.f32 %v2652, 0.0
  %v2661 = vmax.f32 %v2653, 0.0
  %v2662 = vmax.f32 %v2654, 0.0
  %v2663 = vmax.f32 %v2655, 0.0
  %v2664 = vmax.f32 %v2656, 0.0
  %v2665 = vmax.f32 %v2657, 0.0
  %v2666 = vmax.f32 %v2658, 0.0
  %v2667 = vmax.f32 %v2659, 0.0
  %v2668 = vld [vmem:[%s59] sm:$0xf]
  %v2669 = vld [vmem:[%s59 + $0x4] sm:$0xf]
  %v2670 = vpack.c.bf16 %v2661, %v2660
  %v2671 = vpack.c.bf16 %v2663, %v2662
  %v2672 = vpack.c.bf16 %v2665, %v2664
  %v2673 = vpack.c.bf16 %v2667, %v2666
  %v2674 = vld [vmem:[%s61] sm:$0xff]
  %v2675 = vld [vmem:[%s61 + $0x8] sm:$0xff]
  %2677 = vset.pattern.permute.xlu0 0
  %2678 = vperm.xlu0 %2677, %v2674
  %v2679 = vpop.permute.xlu0 %2678
  %2682 = vset.pattern.permute.xlu0 0
  %2683 = vperm.xlu0 %2682, %v2675
  %v2684 = vpop.permute.xlu0 %2683
  %v2688 = vunpack.c.l.b16 %v2668
  %v2689 = vunpack.c.l.b16 %v2669
  %v2690 = vpack.c.b16 %v2689, %v2688
  %vm2691 = vcmask 523264
  %v2693 = vsel %vm2691, %v2690, 0
  %2695 = vmatprep.subr.bf16.mxu0 0
  %2696 = vmatpush1.bf16.msra.mxu0 0
  %2697 = vmatprep.subr.bf16.mxu0 0
  %2698 = vmatpush1.bf16.msra.mxu0 0
  %2699 = vmatprep.subr.bf16.mxu0 0
  %2700 = vmatpush1.bf16.msra.mxu0 0
  %2701 = vmatprep.subr.bf16.mxu0 0
  %2702 = vmatpush1.bf16.msra.mxu0 0
  %2703 = vmatprep.subr.bf16.mxu0 0
  %2704 = vmatpush1.bf16.msra.mxu0 %v2673
  %2705 = vmatprep.subr.bf16.mxu0 0
  %2706 = vmatpush1.bf16.msra.mxu0 %v2672
  %2707 = vmatprep.subr.bf16.mxu0 0
  %2708 = vmatpush1.bf16.msra.mxu0 %v2671
  %2709 = vmatprep.subr.bf16.mxu0 0
  %2710 = vmatpush1.bf16.msra.mxu0 %v2670
  %2711 = vmatprep.subr.bf16.mxu0 0
  %2712 = vmatpush2.bf16.msra.mxu0 0
  %2713 = vmatprep.subr.bf16.mxu0 0
  %2714 = vmatpush2.bf16.msra.mxu0 0
  %2715 = vmatprep.subr.bf16.mxu0 0
  %2716 = vmatpush2.bf16.msra.mxu0 0
  %2717 = vmatprep.subr.bf16.mxu0 0
  %2718 = vmatpush2.bf16.msra.mxu0 0
  %2719 = vmatprep.subr.bf16.mxu0 0
  %2720 = vmatpush2.bf16.msra.mxu0 0
  %2721 = vmatprep.subr.bf16.mxu0 0
  %2722 = vmatpush2.bf16.msra.mxu0 0
  %2723 = vmatprep.subr.bf16.mxu0 0
  %2724 = vmatpush2.bf16.msra.mxu0 0
  %2725 = vmatprep.subr.bf16.mxu0 0
  %2726 = vmatpush2.bf16.msra.mxu0 0
  %2727 = vmatprep.mubr.bf16.mxu0 0
  %2728 = vmatmul.mubr.bf16.gmra.mxu0 %v2693
  %v2729 = vpop.f32.mrf.mxu0
  %v2730 = vadd.f32 %v2679, %v2729
  %v2731 = vpop.f32.mrf.mxu0
  %v2732 = vpop.f32.mrf.mxu0
  %v2733 = vadd.f32 %v2684, %v2732
  %v2734 = vpop.f32.mrf.mxu0
  %2735 = vdwg.mxu0
  %v2736 = vmax.f32 %v2730, 0.0
  %v2737 = vmax.f32 %v2733, 0.0
  %2738 = vrot.lane.b32.xlu0 %v2736, 9
  %v2739 = vpop.permute.xlu0 %2738
  %2740 = vrot.lane.b32.xlu0 %v2737, 9
  %v2741 = vpop.permute.xlu0 %2740
  %v2742 = vld [vmem:[%s3] sm:$0x1]
  %v2744 = vlaneseq
  %v2745 = vshrl.u32 %v2744, 7
  %v2746 = vsub.s32 0, %v2745
  %v2747 = vrot.slane %v2742, %v2746
  %v2749 = vmul.f32 %v2739, %v2747
  %v2750 = vmul.f32 %v2741, %v2747
  %v2751 = vpack.c.bf16 %v2750, %v2749
  %2752 = vrot.lane.b32.xlu0 %v2736, 8
  %v2753 = vpop.permute.xlu0 %2752
  %2754 = vrot.lane.b32.xlu0 %v2737, 8
  %v2755 = vpop.permute.xlu0 %2754
  %v2756 = vld [vmem:[%s233] sm:$0x1]
  %v2758 = vlaneseq
  %v2759 = vshrl.u32 %v2758, 7
  %v2760 = vsub.s32 0, %v2759
  %v2761 = vrot.slane %v2756, %v2760
  %v2763 = vmul.f32 %v2753, %v2761
  %v2764 = vmul.f32 %v2755, %v2761
  %v2765 = vpack.c.bf16 %v2764, %v2763
  %2766 = vrot.lane.b32.xlu0 %v2736, 7
  %v2767 = vpop.permute.xlu0 %2766
  %2768 = vrot.lane.b32.xlu0 %v2737, 7
  %v2769 = vpop.permute.xlu0 %2768
  %v2770 = vld [vmem:[%s245] sm:$0x1]
  %v2772 = vlaneseq
  %v2773 = vshrl.u32 %v2772, 7
  %v2774 = vsub.s32 0, %v2773
  %v2775 = vrot.slane %v2770, %v2774
  %v2777 = vmul.f32 %v2767, %v2775
  %v2778 = vmul.f32 %v2769, %v2775
  %v2779 = vpack.c.bf16 %v2778, %v2777
  %2780 = vrot.lane.b32.xlu0 %v2736, 1
  %v2781 = vpop.permute.xlu0 %2780
  %2782 = vrot.lane.b32.xlu0 %v2737, 1
  %v2783 = vpop.permute.xlu0 %2782
  %v2784 = vld [vmem:[%s257] sm:$0x1]
  %v2786 = vlaneseq
  %v2787 = vshrl.u32 %v2786, 7
  %v2788 = vsub.s32 0, %v2787
  %v2789 = vrot.slane %v2784, %v2788
  %v2791 = vmul.f32 %v2781, %v2789
  %v2792 = vmul.f32 %v2783, %v2789
  %v2793 = vpack.c.bf16 %v2792, %v2791
  %v2794 = vpack.c.bf16 %v2737, %v2736
  %2795 = vrot.lane.b32.xlu0 %v2736, 127
  %v2796 = vpop.permute.xlu0 %2795
  %2797 = vrot.lane.b32.xlu0 %v2737, 127
  %v2798 = vpop.permute.xlu0 %2797
  %v2799 = vld [vmem:[%s270] sm:$0x1]
  %v2801 = vlaneseq
  %v2802 = vshrl.u32 %v2801, 7
  %v2803 = vsub.s32 0, %v2802
  %v2804 = vrot.slane %v2799, %v2803
  %v2806 = vmul.f32 %v2796, %v2804
  %v2807 = vmul.f32 %v2798, %v2804
  %v2808 = vpack.c.bf16 %v2807, %v2806
  %2809 = vrot.lane.b32.xlu0 %v2736, 121
  %v2810 = vpop.permute.xlu0 %2809
  %2811 = vrot.lane.b32.xlu0 %v2737, 121
  %v2812 = vpop.permute.xlu0 %2811
  %v2813 = vld [vmem:[%s282] sm:$0x1]
  %v2815 = vlaneseq
  %v2816 = vshrl.u32 %v2815, 7
  %v2817 = vsub.s32 0, %v2816
  %v2818 = vrot.slane %v2813, %v2817
  %v2820 = vmul.f32 %v2810, %v2818
  %v2821 = vmul.f32 %v2812, %v2818
  %v2822 = vpack.c.bf16 %v2821, %v2820
  %2823 = vrot.lane.b32.xlu0 %v2736, 120
  %v2824 = vpop.permute.xlu0 %2823
  %2825 = vrot.lane.b32.xlu0 %v2737, 120
  %v2826 = vpop.permute.xlu0 %2825
  %v2827 = vld [vmem:[%s294] sm:$0x1]
  %v2829 = vlaneseq
  %v2830 = vshrl.u32 %v2829, 7
  %v2831 = vsub.s32 0, %v2830
  %v2832 = vrot.slane %v2827, %v2831
  %v2834 = vmul.f32 %v2824, %v2832
  %v2835 = vmul.f32 %v2826, %v2832
  %v2836 = vpack.c.bf16 %v2835, %v2834
  %2837 = vrot.lane.b32.xlu0 %v2736, 119
  %v2838 = vpop.permute.xlu0 %2837
  %2839 = vrot.lane.b32.xlu0 %v2737, 119
  %v2840 = vpop.permute.xlu0 %2839
  %v2841 = vld [vmem:[%s306] sm:$0x1]
  %v2843 = vlaneseq
  %v2844 = vshrl.u32 %v2843, 7
  %v2845 = vsub.s32 0, %v2844
  %v2846 = vrot.slane %v2841, %v2845
  %v2848 = vmul.f32 %v2838, %v2846
  %v2849 = vmul.f32 %v2840, %v2846
  %v2850 = vpack.c.bf16 %v2849, %v2848
  %v2851 = vld [vmem:[%s63] sm:$0xff]
  %v2852 = vld [vmem:[%s63 + $0x8] sm:$0xff]
  %v2853 = vld [vmem:[%s65] sm:$0xff]
  %v2854 = vld [vmem:[%s65 + $0x8] sm:$0xff]
  %2856 = vset.pattern.permute.xlu0 0
  %2857 = vperm.xlu0 %2856, %v2853
  %v2858 = vpop.permute.xlu0 %2857
  %2861 = vset.pattern.permute.xlu0 0
  %2862 = vperm.xlu0 %2861, %v2854
  %v2863 = vpop.permute.xlu0 %2862
  %v2867 = vunpack.c.l.b16 %v2851
  %v2868 = vunpack.c.h.b16 %v2851
  %v2869 = vunpack.c.l.b16 %v2852
  %v2870 = vunpack.c.h.b16 %v2852
  %v2871 = vpack.c.b16 %v2869, %v2867
  %v2872 = vpack.c.b16 %v2870, %v2868
  %v2875 = vsel %vm1476, %v2872, 0
  %2877 = vmatprep.subr.bf16.mxu0 0
  %2878 = vmatpush1.bf16.msra.mxu0 %v2836
  %2879 = vmatprep.subr.bf16.mxu0 0
  %2880 = vmatpush1.bf16.msra.mxu0 %v2822
  %2881 = vmatprep.subr.bf16.mxu0 0
  %2882 = vmatpush1.bf16.msra.mxu0 %v2808
  %2883 = vmatprep.subr.bf16.mxu0 0
  %2884 = vmatpush1.bf16.msra.mxu0 %v2794
  %2885 = vmatprep.subr.bf16.mxu0 0
  %2886 = vmatpush1.bf16.msra.mxu0 %v2793
  %2887 = vmatprep.subr.bf16.mxu0 0
  %2888 = vmatpush1.bf16.msra.mxu0 %v2779
  %2889 = vmatprep.subr.bf16.mxu0 0
  %2890 = vmatpush1.bf16.msra.mxu0 %v2765
  %2891 = vmatprep.subr.bf16.mxu0 0
  %2892 = vmatpush1.bf16.msra.mxu0 %v2751
  %2893 = vmatprep.subr.bf16.mxu0 0
  %2894 = vmatpush2.bf16.msra.mxu0 0
  %2895 = vmatprep.subr.bf16.mxu0 0
  %2896 = vmatpush2.bf16.msra.mxu0 0
  %2897 = vmatprep.subr.bf16.mxu0 0
  %2898 = vmatpush2.bf16.msra.mxu0 0
  %2899 = vmatprep.subr.bf16.mxu0 0
  %2900 = vmatpush2.bf16.msra.mxu0 0
  %2901 = vmatprep.subr.bf16.mxu0 0
  %2902 = vmatpush2.bf16.msra.mxu0 0
  %2903 = vmatprep.subr.bf16.mxu0 0
  %2904 = vmatpush2.bf16.msra.mxu0 0
  %2905 = vmatprep.subr.bf16.mxu0 0
  %2906 = vmatpush2.bf16.msra.mxu0 0
  %2907 = vmatprep.subr.bf16.mxu0 0
  %2908 = vmatpush2.bf16.msra.mxu0 %v2850
  %2909 = vmatprep.mubr.bf16.mxu0 %v2875
  %2910 = vmatmul.mubr.bf16.gmra.mxu0 %v2871
  %v2911 = vpop.f32.mrf.mxu0
  %v2912 = vadd.f32 %v2858, %v2911
  %v2913 = vpop.f32.mrf.mxu0
  %v2914 = vpop.f32.mrf.mxu0
  %v2915 = vadd.f32 %v2863, %v2914
  %v2916 = vpop.f32.mrf.mxu0
  %2917 = vdwg.mxu0
  %v2918 = vmax.f32 %v2912, 0.0
  %v2919 = vmax.f32 %v2915, 0.0
  %v2920 = vld [vmem:[%s67] sm:$0xf]
  %v2921 = vld [vmem:[%s67 + $0x4] sm:$0xf]
  %v2922 = vld [vmem:[%s67 + $0x8] sm:$0xf]
  %v2923 = vld [vmem:[%s67 + $0xc] sm:$0xf]
  %v2924 = vld [vmem:[%s67 + $0x10] sm:$0xf]
  %v2925 = vld [vmem:[%s67 + $0x14] sm:$0xf]
  %v2926 = vld [vmem:[%s67 + $0x18] sm:$0xf]
  %v2927 = vld [vmem:[%s67 + $0x1c] sm:$0xf]
  %v2928 = vpack.c.bf16 %v2919, %v2918
  %v2929 = vld [vmem:[%s69] sm:$0xff]
  %v2930 = vld [vmem:[%s69 + $0x8] sm:$0xff]
  %v2931 = vld [vmem:[%s69 + $0x10] sm:$0xff]
  %v2932 = vld [vmem:[%s69 + $0x18] sm:$0xff]
  %v2933 = vld [vmem:[%s69 + $0x20] sm:$0xff]
  %v2934 = vld [vmem:[%s69 + $0x28] sm:$0xff]
  %v2935 = vld [vmem:[%s69 + $0x30] sm:$0xff]
  %v2936 = vld [vmem:[%s69 + $0x38] sm:$0xff]
  %2938 = vset.pattern.permute.xlu0 0
  %2939 = vperm.xlu0 %2938, %v2929
  %v2940 = vpop.permute.xlu0 %2939
  %2943 = vset.pattern.permute.xlu0 0
  %2944 = vperm.xlu0 %2943, %v2930
  %v2945 = vpop.permute.xlu0 %2944
  %2948 = vset.pattern.permute.xlu0 0
  %2949 = vperm.xlu0 %2948, %v2931
  %v2950 = vpop.permute.xlu0 %2949
  %2953 = vset.pattern.permute.xlu0 0
  %2954 = vperm.xlu0 %2953, %v2932
  %v2955 = vpop.permute.xlu0 %2954
  %2958 = vset.pattern.permute.xlu0 0
  %2959 = vperm.xlu0 %2958, %v2933
  %v2960 = vpop.permute.xlu0 %2959
  %2963 = vset.pattern.permute.xlu0 0
  %2964 = vperm.xlu0 %2963, %v2934
  %v2965 = vpop.permute.xlu0 %2964
  %2968 = vset.pattern.permute.xlu0 0
  %2969 = vperm.xlu0 %2968, %v2935
  %v2970 = vpop.permute.xlu0 %2969
  %2973 = vset.pattern.permute.xlu0 0
  %2974 = vperm.xlu0 %2973, %v2936
  %v2975 = vpop.permute.xlu0 %2974
  %v2985 = vunpack.c.l.b16 %v2920
  %v2986 = vunpack.c.l.b16 %v2921
  %v2987 = vunpack.c.l.b16 %v2922
  %v2988 = vunpack.c.l.b16 %v2923
  %v2989 = vunpack.c.l.b16 %v2924
  %v2990 = vunpack.c.l.b16 %v2925
  %v2991 = vunpack.c.l.b16 %v2926
  %v2992 = vunpack.c.l.b16 %v2927
  %v2993 = vpack.c.b16 %v2986, %v2985
  %v2994 = vpack.c.b16 %v2988, %v2987
  %v2995 = vpack.c.b16 %v2990, %v2989
  %v2996 = vpack.c.b16 %v2992, %v2991
  %v2998 = vsel %vm1476, %v2993, 0
  %v3001 = vsel %vm1476, %v2994, 0
  %v3004 = vsel %vm1476, %v2995, 0
  %v3007 = vsel %vm1476, %v2996, 0
  %3009 = vmatprep.subr.bf16.mxu0 0
  %3010 = vmatpush1.bf16.msra.mxu0 0
  %3011 = vmatprep.subr.bf16.mxu0 0
  %3012 = vmatpush1.bf16.msra.mxu0 0
  %3013 = vmatprep.subr.bf16.mxu0 0
  %3014 = vmatpush1.bf16.msra.mxu0 0
  %3015 = vmatprep.subr.bf16.mxu0 0
  %3016 = vmatpush1.bf16.msra.mxu0 0
  %3017 = vmatprep.subr.bf16.mxu0 0
  %3018 = vmatpush1.bf16.msra.mxu0 0
  %3019 = vmatprep.subr.bf16.mxu0 0
  %3020 = vmatpush1.bf16.msra.mxu0 0
  %3021 = vmatprep.subr.bf16.mxu0 0
  %3022 = vmatpush1.bf16.msra.mxu0 0
  %3023 = vmatprep.subr.bf16.mxu0 0
  %3024 = vmatpush1.bf16.msra.mxu0 %v2928
  %3025 = vmatprep.subr.bf16.mxu0 0
  %3026 = vmatpush2.bf16.msra.mxu0 0
  %3027 = vmatprep.subr.bf16.mxu0 0
  %3028 = vmatpush2.bf16.msra.mxu0 0
  %3029 = vmatprep.subr.bf16.mxu0 0
  %3030 = vmatpush2.bf16.msra.mxu0 0
  %3031 = vmatprep.subr.bf16.mxu0 0
  %3032 = vmatpush2.bf16.msra.mxu0 0
  %3033 = vmatprep.subr.bf16.mxu0 0
  %3034 = vmatpush2.bf16.msra.mxu0 0
  %3035 = vmatprep.subr.bf16.mxu0 0
  %3036 = vmatpush2.bf16.msra.mxu0 0
  %3037 = vmatprep.subr.bf16.mxu0 0
  %3038 = vmatpush2.bf16.msra.mxu0 0
  %3039 = vmatprep.subr.bf16.mxu0 0
  %3040 = vmatpush2.bf16.msra.mxu0 0
  %3041 = vmatprep.mubr.bf16.mxu0 0
  %3042 = vmatmul.mubr.bf16.gmra.mxu0 %v2998
  %v3043 = vpop.f32.mrf.mxu0
  %v3044 = vadd.f32 %v2940, %v3043
  %v3045 = vpop.f32.mrf.mxu0
  %v3046 = vpop.f32.mrf.mxu0
  %v3047 = vadd.f32 %v2945, %v3046
  %v3048 = vpop.f32.mrf.mxu0
  %3049 = vmatprep.mubr.bf16.mxu0 0
  %3050 = vmatmul.mubr.bf16.gmra.mxu0 %v3001
  %v3051 = vpop.f32.mrf.mxu0
  %v3052 = vadd.f32 %v2950, %v3051
  %v3053 = vpop.f32.mrf.mxu0
  %v3054 = vpop.f32.mrf.mxu0
  %v3055 = vadd.f32 %v2955, %v3054
  %v3056 = vpop.f32.mrf.mxu0
  %3057 = vmatprep.mubr.bf16.mxu0 0
  %3058 = vmatmul.mubr.bf16.gmra.mxu0 %v3004
  %v3059 = vpop.f32.mrf.mxu0
  %v3060 = vadd.f32 %v2960, %v3059
  %v3061 = vpop.f32.mrf.mxu0
  %v3062 = vpop.f32.mrf.mxu0
  %v3063 = vadd.f32 %v2965, %v3062
  %v3064 = vpop.f32.mrf.mxu0
  %3065 = vmatprep.mubr.bf16.mxu0 0
  %3066 = vmatmul.mubr.bf16.gmra.mxu0 %v3007
  %v3067 = vpop.f32.mrf.mxu0
  %v3068 = vadd.f32 %v2970, %v3067
  %v3069 = vpop.f32.mrf.mxu0
  %v3070 = vpop.f32.mrf.mxu0
  %v3071 = vadd.f32 %v2975, %v3070
  %v3072 = vpop.f32.mrf.mxu0
  %3073 = vdwg.mxu0
  %v3074 = vadd.f32 %v2540, %v3044
  %v3075 = vadd.f32 %v2541, %v3047
  %v3076 = vadd.f32 %v2542, %v3052
  %v3077 = vadd.f32 %v2543, %v3055
  %v3078 = vadd.f32 %v2544, %v3060
  %v3079 = vadd.f32 %v2545, %v3063
  %v3080 = vadd.f32 %v2546, %v3068
  %v3081 = vadd.f32 %v2547, %v3071
  %3082 = vst [vmem:[#allocation2] sm:$0xff] %v3074
  %3083 = vst [vmem:[#allocation2 + $0x8] sm:$0xff] %v3075
  %3084 = vst [vmem:[#allocation2 + $0x10] sm:$0xff] %v3076
  %3085 = vst [vmem:[#allocation2 + $0x18] sm:$0xff] %v3077
  %3086 = vst [vmem:[#allocation2 + $0x20] sm:$0xff] %v3078
  %3087 = vst [vmem:[#allocation2 + $0x28] sm:$0xff] %v3079
  %3088 = vst [vmem:[#allocation2 + $0x30] sm:$0xff] %v3080
  %3089 = vst [vmem:[#allocation2 + $0x38] sm:$0xff] %v3081
  %v3090 = vld [vmem:[#allocation2] sm:$0xff]
  %v3091 = vld [vmem:[#allocation2 + $0x8] sm:$0xff]
  %v3092 = vld [vmem:[#allocation2 + $0x10] sm:$0xff]
  %v3093 = vld [vmem:[#allocation2 + $0x18] sm:$0xff]
  %v3094 = vld [vmem:[#allocation2 + $0x20] sm:$0xff]
  %v3095 = vld [vmem:[#allocation2 + $0x28] sm:$0xff]
  %v3096 = vld [vmem:[#allocation2 + $0x30] sm:$0xff]
  %v3097 = vld [vmem:[#allocation2 + $0x38] sm:$0xff]
  %v3098 = vld [vmem:[%s71] sm:$0xf]
  %v3099 = vld [vmem:[%s71 + $0x4] sm:$0xf]
  %v3100 = vld [vmem:[%s71 + $0x8] sm:$0xf]
  %v3101 = vld [vmem:[%s71 + $0xc] sm:$0xf]
  %v3102 = vld [vmem:[%s71 + $0x10] sm:$0xf]
  %v3103 = vld [vmem:[%s71 + $0x14] sm:$0xf]
  %v3104 = vld [vmem:[%s71 + $0x18] sm:$0xf]
  %v3105 = vld [vmem:[%s71 + $0x1c] sm:$0xf]
  %v3106 = vpack.c.bf16 %v3091, %v3090
  %v3107 = vpack.c.bf16 %v3093, %v3092
  %v3108 = vpack.c.bf16 %v3095, %v3094
  %v3109 = vpack.c.bf16 %v3097, %v3096
  %v3110 = vld [vmem:[%s73] sm:$0xff]
  %v3111 = vld [vmem:[%s73 + $0x8] sm:$0xff]
  %v3112 = vld [vmem:[%s73 + $0x10] sm:$0xff]
  %v3113 = vld [vmem:[%s73 + $0x18] sm:$0xff]
  %v3114 = vld [vmem:[%s73 + $0x20] sm:$0xff]
  %v3115 = vld [vmem:[%s73 + $0x28] sm:$0xff]
  %v3116 = vld [vmem:[%s73 + $0x30] sm:$0xff]
  %v3117 = vld [vmem:[%s73 + $0x38] sm:$0xff]
  %3119 = vset.pattern.permute.xlu0 0
  %3120 = vperm.xlu0 %3119, %v3110
  %v3121 = vpop.permute.xlu0 %3120
  %3124 = vset.pattern.permute.xlu0 0
  %3125 = vperm.xlu0 %3124, %v3111
  %v3126 = vpop.permute.xlu0 %3125
  %3129 = vset.pattern.permute.xlu0 0
  %3130 = vperm.xlu0 %3129, %v3112
  %v3131 = vpop.permute.xlu0 %3130
  %3134 = vset.pattern.permute.xlu0 0
  %3135 = vperm.xlu0 %3134, %v3113
  %v3136 = vpop.permute.xlu0 %3135
  %3139 = vset.pattern.permute.xlu0 0
  %3140 = vperm.xlu0 %3139, %v3114
  %v3141 = vpop.permute.xlu0 %3140
  %3144 = vset.pattern.permute.xlu0 0
  %3145 = vperm.xlu0 %3144, %v3115
  %v3146 = vpop.permute.xlu0 %3145
  %3149 = vset.pattern.permute.xlu0 0
  %3150 = vperm.xlu0 %3149, %v3116
  %v3151 = vpop.permute.xlu0 %3150
  %3154 = vset.pattern.permute.xlu0 0
  %3155 = vperm.xlu0 %3154, %v3117
  %v3156 = vpop.permute.xlu0 %3155
  %v3166 = vunpack.c.l.b16 %v3098
  %v3167 = vunpack.c.l.b16 %v3099
  %v3168 = vunpack.c.l.b16 %v3100
  %v3169 = vunpack.c.l.b16 %v3101
  %v3170 = vunpack.c.l.b16 %v3102
  %v3171 = vunpack.c.l.b16 %v3103
  %v3172 = vunpack.c.l.b16 %v3104
  %v3173 = vunpack.c.l.b16 %v3105
  %v3174 = vpack.c.b16 %v3167, %v3166
  %v3175 = vpack.c.b16 %v3169, %v3168
  %v3176 = vpack.c.b16 %v3171, %v3170
  %v3177 = vpack.c.b16 %v3173, %v3172
  %v3179 = vsel %vm2691, %v3174, 0
  %v3182 = vsel %vm2691, %v3175, 0
  %v3185 = vsel %vm2691, %v3176, 0
  %v3188 = vsel %vm2691, %v3177, 0
  %3190 = vmatprep.subr.bf16.mxu0 0
  %3191 = vmatpush1.bf16.msra.mxu0 0
  %3192 = vmatprep.subr.bf16.mxu0 0
  %3193 = vmatpush1.bf16.msra.mxu0 0
  %3194 = vmatprep.subr.bf16.mxu0 0
  %3195 = vmatpush1.bf16.msra.mxu0 0
  %3196 = vmatprep.subr.bf16.mxu0 0
  %3197 = vmatpush1.bf16.msra.mxu0 0
  %3198 = vmatprep.subr.bf16.mxu0 0
  %3199 = vmatpush1.bf16.msra.mxu0 %v3109
  %3200 = vmatprep.subr.bf16.mxu0 0
  %3201 = vmatpush1.bf16.msra.mxu0 %v3108
  %3202 = vmatprep.subr.bf16.mxu0 0
  %3203 = vmatpush1.bf16.msra.mxu0 %v3107
  %3204 = vmatprep.subr.bf16.mxu0 0
  %3205 = vmatpush1.bf16.msra.mxu0 %v3106
  %3206 = vmatprep.subr.bf16.mxu0 0
  %3207 = vmatpush2.bf16.msra.mxu0 0
  %3208 = vmatprep.subr.bf16.mxu0 0
  %3209 = vmatpush2.bf16.msra.mxu0 0
  %3210 = vmatprep.subr.bf16.mxu0 0
  %3211 = vmatpush2.bf16.msra.mxu0 0
  %3212 = vmatprep.subr.bf16.mxu0 0
  %3213 = vmatpush2.bf16.msra.mxu0 0
  %3214 = vmatprep.subr.bf16.mxu0 0
  %3215 = vmatpush2.bf16.msra.mxu0 0
  %3216 = vmatprep.subr.bf16.mxu0 0
  %3217 = vmatpush2.bf16.msra.mxu0 0
  %3218 = vmatprep.subr.bf16.mxu0 0
  %3219 = vmatpush2.bf16.msra.mxu0 0
  %3220 = vmatprep.subr.bf16.mxu0 0
  %3221 = vmatpush2.bf16.msra.mxu0 0
  %3222 = vmatprep.mubr.bf16.mxu0 0
  %3223 = vmatmul.mubr.bf16.gmra.mxu0 %v3179
  %v3224 = vpop.f32.mrf.mxu0
  %v3225 = vadd.f32 %v3121, %v3224
  %v3226 = vpop.f32.mrf.mxu0
  %v3227 = vpop.f32.mrf.mxu0
  %v3228 = vadd.f32 %v3126, %v3227
  %v3229 = vpop.f32.mrf.mxu0
  %3230 = vmatprep.mubr.bf16.mxu0 0
  %3231 = vmatmul.mubr.bf16.gmra.mxu0 %v3182
  %v3232 = vpop.f32.mrf.mxu0
  %v3233 = vadd.f32 %v3131, %v3232
  %v3234 = vpop.f32.mrf.mxu0
  %v3235 = vpop.f32.mrf.mxu0
  %v3236 = vadd.f32 %v3136, %v3235
  %v3237 = vpop.f32.mrf.mxu0
  %3238 = vmatprep.mubr.bf16.mxu0 0
  %3239 = vmatmul.mubr.bf16.gmra.mxu0 %v3185
  %v3240 = vpop.f32.mrf.mxu0
  %v3241 = vadd.f32 %v3141, %v3240
  %v3242 = vpop.f32.mrf.mxu0
  %v3243 = vpop.f32.mrf.mxu0
  %v3244 = vadd.f32 %v3146, %v3243
  %v3245 = vpop.f32.mrf.mxu0
  %3246 = vmatprep.mubr.bf16.mxu0 0
  %3247 = vmatmul.mubr.bf16.gmra.mxu0 %v3188
  %v3248 = vpop.f32.mrf.mxu0
  %v3249 = vadd.f32 %v3151, %v3248
  %v3250 = vpop.f32.mrf.mxu0
  %v3251 = vpop.f32.mrf.mxu0
  %v3252 = vadd.f32 %v3156, %v3251
  %v3253 = vpop.f32.mrf.mxu0
  %3254 = vdwg.mxu0
  %v3255 = vmax.f32 %v3225, 0.0
  %v3256 = vmax.f32 %v3228, 0.0
  %v3257 = vmax.f32 %v3233, 0.0
  %v3258 = vmax.f32 %v3236, 0.0
  %v3259 = vmax.f32 %v3241, 0.0
  %v3260 = vmax.f32 %v3244, 0.0
  %v3261 = vmax.f32 %v3249, 0.0
  %v3262 = vmax.f32 %v3252, 0.0
  %3263 = vrot.lane.b32.xlu0 %v3255, 9
  %v3264 = vpop.permute.xlu0 %3263
  %3265 = vrot.lane.b32.xlu0 %v3256, 9
  %v3266 = vpop.permute.xlu0 %3265
  %3267 = vrot.lane.b32.xlu0 %v3257, 9
  %v3268 = vpop.permute.xlu0 %3267
  %3269 = vrot.lane.b32.xlu0 %v3258, 9
  %v3270 = vpop.permute.xlu0 %3269
  %3271 = vrot.lane.b32.xlu0 %v3259, 9
  %v3272 = vpop.permute.xlu0 %3271
  %3273 = vrot.lane.b32.xlu0 %v3260, 9
  %v3274 = vpop.permute.xlu0 %3273
  %3275 = vrot.lane.b32.xlu0 %v3261, 9
  %v3276 = vpop.permute.xlu0 %3275
  %3277 = vrot.lane.b32.xlu0 %v3262, 9
  %v3278 = vpop.permute.xlu0 %3277
  %v3279 = vld [vmem:[%s3] sm:$0x1]
  %v3281 = vlaneseq
  %v3282 = vshrl.u32 %v3281, 7
  %v3283 = vsub.s32 0, %v3282
  %v3284 = vrot.slane %v3279, %v3283
  %v3286 = vmul.f32 %v3264, %v3284
  %v3287 = vmul.f32 %v3266, %v3284
  %v3288 = vmul.f32 %v3268, %v3284
  %v3289 = vmul.f32 %v3270, %v3284
  %v3290 = vmul.f32 %v3272, %v3284
  %v3291 = vmul.f32 %v3274, %v3284
  %v3292 = vmul.f32 %v3276, %v3284
  %v3293 = vmul.f32 %v3278, %v3284
  %v3294 = vpack.c.bf16 %v3287, %v3286
  %v3295 = vpack.c.bf16 %v3289, %v3288
  %v3296 = vpack.c.bf16 %v3291, %v3290
  %v3297 = vpack.c.bf16 %v3293, %v3292
  %3298 = vrot.lane.b32.xlu0 %v3255, 8
  %v3299 = vpop.permute.xlu0 %3298
  %3300 = vrot.lane.b32.xlu0 %v3256, 8
  %v3301 = vpop.permute.xlu0 %3300
  %3302 = vrot.lane.b32.xlu0 %v3257, 8
  %v3303 = vpop.permute.xlu0 %3302
  %3304 = vrot.lane.b32.xlu0 %v3258, 8
  %v3305 = vpop.permute.xlu0 %3304
  %3306 = vrot.lane.b32.xlu0 %v3259, 8
  %v3307 = vpop.permute.xlu0 %3306
  %3308 = vrot.lane.b32.xlu0 %v3260, 8
  %v3309 = vpop.permute.xlu0 %3308
  %3310 = vrot.lane.b32.xlu0 %v3261, 8
  %v3311 = vpop.permute.xlu0 %3310
  %3312 = vrot.lane.b32.xlu0 %v3262, 8
  %v3313 = vpop.permute.xlu0 %3312
  %v3314 = vld [vmem:[%s233] sm:$0x1]
  %v3316 = vlaneseq
  %v3317 = vshrl.u32 %v3316, 7
  %v3318 = vsub.s32 0, %v3317
  %v3319 = vrot.slane %v3314, %v3318
  %v3321 = vmul.f32 %v3299, %v3319
  %v3322 = vmul.f32 %v3301, %v3319
  %v3323 = vmul.f32 %v3303, %v3319
  %v3324 = vmul.f32 %v3305, %v3319
  %v3325 = vmul.f32 %v3307, %v3319
  %v3326 = vmul.f32 %v3309, %v3319
  %v3327 = vmul.f32 %v3311, %v3319
  %v3328 = vmul.f32 %v3313, %v3319
  %v3329 = vpack.c.bf16 %v3322, %v3321
  %v3330 = vpack.c.bf16 %v3324, %v3323
  %v3331 = vpack.c.bf16 %v3326, %v3325
  %v3332 = vpack.c.bf16 %v3328, %v3327
  %3333 = vrot.lane.b32.xlu0 %v3255, 7
  %v3334 = vpop.permute.xlu0 %3333
  %3335 = vrot.lane.b32.xlu0 %v3256, 7
  %v3336 = vpop.permute.xlu0 %3335
  %3337 = vrot.lane.b32.xlu0 %v3257, 7
  %v3338 = vpop.permute.xlu0 %3337
  %3339 = vrot.lane.b32.xlu0 %v3258, 7
  %v3340 = vpop.permute.xlu0 %3339
  %3341 = vrot.lane.b32.xlu0 %v3259, 7
  %v3342 = vpop.permute.xlu0 %3341
  %3343 = vrot.lane.b32.xlu0 %v3260, 7
  %v3344 = vpop.permute.xlu0 %3343
  %3345 = vrot.lane.b32.xlu0 %v3261, 7
  %v3346 = vpop.permute.xlu0 %3345
  %3347 = vrot.lane.b32.xlu0 %v3262, 7
  %v3348 = vpop.permute.xlu0 %3347
  %v3349 = vld [vmem:[%s245] sm:$0x1]
  %v3351 = vlaneseq
  %v3352 = vshrl.u32 %v3351, 7
  %v3353 = vsub.s32 0, %v3352
  %v3354 = vrot.slane %v3349, %v3353
  %v3356 = vmul.f32 %v3334, %v3354
  %v3357 = vmul.f32 %v3336, %v3354
  %v3358 = vmul.f32 %v3338, %v3354
  %v3359 = vmul.f32 %v3340, %v3354
  %v3360 = vmul.f32 %v3342, %v3354
  %v3361 = vmul.f32 %v3344, %v3354
  %v3362 = vmul.f32 %v3346, %v3354
  %v3363 = vmul.f32 %v3348, %v3354
  %v3364 = vpack.c.bf16 %v3357, %v3356
  %v3365 = vpack.c.bf16 %v3359, %v3358
  %v3366 = vpack.c.bf16 %v3361, %v3360
  %v3367 = vpack.c.bf16 %v3363, %v3362
  %3368 = vrot.lane.b32.xlu0 %v3255, 1
  %v3369 = vpop.permute.xlu0 %3368
  %3370 = vrot.lane.b32.xlu0 %v3256, 1
  %v3371 = vpop.permute.xlu0 %3370
  %3372 = vrot.lane.b32.xlu0 %v3257, 1
  %v3373 = vpop.permute.xlu0 %3372
  %3374 = vrot.lane.b32.xlu0 %v3258, 1
  %v3375 = vpop.permute.xlu0 %3374
  %3376 = vrot.lane.b32.xlu0 %v3259, 1
  %v3377 = vpop.permute.xlu0 %3376
  %3378 = vrot.lane.b32.xlu0 %v3260, 1
  %v3379 = vpop.permute.xlu0 %3378
  %3380 = vrot.lane.b32.xlu0 %v3261, 1
  %v3381 = vpop.permute.xlu0 %3380
  %3382 = vrot.lane.b32.xlu0 %v3262, 1
  %v3383 = vpop.permute.xlu0 %3382
  %v3384 = vld [vmem:[%s257] sm:$0x1]
  %v3386 = vlaneseq
  %v3387 = vshrl.u32 %v3386, 7
  %v3388 = vsub.s32 0, %v3387
  %v3389 = vrot.slane %v3384, %v3388
  %v3391 = vmul.f32 %v3369, %v3389
  %v3392 = vmul.f32 %v3371, %v3389
  %v3393 = vmul.f32 %v3373, %v3389
  %v3394 = vmul.f32 %v3375, %v3389
  %v3395 = vmul.f32 %v3377, %v3389
  %v3396 = vmul.f32 %v3379, %v3389
  %v3397 = vmul.f32 %v3381, %v3389
  %v3398 = vmul.f32 %v3383, %v3389
  %v3399 = vpack.c.bf16 %v3392, %v3391
  %v3400 = vpack.c.bf16 %v3394, %v3393
  %v3401 = vpack.c.bf16 %v3396, %v3395
  %v3402 = vpack.c.bf16 %v3398, %v3397
  %v3403 = vpack.c.bf16 %v3256, %v3255
  %v3404 = vpack.c.bf16 %v3258, %v3257
  %v3405 = vpack.c.bf16 %v3260, %v3259
  %v3406 = vpack.c.bf16 %v3262, %v3261
  %3407 = vrot.lane.b32.xlu0 %v3255, 127
  %v3408 = vpop.permute.xlu0 %3407
  %3409 = vrot.lane.b32.xlu0 %v3256, 127
  %v3410 = vpop.permute.xlu0 %3409
  %3411 = vrot.lane.b32.xlu0 %v3257, 127
  %v3412 = vpop.permute.xlu0 %3411
  %3413 = vrot.lane.b32.xlu0 %v3258, 127
  %v3414 = vpop.permute.xlu0 %3413
  %3415 = vrot.lane.b32.xlu0 %v3259, 127
  %v3416 = vpop.permute.xlu0 %3415
  %3417 = vrot.lane.b32.xlu0 %v3260, 127
  %v3418 = vpop.permute.xlu0 %3417
  %3419 = vrot.lane.b32.xlu0 %v3261, 127
  %v3420 = vpop.permute.xlu0 %3419
  %3421 = vrot.lane.b32.xlu0 %v3262, 127
  %v3422 = vpop.permute.xlu0 %3421
  %v3423 = vld [vmem:[%s270] sm:$0x1]
  %v3425 = vlaneseq
  %v3426 = vshrl.u32 %v3425, 7
  %v3427 = vsub.s32 0, %v3426
  %v3428 = vrot.slane %v3423, %v3427
  %v3430 = vmul.f32 %v3408, %v3428
  %v3431 = vmul.f32 %v3410, %v3428
  %v3432 = vmul.f32 %v3412, %v3428
  %v3433 = vmul.f32 %v3414, %v3428
  %v3434 = vmul.f32 %v3416, %v3428
  %v3435 = vmul.f32 %v3418, %v3428
  %v3436 = vmul.f32 %v3420, %v3428
  %v3437 = vmul.f32 %v3422, %v3428
  %v3438 = vpack.c.bf16 %v3431, %v3430
  %v3439 = vpack.c.bf16 %v3433, %v3432
  %v3440 = vpack.c.bf16 %v3435, %v3434
  %v3441 = vpack.c.bf16 %v3437, %v3436
  %3442 = vrot.lane.b32.xlu0 %v3255, 121
  %v3443 = vpop.permute.xlu0 %3442
  %3444 = vrot.lane.b32.xlu0 %v3256, 121
  %v3445 = vpop.permute.xlu0 %3444
  %3446 = vrot.lane.b32.xlu0 %v3257, 121
  %v3447 = vpop.permute.xlu0 %3446
  %3448 = vrot.lane.b32.xlu0 %v3258, 121
  %v3449 = vpop.permute.xlu0 %3448
  %3450 = vrot.lane.b32.xlu0 %v3259, 121
  %v3451 = vpop.permute.xlu0 %3450
  %3452 = vrot.lane.b32.xlu0 %v3260, 121
  %v3453 = vpop.permute.xlu0 %3452
  %3454 = vrot.lane.b32.xlu0 %v3261, 121
  %v3455 = vpop.permute.xlu0 %3454
  %3456 = vrot.lane.b32.xlu0 %v3262, 121
  %v3457 = vpop.permute.xlu0 %3456
  %v3458 = vld [vmem:[%s282] sm:$0x1]
  %v3460 = vlaneseq
  %v3461 = vshrl.u32 %v3460, 7
  %v3462 = vsub.s32 0, %v3461
  %v3463 = vrot.slane %v3458, %v3462
  %v3465 = vmul.f32 %v3443, %v3463
  %v3466 = vmul.f32 %v3445, %v3463
  %v3467 = vmul.f32 %v3447, %v3463
  %v3468 = vmul.f32 %v3449, %v3463
  %v3469 = vmul.f32 %v3451, %v3463
  %v3470 = vmul.f32 %v3453, %v3463
  %v3471 = vmul.f32 %v3455, %v3463
  %v3472 = vmul.f32 %v3457, %v3463
  %v3473 = vpack.c.bf16 %v3466, %v3465
  %v3474 = vpack.c.bf16 %v3468, %v3467
  %v3475 = vpack.c.bf16 %v3470, %v3469
  %v3476 = vpack.c.bf16 %v3472, %v3471
  %3477 = vrot.lane.b32.xlu0 %v3255, 120
  %v3478 = vpop.permute.xlu0 %3477
  %3479 = vrot.lane.b32.xlu0 %v3256, 120
  %v3480 = vpop.permute.xlu0 %3479
  %3481 = vrot.lane.b32.xlu0 %v3257, 120
  %v3482 = vpop.permute.xlu0 %3481
  %3483 = vrot.lane.b32.xlu0 %v3258, 120
  %v3484 = vpop.permute.xlu0 %3483
  %3485 = vrot.lane.b32.xlu0 %v3259, 120
  %v3486 = vpop.permute.xlu0 %3485
  %3487 = vrot.lane.b32.xlu0 %v3260, 120
  %v3488 = vpop.permute.xlu0 %3487
  %3489 = vrot.lane.b32.xlu0 %v3261, 120
  %v3490 = vpop.permute.xlu0 %3489
  %3491 = vrot.lane.b32.xlu0 %v3262, 120
  %v3492 = vpop.permute.xlu0 %3491
  %v3493 = vld [vmem:[%s294] sm:$0x1]
  %v3495 = vlaneseq
  %v3496 = vshrl.u32 %v3495, 7
  %v3497 = vsub.s32 0, %v3496
  %v3498 = vrot.slane %v3493, %v3497
  %v3500 = vmul.f32 %v3478, %v3498
  %v3501 = vmul.f32 %v3480, %v3498
  %v3502 = vmul.f32 %v3482, %v3498
  %v3503 = vmul.f32 %v3484, %v3498
  %v3504 = vmul.f32 %v3486, %v3498
  %v3505 = vmul.f32 %v3488, %v3498
  %v3506 = vmul.f32 %v3490, %v3498
  %v3507 = vmul.f32 %v3492, %v3498
  %v3508 = vpack.c.bf16 %v3501, %v3500
  %v3509 = vpack.c.bf16 %v3503, %v3502
  %v3510 = vpack.c.bf16 %v3505, %v3504
  %v3511 = vpack.c.bf16 %v3507, %v3506
  %3512 = vrot.lane.b32.xlu0 %v3255, 119
  %v3513 = vpop.permute.xlu0 %3512
  %3514 = vrot.lane.b32.xlu0 %v3256, 119
  %v3515 = vpop.permute.xlu0 %3514
  %3516 = vrot.lane.b32.xlu0 %v3257, 119
  %v3517 = vpop.permute.xlu0 %3516
  %3518 = vrot.lane.b32.xlu0 %v3258, 119
  %v3519 = vpop.permute.xlu0 %3518
  %3520 = vrot.lane.b32.xlu0 %v3259, 119
  %v3521 = vpop.permute.xlu0 %3520
  %3522 = vrot.lane.b32.xlu0 %v3260, 119
  %v3523 = vpop.permute.xlu0 %3522
  %3524 = vrot.lane.b32.xlu0 %v3261, 119
  %v3525 = vpop.permute.xlu0 %3524
  %3526 = vrot.lane.b32.xlu0 %v3262, 119
  %v3527 = vpop.permute.xlu0 %3526
  %v3528 = vld [vmem:[%s306] sm:$0x1]
  %v3530 = vlaneseq
  %v3531 = vshrl.u32 %v3530, 7
  %v3532 = vsub.s32 0, %v3531
  %v3533 = vrot.slane %v3528, %v3532
  %v3535 = vmul.f32 %v3513, %v3533
  %v3536 = vmul.f32 %v3515, %v3533
  %v3537 = vmul.f32 %v3517, %v3533
  %v3538 = vmul.f32 %v3519, %v3533
  %v3539 = vmul.f32 %v3521, %v3533
  %v3540 = vmul.f32 %v3523, %v3533
  %v3541 = vmul.f32 %v3525, %v3533
  %v3542 = vmul.f32 %v3527, %v3533
  %v3543 = vpack.c.bf16 %v3536, %v3535
  %v3544 = vpack.c.bf16 %v3538, %v3537
  %v3545 = vpack.c.bf16 %v3540, %v3539
  %v3546 = vpack.c.bf16 %v3542, %v3541
  %v3547 = vld [vmem:[%s75] sm:$0xff]
  %v3548 = vld [vmem:[%s75 + $0x8] sm:$0xff]
  %v3549 = vld [vmem:[%s75 + $0x10] sm:$0xf]
  %v3550 = vld [vmem:[%s75 + $0x14] sm:$0xff]
  %v3551 = vld [vmem:[%s75 + $0x1c] sm:$0xff]
  %v3552 = vld [vmem:[%s75 + $0x24] sm:$0xf]
  %v3553 = vld [vmem:[%s75 + $0x28] sm:$0xff]
  %v3554 = vld [vmem:[%s75 + $0x30] sm:$0xff]
  %v3555 = vld [vmem:[%s75 + $0x38] sm:$0xf]
  %v3556 = vld [vmem:[%s75 + $0x3c] sm:$0xff]
  %v3557 = vld [vmem:[%s75 + $0x44] sm:$0xff]
  %v3558 = vld [vmem:[%s75 + $0x4c] sm:$0xf]
  %v3559 = vld [vmem:[%s75 + $0x50] sm:$0xff]
  %v3560 = vld [vmem:[%s75 + $0x58] sm:$0xff]
  %v3561 = vld [vmem:[%s75 + $0x60] sm:$0xf]
  %v3562 = vld [vmem:[%s75 + $0x64] sm:$0xff]
  %v3563 = vld [vmem:[%s75 + $0x6c] sm:$0xff]
  %v3564 = vld [vmem:[%s75 + $0x74] sm:$0xf]
  %v3565 = vld [vmem:[%s75 + $0x78] sm:$0xff]
  %v3566 = vld [vmem:[%s75 + $0x80] sm:$0xff]
  %v3567 = vld [vmem:[%s75 + $0x88] sm:$0xf]
  %v3568 = vld [vmem:[%s75 + $0x8c] sm:$0xff]
  %v3569 = vld [vmem:[%s75 + $0x94] sm:$0xff]
  %v3570 = vld [vmem:[%s75 + $0x9c] sm:$0xf]
  %v3571 = vld [vmem:[%s77] sm:$0xff]
  %v3572 = vld [vmem:[%s77 + $0x8] sm:$0xff]
  %v3573 = vld [vmem:[%s77 + $0x10] sm:$0xff]
  %v3574 = vld [vmem:[%s77 + $0x18] sm:$0xff]
  %v3575 = vld [vmem:[%s77 + $0x20] sm:$0xff]
  %v3576 = vld [vmem:[%s77 + $0x28] sm:$0xff]
  %v3577 = vld [vmem:[%s77 + $0x30] sm:$0xff]
  %v3578 = vld [vmem:[%s77 + $0x38] sm:$0xff]
  %3580 = vset.pattern.permute.xlu0 0
  %3581 = vperm.xlu0 %3580, %v3571
  %v3582 = vpop.permute.xlu0 %3581
  %3585 = vset.pattern.permute.xlu0 0
  %3586 = vperm.xlu0 %3585, %v3572
  %v3587 = vpop.permute.xlu0 %3586
  %3590 = vset.pattern.permute.xlu0 0
  %3591 = vperm.xlu0 %3590, %v3573
  %v3592 = vpop.permute.xlu0 %3591
  %3595 = vset.pattern.permute.xlu0 0
  %3596 = vperm.xlu0 %3595, %v3574
  %v3597 = vpop.permute.xlu0 %3596
  %3600 = vset.pattern.permute.xlu0 0
  %3601 = vperm.xlu0 %3600, %v3575
  %v3602 = vpop.permute.xlu0 %3601
  %3605 = vset.pattern.permute.xlu0 0
  %3606 = vperm.xlu0 %3605, %v3576
  %v3607 = vpop.permute.xlu0 %3606
  %3610 = vset.pattern.permute.xlu0 0
  %3611 = vperm.xlu0 %3610, %v3577
  %v3612 = vpop.permute.xlu0 %3611
  %3615 = vset.pattern.permute.xlu0 0
  %3616 = vperm.xlu0 %3615, %v3578
  %v3617 = vpop.permute.xlu0 %3616
  %v3643 = vunpack.c.l.b16 %v3547
  %v3644 = vunpack.c.h.b16 %v3547
  %v3645 = vunpack.c.l.b16 %v3548
  %v3646 = vunpack.c.h.b16 %v3548
  %v3647 = vunpack.c.l.b16 %v3549
  %v3648 = vunpack.c.l.b16 %v3550
  %v3649 = vunpack.c.h.b16 %v3550
  %v3650 = vunpack.c.l.b16 %v3551
  %v3651 = vunpack.c.h.b16 %v3551
  %v3652 = vunpack.c.l.b16 %v3552
  %v3653 = vunpack.c.l.b16 %v3553
  %v3654 = vunpack.c.h.b16 %v3553
  %v3655 = vunpack.c.l.b16 %v3554
  %v3656 = vunpack.c.h.b16 %v3554
  %v3657 = vunpack.c.l.b16 %v3555
  %v3658 = vunpack.c.l.b16 %v3556
  %v3659 = vunpack.c.h.b16 %v3556
  %v3660 = vunpack.c.l.b16 %v3557
  %v3661 = vunpack.c.h.b16 %v3557
  %v3662 = vunpack.c.l.b16 %v3558
  %v3663 = vunpack.c.l.b16 %v3559
  %v3664 = vunpack.c.h.b16 %v3559
  %v3665 = vunpack.c.l.b16 %v3560
  %v3666 = vunpack.c.h.b16 %v3560
  %v3667 = vunpack.c.l.b16 %v3561
  %v3668 = vunpack.c.l.b16 %v3562
  %v3669 = vunpack.c.h.b16 %v3562
  %v3670 = vunpack.c.l.b16 %v3563
  %v3671 = vunpack.c.h.b16 %v3563
  %v3672 = vunpack.c.l.b16 %v3564
  %v3673 = vunpack.c.l.b16 %v3565
  %v3674 = vunpack.c.h.b16 %v3565
  %v3675 = vunpack.c.l.b16 %v3566
  %v3676 = vunpack.c.h.b16 %v3566
  %v3677 = vunpack.c.l.b16 %v3567
  %v3678 = vunpack.c.l.b16 %v3568
  %v3679 = vunpack.c.h.b16 %v3568
  %v3680 = vunpack.c.l.b16 %v3569
  %v3681 = vunpack.c.h.b16 %v3569
  %v3682 = vunpack.c.l.b16 %v3570
  %v3683 = vpack.c.b16 %v3648, %v3643
  %v3684 = vpack.c.b16 %v3649, %v3644
  %v3685 = vpack.c.b16 %v3650, %v3645
  %v3686 = vpack.c.b16 %v3651, %v3646
  %v3687 = vpack.c.b16 %v3652, %v3647
  %v3688 = vpack.c.b16 %v3658, %v3653
  %v3689 = vpack.c.b16 %v3659, %v3654
  %v3690 = vpack.c.b16 %v3660, %v3655
  %v3691 = vpack.c.b16 %v3661, %v3656
  %v3692 = vpack.c.b16 %v3662, %v3657
  %v3693 = vpack.c.b16 %v3668, %v3663
  %v3694 = vpack.c.b16 %v3669, %v3664
  %v3695 = vpack.c.b16 %v3670, %v3665
  %v3696 = vpack.c.b16 %v3671, %v3666
  %v3697 = vpack.c.b16 %v3672, %v3667
  %v3698 = vpack.c.b16 %v3678, %v3673
  %v3699 = vpack.c.b16 %v3679, %v3674
  %v3700 = vpack.c.b16 %v3680, %v3675
  %v3701 = vpack.c.b16 %v3681, %v3676
  %v3702 = vpack.c.b16 %v3682, %v3677
  %v3720 = vsel %vm2691, %v3687, 0
  %v3723 = vsel %vm2691, %v3692, 0
  %v3726 = vsel %vm2691, %v3697, 0
  %v3729 = vsel %vm2691, %v3702, 0
  %3731 = vmatprep.subr.bf16.mxu0 0
  %3732 = vmatpush1.bf16.msra.mxu0 %v3332
  %3733 = vmatprep.subr.bf16.mxu0 0
  %3734 = vmatpush1.bf16.msra.mxu0 %v3331
  %3735 = vmatprep.subr.bf16.mxu0 0
  %3736 = vmatpush1.bf16.msra.mxu0 %v3330
  %3737 = vmatprep.subr.bf16.mxu0 0
  %3738 = vmatpush1.bf16.msra.mxu0 %v3329
  %3739 = vmatprep.subr.bf16.mxu0 0
  %3740 = vmatpush1.bf16.msra.mxu0 %v3297
  %3741 = vmatprep.subr.bf16.mxu0 0
  %3742 = vmatpush1.bf16.msra.mxu0 %v3296
  %3743 = vmatprep.subr.bf16.mxu0 0
  %3744 = vmatpush1.bf16.msra.mxu0 %v3295
  %3745 = vmatprep.subr.bf16.mxu0 0
  %3746 = vmatpush1.bf16.msra.mxu0 %v3294
  %3747 = vmatprep.subr.bf16.mxu0 0
  %3748 = vmatpush2.bf16.msra.mxu0 %v3402
  %3749 = vmatprep.subr.bf16.mxu0 0
  %3750 = vmatpush2.bf16.msra.mxu0 %v3401
  %3751 = vmatprep.subr.bf16.mxu0 0
  %3752 = vmatpush2.bf16.msra.mxu0 %v3400
  %3753 = vmatprep.subr.bf16.mxu0 0
  %3754 = vmatpush2.bf16.msra.mxu0 %v3399
  %3755 = vmatprep.subr.bf16.mxu0 0
  %3756 = vmatpush2.bf16.msra.mxu0 %v3367
  %3757 = vmatprep.subr.bf16.mxu0 0
  %3758 = vmatpush2.bf16.msra.mxu0 %v3366
  %3759 = vmatprep.subr.bf16.mxu0 0
  %3760 = vmatpush2.bf16.msra.mxu0 %v3365
  %3761 = vmatprep.subr.bf16.mxu0 0
  %3762 = vmatpush2.bf16.msra.mxu0 %v3364
  %3763 = vmatprep.mubr.bf16.mxu0 %v3684
  %3764 = vmatmul.mubr.bf16.gmra.mxu0 %v3683
  %v3765 = vpop.f32.mrf.mxu0
  %v3766 = vadd.f32 %v3582, %v3765
  %v3767 = vpop.f32.mrf.mxu0
  %v3768 = vpop.f32.mrf.mxu0
  %v3769 = vadd.f32 %v3587, %v3768
  %v3770 = vpop.f32.mrf.mxu0
  %3771 = vmatprep.mubr.bf16.mxu0 %v3689
  %3772 = vmatmul.mubr.bf16.gmra.mxu0 %v3688
  %v3773 = vpop.f32.mrf.mxu0
  %v3774 = vadd.f32 %v3592, %v3773
  %v3775 = vpop.f32.mrf.mxu0
  %v3776 = vpop.f32.mrf.mxu0
  %v3777 = vadd.f32 %v3597, %v3776
  %v3778 = vpop.f32.mrf.mxu0
  %3779 = vmatprep.mubr.bf16.mxu0 %v3694
  %3780 = vmatmul.mubr.bf16.gmra.mxu0 %v3693
  %v3781 = vpop.f32.mrf.mxu0
  %v3782 = vadd.f32 %v3602, %v3781
  %v3783 = vpop.f32.mrf.mxu0
  %v3784 = vpop.f32.mrf.mxu0
  %v3785 = vadd.f32 %v3607, %v3784
  %v3786 = vpop.f32.mrf.mxu0
  %3787 = vmatprep.mubr.bf16.mxu0 %v3699
  %3788 = vmatmul.mubr.bf16.gmra.mxu0 %v3698
  %v3789 = vpop.f32.mrf.mxu0
  %v3790 = vadd.f32 %v3612, %v3789
  %v3791 = vpop.f32.mrf.mxu0
  %v3792 = vpop.f32.mrf.mxu0
  %v3793 = vadd.f32 %v3617, %v3792
  %v3794 = vpop.f32.mrf.mxu0
  %3795 = vdwg.mxu0
  %3796 = vmatprep.subr.bf16.mxu0 0
  %3797 = vmatpush1.bf16.msra.mxu0 %v3441
  %3798 = vmatprep.subr.bf16.mxu0 0
  %3799 = vmatpush1.bf16.msra.mxu0 %v3440
  %3800 = vmatprep.subr.bf16.mxu0 0
  %3801 = vmatpush1.bf16.msra.mxu0 %v3439
  %3802 = vmatprep.subr.bf16.mxu0 0
  %3803 = vmatpush1.bf16.msra.mxu0 %v3438
  %3804 = vmatprep.subr.bf16.mxu0 0
  %3805 = vmatpush1.bf16.msra.mxu0 %v3406
  %3806 = vmatprep.subr.bf16.mxu0 0
  %3807 = vmatpush1.bf16.msra.mxu0 %v3405
  %3808 = vmatprep.subr.bf16.mxu0 0
  %3809 = vmatpush1.bf16.msra.mxu0 %v3404
  %3810 = vmatprep.subr.bf16.mxu0 0
  %3811 = vmatpush1.bf16.msra.mxu0 %v3403
  %3812 = vmatprep.subr.bf16.mxu0 0
  %3813 = vmatpush2.bf16.msra.mxu0 %v3511
  %3814 = vmatprep.subr.bf16.mxu0 0
  %3815 = vmatpush2.bf16.msra.mxu0 %v3510
  %3816 = vmatprep.subr.bf16.mxu0 0
  %3817 = vmatpush2.bf16.msra.mxu0 %v3509
  %3818 = vmatprep.subr.bf16.mxu0 0
  %3819 = vmatpush2.bf16.msra.mxu0 %v3508
  %3820 = vmatprep.subr.bf16.mxu0 0
  %3821 = vmatpush2.bf16.msra.mxu0 %v3476
  %3822 = vmatprep.subr.bf16.mxu0 0
  %3823 = vmatpush2.bf16.msra.mxu0 %v3475
  %3824 = vmatprep.subr.bf16.mxu0 0
  %3825 = vmatpush2.bf16.msra.mxu0 %v3474
  %3826 = vmatprep.subr.bf16.mxu0 0
  %3827 = vmatpush2.bf16.msra.mxu0 %v3473
  %3828 = vmatprep.mubr.bf16.mxu0 %v3686
  %3829 = vmatmul.mubr.bf16.gmra.mxu0 %v3685
  %v3830 = vpop.f32.mrf.mxu0
  %v3831 = vadd.f32 %v3766, %v3830
  %v3832 = vpop.f32.mrf.mxu0
  %v3833 = vpop.f32.mrf.mxu0
  %v3834 = vadd.f32 %v3769, %v3833
  %v3835 = vpop.f32.mrf.mxu0
  %3836 = vmatprep.mubr.bf16.mxu0 %v3691
  %3837 = vmatmul.mubr.bf16.gmra.mxu0 %v3690
  %v3838 = vpop.f32.mrf.mxu0
  %v3839 = vadd.f32 %v3774, %v3838
  %v3840 = vpop.f32.mrf.mxu0
  %v3841 = vpop.f32.mrf.mxu0
  %v3842 = vadd.f32 %v3777, %v3841
  %v3843 = vpop.f32.mrf.mxu0
  %3844 = vmatprep.mubr.bf16.mxu0 %v3696
  %3845 = vmatmul.mubr.bf16.gmra.mxu0 %v3695
  %v3846 = vpop.f32.mrf.mxu0
  %v3847 = vadd.f32 %v3782, %v3846
  %v3848 = vpop.f32.mrf.mxu0
  %v3849 = vpop.f32.mrf.mxu0
  %v3850 = vadd.f32 %v3785, %v3849
  %v3851 = vpop.f32.mrf.mxu0
  %3852 = vmatprep.mubr.bf16.mxu0 %v3701
  %3853 = vmatmul.mubr.bf16.gmra.mxu0 %v3700
  %v3854 = vpop.f32.mrf.mxu0
  %v3855 = vadd.f32 %v3790, %v3854
  %v3856 = vpop.f32.mrf.mxu0
  %v3857 = vpop.f32.mrf.mxu0
  %v3858 = vadd.f32 %v3793, %v3857
  %v3859 = vpop.f32.mrf.mxu0
  %3860 = vdwg.mxu0
  %3861 = vmatprep.subr.bf16.mxu0 0
  %3862 = vmatpush1.bf16.msra.mxu0 0
  %3863 = vmatprep.subr.bf16.mxu0 0
  %3864 = vmatpush1.bf16.msra.mxu0 0
  %3865 = vmatprep.subr.bf16.mxu0 0
  %3866 = vmatpush1.bf16.msra.mxu0 0
  %3867 = vmatprep.subr.bf16.mxu0 0
  %3868 = vmatpush1.bf16.msra.mxu0 0
  %3869 = vmatprep.subr.bf16.mxu0 0
  %3870 = vmatpush1.bf16.msra.mxu0 %v3546
  %3871 = vmatprep.subr.bf16.mxu0 0
  %3872 = vmatpush1.bf16.msra.mxu0 %v3545
  %3873 = vmatprep.subr.bf16.mxu0 0
  %3874 = vmatpush1.bf16.msra.mxu0 %v3544
  %3875 = vmatprep.subr.bf16.mxu0 0
  %3876 = vmatpush1.bf16.msra.mxu0 %v3543
  %3877 = vmatprep.subr.bf16.mxu0 0
  %3878 = vmatpush2.bf16.msra.mxu0 0
  %3879 = vmatprep.subr.bf16.mxu0 0
  %3880 = vmatpush2.bf16.msra.mxu0 0
  %3881 = vmatprep.subr.bf16.mxu0 0
  %3882 = vmatpush2.bf16.msra.mxu0 0
  %3883 = vmatprep.subr.bf16.mxu0 0
  %3884 = vmatpush2.bf16.msra.mxu0 0
  %3885 = vmatprep.subr.bf16.mxu0 0
  %3886 = vmatpush2.bf16.msra.mxu0 0
  %3887 = vmatprep.subr.bf16.mxu0 0
  %3888 = vmatpush2.bf16.msra.mxu0 0
  %3889 = vmatprep.subr.bf16.mxu0 0
  %3890 = vmatpush2.bf16.msra.mxu0 0
  %3891 = vmatprep.subr.bf16.mxu0 0
  %3892 = vmatpush2.bf16.msra.mxu0 0
  %3893 = vmatprep.mubr.bf16.mxu0 0
  %3894 = vmatmul.mubr.bf16.gmra.mxu0 %v3720
  %v3895 = vpop.f32.mrf.mxu0
  %v3896 = vadd.f32 %v3831, %v3895
  %v3897 = vpop.f32.mrf.mxu0
  %v3898 = vpop.f32.mrf.mxu0
  %v3899 = vadd.f32 %v3834, %v3898
  %v3900 = vpop.f32.mrf.mxu0
  %3901 = vmatprep.mubr.bf16.mxu0 0
  %3902 = vmatmul.mubr.bf16.gmra.mxu0 %v3723
  %v3903 = vpop.f32.mrf.mxu0
  %v3904 = vadd.f32 %v3839, %v3903
  %v3905 = vpop.f32.mrf.mxu0
  %v3906 = vpop.f32.mrf.mxu0
  %v3907 = vadd.f32 %v3842, %v3906
  %v3908 = vpop.f32.mrf.mxu0
  %3909 = vmatprep.mubr.bf16.mxu0 0
  %3910 = vmatmul.mubr.bf16.gmra.mxu0 %v3726
  %v3911 = vpop.f32.mrf.mxu0
  %v3912 = vadd.f32 %v3847, %v3911
  %v3913 = vpop.f32.mrf.mxu0
  %v3914 = vpop.f32.mrf.mxu0
  %v3915 = vadd.f32 %v3850, %v3914
  %v3916 = vpop.f32.mrf.mxu0
  %3917 = vmatprep.mubr.bf16.mxu0 0
  %3918 = vmatmul.mubr.bf16.gmra.mxu0 %v3729
  %v3919 = vpop.f32.mrf.mxu0
  %v3920 = vadd.f32 %v3855, %v3919
  %v3921 = vpop.f32.mrf.mxu0
  %v3922 = vpop.f32.mrf.mxu0
  %v3923 = vadd.f32 %v3858, %v3922
  %v3924 = vpop.f32.mrf.mxu0
  %3925 = vdwg.mxu0
  %v3926 = vmax.f32 %v3896, 0.0
  %v3927 = vmax.f32 %v3899, 0.0
  %v3928 = vmax.f32 %v3904, 0.0
  %v3929 = vmax.f32 %v3907, 0.0
  %v3930 = vmax.f32 %v3912, 0.0
  %v3931 = vmax.f32 %v3915, 0.0
  %v3932 = vmax.f32 %v3920, 0.0
  %v3933 = vmax.f32 %v3923, 0.0
  %v3934 = vpack.c.bf16 %v3927, %v3926
  %v3935 = vpack.c.bf16 %v3929, %v3928
  %v3936 = vpack.c.bf16 %v3931, %v3930
  %v3937 = vpack.c.bf16 %v3933, %v3932
  %v3938 = vld [vmem:[%s79] sm:$0xf]
  %v3939 = vld [vmem:[%s79 + $0x4] sm:$0xf]
  %v3940 = vld [vmem:[%s79 + $0x8] sm:$0xf]
  %v3941 = vld [vmem:[%s79 + $0xc] sm:$0xf]
  %v3942 = vld [vmem:[%s79 + $0x10] sm:$0xf]
  %v3943 = vld [vmem:[%s79 + $0x14] sm:$0xf]
  %v3944 = vld [vmem:[%s79 + $0x18] sm:$0xf]
  %v3945 = vld [vmem:[%s79 + $0x1c] sm:$0xf]
  %v3946 = vld [vmem:[%s79 + $0x20] sm:$0xf]
  %v3947 = vld [vmem:[%s79 + $0x24] sm:$0xf]
  %v3948 = vld [vmem:[%s79 + $0x28] sm:$0xf]
  %v3949 = vld [vmem:[%s79 + $0x2c] sm:$0xf]
  %v3950 = vld [vmem:[%s79 + $0x30] sm:$0xf]
  %v3951 = vld [vmem:[%s79 + $0x34] sm:$0xf]
  %v3952 = vld [vmem:[%s79 + $0x38] sm:$0xf]
  %v3953 = vld [vmem:[%s79 + $0x3c] sm:$0xf]
  %v3954 = vld [vmem:[%s79 + $0x40] sm:$0xf]
  %v3955 = vld [vmem:[%s79 + $0x44] sm:$0xf]
  %v3956 = vld [vmem:[%s79 + $0x48] sm:$0xf]
  %v3957 = vld [vmem:[%s79 + $0x4c] sm:$0xf]
  %v3958 = vld [vmem:[%s79 + $0x50] sm:$0xf]
  %v3959 = vld [vmem:[%s79 + $0x54] sm:$0xf]
  %v3960 = vld [vmem:[%s79 + $0x58] sm:$0xf]
  %v3961 = vld [vmem:[%s79 + $0x5c] sm:$0xf]
  %v3962 = vld [vmem:[%s79 + $0x60] sm:$0xf]
  %v3963 = vld [vmem:[%s79 + $0x64] sm:$0xf]
  %v3964 = vld [vmem:[%s79 + $0x68] sm:$0xf]
  %v3965 = vld [vmem:[%s79 + $0x6c] sm:$0xf]
  %v3966 = vld [vmem:[%s79 + $0x70] sm:$0xf]
  %v3967 = vld [vmem:[%s79 + $0x74] sm:$0xf]
  %v3968 = vld [vmem:[%s79 + $0x78] sm:$0xf]
  %v3969 = vld [vmem:[%s79 + $0x7c] sm:$0xf]
  %v3970 = vld [vmem:[%s81] sm:$0xff]
  %v3971 = vld [vmem:[%s81 + $0x8] sm:$0xff]
  %v3972 = vld [vmem:[%s81 + $0x10] sm:$0xff]
  %v3973 = vld [vmem:[%s81 + $0x18] sm:$0xff]
  %v3974 = vld [vmem:[%s81 + $0x20] sm:$0xff]
  %v3975 = vld [vmem:[%s81 + $0x28] sm:$0xff]
  %v3976 = vld [vmem:[%s81 + $0x30] sm:$0xff]
  %v3977 = vld [vmem:[%s81 + $0x38] sm:$0xff]
  %v3978 = vld [vmem:[%s81 + $0x40] sm:$0xff]
  %v3979 = vld [vmem:[%s81 + $0x48] sm:$0xff]
  %v3980 = vld [vmem:[%s81 + $0x50] sm:$0xff]
  %v3981 = vld [vmem:[%s81 + $0x58] sm:$0xff]
  %v3982 = vld [vmem:[%s81 + $0x60] sm:$0xff]
  %v3983 = vld [vmem:[%s81 + $0x68] sm:$0xff]
  %v3984 = vld [vmem:[%s81 + $0x70] sm:$0xff]
  %v3985 = vld [vmem:[%s81 + $0x78] sm:$0xff]
  %v3986 = vld [vmem:[%s81 + $0x80] sm:$0xff]
  %v3987 = vld [vmem:[%s81 + $0x88] sm:$0xff]
  %v3988 = vld [vmem:[%s81 + $0x90] sm:$0xff]
  %v3989 = vld [vmem:[%s81 + $0x98] sm:$0xff]
  %v3990 = vld [vmem:[%s81 + $0xa0] sm:$0xff]
  %v3991 = vld [vmem:[%s81 + $0xa8] sm:$0xff]
  %v3992 = vld [vmem:[%s81 + $0xb0] sm:$0xff]
  %v3993 = vld [vmem:[%s81 + $0xb8] sm:$0xff]
  %v3994 = vld [vmem:[%s81 + $0xc0] sm:$0xff]
  %v3995 = vld [vmem:[%s81 + $0xc8] sm:$0xff]
  %v3996 = vld [vmem:[%s81 + $0xd0] sm:$0xff]
  %v3997 = vld [vmem:[%s81 + $0xd8] sm:$0xff]
  %v3998 = vld [vmem:[%s81 + $0xe0] sm:$0xff]
  %v3999 = vld [vmem:[%s81 + $0xe8] sm:$0xff]
  %v4000 = vld [vmem:[%s81 + $0xf0] sm:$0xff]
  %v4001 = vld [vmem:[%s81 + $0xf8] sm:$0xff]
  %4003 = vset.pattern.permute.xlu0 0
  %4004 = vperm.xlu0 %4003, %v3970
  %v4005 = vpop.permute.xlu0 %4004
  %4008 = vset.pattern.permute.xlu0 0
  %4009 = vperm.xlu0 %4008, %v3971
  %v4010 = vpop.permute.xlu0 %4009
  %4013 = vset.pattern.permute.xlu0 0
  %4014 = vperm.xlu0 %4013, %v3972
  %v4015 = vpop.permute.xlu0 %4014
  %4018 = vset.pattern.permute.xlu0 0
  %4019 = vperm.xlu0 %4018, %v3973
  %v4020 = vpop.permute.xlu0 %4019
  %4023 = vset.pattern.permute.xlu0 0
  %4024 = vperm.xlu0 %4023, %v3974
  %v4025 = vpop.permute.xlu0 %4024
  %4028 = vset.pattern.permute.xlu0 0
  %4029 = vperm.xlu0 %4028, %v3975
  %v4030 = vpop.permute.xlu0 %4029
  %4033 = vset.pattern.permute.xlu0 0
  %4034 = vperm.xlu0 %4033, %v3976
  %v4035 = vpop.permute.xlu0 %4034
  %4038 = vset.pattern.permute.xlu0 0
  %4039 = vperm.xlu0 %4038, %v3977
  %v4040 = vpop.permute.xlu0 %4039
  %4043 = vset.pattern.permute.xlu0 0
  %4044 = vperm.xlu0 %4043, %v3978
  %v4045 = vpop.permute.xlu0 %4044
  %4048 = vset.pattern.permute.xlu0 0
  %4049 = vperm.xlu0 %4048, %v3979
  %v4050 = vpop.permute.xlu0 %4049
  %4053 = vset.pattern.permute.xlu0 0
  %4054 = vperm.xlu0 %4053, %v3980
  %v4055 = vpop.permute.xlu0 %4054
  %4058 = vset.pattern.permute.xlu0 0
  %4059 = vperm.xlu0 %4058, %v3981
  %v4060 = vpop.permute.xlu0 %4059
  %4063 = vset.pattern.permute.xlu0 0
  %4064 = vperm.xlu0 %4063, %v3982
  %v4065 = vpop.permute.xlu0 %4064
  %4068 = vset.pattern.permute.xlu0 0
  %4069 = vperm.xlu0 %4068, %v3983
  %v4070 = vpop.permute.xlu0 %4069
  %4073 = vset.pattern.permute.xlu0 0
  %4074 = vperm.xlu0 %4073, %v3984
  %v4075 = vpop.permute.xlu0 %4074
  %4078 = vset.pattern.permute.xlu0 0
  %4079 = vperm.xlu0 %4078, %v3985
  %v4080 = vpop.permute.xlu0 %4079
  %4083 = vset.pattern.permute.xlu0 0
  %4084 = vperm.xlu0 %4083, %v3986
  %v4085 = vpop.permute.xlu0 %4084
  %4088 = vset.pattern.permute.xlu0 0
  %4089 = vperm.xlu0 %4088, %v3987
  %v4090 = vpop.permute.xlu0 %4089
  %4093 = vset.pattern.permute.xlu0 0
  %4094 = vperm.xlu0 %4093, %v3988
  %v4095 = vpop.permute.xlu0 %4094
  %4098 = vset.pattern.permute.xlu0 0
  %4099 = vperm.xlu0 %4098, %v3989
  %v4100 = vpop.permute.xlu0 %4099
  %4103 = vset.pattern.permute.xlu0 0
  %4104 = vperm.xlu0 %4103, %v3990
  %v4105 = vpop.permute.xlu0 %4104
  %4108 = vset.pattern.permute.xlu0 0
  %4109 = vperm.xlu0 %4108, %v3991
  %v4110 = vpop.permute.xlu0 %4109
  %4113 = vset.pattern.permute.xlu0 0
  %4114 = vperm.xlu0 %4113, %v3992
  %v4115 = vpop.permute.xlu0 %4114
  %4118 = vset.pattern.permute.xlu0 0
  %4119 = vperm.xlu0 %4118, %v3993
  %v4120 = vpop.permute.xlu0 %4119
  %4123 = vset.pattern.permute.xlu0 0
  %4124 = vperm.xlu0 %4123, %v3994
  %v4125 = vpop.permute.xlu0 %4124
  %4128 = vset.pattern.permute.xlu0 0
  %4129 = vperm.xlu0 %4128, %v3995
  %v4130 = vpop.permute.xlu0 %4129
  %4133 = vset.pattern.permute.xlu0 0
  %4134 = vperm.xlu0 %4133, %v3996
  %v4135 = vpop.permute.xlu0 %4134
  %4138 = vset.pattern.permute.xlu0 0
  %4139 = vperm.xlu0 %4138, %v3997
  %v4140 = vpop.permute.xlu0 %4139
  %4143 = vset.pattern.permute.xlu0 0
  %4144 = vperm.xlu0 %4143, %v3998
  %v4145 = vpop.permute.xlu0 %4144
  %4148 = vset.pattern.permute.xlu0 0
  %4149 = vperm.xlu0 %4148, %v3999
  %v4150 = vpop.permute.xlu0 %4149
  %4153 = vset.pattern.permute.xlu0 0
  %4154 = vperm.xlu0 %4153, %v4000
  %v4155 = vpop.permute.xlu0 %4154
  %4158 = vset.pattern.permute.xlu0 0
  %4159 = vperm.xlu0 %4158, %v4001
  %v4160 = vpop.permute.xlu0 %4159
  %v4194 = vunpack.c.l.b16 %v3938
  %v4195 = vunpack.c.l.b16 %v3939
  %v4196 = vunpack.c.l.b16 %v3940
  %v4197 = vunpack.c.l.b16 %v3941
  %v4198 = vunpack.c.l.b16 %v3942
  %v4199 = vunpack.c.l.b16 %v3943
  %v4200 = vunpack.c.l.b16 %v3944
  %v4201 = vunpack.c.l.b16 %v3945
  %v4202 = vunpack.c.l.b16 %v3946
  %v4203 = vunpack.c.l.b16 %v3947
  %v4204 = vunpack.c.l.b16 %v3948
  %v4205 = vunpack.c.l.b16 %v3949
  %v4206 = vunpack.c.l.b16 %v3950
  %v4207 = vunpack.c.l.b16 %v3951
  %v4208 = vunpack.c.l.b16 %v3952
  %v4209 = vunpack.c.l.b16 %v3953
  %v4210 = vunpack.c.l.b16 %v3954
  %v4211 = vunpack.c.l.b16 %v3955
  %v4212 = vunpack.c.l.b16 %v3956
  %v4213 = vunpack.c.l.b16 %v3957
  %v4214 = vunpack.c.l.b16 %v3958
  %v4215 = vunpack.c.l.b16 %v3959
  %v4216 = vunpack.c.l.b16 %v3960
  %v4217 = vunpack.c.l.b16 %v3961
  %v4218 = vunpack.c.l.b16 %v3962
  %v4219 = vunpack.c.l.b16 %v3963
  %v4220 = vunpack.c.l.b16 %v3964
  %v4221 = vunpack.c.l.b16 %v3965
  %v4222 = vunpack.c.l.b16 %v3966
  %v4223 = vunpack.c.l.b16 %v3967
  %v4224 = vunpack.c.l.b16 %v3968
  %v4225 = vunpack.c.l.b16 %v3969
  %v4226 = vpack.c.b16 %v4195, %v4194
  %v4227 = vpack.c.b16 %v4197, %v4196
  %v4228 = vpack.c.b16 %v4199, %v4198
  %v4229 = vpack.c.b16 %v4201, %v4200
  %v4230 = vpack.c.b16 %v4203, %v4202
  %v4231 = vpack.c.b16 %v4205, %v4204
  %v4232 = vpack.c.b16 %v4207, %v4206
  %v4233 = vpack.c.b16 %v4209, %v4208
  %v4234 = vpack.c.b16 %v4211, %v4210
  %v4235 = vpack.c.b16 %v4213, %v4212
  %v4236 = vpack.c.b16 %v4215, %v4214
  %v4237 = vpack.c.b16 %v4217, %v4216
  %v4238 = vpack.c.b16 %v4219, %v4218
  %v4239 = vpack.c.b16 %v4221, %v4220
  %v4240 = vpack.c.b16 %v4223, %v4222
  %v4241 = vpack.c.b16 %v4225, %v4224
  %4258 = vmatprep.subr.bf16.mxu0 0
  %4259 = vmatpush1.bf16.msra.mxu0 %v3109
  %4260 = vmatprep.subr.bf16.mxu0 0
  %4261 = vmatpush1.bf16.msra.mxu0 %v3108
  %4262 = vmatprep.subr.bf16.mxu0 0
  %4263 = vmatpush1.bf16.msra.mxu0 %v3107
  %4264 = vmatprep.subr.bf16.mxu0 0
  %4265 = vmatpush1.bf16.msra.mxu0 %v3106
  %4266 = vmatprep.subr.bf16.mxu0 0
  %4267 = vmatpush1.bf16.msra.mxu0 %v3937
  %4268 = vmatprep.subr.bf16.mxu0 0
  %4269 = vmatpush1.bf16.msra.mxu0 %v3936
  %4270 = vmatprep.subr.bf16.mxu0 0
  %4271 = vmatpush1.bf16.msra.mxu0 %v3935
  %4272 = vmatprep.subr.bf16.mxu0 0
  %4273 = vmatpush1.bf16.msra.mxu0 %v3934
  %4274 = vmatprep.subr.bf16.mxu0 0
  %4275 = vmatpush2.bf16.msra.mxu0 0
  %4276 = vmatprep.subr.bf16.mxu0 0
  %4277 = vmatpush2.bf16.msra.mxu0 0
  %4278 = vmatprep.subr.bf16.mxu0 0
  %4279 = vmatpush2.bf16.msra.mxu0 0
  %4280 = vmatprep.subr.bf16.mxu0 0
  %4281 = vmatpush2.bf16.msra.mxu0 0
  %4282 = vmatprep.subr.bf16.mxu0 0
  %4283 = vmatpush2.bf16.msra.mxu0 0
  %4284 = vmatprep.subr.bf16.mxu0 0
  %4285 = vmatpush2.bf16.msra.mxu0 0
  %4286 = vmatprep.subr.bf16.mxu0 0
  %4287 = vmatpush2.bf16.msra.mxu0 0
  %4288 = vmatprep.subr.bf16.mxu0 0
  %4289 = vmatpush2.bf16.msra.mxu0 0
  %4290 = vmatprep.mubr.bf16.mxu0 0
  %4291 = vmatmul.mubr.bf16.gmra.mxu0 %v4226
  %v4292 = vpop.f32.mrf.mxu0
  %v4293 = vadd.f32 %v4005, %v4292
  %v4294 = vpop.f32.mrf.mxu0
  %v4295 = vpop.f32.mrf.mxu0
  %v4296 = vadd.f32 %v4010, %v4295
  %v4297 = vpop.f32.mrf.mxu0
  %4298 = vmatprep.mubr.bf16.mxu0 0
  %4299 = vmatmul.mubr.bf16.gmra.mxu0 %v4227
  %v4300 = vpop.f32.mrf.mxu0
  %v4301 = vadd.f32 %v4015, %v4300
  %v4302 = vpop.f32.mrf.mxu0
  %v4303 = vpop.f32.mrf.mxu0
  %v4304 = vadd.f32 %v4020, %v4303
  %v4305 = vpop.f32.mrf.mxu0
  %4306 = vmatprep.mubr.bf16.mxu0 0
  %4307 = vmatmul.mubr.bf16.gmra.mxu0 %v4228
  %v4308 = vpop.f32.mrf.mxu0
  %v4309 = vadd.f32 %v4025, %v4308
  %v4310 = vpop.f32.mrf.mxu0
  %v4311 = vpop.f32.mrf.mxu0
  %v4312 = vadd.f32 %v4030, %v4311
  %v4313 = vpop.f32.mrf.mxu0
  %4314 = vmatprep.mubr.bf16.mxu0 0
  %4315 = vmatmul.mubr.bf16.gmra.mxu0 %v4229
  %v4316 = vpop.f32.mrf.mxu0
  %v4317 = vadd.f32 %v4035, %v4316
  %v4318 = vpop.f32.mrf.mxu0
  %v4319 = vpop.f32.mrf.mxu0
  %v4320 = vadd.f32 %v4040, %v4319
  %v4321 = vpop.f32.mrf.mxu0
  %4322 = vmatprep.mubr.bf16.mxu0 0
  %4323 = vmatmul.mubr.bf16.gmra.mxu0 %v4230
  %v4324 = vpop.f32.mrf.mxu0
  %v4325 = vadd.f32 %v4045, %v4324
  %v4326 = vpop.f32.mrf.mxu0
  %v4327 = vpop.f32.mrf.mxu0
  %v4328 = vadd.f32 %v4050, %v4327
  %v4329 = vpop.f32.mrf.mxu0
  %4330 = vmatprep.mubr.bf16.mxu0 0
  %4331 = vmatmul.mubr.bf16.gmra.mxu0 %v4231
  %v4332 = vpop.f32.mrf.mxu0
  %v4333 = vadd.f32 %v4055, %v4332
  %v4334 = vpop.f32.mrf.mxu0
  %v4335 = vpop.f32.mrf.mxu0
  %v4336 = vadd.f32 %v4060, %v4335
  %v4337 = vpop.f32.mrf.mxu0
  %4338 = vmatprep.mubr.bf16.mxu0 0
  %4339 = vmatmul.mubr.bf16.gmra.mxu0 %v4232
  %v4340 = vpop.f32.mrf.mxu0
  %v4341 = vadd.f32 %v4065, %v4340
  %v4342 = vpop.f32.mrf.mxu0
  %v4343 = vpop.f32.mrf.mxu0
  %v4344 = vadd.f32 %v4070, %v4343
  %v4345 = vpop.f32.mrf.mxu0
  %4346 = vmatprep.mubr.bf16.mxu0 0
  %4347 = vmatmul.mubr.bf16.gmra.mxu0 %v4233
  %v4348 = vpop.f32.mrf.mxu0
  %v4349 = vadd.f32 %v4075, %v4348
  %v4350 = vpop.f32.mrf.mxu0
  %v4351 = vpop.f32.mrf.mxu0
  %v4352 = vadd.f32 %v4080, %v4351
  %v4353 = vpop.f32.mrf.mxu0
  %4354 = vmatprep.mubr.bf16.mxu0 0
  %4355 = vmatmul.mubr.bf16.gmra.mxu0 %v4234
  %v4356 = vpop.f32.mrf.mxu0
  %v4357 = vadd.f32 %v4085, %v4356
  %v4358 = vpop.f32.mrf.mxu0
  %v4359 = vpop.f32.mrf.mxu0
  %v4360 = vadd.f32 %v4090, %v4359
  %v4361 = vpop.f32.mrf.mxu0
  %4362 = vmatprep.mubr.bf16.mxu0 0
  %4363 = vmatmul.mubr.bf16.gmra.mxu0 %v4235
  %v4364 = vpop.f32.mrf.mxu0
  %v4365 = vadd.f32 %v4095, %v4364
  %v4366 = vpop.f32.mrf.mxu0
  %v4367 = vpop.f32.mrf.mxu0
  %v4368 = vadd.f32 %v4100, %v4367
  %v4369 = vpop.f32.mrf.mxu0
  %4370 = vmatprep.mubr.bf16.mxu0 0
  %4371 = vmatmul.mubr.bf16.gmra.mxu0 %v4236
  %v4372 = vpop.f32.mrf.mxu0
  %v4373 = vadd.f32 %v4105, %v4372
  %v4374 = vpop.f32.mrf.mxu0
  %v4375 = vpop.f32.mrf.mxu0
  %v4376 = vadd.f32 %v4110, %v4375
  %v4377 = vpop.f32.mrf.mxu0
  %4378 = vmatprep.mubr.bf16.mxu0 0
  %4379 = vmatmul.mubr.bf16.gmra.mxu0 %v4237
  %v4380 = vpop.f32.mrf.mxu0
  %v4381 = vadd.f32 %v4115, %v4380
  %v4382 = vpop.f32.mrf.mxu0
  %v4383 = vpop.f32.mrf.mxu0
  %v4384 = vadd.f32 %v4120, %v4383
  %v4385 = vpop.f32.mrf.mxu0
  %4386 = vmatprep.mubr.bf16.mxu0 0
  %4387 = vmatmul.mubr.bf16.gmra.mxu0 %v4238
  %v4388 = vpop.f32.mrf.mxu0
  %v4389 = vadd.f32 %v4125, %v4388
  %v4390 = vpop.f32.mrf.mxu0
  %v4391 = vpop.f32.mrf.mxu0
  %v4392 = vadd.f32 %v4130, %v4391
  %v4393 = vpop.f32.mrf.mxu0
  %4394 = vmatprep.mubr.bf16.mxu0 0
  %4395 = vmatmul.mubr.bf16.gmra.mxu0 %v4239
  %v4396 = vpop.f32.mrf.mxu0
  %v4397 = vadd.f32 %v4135, %v4396
  %v4398 = vpop.f32.mrf.mxu0
  %v4399 = vpop.f32.mrf.mxu0
  %v4400 = vadd.f32 %v4140, %v4399
  %v4401 = vpop.f32.mrf.mxu0
  %4402 = vmatprep.mubr.bf16.mxu0 0
  %4403 = vmatmul.mubr.bf16.gmra.mxu0 %v4240
  %v4404 = vpop.f32.mrf.mxu0
  %v4405 = vadd.f32 %v4145, %v4404
  %v4406 = vpop.f32.mrf.mxu0
  %v4407 = vpop.f32.mrf.mxu0
  %v4408 = vadd.f32 %v4150, %v4407
  %v4409 = vpop.f32.mrf.mxu0
  %4410 = vmatprep.mubr.bf16.mxu0 0
  %4411 = vmatmul.mubr.bf16.gmra.mxu0 %v4241
  %v4412 = vpop.f32.mrf.mxu0
  %v4413 = vadd.f32 %v4155, %v4412
  %v4414 = vpop.f32.mrf.mxu0
  %v4415 = vpop.f32.mrf.mxu0
  %v4416 = vadd.f32 %v4160, %v4415
  %v4417 = vpop.f32.mrf.mxu0
  %4418 = vdwg.mxu0
  %4419 = vst [vmem:[#allocation2] sm:$0xff] %v4293
  %4420 = vst [vmem:[#allocation2 + $0x8] sm:$0xff] %v4296
  %4421 = vst [vmem:[#allocation2 + $0x10] sm:$0xff] %v4301
  %4422 = vst [vmem:[#allocation2 + $0x18] sm:$0xff] %v4304
  %4423 = vst [vmem:[#allocation2 + $0x20] sm:$0xff] %v4309
  %4424 = vst [vmem:[#allocation2 + $0x28] sm:$0xff] %v4312
  %4425 = vst [vmem:[#allocation2 + $0x30] sm:$0xff] %v4317
  %4426 = vst [vmem:[#allocation2 + $0x38] sm:$0xff] %v4320
  %4427 = vst [vmem:[#allocation2 + $0x40] sm:$0xff] %v4325
  %4428 = vst [vmem:[#allocation2 + $0x48] sm:$0xff] %v4328
  %4429 = vst [vmem:[#allocation2 + $0x50] sm:$0xff] %v4333
  %4430 = vst [vmem:[#allocation2 + $0x58] sm:$0xff] %v4336
  %4431 = vst [vmem:[#allocation2 + $0x60] sm:$0xff] %v4341
  %4432 = vst [vmem:[#allocation2 + $0x68] sm:$0xff] %v4344
  %4433 = vst [vmem:[#allocation2 + $0x70] sm:$0xff] %v4349
  %4434 = vst [vmem:[#allocation2 + $0x78] sm:$0xff] %v4352
  %4435 = vst [vmem:[#allocation2 + $0x80] sm:$0xff] %v4357
  %4436 = vst [vmem:[#allocation2 + $0x88] sm:$0xff] %v4360
  %4437 = vst [vmem:[#allocation2 + $0x90] sm:$0xff] %v4365
  %4438 = vst [vmem:[#allocation2 + $0x98] sm:$0xff] %v4368
  %4439 = vst [vmem:[#allocation2 + $0xa0] sm:$0xff] %v4373
  %4440 = vst [vmem:[#allocation2 + $0xa8] sm:$0xff] %v4376
  %4441 = vst [vmem:[#allocation2 + $0xb0] sm:$0xff] %v4381
  %4442 = vst [vmem:[#allocation2 + $0xb8] sm:$0xff] %v4384
  %4443 = vst [vmem:[#allocation2 + $0xc0] sm:$0xff] %v4389
  %4444 = vst [vmem:[#allocation2 + $0xc8] sm:$0xff] %v4392
  %4445 = vst [vmem:[#allocation2 + $0xd0] sm:$0xff] %v4397
  %4446 = vst [vmem:[#allocation2 + $0xd8] sm:$0xff] %v4400
  %4447 = vst [vmem:[#allocation2 + $0xe0] sm:$0xff] %v4405
  %4448 = vst [vmem:[#allocation2 + $0xe8] sm:$0xff] %v4408
  %4449 = vst [vmem:[#allocation2 + $0xf0] sm:$0xff] %v4413
  %4450 = vst [vmem:[#allocation2 + $0xf8] sm:$0xff] %v4416
  %v4451 = vld [vmem:[#allocation2] sm:$0xff]
  %v4452 = vld [vmem:[#allocation2 + $0x8] sm:$0xff]
  %v4453 = vld [vmem:[#allocation2 + $0x10] sm:$0xff]
  %v4454 = vld [vmem:[#allocation2 + $0x18] sm:$0xff]
  %v4455 = vld [vmem:[#allocation2 + $0x20] sm:$0xff]
  %v4456 = vld [vmem:[#allocation2 + $0x28] sm:$0xff]
  %v4457 = vld [vmem:[#allocation2 + $0x30] sm:$0xff]
  %v4458 = vld [vmem:[#allocation2 + $0x38] sm:$0xff]
  %v4459 = vld [vmem:[#allocation2 + $0x40] sm:$0xff]
  %v4460 = vld [vmem:[#allocation2 + $0x48] sm:$0xff]
  %v4461 = vld [vmem:[#allocation2 + $0x50] sm:$0xff]
  %v4462 = vld [vmem:[#allocation2 + $0x58] sm:$0xff]
  %v4463 = vld [vmem:[#allocation2 + $0x60] sm:$0xff]
  %v4464 = vld [vmem:[#allocation2 + $0x68] sm:$0xff]
  %v4465 = vld [vmem:[#allocation2 + $0x70] sm:$0xff]
  %v4466 = vld [vmem:[#allocation2 + $0x78] sm:$0xff]
  %v4467 = vld [vmem:[#allocation2 + $0x80] sm:$0xff]
  %v4468 = vld [vmem:[#allocation2 + $0x88] sm:$0xff]
  %v4469 = vld [vmem:[#allocation2 + $0x90] sm:$0xff]
  %v4470 = vld [vmem:[#allocation2 + $0x98] sm:$0xff]
  %v4471 = vld [vmem:[#allocation2 + $0xa0] sm:$0xff]
  %v4472 = vld [vmem:[#allocation2 + $0xa8] sm:$0xff]
  %v4473 = vld [vmem:[#allocation2 + $0xb0] sm:$0xff]
  %v4474 = vld [vmem:[#allocation2 + $0xb8] sm:$0xff]
  %v4475 = vld [vmem:[#allocation2 + $0xc0] sm:$0xff]
  %v4476 = vld [vmem:[#allocation2 + $0xc8] sm:$0xff]
  %v4477 = vld [vmem:[#allocation2 + $0xd0] sm:$0xff]
  %v4478 = vld [vmem:[#allocation2 + $0xd8] sm:$0xff]
  %v4479 = vld [vmem:[#allocation2 + $0xe0] sm:$0xff]
  %v4480 = vld [vmem:[#allocation2 + $0xe8] sm:$0xff]
  %v4481 = vld [vmem:[#allocation2 + $0xf0] sm:$0xff]
  %v4482 = vld [vmem:[#allocation2 + $0xf8] sm:$0xff]
  %v4483 = vld [vmem:[%s83] sm:$0xff]
  %v4484 = vld [vmem:[%s83 + $0x8] sm:$0xff]
  %v4485 = vld [vmem:[%s83 + $0x10] sm:$0xff]
  %v4486 = vld [vmem:[%s83 + $0x18] sm:$0xff]
  %v4487 = vld [vmem:[%s83 + $0x20] sm:$0xff]
  %v4488 = vld [vmem:[%s83 + $0x28] sm:$0xff]
  %v4489 = vld [vmem:[%s83 + $0x30] sm:$0xff]
  %v4490 = vld [vmem:[%s83 + $0x38] sm:$0xff]
  %v4491 = vld [vmem:[%s83 + $0x40] sm:$0xff]
  %v4492 = vld [vmem:[%s83 + $0x48] sm:$0xff]
  %v4493 = vld [vmem:[%s83 + $0x50] sm:$0xff]
  %v4494 = vld [vmem:[%s83 + $0x58] sm:$0xff]
  %v4495 = vld [vmem:[%s83 + $0x60] sm:$0xff]
  %v4496 = vld [vmem:[%s83 + $0x68] sm:$0xff]
  %v4497 = vld [vmem:[%s83 + $0x70] sm:$0xff]
  %v4498 = vld [vmem:[%s83 + $0x78] sm:$0xff]
  %v4499 = vld [vmem:[%s83 + $0x80] sm:$0xff]
  %v4500 = vld [vmem:[%s83 + $0x88] sm:$0xff]
  %v4501 = vld [vmem:[%s83 + $0x90] sm:$0xff]
  %v4502 = vld [vmem:[%s83 + $0x98] sm:$0xff]
  %v4503 = vld [vmem:[%s83 + $0xa0] sm:$0xff]
  %v4504 = vld [vmem:[%s83 + $0xa8] sm:$0xff]
  %v4505 = vld [vmem:[%s83 + $0xb0] sm:$0xff]
  %v4506 = vld [vmem:[%s83 + $0xb8] sm:$0xff]
  %v4507 = vld [vmem:[%s83 + $0xc0] sm:$0xff]
  %v4508 = vld [vmem:[%s83 + $0xc8] sm:$0xff]
  %v4509 = vld [vmem:[%s83 + $0xd0] sm:$0xff]
  %v4510 = vld [vmem:[%s83 + $0xd8] sm:$0xff]
  %v4511 = vld [vmem:[%s83 + $0xe0] sm:$0xff]
  %v4512 = vld [vmem:[%s83 + $0xe8] sm:$0xff]
  %v4513 = vld [vmem:[%s83 + $0xf0] sm:$0xff]
  %v4514 = vld [vmem:[%s83 + $0xf8] sm:$0xff]
  %4516 = vset.pattern.permute.xlu0 0
  %4517 = vperm.xlu0 %4516, %v4483
  %v4518 = vpop.permute.xlu0 %4517
  %4521 = vset.pattern.permute.xlu0 0
  %4522 = vperm.xlu0 %4521, %v4484
  %v4523 = vpop.permute.xlu0 %4522
  %4526 = vset.pattern.permute.xlu0 0
  %4527 = vperm.xlu0 %4526, %v4485
  %v4528 = vpop.permute.xlu0 %4527
  %4531 = vset.pattern.permute.xlu0 0
  %4532 = vperm.xlu0 %4531, %v4486
  %v4533 = vpop.permute.xlu0 %4532
  %4536 = vset.pattern.permute.xlu0 0
  %4537 = vperm.xlu0 %4536, %v4487
  %v4538 = vpop.permute.xlu0 %4537
  %4541 = vset.pattern.permute.xlu0 0
  %4542 = vperm.xlu0 %4541, %v4488
  %v4543 = vpop.permute.xlu0 %4542
  %4546 = vset.pattern.permute.xlu0 0
  %4547 = vperm.xlu0 %4546, %v4489
  %v4548 = vpop.permute.xlu0 %4547
  %4551 = vset.pattern.permute.xlu0 0
  %4552 = vperm.xlu0 %4551, %v4490
  %v4553 = vpop.permute.xlu0 %4552
  %4556 = vset.pattern.permute.xlu0 0
  %4557 = vperm.xlu0 %4556, %v4491
  %v4558 = vpop.permute.xlu0 %4557
  %4561 = vset.pattern.permute.xlu0 0
  %4562 = vperm.xlu0 %4561, %v4492
  %v4563 = vpop.permute.xlu0 %4562
  %4566 = vset.pattern.permute.xlu0 0
  %4567 = vperm.xlu0 %4566, %v4493
  %v4568 = vpop.permute.xlu0 %4567
  %4571 = vset.pattern.permute.xlu0 0
  %4572 = vperm.xlu0 %4571, %v4494
  %v4573 = vpop.permute.xlu0 %4572
  %4576 = vset.pattern.permute.xlu0 0
  %4577 = vperm.xlu0 %4576, %v4495
  %v4578 = vpop.permute.xlu0 %4577
  %4581 = vset.pattern.permute.xlu0 0
  %4582 = vperm.xlu0 %4581, %v4496
  %v4583 = vpop.permute.xlu0 %4582
  %4586 = vset.pattern.permute.xlu0 0
  %4587 = vperm.xlu0 %4586, %v4497
  %v4588 = vpop.permute.xlu0 %4587
  %4591 = vset.pattern.permute.xlu0 0
  %4592 = vperm.xlu0 %4591, %v4498
  %v4593 = vpop.permute.xlu0 %4592
  %4596 = vset.pattern.permute.xlu0 0
  %4597 = vperm.xlu0 %4596, %v4499
  %v4598 = vpop.permute.xlu0 %4597
  %4601 = vset.pattern.permute.xlu0 0
  %4602 = vperm.xlu0 %4601, %v4500
  %v4603 = vpop.permute.xlu0 %4602
  %4606 = vset.pattern.permute.xlu0 0
  %4607 = vperm.xlu0 %4606, %v4501
  %v4608 = vpop.permute.xlu0 %4607
  %4611 = vset.pattern.permute.xlu0 0
  %4612 = vperm.xlu0 %4611, %v4502
  %v4613 = vpop.permute.xlu0 %4612
  %4616 = vset.pattern.permute.xlu0 0
  %4617 = vperm.xlu0 %4616, %v4503
  %v4618 = vpop.permute.xlu0 %4617
  %4621 = vset.pattern.permute.xlu0 0
  %4622 = vperm.xlu0 %4621, %v4504
  %v4623 = vpop.permute.xlu0 %4622
  %4626 = vset.pattern.permute.xlu0 0
  %4627 = vperm.xlu0 %4626, %v4505
  %v4628 = vpop.permute.xlu0 %4627
  %4631 = vset.pattern.permute.xlu0 0
  %4632 = vperm.xlu0 %4631, %v4506
  %v4633 = vpop.permute.xlu0 %4632
  %4636 = vset.pattern.permute.xlu0 0
  %4637 = vperm.xlu0 %4636, %v4507
  %v4638 = vpop.permute.xlu0 %4637
  %4641 = vset.pattern.permute.xlu0 0
  %4642 = vperm.xlu0 %4641, %v4508
  %v4643 = vpop.permute.xlu0 %4642
  %4646 = vset.pattern.permute.xlu0 0
  %4647 = vperm.xlu0 %4646, %v4509
  %v4648 = vpop.permute.xlu0 %4647
  %4651 = vset.pattern.permute.xlu0 0
  %4652 = vperm.xlu0 %4651, %v4510
  %v4653 = vpop.permute.xlu0 %4652
  %4656 = vset.pattern.permute.xlu0 0
  %4657 = vperm.xlu0 %4656, %v4511
  %v4658 = vpop.permute.xlu0 %4657
  %4661 = vset.pattern.permute.xlu0 0
  %4662 = vperm.xlu0 %4661, %v4512
  %v4663 = vpop.permute.xlu0 %4662
  %4666 = vset.pattern.permute.xlu0 0
  %4667 = vperm.xlu0 %4666, %v4513
  %v4668 = vpop.permute.xlu0 %4667
  %4671 = vset.pattern.permute.xlu0 0
  %4672 = vperm.xlu0 %4671, %v4514
  %v4673 = vpop.permute.xlu0 %4672
  %v4675 = vmul.f32 %v4451, %v4518
  %v4676 = vmul.f32 %v4452, %v4523
  %v4677 = vmul.f32 %v4453, %v4528
  %v4678 = vmul.f32 %v4454, %v4533
  %v4679 = vmul.f32 %v4455, %v4538
  %v4680 = vmul.f32 %v4456, %v4543
  %v4681 = vmul.f32 %v4457, %v4548
  %v4682 = vmul.f32 %v4458, %v4553
  %v4683 = vmul.f32 %v4459, %v4558
  %v4684 = vmul.f32 %v4460, %v4563
  %v4685 = vmul.f32 %v4461, %v4568
  %v4686 = vmul.f32 %v4462, %v4573
  %v4687 = vmul.f32 %v4463, %v4578
  %v4688 = vmul.f32 %v4464, %v4583
  %v4689 = vmul.f32 %v4465, %v4588
  %v4690 = vmul.f32 %v4466, %v4593
  %v4691 = vmul.f32 %v4467, %v4598
  %v4692 = vmul.f32 %v4468, %v4603
  %v4693 = vmul.f32 %v4469, %v4608
  %v4694 = vmul.f32 %v4470, %v4613
  %v4695 = vmul.f32 %v4471, %v4618
  %v4696 = vmul.f32 %v4472, %v4623
  %v4697 = vmul.f32 %v4473, %v4628
  %v4698 = vmul.f32 %v4474, %v4633
  %v4699 = vmul.f32 %v4475, %v4638
  %v4700 = vmul.f32 %v4476, %v4643
  %v4701 = vmul.f32 %v4477, %v4648
  %v4702 = vmul.f32 %v4478, %v4653
  %v4703 = vmul.f32 %v4479, %v4658
  %v4704 = vmul.f32 %v4480, %v4663
  %v4705 = vmul.f32 %v4481, %v4668
  %v4706 = vmul.f32 %v4482, %v4673
  %v4707 = vld [vmem:[%s85] sm:$0xff]
  %v4708 = vld [vmem:[%s85 + $0x8] sm:$0xff]
  %v4709 = vld [vmem:[%s85 + $0x10] sm:$0xff]
  %v4710 = vld [vmem:[%s85 + $0x18] sm:$0xff]
  %v4711 = vld [vmem:[%s85 + $0x20] sm:$0xff]
  %v4712 = vld [vmem:[%s85 + $0x28] sm:$0xff]
  %v4713 = vld [vmem:[%s85 + $0x30] sm:$0xff]
  %v4714 = vld [vmem:[%s85 + $0x38] sm:$0xff]
  %v4715 = vld [vmem:[%s85 + $0x40] sm:$0xff]
  %v4716 = vld [vmem:[%s85 + $0x48] sm:$0xff]
  %v4717 = vld [vmem:[%s85 + $0x50] sm:$0xff]
  %v4718 = vld [vmem:[%s85 + $0x58] sm:$0xff]
  %v4719 = vld [vmem:[%s85 + $0x60] sm:$0xff]
  %v4720 = vld [vmem:[%s85 + $0x68] sm:$0xff]
  %v4721 = vld [vmem:[%s85 + $0x70] sm:$0xff]
  %v4722 = vld [vmem:[%s85 + $0x78] sm:$0xff]
  %v4723 = vld [vmem:[%s85 + $0x80] sm:$0xff]
  %v4724 = vld [vmem:[%s85 + $0x88] sm:$0xff]
  %v4725 = vld [vmem:[%s85 + $0x90] sm:$0xff]
  %v4726 = vld [vmem:[%s85 + $0x98] sm:$0xff]
  %v4727 = vld [vmem:[%s85 + $0xa0] sm:$0xff]
  %v4728 = vld [vmem:[%s85 + $0xa8] sm:$0xff]
  %v4729 = vld [vmem:[%s85 + $0xb0] sm:$0xff]
  %v4730 = vld [vmem:[%s85 + $0xb8] sm:$0xff]
  %v4731 = vld [vmem:[%s85 + $0xc0] sm:$0xff]
  %v4732 = vld [vmem:[%s85 + $0xc8] sm:$0xff]
  %v4733 = vld [vmem:[%s85 + $0xd0] sm:$0xff]
  %v4734 = vld [vmem:[%s85 + $0xd8] sm:$0xff]
  %v4735 = vld [vmem:[%s85 + $0xe0] sm:$0xff]
  %v4736 = vld [vmem:[%s85 + $0xe8] sm:$0xff]
  %v4737 = vld [vmem:[%s85 + $0xf0] sm:$0xff]
  %v4738 = vld [vmem:[%s85 + $0xf8] sm:$0xff]
  %4740 = vset.pattern.permute.xlu0 0
  %4741 = vperm.xlu0 %4740, %v4707
  %v4742 = vpop.permute.xlu0 %4741
  %4745 = vset.pattern.permute.xlu0 0
  %4746 = vperm.xlu0 %4745, %v4708
  %v4747 = vpop.permute.xlu0 %4746
  %4750 = vset.pattern.permute.xlu0 0
  %4751 = vperm.xlu0 %4750, %v4709
  %v4752 = vpop.permute.xlu0 %4751
  %4755 = vset.pattern.permute.xlu0 0
  %4756 = vperm.xlu0 %4755, %v4710
  %v4757 = vpop.permute.xlu0 %4756
  %4760 = vset.pattern.permute.xlu0 0
  %4761 = vperm.xlu0 %4760, %v4711
  %v4762 = vpop.permute.xlu0 %4761
  %4765 = vset.pattern.permute.xlu0 0
  %4766 = vperm.xlu0 %4765, %v4712
  %v4767 = vpop.permute.xlu0 %4766
  %4770 = vset.pattern.permute.xlu0 0
  %4771 = vperm.xlu0 %4770, %v4713
  %v4772 = vpop.permute.xlu0 %4771
  %4775 = vset.pattern.permute.xlu0 0
  %4776 = vperm.xlu0 %4775, %v4714
  %v4777 = vpop.permute.xlu0 %4776
  %4780 = vset.pattern.permute.xlu0 0
  %4781 = vperm.xlu0 %4780, %v4715
  %v4782 = vpop.permute.xlu0 %4781
  %4785 = vset.pattern.permute.xlu0 0
  %4786 = vperm.xlu0 %4785, %v4716
  %v4787 = vpop.permute.xlu0 %4786
  %4790 = vset.pattern.permute.xlu0 0
  %4791 = vperm.xlu0 %4790, %v4717
  %v4792 = vpop.permute.xlu0 %4791
  %4795 = vset.pattern.permute.xlu0 0
  %4796 = vperm.xlu0 %4795, %v4718
  %v4797 = vpop.permute.xlu0 %4796
  %4800 = vset.pattern.permute.xlu0 0
  %4801 = vperm.xlu0 %4800, %v4719
  %v4802 = vpop.permute.xlu0 %4801
  %4805 = vset.pattern.permute.xlu0 0
  %4806 = vperm.xlu0 %4805, %v4720
  %v4807 = vpop.permute.xlu0 %4806
  %4810 = vset.pattern.permute.xlu0 0
  %4811 = vperm.xlu0 %4810, %v4721
  %v4812 = vpop.permute.xlu0 %4811
  %4815 = vset.pattern.permute.xlu0 0
  %4816 = vperm.xlu0 %4815, %v4722
  %v4817 = vpop.permute.xlu0 %4816
  %4820 = vset.pattern.permute.xlu0 0
  %4821 = vperm.xlu0 %4820, %v4723
  %v4822 = vpop.permute.xlu0 %4821
  %4825 = vset.pattern.permute.xlu0 0
  %4826 = vperm.xlu0 %4825, %v4724
  %v4827 = vpop.permute.xlu0 %4826
  %4830 = vset.pattern.permute.xlu0 0
  %4831 = vperm.xlu0 %4830, %v4725
  %v4832 = vpop.permute.xlu0 %4831
  %4835 = vset.pattern.permute.xlu0 0
  %4836 = vperm.xlu0 %4835, %v4726
  %v4837 = vpop.permute.xlu0 %4836
  %4840 = vset.pattern.permute.xlu0 0
  %4841 = vperm.xlu0 %4840, %v4727
  %v4842 = vpop.permute.xlu0 %4841
  %4845 = vset.pattern.permute.xlu0 0
  %4846 = vperm.xlu0 %4845, %v4728
  %v4847 = vpop.permute.xlu0 %4846
  %4850 = vset.pattern.permute.xlu0 0
  %4851 = vperm.xlu0 %4850, %v4729
  %v4852 = vpop.permute.xlu0 %4851
  %4855 = vset.pattern.permute.xlu0 0
  %4856 = vperm.xlu0 %4855, %v4730
  %v4857 = vpop.permute.xlu0 %4856
  %4860 = vset.pattern.permute.xlu0 0
  %4861 = vperm.xlu0 %4860, %v4731
  %v4862 = vpop.permute.xlu0 %4861
  %4865 = vset.pattern.permute.xlu0 0
  %4866 = vperm.xlu0 %4865, %v4732
  %v4867 = vpop.permute.xlu0 %4866
  %4870 = vset.pattern.permute.xlu0 0
  %4871 = vperm.xlu0 %4870, %v4733
  %v4872 = vpop.permute.xlu0 %4871
  %4875 = vset.pattern.permute.xlu0 0
  %4876 = vperm.xlu0 %4875, %v4734
  %v4877 = vpop.permute.xlu0 %4876
  %4880 = vset.pattern.permute.xlu0 0
  %4881 = vperm.xlu0 %4880, %v4735
  %v4882 = vpop.permute.xlu0 %4881
  %4885 = vset.pattern.permute.xlu0 0
  %4886 = vperm.xlu0 %4885, %v4736
  %v4887 = vpop.permute.xlu0 %4886
  %4890 = vset.pattern.permute.xlu0 0
  %4891 = vperm.xlu0 %4890, %v4737
  %v4892 = vpop.permute.xlu0 %4891
  %4895 = vset.pattern.permute.xlu0 0
  %4896 = vperm.xlu0 %4895, %v4738
  %v4897 = vpop.permute.xlu0 %4896
  %v4899 = vadd.f32 %v4675, %v4742
  %v4900 = vadd.f32 %v4676, %v4747
  %v4901 = vadd.f32 %v4677, %v4752
  %v4902 = vadd.f32 %v4678, %v4757
  %v4903 = vadd.f32 %v4679, %v4762
  %v4904 = vadd.f32 %v4680, %v4767
  %v4905 = vadd.f32 %v4681, %v4772
  %v4906 = vadd.f32 %v4682, %v4777
  %v4907 = vadd.f32 %v4683, %v4782
  %v4908 = vadd.f32 %v4684, %v4787
  %v4909 = vadd.f32 %v4685, %v4792
  %v4910 = vadd.f32 %v4686, %v4797
  %v4911 = vadd.f32 %v4687, %v4802
  %v4912 = vadd.f32 %v4688, %v4807
  %v4913 = vadd.f32 %v4689, %v4812
  %v4914 = vadd.f32 %v4690, %v4817
  %v4915 = vadd.f32 %v4691, %v4822
  %v4916 = vadd.f32 %v4692, %v4827
  %v4917 = vadd.f32 %v4693, %v4832
  %v4918 = vadd.f32 %v4694, %v4837
  %v4919 = vadd.f32 %v4695, %v4842
  %v4920 = vadd.f32 %v4696, %v4847
  %v4921 = vadd.f32 %v4697, %v4852
  %v4922 = vadd.f32 %v4698, %v4857
  %v4923 = vadd.f32 %v4699, %v4862
  %v4924 = vadd.f32 %v4700, %v4867
  %v4925 = vadd.f32 %v4701, %v4872
  %v4926 = vadd.f32 %v4702, %v4877
  %v4927 = vadd.f32 %v4703, %v4882
  %v4928 = vadd.f32 %v4704, %v4887
  %v4929 = vadd.f32 %v4705, %v4892
  %v4930 = vadd.f32 %v4706, %v4897
  %v4931 = vmax.f32 %v4899, 0.0
  %v4932 = vmax.f32 %v4900, 0.0
  %v4933 = vmax.f32 %v4901, 0.0
  %v4934 = vmax.f32 %v4902, 0.0
  %v4935 = vmax.f32 %v4903, 0.0
  %v4936 = vmax.f32 %v4904, 0.0
  %v4937 = vmax.f32 %v4905, 0.0
  %v4938 = vmax.f32 %v4906, 0.0
  %v4939 = vmax.f32 %v4907, 0.0
  %v4940 = vmax.f32 %v4908, 0.0
  %v4941 = vmax.f32 %v4909, 0.0
  %v4942 = vmax.f32 %v4910, 0.0
  %v4943 = vmax.f32 %v4911, 0.0
  %v4944 = vmax.f32 %v4912, 0.0
  %v4945 = vmax.f32 %v4913, 0.0
  %v4946 = vmax.f32 %v4914, 0.0
  %v4947 = vmax.f32 %v4915, 0.0
  %v4948 = vmax.f32 %v4916, 0.0
  %v4949 = vmax.f32 %v4917, 0.0
  %v4950 = vmax.f32 %v4918, 0.0
  %v4951 = vmax.f32 %v4919, 0.0
  %v4952 = vmax.f32 %v4920, 0.0
  %v4953 = vmax.f32 %v4921, 0.0
  %v4954 = vmax.f32 %v4922, 0.0
  %v4955 = vmax.f32 %v4923, 0.0
  %v4956 = vmax.f32 %v4924, 0.0
  %v4957 = vmax.f32 %v4925, 0.0
  %v4958 = vmax.f32 %v4926, 0.0
  %v4959 = vmax.f32 %v4927, 0.0
  %v4960 = vmax.f32 %v4928, 0.0
  %v4961 = vmax.f32 %v4929, 0.0
  %v4962 = vmax.f32 %v4930, 0.0
  %v4963 = vld [vmem:[%s87] sm:$0xff]
  %v4964 = vld [vmem:[%s87 + $0x8] sm:$0xff]
  %v4965 = vld [vmem:[%s87 + $0x10] sm:$0xff]
  %v4966 = vld [vmem:[%s87 + $0x18] sm:$0xff]
  %v4967 = vld [vmem:[%s87 + $0x20] sm:$0xff]
  %v4968 = vld [vmem:[%s87 + $0x28] sm:$0xff]
  %v4969 = vld [vmem:[%s87 + $0x30] sm:$0xff]
  %v4970 = vld [vmem:[%s87 + $0x38] sm:$0xff]
  %v4971 = vpack.c.bf16 %v4932, %v4931
  %v4972 = vpack.c.bf16 %v4934, %v4933
  %v4973 = vpack.c.bf16 %v4936, %v4935
  %v4974 = vpack.c.bf16 %v4938, %v4937
  %v4975 = vpack.c.bf16 %v4940, %v4939
  %v4976 = vpack.c.bf16 %v4942, %v4941
  %v4977 = vpack.c.bf16 %v4944, %v4943
  %v4978 = vpack.c.bf16 %v4946, %v4945
  %v4979 = vpack.c.bf16 %v4948, %v4947
  %v4980 = vpack.c.bf16 %v4950, %v4949
  %v4981 = vpack.c.bf16 %v4952, %v4951
  %v4982 = vpack.c.bf16 %v4954, %v4953
  %v4983 = vpack.c.bf16 %v4956, %v4955
  %v4984 = vpack.c.bf16 %v4958, %v4957
  %v4985 = vpack.c.bf16 %v4960, %v4959
  %v4986 = vpack.c.bf16 %v4962, %v4961
  %v4987 = vld [vmem:[%s89] sm:$0xff]
  %v4988 = vld [vmem:[%s89 + $0x8] sm:$0xff]
  %v4989 = vld [vmem:[%s89 + $0x10] sm:$0xff]
  %v4990 = vld [vmem:[%s89 + $0x18] sm:$0xff]
  %v4991 = vld [vmem:[%s89 + $0x20] sm:$0xff]
  %v4992 = vld [vmem:[%s89 + $0x28] sm:$0xff]
  %v4993 = vld [vmem:[%s89 + $0x30] sm:$0xff]
  %v4994 = vld [vmem:[%s89 + $0x38] sm:$0xff]
  %4996 = vset.pattern.permute.xlu0 0
  %4997 = vperm.xlu0 %4996, %v4987
  %v4998 = vpop.permute.xlu0 %4997
  %5001 = vset.pattern.permute.xlu0 0
  %5002 = vperm.xlu0 %5001, %v4988
  %v5003 = vpop.permute.xlu0 %5002
  %5006 = vset.pattern.permute.xlu0 0
  %5007 = vperm.xlu0 %5006, %v4989
  %v5008 = vpop.permute.xlu0 %5007
  %5011 = vset.pattern.permute.xlu0 0
  %5012 = vperm.xlu0 %5011, %v4990
  %v5013 = vpop.permute.xlu0 %5012
  %5016 = vset.pattern.permute.xlu0 0
  %5017 = vperm.xlu0 %5016, %v4991
  %v5018 = vpop.permute.xlu0 %5017
  %5021 = vset.pattern.permute.xlu0 0
  %5022 = vperm.xlu0 %5021, %v4992
  %v5023 = vpop.permute.xlu0 %5022
  %5026 = vset.pattern.permute.xlu0 0
  %5027 = vperm.xlu0 %5026, %v4993
  %v5028 = vpop.permute.xlu0 %5027
  %5031 = vset.pattern.permute.xlu0 0
  %5032 = vperm.xlu0 %5031, %v4994
  %v5033 = vpop.permute.xlu0 %5032
  %v5043 = vunpack.c.l.b16 %v4963
  %v5044 = vunpack.c.h.b16 %v4963
  %v5045 = vunpack.c.l.b16 %v4964
  %v5046 = vunpack.c.h.b16 %v4964
  %v5047 = vunpack.c.l.b16 %v4965
  %v5048 = vunpack.c.h.b16 %v4965
  %v5049 = vunpack.c.l.b16 %v4966
  %v5050 = vunpack.c.h.b16 %v4966
  %v5051 = vunpack.c.l.b16 %v4967
  %v5052 = vunpack.c.h.b16 %v4967
  %v5053 = vunpack.c.l.b16 %v4968
  %v5054 = vunpack.c.h.b16 %v4968
  %v5055 = vunpack.c.l.b16 %v4969
  %v5056 = vunpack.c.h.b16 %v4969
  %v5057 = vunpack.c.l.b16 %v4970
  %v5058 = vunpack.c.h.b16 %v4970
  %v5059 = vpack.c.b16 %v5045, %v5043
  %v5060 = vpack.c.b16 %v5046, %v5044
  %v5061 = vpack.c.b16 %v5049, %v5047
  %v5062 = vpack.c.b16 %v5050, %v5048
  %v5063 = vpack.c.b16 %v5053, %v5051
  %v5064 = vpack.c.b16 %v5054, %v5052
  %v5065 = vpack.c.b16 %v5057, %v5055
  %v5066 = vpack.c.b16 %v5058, %v5056
  %5075 = vmatprep.subr.bf16.mxu0 0
  %5076 = vmatpush1.bf16.msra.mxu0 %v4978
  %5077 = vmatprep.subr.bf16.mxu0 0
  %5078 = vmatpush1.bf16.msra.mxu0 %v4977
  %5079 = vmatprep.subr.bf16.mxu0 0
  %5080 = vmatpush1.bf16.msra.mxu0 %v4976
  %5081 = vmatprep.subr.bf16.mxu0 0
  %5082 = vmatpush1.bf16.msra.mxu0 %v4975
  %5083 = vmatprep.subr.bf16.mxu0 0
  %5084 = vmatpush1.bf16.msra.mxu0 %v4974
  %5085 = vmatprep.subr.bf16.mxu0 0
  %5086 = vmatpush1.bf16.msra.mxu0 %v4973
  %5087 = vmatprep.subr.bf16.mxu0 0
  %5088 = vmatpush1.bf16.msra.mxu0 %v4972
  %5089 = vmatprep.subr.bf16.mxu0 0
  %5090 = vmatpush1.bf16.msra.mxu0 %v4971
  %5091 = vmatprep.subr.bf16.mxu0 0
  %5092 = vmatpush2.bf16.msra.mxu0 %v4986
  %5093 = vmatprep.subr.bf16.mxu0 0
  %5094 = vmatpush2.bf16.msra.mxu0 %v4985
  %5095 = vmatprep.subr.bf16.mxu0 0
  %5096 = vmatpush2.bf16.msra.mxu0 %v4984
  %5097 = vmatprep.subr.bf16.mxu0 0
  %5098 = vmatpush2.bf16.msra.mxu0 %v4983
  %5099 = vmatprep.subr.bf16.mxu0 0
  %5100 = vmatpush2.bf16.msra.mxu0 %v4982
  %5101 = vmatprep.subr.bf16.mxu0 0
  %5102 = vmatpush2.bf16.msra.mxu0 %v4981
  %5103 = vmatprep.subr.bf16.mxu0 0
  %5104 = vmatpush2.bf16.msra.mxu0 %v4980
  %5105 = vmatprep.subr.bf16.mxu0 0
  %5106 = vmatpush2.bf16.msra.mxu0 %v4979
  %5107 = vmatprep.mubr.bf16.mxu0 %v5060
  %5108 = vmatmul.mubr.bf16.gmra.mxu0 %v5059
  %v5109 = vpop.f32.mrf.mxu0
  %v5110 = vadd.f32 %v4998, %v5109
  %v5111 = vpop.f32.mrf.mxu0
  %v5112 = vpop.f32.mrf.mxu0
  %v5113 = vadd.f32 %v5003, %v5112
  %v5114 = vpop.f32.mrf.mxu0
  %5115 = vmatprep.mubr.bf16.mxu0 %v5062
  %5116 = vmatmul.mubr.bf16.gmra.mxu0 %v5061
  %v5117 = vpop.f32.mrf.mxu0
  %v5118 = vadd.f32 %v5008, %v5117
  %v5119 = vpop.f32.mrf.mxu0
  %v5120 = vpop.f32.mrf.mxu0
  %v5121 = vadd.f32 %v5013, %v5120
  %v5122 = vpop.f32.mrf.mxu0
  %5123 = vmatprep.mubr.bf16.mxu0 %v5064
  %5124 = vmatmul.mubr.bf16.gmra.mxu0 %v5063
  %v5125 = vpop.f32.mrf.mxu0
  %v5126 = vadd.f32 %v5018, %v5125
  %v5127 = vpop.f32.mrf.mxu0
  %v5128 = vpop.f32.mrf.mxu0
  %v5129 = vadd.f32 %v5023, %v5128
  %v5130 = vpop.f32.mrf.mxu0
  %5131 = vmatprep.mubr.bf16.mxu0 %v5066
  %5132 = vmatmul.mubr.bf16.gmra.mxu0 %v5065
  %v5133 = vpop.f32.mrf.mxu0
  %v5134 = vadd.f32 %v5028, %v5133
  %v5135 = vpop.f32.mrf.mxu0
  %v5136 = vpop.f32.mrf.mxu0
  %v5137 = vadd.f32 %v5033, %v5136
  %v5138 = vpop.f32.mrf.mxu0
  %5139 = vdwg.mxu0
  %v5140 = vmax.f32 %v5110, 0.0
  %v5141 = vmax.f32 %v5113, 0.0
  %v5142 = vmax.f32 %v5118, 0.0
  %v5143 = vmax.f32 %v5121, 0.0
  %v5144 = vmax.f32 %v5126, 0.0
  %v5145 = vmax.f32 %v5129, 0.0
  %v5146 = vmax.f32 %v5134, 0.0
  %v5147 = vmax.f32 %v5137, 0.0
  %5148 = vrot.lane.b32.xlu0 %v5140, 9
  %v5149 = vpop.permute.xlu0 %5148
  %5150 = vrot.lane.b32.xlu0 %v5141, 9
  %v5151 = vpop.permute.xlu0 %5150
  %5152 = vrot.lane.b32.xlu0 %v5142, 9
  %v5153 = vpop.permute.xlu0 %5152
  %5154 = vrot.lane.b32.xlu0 %v5143, 9
  %v5155 = vpop.permute.xlu0 %5154
  %5156 = vrot.lane.b32.xlu0 %v5144, 9
  %v5157 = vpop.permute.xlu0 %5156
  %5158 = vrot.lane.b32.xlu0 %v5145, 9
  %v5159 = vpop.permute.xlu0 %5158
  %5160 = vrot.lane.b32.xlu0 %v5146, 9
  %v5161 = vpop.permute.xlu0 %5160
  %5162 = vrot.lane.b32.xlu0 %v5147, 9
  %v5163 = vpop.permute.xlu0 %5162
  %v5164 = vld [vmem:[%s3] sm:$0x1]
  %v5166 = vlaneseq
  %v5167 = vshrl.u32 %v5166, 7
  %v5168 = vsub.s32 0, %v5167
  %v5169 = vrot.slane %v5164, %v5168
  %v5171 = vmul.f32 %v5149, %v5169
  %v5172 = vmul.f32 %v5151, %v5169
  %v5173 = vmul.f32 %v5153, %v5169
  %v5174 = vmul.f32 %v5155, %v5169
  %v5175 = vmul.f32 %v5157, %v5169
  %v5176 = vmul.f32 %v5159, %v5169
  %v5177 = vmul.f32 %v5161, %v5169
  %v5178 = vmul.f32 %v5163, %v5169
  %v5179 = vpack.c.bf16 %v5172, %v5171
  %v5180 = vpack.c.bf16 %v5174, %v5173
  %v5181 = vpack.c.bf16 %v5176, %v5175
  %v5182 = vpack.c.bf16 %v5178, %v5177
  %5183 = vrot.lane.b32.xlu0 %v5140, 8
  %v5184 = vpop.permute.xlu0 %5183
  %5185 = vrot.lane.b32.xlu0 %v5141, 8
  %v5186 = vpop.permute.xlu0 %5185
  %5187 = vrot.lane.b32.xlu0 %v5142, 8
  %v5188 = vpop.permute.xlu0 %5187
  %5189 = vrot.lane.b32.xlu0 %v5143, 8
  %v5190 = vpop.permute.xlu0 %5189
  %5191 = vrot.lane.b32.xlu0 %v5144, 8
  %v5192 = vpop.permute.xlu0 %5191
  %5193 = vrot.lane.b32.xlu0 %v5145, 8
  %v5194 = vpop.permute.xlu0 %5193
  %5195 = vrot.lane.b32.xlu0 %v5146, 8
  %v5196 = vpop.permute.xlu0 %5195
  %5197 = vrot.lane.b32.xlu0 %v5147, 8
  %v5198 = vpop.permute.xlu0 %5197
  %v5199 = vld [vmem:[%s233] sm:$0x1]
  %v5201 = vlaneseq
  %v5202 = vshrl.u32 %v5201, 7
  %v5203 = vsub.s32 0, %v5202
  %v5204 = vrot.slane %v5199, %v5203
  %v5206 = vmul.f32 %v5184, %v5204
  %v5207 = vmul.f32 %v5186, %v5204
  %v5208 = vmul.f32 %v5188, %v5204
  %v5209 = vmul.f32 %v5190, %v5204
  %v5210 = vmul.f32 %v5192, %v5204
  %v5211 = vmul.f32 %v5194, %v5204
  %v5212 = vmul.f32 %v5196, %v5204
  %v5213 = vmul.f32 %v5198, %v5204
  %v5214 = vpack.c.bf16 %v5207, %v5206
  %v5215 = vpack.c.bf16 %v5209, %v5208
  %v5216 = vpack.c.bf16 %v5211, %v5210
  %v5217 = vpack.c.bf16 %v5213, %v5212
  %5218 = vrot.lane.b32.xlu0 %v5140, 7
  %v5219 = vpop.permute.xlu0 %5218
  %5220 = vrot.lane.b32.xlu0 %v5141, 7
  %v5221 = vpop.permute.xlu0 %5220
  %5222 = vrot.lane.b32.xlu0 %v5142, 7
  %v5223 = vpop.permute.xlu0 %5222
  %5224 = vrot.lane.b32.xlu0 %v5143, 7
  %v5225 = vpop.permute.xlu0 %5224
  %5226 = vrot.lane.b32.xlu0 %v5144, 7
  %v5227 = vpop.permute.xlu0 %5226
  %5228 = vrot.lane.b32.xlu0 %v5145, 7
  %v5229 = vpop.permute.xlu0 %5228
  %5230 = vrot.lane.b32.xlu0 %v5146, 7
  %v5231 = vpop.permute.xlu0 %5230
  %5232 = vrot.lane.b32.xlu0 %v5147, 7
  %v5233 = vpop.permute.xlu0 %5232
  %v5234 = vld [vmem:[%s245] sm:$0x1]
  %v5236 = vlaneseq
  %v5237 = vshrl.u32 %v5236, 7
  %v5238 = vsub.s32 0, %v5237
  %v5239 = vrot.slane %v5234, %v5238
  %v5241 = vmul.f32 %v5219, %v5239
  %v5242 = vmul.f32 %v5221, %v5239
  %v5243 = vmul.f32 %v5223, %v5239
  %v5244 = vmul.f32 %v5225, %v5239
  %v5245 = vmul.f32 %v5227, %v5239
  %v5246 = vmul.f32 %v5229, %v5239
  %v5247 = vmul.f32 %v5231, %v5239
  %v5248 = vmul.f32 %v5233, %v5239
  %v5249 = vpack.c.bf16 %v5242, %v5241
  %v5250 = vpack.c.bf16 %v5244, %v5243
  %v5251 = vpack.c.bf16 %v5246, %v5245
  %v5252 = vpack.c.bf16 %v5248, %v5247
  %5253 = vrot.lane.b32.xlu0 %v5140, 1
  %v5254 = vpop.permute.xlu0 %5253
  %5255 = vrot.lane.b32.xlu0 %v5141, 1
  %v5256 = vpop.permute.xlu0 %5255
  %5257 = vrot.lane.b32.xlu0 %v5142, 1
  %v5258 = vpop.permute.xlu0 %5257
  %5259 = vrot.lane.b32.xlu0 %v5143, 1
  %v5260 = vpop.permute.xlu0 %5259
  %5261 = vrot.lane.b32.xlu0 %v5144, 1
  %v5262 = vpop.permute.xlu0 %5261
  %5263 = vrot.lane.b32.xlu0 %v5145, 1
  %v5264 = vpop.permute.xlu0 %5263
  %5265 = vrot.lane.b32.xlu0 %v5146, 1
  %v5266 = vpop.permute.xlu0 %5265
  %5267 = vrot.lane.b32.xlu0 %v5147, 1
  %v5268 = vpop.permute.xlu0 %5267
  %v5269 = vld [vmem:[%s257] sm:$0x1]
  %v5271 = vlaneseq
  %v5272 = vshrl.u32 %v5271, 7
  %v5273 = vsub.s32 0, %v5272
  %v5274 = vrot.slane %v5269, %v5273
  %v5276 = vmul.f32 %v5254, %v5274
  %v5277 = vmul.f32 %v5256, %v5274
  %v5278 = vmul.f32 %v5258, %v5274
  %v5279 = vmul.f32 %v5260, %v5274
  %v5280 = vmul.f32 %v5262, %v5274
  %v5281 = vmul.f32 %v5264, %v5274
  %v5282 = vmul.f32 %v5266, %v5274
  %v5283 = vmul.f32 %v5268, %v5274
  %v5284 = vpack.c.bf16 %v5277, %v5276
  %v5285 = vpack.c.bf16 %v5279, %v5278
  %v5286 = vpack.c.bf16 %v5281, %v5280
  %v5287 = vpack.c.bf16 %v5283, %v5282
  %v5288 = vpack.c.bf16 %v5141, %v5140
  %v5289 = vpack.c.bf16 %v5143, %v5142
  %v5290 = vpack.c.bf16 %v5145, %v5144
  %v5291 = vpack.c.bf16 %v5147, %v5146
  %5292 = vrot.lane.b32.xlu0 %v5140, 127
  %v5293 = vpop.permute.xlu0 %5292
  %5294 = vrot.lane.b32.xlu0 %v5141, 127
  %v5295 = vpop.permute.xlu0 %5294
  %5296 = vrot.lane.b32.xlu0 %v5142, 127
  %v5297 = vpop.permute.xlu0 %5296
  %5298 = vrot.lane.b32.xlu0 %v5143, 127
  %v5299 = vpop.permute.xlu0 %5298
  %5300 = vrot.lane.b32.xlu0 %v5144, 127
  %v5301 = vpop.permute.xlu0 %5300
  %5302 = vrot.lane.b32.xlu0 %v5145, 127
  %v5303 = vpop.permute.xlu0 %5302
  %5304 = vrot.lane.b32.xlu0 %v5146, 127
  %v5305 = vpop.permute.xlu0 %5304
  %5306 = vrot.lane.b32.xlu0 %v5147, 127
  %v5307 = vpop.permute.xlu0 %5306
  %v5308 = vld [vmem:[%s270] sm:$0x1]
  %v5310 = vlaneseq
  %v5311 = vshrl.u32 %v5310, 7
  %v5312 = vsub.s32 0, %v5311
  %v5313 = vrot.slane %v5308, %v5312
  %v5315 = vmul.f32 %v5293, %v5313
  %v5316 = vmul.f32 %v5295, %v5313
  %v5317 = vmul.f32 %v5297, %v5313
  %v5318 = vmul.f32 %v5299, %v5313
  %v5319 = vmul.f32 %v5301, %v5313
  %v5320 = vmul.f32 %v5303, %v5313
  %v5321 = vmul.f32 %v5305, %v5313
  %v5322 = vmul.f32 %v5307, %v5313
  %v5323 = vpack.c.bf16 %v5316, %v5315
  %v5324 = vpack.c.bf16 %v5318, %v5317
  %v5325 = vpack.c.bf16 %v5320, %v5319
  %v5326 = vpack.c.bf16 %v5322, %v5321
  %5327 = vrot.lane.b32.xlu0 %v5140, 121
  %v5328 = vpop.permute.xlu0 %5327
  %5329 = vrot.lane.b32.xlu0 %v5141, 121
  %v5330 = vpop.permute.xlu0 %5329
  %5331 = vrot.lane.b32.xlu0 %v5142, 121
  %v5332 = vpop.permute.xlu0 %5331
  %5333 = vrot.lane.b32.xlu0 %v5143, 121
  %v5334 = vpop.permute.xlu0 %5333
  %5335 = vrot.lane.b32.xlu0 %v5144, 121
  %v5336 = vpop.permute.xlu0 %5335
  %5337 = vrot.lane.b32.xlu0 %v5145, 121
  %v5338 = vpop.permute.xlu0 %5337
  %5339 = vrot.lane.b32.xlu0 %v5146, 121
  %v5340 = vpop.permute.xlu0 %5339
  %5341 = vrot.lane.b32.xlu0 %v5147, 121
  %v5342 = vpop.permute.xlu0 %5341
  %v5343 = vld [vmem:[%s282] sm:$0x1]
  %v5345 = vlaneseq
  %v5346 = vshrl.u32 %v5345, 7
  %v5347 = vsub.s32 0, %v5346
  %v5348 = vrot.slane %v5343, %v5347
  %v5350 = vmul.f32 %v5328, %v5348
  %v5351 = vmul.f32 %v5330, %v5348
  %v5352 = vmul.f32 %v5332, %v5348
  %v5353 = vmul.f32 %v5334, %v5348
  %v5354 = vmul.f32 %v5336, %v5348
  %v5355 = vmul.f32 %v5338, %v5348
  %v5356 = vmul.f32 %v5340, %v5348
  %v5357 = vmul.f32 %v5342, %v5348
  %v5358 = vpack.c.bf16 %v5351, %v5350
  %v5359 = vpack.c.bf16 %v5353, %v5352
  %v5360 = vpack.c.bf16 %v5355, %v5354
  %v5361 = vpack.c.bf16 %v5357, %v5356
  %5362 = vrot.lane.b32.xlu0 %v5140, 120
  %v5363 = vpop.permute.xlu0 %5362
  %5364 = vrot.lane.b32.xlu0 %v5141, 120
  %v5365 = vpop.permute.xlu0 %5364
  %5366 = vrot.lane.b32.xlu0 %v5142, 120
  %v5367 = vpop.permute.xlu0 %5366
  %5368 = vrot.lane.b32.xlu0 %v5143, 120
  %v5369 = vpop.permute.xlu0 %5368
  %5370 = vrot.lane.b32.xlu0 %v5144, 120
  %v5371 = vpop.permute.xlu0 %5370
  %5372 = vrot.lane.b32.xlu0 %v5145, 120
  %v5373 = vpop.permute.xlu0 %5372
  %5374 = vrot.lane.b32.xlu0 %v5146, 120
  %v5375 = vpop.permute.xlu0 %5374
  %5376 = vrot.lane.b32.xlu0 %v5147, 120
  %v5377 = vpop.permute.xlu0 %5376
  %v5378 = vld [vmem:[%s294] sm:$0x1]
  %v5380 = vlaneseq
  %v5381 = vshrl.u32 %v5380, 7
  %v5382 = vsub.s32 0, %v5381
  %v5383 = vrot.slane %v5378, %v5382
  %v5385 = vmul.f32 %v5363, %v5383
  %v5386 = vmul.f32 %v5365, %v5383
  %v5387 = vmul.f32 %v5367, %v5383
  %v5388 = vmul.f32 %v5369, %v5383
  %v5389 = vmul.f32 %v5371, %v5383
  %v5390 = vmul.f32 %v5373, %v5383
  %v5391 = vmul.f32 %v5375, %v5383
  %v5392 = vmul.f32 %v5377, %v5383
  %v5393 = vpack.c.bf16 %v5386, %v5385
  %v5394 = vpack.c.bf16 %v5388, %v5387
  %v5395 = vpack.c.bf16 %v5390, %v5389
  %v5396 = vpack.c.bf16 %v5392, %v5391
  %5397 = vrot.lane.b32.xlu0 %v5140, 119
  %v5398 = vpop.permute.xlu0 %5397
  %5399 = vrot.lane.b32.xlu0 %v5141, 119
  %v5400 = vpop.permute.xlu0 %5399
  %5401 = vrot.lane.b32.xlu0 %v5142, 119
  %v5402 = vpop.permute.xlu0 %5401
  %5403 = vrot.lane.b32.xlu0 %v5143, 119
  %v5404 = vpop.permute.xlu0 %5403
  %5405 = vrot.lane.b32.xlu0 %v5144, 119
  %v5406 = vpop.permute.xlu0 %5405
  %5407 = vrot.lane.b32.xlu0 %v5145, 119
  %v5408 = vpop.permute.xlu0 %5407
  %5409 = vrot.lane.b32.xlu0 %v5146, 119
  %v5410 = vpop.permute.xlu0 %5409
  %5411 = vrot.lane.b32.xlu0 %v5147, 119
  %v5412 = vpop.permute.xlu0 %5411
  %v5413 = vld [vmem:[%s306] sm:$0x1]
  %v5415 = vlaneseq
  %v5416 = vshrl.u32 %v5415, 7
  %v5417 = vsub.s32 0, %v5416
  %v5418 = vrot.slane %v5413, %v5417
  %v5420 = vmul.f32 %v5398, %v5418
  %v5421 = vmul.f32 %v5400, %v5418
  %v5422 = vmul.f32 %v5402, %v5418
  %v5423 = vmul.f32 %v5404, %v5418
  %v5424 = vmul.f32 %v5406, %v5418
  %v5425 = vmul.f32 %v5408, %v5418
  %v5426 = vmul.f32 %v5410, %v5418
  %v5427 = vmul.f32 %v5412, %v5418
  %v5428 = vpack.c.bf16 %v5421, %v5420
  %v5429 = vpack.c.bf16 %v5423, %v5422
  %v5430 = vpack.c.bf16 %v5425, %v5424
  %v5431 = vpack.c.bf16 %v5427, %v5426
  %v5432 = vld [vmem:[%s91] sm:$0xff]
  %v5433 = vld [vmem:[%s91 + $0x8] sm:$0xff]
  %v5434 = vld [vmem:[%s91 + $0x10] sm:$0xf]
  %v5435 = vld [vmem:[%s91 + $0x14] sm:$0xff]
  %v5436 = vld [vmem:[%s91 + $0x1c] sm:$0xff]
  %v5437 = vld [vmem:[%s91 + $0x24] sm:$0xf]
  %v5438 = vld [vmem:[%s91 + $0x28] sm:$0xff]
  %v5439 = vld [vmem:[%s91 + $0x30] sm:$0xff]
  %v5440 = vld [vmem:[%s91 + $0x38] sm:$0xf]
  %v5441 = vld [vmem:[%s91 + $0x3c] sm:$0xff]
  %v5442 = vld [vmem:[%s91 + $0x44] sm:$0xff]
  %v5443 = vld [vmem:[%s91 + $0x4c] sm:$0xf]
  %v5444 = vld [vmem:[%s91 + $0x50] sm:$0xff]
  %v5445 = vld [vmem:[%s91 + $0x58] sm:$0xff]
  %v5446 = vld [vmem:[%s91 + $0x60] sm:$0xf]
  %v5447 = vld [vmem:[%s91 + $0x64] sm:$0xff]
  %v5448 = vld [vmem:[%s91 + $0x6c] sm:$0xff]
  %v5449 = vld [vmem:[%s91 + $0x74] sm:$0xf]
  %v5450 = vld [vmem:[%s91 + $0x78] sm:$0xff]
  %v5451 = vld [vmem:[%s91 + $0x80] sm:$0xff]
  %v5452 = vld [vmem:[%s91 + $0x88] sm:$0xf]
  %v5453 = vld [vmem:[%s91 + $0x8c] sm:$0xff]
  %v5454 = vld [vmem:[%s91 + $0x94] sm:$0xff]
  %v5455 = vld [vmem:[%s91 + $0x9c] sm:$0xf]
  %v5456 = vld [vmem:[%s93] sm:$0xff]
  %v5457 = vld [vmem:[%s93 + $0x8] sm:$0xff]
  %v5458 = vld [vmem:[%s93 + $0x10] sm:$0xff]
  %v5459 = vld [vmem:[%s93 + $0x18] sm:$0xff]
  %v5460 = vld [vmem:[%s93 + $0x20] sm:$0xff]
  %v5461 = vld [vmem:[%s93 + $0x28] sm:$0xff]
  %v5462 = vld [vmem:[%s93 + $0x30] sm:$0xff]
  %v5463 = vld [vmem:[%s93 + $0x38] sm:$0xff]
  %5465 = vset.pattern.permute.xlu0 0
  %5466 = vperm.xlu0 %5465, %v5456
  %v5467 = vpop.permute.xlu0 %5466
  %5470 = vset.pattern.permute.xlu0 0
  %5471 = vperm.xlu0 %5470, %v5457
  %v5472 = vpop.permute.xlu0 %5471
  %5475 = vset.pattern.permute.xlu0 0
  %5476 = vperm.xlu0 %5475, %v5458
  %v5477 = vpop.permute.xlu0 %5476
  %5480 = vset.pattern.permute.xlu0 0
  %5481 = vperm.xlu0 %5480, %v5459
  %v5482 = vpop.permute.xlu0 %5481
  %5485 = vset.pattern.permute.xlu0 0
  %5486 = vperm.xlu0 %5485, %v5460
  %v5487 = vpop.permute.xlu0 %5486
  %5490 = vset.pattern.permute.xlu0 0
  %5491 = vperm.xlu0 %5490, %v5461
  %v5492 = vpop.permute.xlu0 %5491
  %5495 = vset.pattern.permute.xlu0 0
  %5496 = vperm.xlu0 %5495, %v5462
  %v5497 = vpop.permute.xlu0 %5496
  %5500 = vset.pattern.permute.xlu0 0
  %5501 = vperm.xlu0 %5500, %v5463
  %v5502 = vpop.permute.xlu0 %5501
  %v5528 = vunpack.c.l.b16 %v5432
  %v5529 = vunpack.c.h.b16 %v5432
  %v5530 = vunpack.c.l.b16 %v5433
  %v5531 = vunpack.c.h.b16 %v5433
  %v5532 = vunpack.c.l.b16 %v5434
  %v5533 = vunpack.c.l.b16 %v5435
  %v5534 = vunpack.c.h.b16 %v5435
  %v5535 = vunpack.c.l.b16 %v5436
  %v5536 = vunpack.c.h.b16 %v5436
  %v5537 = vunpack.c.l.b16 %v5437
  %v5538 = vunpack.c.l.b16 %v5438
  %v5539 = vunpack.c.h.b16 %v5438
  %v5540 = vunpack.c.l.b16 %v5439
  %v5541 = vunpack.c.h.b16 %v5439
  %v5542 = vunpack.c.l.b16 %v5440
  %v5543 = vunpack.c.l.b16 %v5441
  %v5544 = vunpack.c.h.b16 %v5441
  %v5545 = vunpack.c.l.b16 %v5442
  %v5546 = vunpack.c.h.b16 %v5442
  %v5547 = vunpack.c.l.b16 %v5443
  %v5548 = vunpack.c.l.b16 %v5444
  %v5549 = vunpack.c.h.b16 %v5444
  %v5550 = vunpack.c.l.b16 %v5445
  %v5551 = vunpack.c.h.b16 %v5445
  %v5552 = vunpack.c.l.b16 %v5446
  %v5553 = vunpack.c.l.b16 %v5447
  %v5554 = vunpack.c.h.b16 %v5447
  %v5555 = vunpack.c.l.b16 %v5448
  %v5556 = vunpack.c.h.b16 %v5448
  %v5557 = vunpack.c.l.b16 %v5449
  %v5558 = vunpack.c.l.b16 %v5450
  %v5559 = vunpack.c.h.b16 %v5450
  %v5560 = vunpack.c.l.b16 %v5451
  %v5561 = vunpack.c.h.b16 %v5451
  %v5562 = vunpack.c.l.b16 %v5452
  %v5563 = vunpack.c.l.b16 %v5453
  %v5564 = vunpack.c.h.b16 %v5453
  %v5565 = vunpack.c.l.b16 %v5454
  %v5566 = vunpack.c.h.b16 %v5454
  %v5567 = vunpack.c.l.b16 %v5455
  %v5568 = vpack.c.b16 %v5533, %v5528
  %v5569 = vpack.c.b16 %v5534, %v5529
  %v5570 = vpack.c.b16 %v5535, %v5530
  %v5571 = vpack.c.b16 %v5536, %v5531
  %v5572 = vpack.c.b16 %v5537, %v5532
  %v5573 = vpack.c.b16 %v5543, %v5538
  %v5574 = vpack.c.b16 %v5544, %v5539
  %v5575 = vpack.c.b16 %v5545, %v5540
  %v5576 = vpack.c.b16 %v5546, %v5541
  %v5577 = vpack.c.b16 %v5547, %v5542
  %v5578 = vpack.c.b16 %v5553, %v5548
  %v5579 = vpack.c.b16 %v5554, %v5549
  %v5580 = vpack.c.b16 %v5555, %v5550
  %v5581 = vpack.c.b16 %v5556, %v5551
  %v5582 = vpack.c.b16 %v5557, %v5552
  %v5583 = vpack.c.b16 %v5563, %v5558
  %v5584 = vpack.c.b16 %v5564, %v5559
  %v5585 = vpack.c.b16 %v5565, %v5560
  %v5586 = vpack.c.b16 %v5566, %v5561
  %v5587 = vpack.c.b16 %v5567, %v5562
  %v5605 = vsel %vm2691, %v5572, 0
  %v5608 = vsel %vm2691, %v5577, 0
  %v5611 = vsel %vm2691, %v5582, 0
  %v5614 = vsel %vm2691, %v5587, 0
  %5616 = vmatprep.subr.bf16.mxu0 0
  %5617 = vmatpush1.bf16.msra.mxu0 %v5217
  %5618 = vmatprep.subr.bf16.mxu0 0
  %5619 = vmatpush1.bf16.msra.mxu0 %v5216
  %5620 = vmatprep.subr.bf16.mxu0 0
  %5621 = vmatpush1.bf16.msra.mxu0 %v5215
  %5622 = vmatprep.subr.bf16.mxu0 0
  %5623 = vmatpush1.bf16.msra.mxu0 %v5214
  %5624 = vmatprep.subr.bf16.mxu0 0
  %5625 = vmatpush1.bf16.msra.mxu0 %v5182
  %5626 = vmatprep.subr.bf16.mxu0 0
  %5627 = vmatpush1.bf16.msra.mxu0 %v5181
  %5628 = vmatprep.subr.bf16.mxu0 0
  %5629 = vmatpush1.bf16.msra.mxu0 %v5180
  %5630 = vmatprep.subr.bf16.mxu0 0
  %5631 = vmatpush1.bf16.msra.mxu0 %v5179
  %5632 = vmatprep.subr.bf16.mxu0 0
  %5633 = vmatpush2.bf16.msra.mxu0 %v5287
  %5634 = vmatprep.subr.bf16.mxu0 0
  %5635 = vmatpush2.bf16.msra.mxu0 %v5286
  %5636 = vmatprep.subr.bf16.mxu0 0
  %5637 = vmatpush2.bf16.msra.mxu0 %v5285
  %5638 = vmatprep.subr.bf16.mxu0 0
  %5639 = vmatpush2.bf16.msra.mxu0 %v5284
  %5640 = vmatprep.subr.bf16.mxu0 0
  %5641 = vmatpush2.bf16.msra.mxu0 %v5252
  %5642 = vmatprep.subr.bf16.mxu0 0
  %5643 = vmatpush2.bf16.msra.mxu0 %v5251
  %5644 = vmatprep.subr.bf16.mxu0 0
  %5645 = vmatpush2.bf16.msra.mxu0 %v5250
  %5646 = vmatprep.subr.bf16.mxu0 0
  %5647 = vmatpush2.bf16.msra.mxu0 %v5249
  %5648 = vmatprep.mubr.bf16.mxu0 %v5569
  %5649 = vmatmul.mubr.bf16.gmra.mxu0 %v5568
  %v5650 = vpop.f32.mrf.mxu0
  %v5651 = vadd.f32 %v5467, %v5650
  %v5652 = vpop.f32.mrf.mxu0
  %v5653 = vpop.f32.mrf.mxu0
  %v5654 = vadd.f32 %v5472, %v5653
  %v5655 = vpop.f32.mrf.mxu0
  %5656 = vmatprep.mubr.bf16.mxu0 %v5574
  %5657 = vmatmul.mubr.bf16.gmra.mxu0 %v5573
  %v5658 = vpop.f32.mrf.mxu0
  %v5659 = vadd.f32 %v5477, %v5658
  %v5660 = vpop.f32.mrf.mxu0
  %v5661 = vpop.f32.mrf.mxu0
  %v5662 = vadd.f32 %v5482, %v5661
  %v5663 = vpop.f32.mrf.mxu0
  %5664 = vmatprep.mubr.bf16.mxu0 %v5579
  %5665 = vmatmul.mubr.bf16.gmra.mxu0 %v5578
  %v5666 = vpop.f32.mrf.mxu0
  %v5667 = vadd.f32 %v5487, %v5666
  %v5668 = vpop.f32.mrf.mxu0
  %v5669 = vpop.f32.mrf.mxu0
  %v5670 = vadd.f32 %v5492, %v5669
  %v5671 = vpop.f32.mrf.mxu0
  %5672 = vmatprep.mubr.bf16.mxu0 %v5584
  %5673 = vmatmul.mubr.bf16.gmra.mxu0 %v5583
  %v5674 = vpop.f32.mrf.mxu0
  %v5675 = vadd.f32 %v5497, %v5674
  %v5676 = vpop.f32.mrf.mxu0
  %v5677 = vpop.f32.mrf.mxu0
  %v5678 = vadd.f32 %v5502, %v5677
  %v5679 = vpop.f32.mrf.mxu0
  %5680 = vdwg.mxu0
  %5681 = vmatprep.subr.bf16.mxu0 0
  %5682 = vmatpush1.bf16.msra.mxu0 %v5326
  %5683 = vmatprep.subr.bf16.mxu0 0
  %5684 = vmatpush1.bf16.msra.mxu0 %v5325
  %5685 = vmatprep.subr.bf16.mxu0 0
  %5686 = vmatpush1.bf16.msra.mxu0 %v5324
  %5687 = vmatprep.subr.bf16.mxu0 0
  %5688 = vmatpush1.bf16.msra.mxu0 %v5323
  %5689 = vmatprep.subr.bf16.mxu0 0
  %5690 = vmatpush1.bf16.msra.mxu0 %v5291
  %5691 = vmatprep.subr.bf16.mxu0 0
  %5692 = vmatpush1.bf16.msra.mxu0 %v5290
  %5693 = vmatprep.subr.bf16.mxu0 0
  %5694 = vmatpush1.bf16.msra.mxu0 %v5289
  %5695 = vmatprep.subr.bf16.mxu0 0
  %5696 = vmatpush1.bf16.msra.mxu0 %v5288
  %5697 = vmatprep.subr.bf16.mxu0 0
  %5698 = vmatpush2.bf16.msra.mxu0 %v5396
  %5699 = vmatprep.subr.bf16.mxu0 0
  %5700 = vmatpush2.bf16.msra.mxu0 %v5395
  %5701 = vmatprep.subr.bf16.mxu0 0
  %5702 = vmatpush2.bf16.msra.mxu0 %v5394
  %5703 = vmatprep.subr.bf16.mxu0 0
  %5704 = vmatpush2.bf16.msra.mxu0 %v5393
  %5705 = vmatprep.subr.bf16.mxu0 0
  %5706 = vmatpush2.bf16.msra.mxu0 %v5361
  %5707 = vmatprep.subr.bf16.mxu0 0
  %5708 = vmatpush2.bf16.msra.mxu0 %v5360
  %5709 = vmatprep.subr.bf16.mxu0 0
  %5710 = vmatpush2.bf16.msra.mxu0 %v5359
  %5711 = vmatprep.subr.bf16.mxu0 0
  %5712 = vmatpush2.bf16.msra.mxu0 %v5358
  %5713 = vmatprep.mubr.bf16.mxu0 %v5571
  %5714 = vmatmul.mubr.bf16.gmra.mxu0 %v5570
  %v5715 = vpop.f32.mrf.mxu0
  %v5716 = vadd.f32 %v5651, %v5715
  %v5717 = vpop.f32.mrf.mxu0
  %v5718 = vpop.f32.mrf.mxu0
  %v5719 = vadd.f32 %v5654, %v5718
  %v5720 = vpop.f32.mrf.mxu0
  %5721 = vmatprep.mubr.bf16.mxu0 %v5576
  %5722 = vmatmul.mubr.bf16.gmra.mxu0 %v5575
  %v5723 = vpop.f32.mrf.mxu0
  %v5724 = vadd.f32 %v5659, %v5723
  %v5725 = vpop.f32.mrf.mxu0
  %v5726 = vpop.f32.mrf.mxu0
  %v5727 = vadd.f32 %v5662, %v5726
  %v5728 = vpop.f32.mrf.mxu0
  %5729 = vmatprep.mubr.bf16.mxu0 %v5581
  %5730 = vmatmul.mubr.bf16.gmra.mxu0 %v5580
  %v5731 = vpop.f32.mrf.mxu0
  %v5732 = vadd.f32 %v5667, %v5731
  %v5733 = vpop.f32.mrf.mxu0
  %v5734 = vpop.f32.mrf.mxu0
  %v5735 = vadd.f32 %v5670, %v5734
  %v5736 = vpop.f32.mrf.mxu0
  %5737 = vmatprep.mubr.bf16.mxu0 %v5586
  %5738 = vmatmul.mubr.bf16.gmra.mxu0 %v5585
  %v5739 = vpop.f32.mrf.mxu0
  %v5740 = vadd.f32 %v5675, %v5739
  %v5741 = vpop.f32.mrf.mxu0
  %v5742 = vpop.f32.mrf.mxu0
  %v5743 = vadd.f32 %v5678, %v5742
  %v5744 = vpop.f32.mrf.mxu0
  %5745 = vdwg.mxu0
  %5746 = vmatprep.subr.bf16.mxu0 0
  %5747 = vmatpush1.bf16.msra.mxu0 0
  %5748 = vmatprep.subr.bf16.mxu0 0
  %5749 = vmatpush1.bf16.msra.mxu0 0
  %5750 = vmatprep.subr.bf16.mxu0 0
  %5751 = vmatpush1.bf16.msra.mxu0 0
  %5752 = vmatprep.subr.bf16.mxu0 0
  %5753 = vmatpush1.bf16.msra.mxu0 0
  %5754 = vmatprep.subr.bf16.mxu0 0
  %5755 = vmatpush1.bf16.msra.mxu0 %v5431
  %5756 = vmatprep.subr.bf16.mxu0 0
  %5757 = vmatpush1.bf16.msra.mxu0 %v5430
  %5758 = vmatprep.subr.bf16.mxu0 0
  %5759 = vmatpush1.bf16.msra.mxu0 %v5429
  %5760 = vmatprep.subr.bf16.mxu0 0
  %5761 = vmatpush1.bf16.msra.mxu0 %v5428
  %5762 = vmatprep.subr.bf16.mxu0 0
  %5763 = vmatpush2.bf16.msra.mxu0 0
  %5764 = vmatprep.subr.bf16.mxu0 0
  %5765 = vmatpush2.bf16.msra.mxu0 0
  %5766 = vmatprep.subr.bf16.mxu0 0
  %5767 = vmatpush2.bf16.msra.mxu0 0
  %5768 = vmatprep.subr.bf16.mxu0 0
  %5769 = vmatpush2.bf16.msra.mxu0 0
  %5770 = vmatprep.subr.bf16.mxu0 0
  %5771 = vmatpush2.bf16.msra.mxu0 0
  %5772 = vmatprep.subr.bf16.mxu0 0
  %5773 = vmatpush2.bf16.msra.mxu0 0
  %5774 = vmatprep.subr.bf16.mxu0 0
  %5775 = vmatpush2.bf16.msra.mxu0 0
  %5776 = vmatprep.subr.bf16.mxu0 0
  %5777 = vmatpush2.bf16.msra.mxu0 0
  %5778 = vmatprep.mubr.bf16.mxu0 0
  %5779 = vmatmul.mubr.bf16.gmra.mxu0 %v5605
  %v5780 = vpop.f32.mrf.mxu0
  %v5781 = vadd.f32 %v5716, %v5780
  %v5782 = vpop.f32.mrf.mxu0
  %v5783 = vpop.f32.mrf.mxu0
  %v5784 = vadd.f32 %v5719, %v5783
  %v5785 = vpop.f32.mrf.mxu0
  %5786 = vmatprep.mubr.bf16.mxu0 0
  %5787 = vmatmul.mubr.bf16.gmra.mxu0 %v5608
  %v5788 = vpop.f32.mrf.mxu0
  %v5789 = vadd.f32 %v5724, %v5788
  %v5790 = vpop.f32.mrf.mxu0
  %v5791 = vpop.f32.mrf.mxu0
  %v5792 = vadd.f32 %v5727, %v5791
  %v5793 = vpop.f32.mrf.mxu0
  %5794 = vmatprep.mubr.bf16.mxu0 0
  %5795 = vmatmul.mubr.bf16.gmra.mxu0 %v5611
  %v5796 = vpop.f32.mrf.mxu0
  %v5797 = vadd.f32 %v5732, %v5796
  %v5798 = vpop.f32.mrf.mxu0
  %v5799 = vpop.f32.mrf.mxu0
  %v5800 = vadd.f32 %v5735, %v5799
  %v5801 = vpop.f32.mrf.mxu0
  %5802 = vmatprep.mubr.bf16.mxu0 0
  %5803 = vmatmul.mubr.bf16.gmra.mxu0 %v5614
  %v5804 = vpop.f32.mrf.mxu0
  %v5805 = vadd.f32 %v5740, %v5804
  %v5806 = vpop.f32.mrf.mxu0
  %v5807 = vpop.f32.mrf.mxu0
  %v5808 = vadd.f32 %v5743, %v5807
  %v5809 = vpop.f32.mrf.mxu0
  %5810 = vdwg.mxu0
  %v5811 = vmax.f32 %v5781, 0.0
  %v5812 = vmax.f32 %v5784, 0.0
  %v5813 = vmax.f32 %v5789, 0.0
  %v5814 = vmax.f32 %v5792, 0.0
  %v5815 = vmax.f32 %v5797, 0.0
  %v5816 = vmax.f32 %v5800, 0.0
  %v5817 = vmax.f32 %v5805, 0.0
  %v5818 = vmax.f32 %v5808, 0.0
  %v5819 = vld [vmem:[%s95] sm:$0xf]
  %v5820 = vld [vmem:[%s95 + $0x4] sm:$0xf]
  %v5821 = vld [vmem:[%s95 + $0x8] sm:$0xf]
  %v5822 = vld [vmem:[%s95 + $0xc] sm:$0xf]
  %v5823 = vld [vmem:[%s95 + $0x10] sm:$0xf]
  %v5824 = vld [vmem:[%s95 + $0x14] sm:$0xf]
  %v5825 = vld [vmem:[%s95 + $0x18] sm:$0xf]
  %v5826 = vld [vmem:[%s95 + $0x1c] sm:$0xf]
  %v5827 = vld [vmem:[%s95 + $0x20] sm:$0xf]
  %v5828 = vld [vmem:[%s95 + $0x24] sm:$0xf]
  %v5829 = vld [vmem:[%s95 + $0x28] sm:$0xf]
  %v5830 = vld [vmem:[%s95 + $0x2c] sm:$0xf]
  %v5831 = vld [vmem:[%s95 + $0x30] sm:$0xf]
  %v5832 = vld [vmem:[%s95 + $0x34] sm:$0xf]
  %v5833 = vld [vmem:[%s95 + $0x38] sm:$0xf]
  %v5834 = vld [vmem:[%s95 + $0x3c] sm:$0xf]
  %v5835 = vld [vmem:[%s95 + $0x40] sm:$0xf]
  %v5836 = vld [vmem:[%s95 + $0x44] sm:$0xf]
  %v5837 = vld [vmem:[%s95 + $0x48] sm:$0xf]
  %v5838 = vld [vmem:[%s95 + $0x4c] sm:$0xf]
  %v5839 = vld [vmem:[%s95 + $0x50] sm:$0xf]
  %v5840 = vld [vmem:[%s95 + $0x54] sm:$0xf]
  %v5841 = vld [vmem:[%s95 + $0x58] sm:$0xf]
  %v5842 = vld [vmem:[%s95 + $0x5c] sm:$0xf]
  %v5843 = vld [vmem:[%s95 + $0x60] sm:$0xf]
  %v5844 = vld [vmem:[%s95 + $0x64] sm:$0xf]
  %v5845 = vld [vmem:[%s95 + $0x68] sm:$0xf]
  %v5846 = vld [vmem:[%s95 + $0x6c] sm:$0xf]
  %v5847 = vld [vmem:[%s95 + $0x70] sm:$0xf]
  %v5848 = vld [vmem:[%s95 + $0x74] sm:$0xf]
  %v5849 = vld [vmem:[%s95 + $0x78] sm:$0xf]
  %v5850 = vld [vmem:[%s95 + $0x7c] sm:$0xf]
  %v5851 = vpack.c.bf16 %v5812, %v5811
  %v5852 = vpack.c.bf16 %v5814, %v5813
  %v5853 = vpack.c.bf16 %v5816, %v5815
  %v5854 = vpack.c.bf16 %v5818, %v5817
  %v5855 = vld [vmem:[%s97] sm:$0xff]
  %v5856 = vld [vmem:[%s97 + $0x8] sm:$0xff]
  %v5857 = vld [vmem:[%s97 + $0x10] sm:$0xff]
  %v5858 = vld [vmem:[%s97 + $0x18] sm:$0xff]
  %v5859 = vld [vmem:[%s97 + $0x20] sm:$0xff]
  %v5860 = vld [vmem:[%s97 + $0x28] sm:$0xff]
  %v5861 = vld [vmem:[%s97 + $0x30] sm:$0xff]
  %v5862 = vld [vmem:[%s97 + $0x38] sm:$0xff]
  %v5863 = vld [vmem:[%s97 + $0x40] sm:$0xff]
  %v5864 = vld [vmem:[%s97 + $0x48] sm:$0xff]
  %v5865 = vld [vmem:[%s97 + $0x50] sm:$0xff]
  %v5866 = vld [vmem:[%s97 + $0x58] sm:$0xff]
  %v5867 = vld [vmem:[%s97 + $0x60] sm:$0xff]
  %v5868 = vld [vmem:[%s97 + $0x68] sm:$0xff]
  %v5869 = vld [vmem:[%s97 + $0x70] sm:$0xff]
  %v5870 = vld [vmem:[%s97 + $0x78] sm:$0xff]
  %v5871 = vld [vmem:[%s97 + $0x80] sm:$0xff]
  %v5872 = vld [vmem:[%s97 + $0x88] sm:$0xff]
  %v5873 = vld [vmem:[%s97 + $0x90] sm:$0xff]
  %v5874 = vld [vmem:[%s97 + $0x98] sm:$0xff]
  %v5875 = vld [vmem:[%s97 + $0xa0] sm:$0xff]
  %v5876 = vld [vmem:[%s97 + $0xa8] sm:$0xff]
  %v5877 = vld [vmem:[%s97 + $0xb0] sm:$0xff]
  %v5878 = vld [vmem:[%s97 + $0xb8] sm:$0xff]
  %v5879 = vld [vmem:[%s97 + $0xc0] sm:$0xff]
  %v5880 = vld [vmem:[%s97 + $0xc8] sm:$0xff]
  %v5881 = vld [vmem:[%s97 + $0xd0] sm:$0xff]
  %v5882 = vld [vmem:[%s97 + $0xd8] sm:$0xff]
  %v5883 = vld [vmem:[%s97 + $0xe0] sm:$0xff]
  %v5884 = vld [vmem:[%s97 + $0xe8] sm:$0xff]
  %v5885 = vld [vmem:[%s97 + $0xf0] sm:$0xff]
  %v5886 = vld [vmem:[%s97 + $0xf8] sm:$0xff]
  %5888 = vset.pattern.permute.xlu0 0
  %5889 = vperm.xlu0 %5888, %v5855
  %v5890 = vpop.permute.xlu0 %5889
  %5893 = vset.pattern.permute.xlu0 0
  %5894 = vperm.xlu0 %5893, %v5856
  %v5895 = vpop.permute.xlu0 %5894
  %5898 = vset.pattern.permute.xlu0 0
  %5899 = vperm.xlu0 %5898, %v5857
  %v5900 = vpop.permute.xlu0 %5899
  %5903 = vset.pattern.permute.xlu0 0
  %5904 = vperm.xlu0 %5903, %v5858
  %v5905 = vpop.permute.xlu0 %5904
  %5908 = vset.pattern.permute.xlu0 0
  %5909 = vperm.xlu0 %5908, %v5859
  %v5910 = vpop.permute.xlu0 %5909
  %5913 = vset.pattern.permute.xlu0 0
  %5914 = vperm.xlu0 %5913, %v5860
  %v5915 = vpop.permute.xlu0 %5914
  %5918 = vset.pattern.permute.xlu0 0
  %5919 = vperm.xlu0 %5918, %v5861
  %v5920 = vpop.permute.xlu0 %5919
  %5923 = vset.pattern.permute.xlu0 0
  %5924 = vperm.xlu0 %5923, %v5862
  %v5925 = vpop.permute.xlu0 %5924
  %5928 = vset.pattern.permute.xlu0 0
  %5929 = vperm.xlu0 %5928, %v5863
  %v5930 = vpop.permute.xlu0 %5929
  %5933 = vset.pattern.permute.xlu0 0
  %5934 = vperm.xlu0 %5933, %v5864
  %v5935 = vpop.permute.xlu0 %5934
  %5938 = vset.pattern.permute.xlu0 0
  %5939 = vperm.xlu0 %5938, %v5865
  %v5940 = vpop.permute.xlu0 %5939
  %5943 = vset.pattern.permute.xlu0 0
  %5944 = vperm.xlu0 %5943, %v5866
  %v5945 = vpop.permute.xlu0 %5944
  %5948 = vset.pattern.permute.xlu0 0
  %5949 = vperm.xlu0 %5948, %v5867
  %v5950 = vpop.permute.xlu0 %5949
  %5953 = vset.pattern.permute.xlu0 0
  %5954 = vperm.xlu0 %5953, %v5868
  %v5955 = vpop.permute.xlu0 %5954
  %5958 = vset.pattern.permute.xlu0 0
  %5959 = vperm.xlu0 %5958, %v5869
  %v5960 = vpop.permute.xlu0 %5959
  %5963 = vset.pattern.permute.xlu0 0
  %5964 = vperm.xlu0 %5963, %v5870
  %v5965 = vpop.permute.xlu0 %5964
  %5968 = vset.pattern.permute.xlu0 0
  %5969 = vperm.xlu0 %5968, %v5871
  %v5970 = vpop.permute.xlu0 %5969
  %5973 = vset.pattern.permute.xlu0 0
  %5974 = vperm.xlu0 %5973, %v5872
  %v5975 = vpop.permute.xlu0 %5974
  %5978 = vset.pattern.permute.xlu0 0
  %5979 = vperm.xlu0 %5978, %v5873
  %v5980 = vpop.permute.xlu0 %5979
  %5983 = vset.pattern.permute.xlu0 0
  %5984 = vperm.xlu0 %5983, %v5874
  %v5985 = vpop.permute.xlu0 %5984
  %5988 = vset.pattern.permute.xlu0 0
  %5989 = vperm.xlu0 %5988, %v5875
  %v5990 = vpop.permute.xlu0 %5989
  %5993 = vset.pattern.permute.xlu0 0
  %5994 = vperm.xlu0 %5993, %v5876
  %v5995 = vpop.permute.xlu0 %5994
  %5998 = vset.pattern.permute.xlu0 0
  %5999 = vperm.xlu0 %5998, %v5877
  %v6000 = vpop.permute.xlu0 %5999
  %6003 = vset.pattern.permute.xlu0 0
  %6004 = vperm.xlu0 %6003, %v5878
  %v6005 = vpop.permute.xlu0 %6004
  %6008 = vset.pattern.permute.xlu0 0
  %6009 = vperm.xlu0 %6008, %v5879
  %v6010 = vpop.permute.xlu0 %6009
  %6013 = vset.pattern.permute.xlu0 0
  %6014 = vperm.xlu0 %6013, %v5880
  %v6015 = vpop.permute.xlu0 %6014
  %6018 = vset.pattern.permute.xlu0 0
  %6019 = vperm.xlu0 %6018, %v5881
  %v6020 = vpop.permute.xlu0 %6019
  %6023 = vset.pattern.permute.xlu0 0
  %6024 = vperm.xlu0 %6023, %v5882
  %v6025 = vpop.permute.xlu0 %6024
  %6028 = vset.pattern.permute.xlu0 0
  %6029 = vperm.xlu0 %6028, %v5883
  %v6030 = vpop.permute.xlu0 %6029
  %6033 = vset.pattern.permute.xlu0 0
  %6034 = vperm.xlu0 %6033, %v5884
  %v6035 = vpop.permute.xlu0 %6034
  %6038 = vset.pattern.permute.xlu0 0
  %6039 = vperm.xlu0 %6038, %v5885
  %v6040 = vpop.permute.xlu0 %6039
  %6043 = vset.pattern.permute.xlu0 0
  %6044 = vperm.xlu0 %6043, %v5886
  %v6045 = vpop.permute.xlu0 %6044
  %v6079 = vunpack.c.l.b16 %v5819
  %v6080 = vunpack.c.l.b16 %v5820
  %v6081 = vunpack.c.l.b16 %v5821
  %v6082 = vunpack.c.l.b16 %v5822
  %v6083 = vunpack.c.l.b16 %v5823
  %v6084 = vunpack.c.l.b16 %v5824
  %v6085 = vunpack.c.l.b16 %v5825
  %v6086 = vunpack.c.l.b16 %v5826
  %v6087 = vunpack.c.l.b16 %v5827
  %v6088 = vunpack.c.l.b16 %v5828
  %v6089 = vunpack.c.l.b16 %v5829
  %v6090 = vunpack.c.l.b16 %v5830
  %v6091 = vunpack.c.l.b16 %v5831
  %v6092 = vunpack.c.l.b16 %v5832
  %v6093 = vunpack.c.l.b16 %v5833
  %v6094 = vunpack.c.l.b16 %v5834
  %v6095 = vunpack.c.l.b16 %v5835
  %v6096 = vunpack.c.l.b16 %v5836
  %v6097 = vunpack.c.l.b16 %v5837
  %v6098 = vunpack.c.l.b16 %v5838
  %v6099 = vunpack.c.l.b16 %v5839
  %v6100 = vunpack.c.l.b16 %v5840
  %v6101 = vunpack.c.l.b16 %v5841
  %v6102 = vunpack.c.l.b16 %v5842
  %v6103 = vunpack.c.l.b16 %v5843
  %v6104 = vunpack.c.l.b16 %v5844
  %v6105 = vunpack.c.l.b16 %v5845
  %v6106 = vunpack.c.l.b16 %v5846
  %v6107 = vunpack.c.l.b16 %v5847
  %v6108 = vunpack.c.l.b16 %v5848
  %v6109 = vunpack.c.l.b16 %v5849
  %v6110 = vunpack.c.l.b16 %v5850
  %v6111 = vpack.c.b16 %v6080, %v6079
  %v6112 = vpack.c.b16 %v6082, %v6081
  %v6113 = vpack.c.b16 %v6084, %v6083
  %v6114 = vpack.c.b16 %v6086, %v6085
  %v6115 = vpack.c.b16 %v6088, %v6087
  %v6116 = vpack.c.b16 %v6090, %v6089
  %v6117 = vpack.c.b16 %v6092, %v6091
  %v6118 = vpack.c.b16 %v6094, %v6093
  %v6119 = vpack.c.b16 %v6096, %v6095
  %v6120 = vpack.c.b16 %v6098, %v6097
  %v6121 = vpack.c.b16 %v6100, %v6099
  %v6122 = vpack.c.b16 %v6102, %v6101
  %v6123 = vpack.c.b16 %v6104, %v6103
  %v6124 = vpack.c.b16 %v6106, %v6105
  %v6125 = vpack.c.b16 %v6108, %v6107
  %v6126 = vpack.c.b16 %v6110, %v6109
  %v6128 = vsel %vm2691, %v6111, 0
  %v6131 = vsel %vm2691, %v6112, 0
  %v6134 = vsel %vm2691, %v6113, 0
  %v6137 = vsel %vm2691, %v6114, 0
  %v6140 = vsel %vm2691, %v6115, 0
  %v6143 = vsel %vm2691, %v6116, 0
  %v6146 = vsel %vm2691, %v6117, 0
  %v6149 = vsel %vm2691, %v6118, 0
  %v6152 = vsel %vm2691, %v6119, 0
  %v6155 = vsel %vm2691, %v6120, 0
  %v6158 = vsel %vm2691, %v6121, 0
  %v6161 = vsel %vm2691, %v6122, 0
  %v6164 = vsel %vm2691, %v6123, 0
  %v6167 = vsel %vm2691, %v6124, 0
  %v6170 = vsel %vm2691, %v6125, 0
  %v6173 = vsel %vm2691, %v6126, 0
  %6175 = vmatprep.subr.bf16.mxu0 0
  %6176 = vmatpush1.bf16.msra.mxu0 0
  %6177 = vmatprep.subr.bf16.mxu0 0
  %6178 = vmatpush1.bf16.msra.mxu0 0
  %6179 = vmatprep.subr.bf16.mxu0 0
  %6180 = vmatpush1.bf16.msra.mxu0 0
  %6181 = vmatprep.subr.bf16.mxu0 0
  %6182 = vmatpush1.bf16.msra.mxu0 0
  %6183 = vmatprep.subr.bf16.mxu0 0
  %6184 = vmatpush1.bf16.msra.mxu0 %v5854
  %6185 = vmatprep.subr.bf16.mxu0 0
  %6186 = vmatpush1.bf16.msra.mxu0 %v5853
  %6187 = vmatprep.subr.bf16.mxu0 0
  %6188 = vmatpush1.bf16.msra.mxu0 %v5852
  %6189 = vmatprep.subr.bf16.mxu0 0
  %6190 = vmatpush1.bf16.msra.mxu0 %v5851
  %6191 = vmatprep.subr.bf16.mxu0 0
  %6192 = vmatpush2.bf16.msra.mxu0 0
  %6193 = vmatprep.subr.bf16.mxu0 0
  %6194 = vmatpush2.bf16.msra.mxu0 0
  %6195 = vmatprep.subr.bf16.mxu0 0
  %6196 = vmatpush2.bf16.msra.mxu0 0
  %6197 = vmatprep.subr.bf16.mxu0 0
  %6198 = vmatpush2.bf16.msra.mxu0 0
  %6199 = vmatprep.subr.bf16.mxu0 0
  %6200 = vmatpush2.bf16.msra.mxu0 0
  %6201 = vmatprep.subr.bf16.mxu0 0
  %6202 = vmatpush2.bf16.msra.mxu0 0
  %6203 = vmatprep.subr.bf16.mxu0 0
  %6204 = vmatpush2.bf16.msra.mxu0 0
  %6205 = vmatprep.subr.bf16.mxu0 0
  %6206 = vmatpush2.bf16.msra.mxu0 0
  %6207 = vmatprep.mubr.bf16.mxu0 0
  %6208 = vmatmul.mubr.bf16.gmra.mxu0 %v6128
  %v6209 = vpop.f32.mrf.mxu0
  %v6210 = vadd.f32 %v5890, %v6209
  %v6211 = vpop.f32.mrf.mxu0
  %v6212 = vpop.f32.mrf.mxu0
  %v6213 = vadd.f32 %v5895, %v6212
  %v6214 = vpop.f32.mrf.mxu0
  %6215 = vmatprep.mubr.bf16.mxu0 0
  %6216 = vmatmul.mubr.bf16.gmra.mxu0 %v6131
  %v6217 = vpop.f32.mrf.mxu0
  %v6218 = vadd.f32 %v5900, %v6217
  %v6219 = vpop.f32.mrf.mxu0
  %v6220 = vpop.f32.mrf.mxu0
  %v6221 = vadd.f32 %v5905, %v6220
  %v6222 = vpop.f32.mrf.mxu0
  %6223 = vmatprep.mubr.bf16.mxu0 0
  %6224 = vmatmul.mubr.bf16.gmra.mxu0 %v6134
  %v6225 = vpop.f32.mrf.mxu0
  %v6226 = vadd.f32 %v5910, %v6225
  %v6227 = vpop.f32.mrf.mxu0
  %v6228 = vpop.f32.mrf.mxu0
  %v6229 = vadd.f32 %v5915, %v6228
  %v6230 = vpop.f32.mrf.mxu0
  %6231 = vmatprep.mubr.bf16.mxu0 0
  %6232 = vmatmul.mubr.bf16.gmra.mxu0 %v6137
  %v6233 = vpop.f32.mrf.mxu0
  %v6234 = vadd.f32 %v5920, %v6233
  %v6235 = vpop.f32.mrf.mxu0
  %v6236 = vpop.f32.mrf.mxu0
  %v6237 = vadd.f32 %v5925, %v6236
  %v6238 = vpop.f32.mrf.mxu0
  %6239 = vmatprep.mubr.bf16.mxu0 0
  %6240 = vmatmul.mubr.bf16.gmra.mxu0 %v6140
  %v6241 = vpop.f32.mrf.mxu0
  %v6242 = vadd.f32 %v5930, %v6241
  %v6243 = vpop.f32.mrf.mxu0
  %v6244 = vpop.f32.mrf.mxu0
  %v6245 = vadd.f32 %v5935, %v6244
  %v6246 = vpop.f32.mrf.mxu0
  %6247 = vmatprep.mubr.bf16.mxu0 0
  %6248 = vmatmul.mubr.bf16.gmra.mxu0 %v6143
  %v6249 = vpop.f32.mrf.mxu0
  %v6250 = vadd.f32 %v5940, %v6249
  %v6251 = vpop.f32.mrf.mxu0
  %v6252 = vpop.f32.mrf.mxu0
  %v6253 = vadd.f32 %v5945, %v6252
  %v6254 = vpop.f32.mrf.mxu0
  %6255 = vmatprep.mubr.bf16.mxu0 0
  %6256 = vmatmul.mubr.bf16.gmra.mxu0 %v6146
  %v6257 = vpop.f32.mrf.mxu0
  %v6258 = vadd.f32 %v5950, %v6257
  %v6259 = vpop.f32.mrf.mxu0
  %v6260 = vpop.f32.mrf.mxu0
  %v6261 = vadd.f32 %v5955, %v6260
  %v6262 = vpop.f32.mrf.mxu0
  %6263 = vmatprep.mubr.bf16.mxu0 0
  %6264 = vmatmul.mubr.bf16.gmra.mxu0 %v6149
  %v6265 = vpop.f32.mrf.mxu0
  %v6266 = vadd.f32 %v5960, %v6265
  %v6267 = vpop.f32.mrf.mxu0
  %v6268 = vpop.f32.mrf.mxu0
  %v6269 = vadd.f32 %v5965, %v6268
  %v6270 = vpop.f32.mrf.mxu0
  %6271 = vmatprep.mubr.bf16.mxu0 0
  %6272 = vmatmul.mubr.bf16.gmra.mxu0 %v6152
  %v6273 = vpop.f32.mrf.mxu0
  %v6274 = vadd.f32 %v5970, %v6273
  %v6275 = vpop.f32.mrf.mxu0
  %v6276 = vpop.f32.mrf.mxu0
  %v6277 = vadd.f32 %v5975, %v6276
  %v6278 = vpop.f32.mrf.mxu0
  %6279 = vmatprep.mubr.bf16.mxu0 0
  %6280 = vmatmul.mubr.bf16.gmra.mxu0 %v6155
  %v6281 = vpop.f32.mrf.mxu0
  %v6282 = vadd.f32 %v5980, %v6281
  %v6283 = vpop.f32.mrf.mxu0
  %v6284 = vpop.f32.mrf.mxu0
  %v6285 = vadd.f32 %v5985, %v6284
  %v6286 = vpop.f32.mrf.mxu0
  %6287 = vmatprep.mubr.bf16.mxu0 0
  %6288 = vmatmul.mubr.bf16.gmra.mxu0 %v6158
  %v6289 = vpop.f32.mrf.mxu0
  %v6290 = vadd.f32 %v5990, %v6289
  %v6291 = vpop.f32.mrf.mxu0
  %v6292 = vpop.f32.mrf.mxu0
  %v6293 = vadd.f32 %v5995, %v6292
  %v6294 = vpop.f32.mrf.mxu0
  %6295 = vmatprep.mubr.bf16.mxu0 0
  %6296 = vmatmul.mubr.bf16.gmra.mxu0 %v6161
  %v6297 = vpop.f32.mrf.mxu0
  %v6298 = vadd.f32 %v6000, %v6297
  %v6299 = vpop.f32.mrf.mxu0
  %v6300 = vpop.f32.mrf.mxu0
  %v6301 = vadd.f32 %v6005, %v6300
  %v6302 = vpop.f32.mrf.mxu0
  %6303 = vmatprep.mubr.bf16.mxu0 0
  %6304 = vmatmul.mubr.bf16.gmra.mxu0 %v6164
  %v6305 = vpop.f32.mrf.mxu0
  %v6306 = vadd.f32 %v6010, %v6305
  %v6307 = vpop.f32.mrf.mxu0
  %v6308 = vpop.f32.mrf.mxu0
  %v6309 = vadd.f32 %v6015, %v6308
  %v6310 = vpop.f32.mrf.mxu0
  %6311 = vmatprep.mubr.bf16.mxu0 0
  %6312 = vmatmul.mubr.bf16.gmra.mxu0 %v6167
  %v6313 = vpop.f32.mrf.mxu0
  %v6314 = vadd.f32 %v6020, %v6313
  %v6315 = vpop.f32.mrf.mxu0
  %v6316 = vpop.f32.mrf.mxu0
  %v6317 = vadd.f32 %v6025, %v6316
  %v6318 = vpop.f32.mrf.mxu0
  %6319 = vmatprep.mubr.bf16.mxu0 0
  %6320 = vmatmul.mubr.bf16.gmra.mxu0 %v6170
  %v6321 = vpop.f32.mrf.mxu0
  %v6322 = vadd.f32 %v6030, %v6321
  %v6323 = vpop.f32.mrf.mxu0
  %v6324 = vpop.f32.mrf.mxu0
  %v6325 = vadd.f32 %v6035, %v6324
  %v6326 = vpop.f32.mrf.mxu0
  %6327 = vmatprep.mubr.bf16.mxu0 0
  %6328 = vmatmul.mubr.bf16.gmra.mxu0 %v6173
  %v6329 = vpop.f32.mrf.mxu0
  %v6330 = vadd.f32 %v6040, %v6329
  %v6331 = vpop.f32.mrf.mxu0
  %v6332 = vpop.f32.mrf.mxu0
  %v6333 = vadd.f32 %v6045, %v6332
  %v6334 = vpop.f32.mrf.mxu0
  %6335 = vdwg.mxu0
  %v6336 = vadd.f32 %v4451, %v6210
  %v6337 = vadd.f32 %v4452, %v6213
  %v6338 = vadd.f32 %v4453, %v6218
  %v6339 = vadd.f32 %v4454, %v6221
  %v6340 = vadd.f32 %v4455, %v6226
  %v6341 = vadd.f32 %v4456, %v6229
  %v6342 = vadd.f32 %v4457, %v6234
  %v6343 = vadd.f32 %v4458, %v6237
  %v6344 = vadd.f32 %v4459, %v6242
  %v6345 = vadd.f32 %v4460, %v6245
  %v6346 = vadd.f32 %v4461, %v6250
  %v6347 = vadd.f32 %v4462, %v6253
  %v6348 = vadd.f32 %v4463, %v6258
  %v6349 = vadd.f32 %v4464, %v6261
  %v6350 = vadd.f32 %v4465, %v6266
  %v6351 = vadd.f32 %v4466, %v6269
  %v6352 = vadd.f32 %v4467, %v6274
  %v6353 = vadd.f32 %v4468, %v6277
  %v6354 = vadd.f32 %v4469, %v6282
  %v6355 = vadd.f32 %v4470, %v6285
  %v6356 = vadd.f32 %v4471, %v6290
  %v6357 = vadd.f32 %v4472, %v6293
  %v6358 = vadd.f32 %v4473, %v6298
  %v6359 = vadd.f32 %v4474, %v6301
  %v6360 = vadd.f32 %v4475, %v6306
  %v6361 = vadd.f32 %v4476, %v6309
  %v6362 = vadd.f32 %v4477, %v6314
  %v6363 = vadd.f32 %v4478, %v6317
  %v6364 = vadd.f32 %v4479, %v6322
  %v6365 = vadd.f32 %v4480, %v6325
  %v6366 = vadd.f32 %v4481, %v6330
  %v6367 = vadd.f32 %v4482, %v6333
  %6368 = vst [vmem:[#allocation2] sm:$0xff] %v6336
  %6369 = vst [vmem:[#allocation2 + $0x8] sm:$0xff] %v6337
  %6370 = vst [vmem:[#allocation2 + $0x10] sm:$0xff] %v6338
  %6371 = vst [vmem:[#allocation2 + $0x18] sm:$0xff] %v6339
  %6372 = vst [vmem:[#allocation2 + $0x20] sm:$0xff] %v6340
  %6373 = vst [vmem:[#allocation2 + $0x28] sm:$0xff] %v6341
  %6374 = vst [vmem:[#allocation2 + $0x30] sm:$0xff] %v6342
  %6375 = vst [vmem:[#allocation2 + $0x38] sm:$0xff] %v6343
  %6376 = vst [vmem:[#allocation2 + $0x40] sm:$0xff] %v6344
  %6377 = vst [vmem:[#allocation2 + $0x48] sm:$0xff] %v6345
  %6378 = vst [vmem:[#allocation2 + $0x50] sm:$0xff] %v6346
  %6379 = vst [vmem:[#allocation2 + $0x58] sm:$0xff] %v6347
  %6380 = vst [vmem:[#allocation2 + $0x60] sm:$0xff] %v6348
  %6381 = vst [vmem:[#allocation2 + $0x68] sm:$0xff] %v6349
  %6382 = vst [vmem:[#allocation2 + $0x70] sm:$0xff] %v6350
  %6383 = vst [vmem:[#allocation2 + $0x78] sm:$0xff] %v6351
  %6384 = vst [vmem:[#allocation2 + $0x80] sm:$0xff] %v6352
  %6385 = vst [vmem:[#allocation2 + $0x88] sm:$0xff] %v6353
  %6386 = vst [vmem:[#allocation2 + $0x90] sm:$0xff] %v6354
  %6387 = vst [vmem:[#allocation2 + $0x98] sm:$0xff] %v6355
  %6388 = vst [vmem:[#allocation2 + $0xa0] sm:$0xff] %v6356
  %6389 = vst [vmem:[#allocation2 + $0xa8] sm:$0xff] %v6357
  %6390 = vst [vmem:[#allocation2 + $0xb0] sm:$0xff] %v6358
  %6391 = vst [vmem:[#allocation2 + $0xb8] sm:$0xff] %v6359
  %6392 = vst [vmem:[#allocation2 + $0xc0] sm:$0xff] %v6360
  %6393 = vst [vmem:[#allocation2 + $0xc8] sm:$0xff] %v6361
  %6394 = vst [vmem:[#allocation2 + $0xd0] sm:$0xff] %v6362
  %6395 = vst [vmem:[#allocation2 + $0xd8] sm:$0xff] %v6363
  %6396 = vst [vmem:[#allocation2 + $0xe0] sm:$0xff] %v6364
  %6397 = vst [vmem:[#allocation2 + $0xe8] sm:$0xff] %v6365
  %6398 = vst [vmem:[#allocation2 + $0xf0] sm:$0xff] %v6366
  %6399 = vst [vmem:[#allocation2 + $0xf8] sm:$0xff] %v6367
  %v6400 = vld [vmem:[#allocation2] sm:$0xff]
  %v6401 = vld [vmem:[#allocation2 + $0x8] sm:$0xff]
  %v6402 = vld [vmem:[#allocation2 + $0x10] sm:$0xff]
  %v6403 = vld [vmem:[#allocation2 + $0x18] sm:$0xff]
  %v6404 = vld [vmem:[#allocation2 + $0x20] sm:$0xff]
  %v6405 = vld [vmem:[#allocation2 + $0x28] sm:$0xff]
  %v6406 = vld [vmem:[#allocation2 + $0x30] sm:$0xff]
  %v6407 = vld [vmem:[#allocation2 + $0x38] sm:$0xff]
  %v6408 = vld [vmem:[#allocation2 + $0x40] sm:$0xff]
  %v6409 = vld [vmem:[#allocation2 + $0x48] sm:$0xff]
  %v6410 = vld [vmem:[#allocation2 + $0x50] sm:$0xff]
  %v6411 = vld [vmem:[#allocation2 + $0x58] sm:$0xff]
  %v6412 = vld [vmem:[#allocation2 + $0x60] sm:$0xff]
  %v6413 = vld [vmem:[#allocation2 + $0x68] sm:$0xff]
  %v6414 = vld [vmem:[#allocation2 + $0x70] sm:$0xff]
  %v6415 = vld [vmem:[#allocation2 + $0x78] sm:$0xff]
  %v6416 = vld [vmem:[#allocation2 + $0x80] sm:$0xff]
  %v6417 = vld [vmem:[#allocation2 + $0x88] sm:$0xff]
  %v6418 = vld [vmem:[#allocation2 + $0x90] sm:$0xff]
  %v6419 = vld [vmem:[#allocation2 + $0x98] sm:$0xff]
  %v6420 = vld [vmem:[#allocation2 + $0xa0] sm:$0xff]
  %v6421 = vld [vmem:[#allocation2 + $0xa8] sm:$0xff]
  %v6422 = vld [vmem:[#allocation2 + $0xb0] sm:$0xff]
  %v6423 = vld [vmem:[#allocation2 + $0xb8] sm:$0xff]
  %v6424 = vld [vmem:[#allocation2 + $0xc0] sm:$0xff]
  %v6425 = vld [vmem:[#allocation2 + $0xc8] sm:$0xff]
  %v6426 = vld [vmem:[#allocation2 + $0xd0] sm:$0xff]
  %v6427 = vld [vmem:[#allocation2 + $0xd8] sm:$0xff]
  %v6428 = vld [vmem:[#allocation2 + $0xe0] sm:$0xff]
  %v6429 = vld [vmem:[#allocation2 + $0xe8] sm:$0xff]
  %v6430 = vld [vmem:[#allocation2 + $0xf0] sm:$0xff]
  %v6431 = vld [vmem:[#allocation2 + $0xf8] sm:$0xff]
  %v6432 = vld [vmem:[%s99] sm:$0xff]
  %v6433 = vld [vmem:[%s99 + $0x8] sm:$0xff]
  %v6434 = vld [vmem:[%s99 + $0x10] sm:$0xff]
  %v6435 = vld [vmem:[%s99 + $0x18] sm:$0xff]
  %v6436 = vld [vmem:[%s99 + $0x20] sm:$0xff]
  %v6437 = vld [vmem:[%s99 + $0x28] sm:$0xff]
  %v6438 = vld [vmem:[%s99 + $0x30] sm:$0xff]
  %v6439 = vld [vmem:[%s99 + $0x38] sm:$0xff]
  %v6440 = vld [vmem:[%s99 + $0x40] sm:$0xff]
  %v6441 = vld [vmem:[%s99 + $0x48] sm:$0xff]
  %v6442 = vld [vmem:[%s99 + $0x50] sm:$0xff]
  %v6443 = vld [vmem:[%s99 + $0x58] sm:$0xff]
  %v6444 = vld [vmem:[%s99 + $0x60] sm:$0xff]
  %v6445 = vld [vmem:[%s99 + $0x68] sm:$0xff]
  %v6446 = vld [vmem:[%s99 + $0x70] sm:$0xff]
  %v6447 = vld [vmem:[%s99 + $0x78] sm:$0xff]
  %v6448 = vld [vmem:[%s99 + $0x80] sm:$0xff]
  %v6449 = vld [vmem:[%s99 + $0x88] sm:$0xff]
  %v6450 = vld [vmem:[%s99 + $0x90] sm:$0xff]
  %v6451 = vld [vmem:[%s99 + $0x98] sm:$0xff]
  %v6452 = vld [vmem:[%s99 + $0xa0] sm:$0xff]
  %v6453 = vld [vmem:[%s99 + $0xa8] sm:$0xff]
  %v6454 = vld [vmem:[%s99 + $0xb0] sm:$0xff]
  %v6455 = vld [vmem:[%s99 + $0xb8] sm:$0xff]
  %v6456 = vld [vmem:[%s99 + $0xc0] sm:$0xff]
  %v6457 = vld [vmem:[%s99 + $0xc8] sm:$0xff]
  %v6458 = vld [vmem:[%s99 + $0xd0] sm:$0xff]
  %v6459 = vld [vmem:[%s99 + $0xd8] sm:$0xff]
  %v6460 = vld [vmem:[%s99 + $0xe0] sm:$0xff]
  %v6461 = vld [vmem:[%s99 + $0xe8] sm:$0xff]
  %v6462 = vld [vmem:[%s99 + $0xf0] sm:$0xff]
  %v6463 = vld [vmem:[%s99 + $0xf8] sm:$0xff]
  %6465 = vset.pattern.permute.xlu0 0
  %6466 = vperm.xlu0 %6465, %v6432
  %v6467 = vpop.permute.xlu0 %6466
  %6470 = vset.pattern.permute.xlu0 0
  %6471 = vperm.xlu0 %6470, %v6433
  %v6472 = vpop.permute.xlu0 %6471
  %6475 = vset.pattern.permute.xlu0 0
  %6476 = vperm.xlu0 %6475, %v6434
  %v6477 = vpop.permute.xlu0 %6476
  %6480 = vset.pattern.permute.xlu0 0
  %6481 = vperm.xlu0 %6480, %v6435
  %v6482 = vpop.permute.xlu0 %6481
  %6485 = vset.pattern.permute.xlu0 0
  %6486 = vperm.xlu0 %6485, %v6436
  %v6487 = vpop.permute.xlu0 %6486
  %6490 = vset.pattern.permute.xlu0 0
  %6491 = vperm.xlu0 %6490, %v6437
  %v6492 = vpop.permute.xlu0 %6491
  %6495 = vset.pattern.permute.xlu0 0
  %6496 = vperm.xlu0 %6495, %v6438
  %v6497 = vpop.permute.xlu0 %6496
  %6500 = vset.pattern.permute.xlu0 0
  %6501 = vperm.xlu0 %6500, %v6439
  %v6502 = vpop.permute.xlu0 %6501
  %6505 = vset.pattern.permute.xlu0 0
  %6506 = vperm.xlu0 %6505, %v6440
  %v6507 = vpop.permute.xlu0 %6506
  %6510 = vset.pattern.permute.xlu0 0
  %6511 = vperm.xlu0 %6510, %v6441
  %v6512 = vpop.permute.xlu0 %6511
  %6515 = vset.pattern.permute.xlu0 0
  %6516 = vperm.xlu0 %6515, %v6442
  %v6517 = vpop.permute.xlu0 %6516
  %6520 = vset.pattern.permute.xlu0 0
  %6521 = vperm.xlu0 %6520, %v6443
  %v6522 = vpop.permute.xlu0 %6521
  %6525 = vset.pattern.permute.xlu0 0
  %6526 = vperm.xlu0 %6525, %v6444
  %v6527 = vpop.permute.xlu0 %6526
  %6530 = vset.pattern.permute.xlu0 0
  %6531 = vperm.xlu0 %6530, %v6445
  %v6532 = vpop.permute.xlu0 %6531
  %6535 = vset.pattern.permute.xlu0 0
  %6536 = vperm.xlu0 %6535, %v6446
  %v6537 = vpop.permute.xlu0 %6536
  %6540 = vset.pattern.permute.xlu0 0
  %6541 = vperm.xlu0 %6540, %v6447
  %v6542 = vpop.permute.xlu0 %6541
  %6545 = vset.pattern.permute.xlu0 0
  %6546 = vperm.xlu0 %6545, %v6448
  %v6547 = vpop.permute.xlu0 %6546
  %6550 = vset.pattern.permute.xlu0 0
  %6551 = vperm.xlu0 %6550, %v6449
  %v6552 = vpop.permute.xlu0 %6551
  %6555 = vset.pattern.permute.xlu0 0
  %6556 = vperm.xlu0 %6555, %v6450
  %v6557 = vpop.permute.xlu0 %6556
  %6560 = vset.pattern.permute.xlu0 0
  %6561 = vperm.xlu0 %6560, %v6451
  %v6562 = vpop.permute.xlu0 %6561
  %6565 = vset.pattern.permute.xlu0 0
  %6566 = vperm.xlu0 %6565, %v6452
  %v6567 = vpop.permute.xlu0 %6566
  %6570 = vset.pattern.permute.xlu0 0
  %6571 = vperm.xlu0 %6570, %v6453
  %v6572 = vpop.permute.xlu0 %6571
  %6575 = vset.pattern.permute.xlu0 0
  %6576 = vperm.xlu0 %6575, %v6454
  %v6577 = vpop.permute.xlu0 %6576
  %6580 = vset.pattern.permute.xlu0 0
  %6581 = vperm.xlu0 %6580, %v6455
  %v6582 = vpop.permute.xlu0 %6581
  %6585 = vset.pattern.permute.xlu0 0
  %6586 = vperm.xlu0 %6585, %v6456
  %v6587 = vpop.permute.xlu0 %6586
  %6590 = vset.pattern.permute.xlu0 0
  %6591 = vperm.xlu0 %6590, %v6457
  %v6592 = vpop.permute.xlu0 %6591
  %6595 = vset.pattern.permute.xlu0 0
  %6596 = vperm.xlu0 %6595, %v6458
  %v6597 = vpop.permute.xlu0 %6596
  %6600 = vset.pattern.permute.xlu0 0
  %6601 = vperm.xlu0 %6600, %v6459
  %v6602 = vpop.permute.xlu0 %6601
  %6605 = vset.pattern.permute.xlu0 0
  %6606 = vperm.xlu0 %6605, %v6460
  %v6607 = vpop.permute.xlu0 %6606
  %6610 = vset.pattern.permute.xlu0 0
  %6611 = vperm.xlu0 %6610, %v6461
  %v6612 = vpop.permute.xlu0 %6611
  %6615 = vset.pattern.permute.xlu0 0
  %6616 = vperm.xlu0 %6615, %v6462
  %v6617 = vpop.permute.xlu0 %6616
  %6620 = vset.pattern.permute.xlu0 0
  %6621 = vperm.xlu0 %6620, %v6463
  %v6622 = vpop.permute.xlu0 %6621
  %v6624 = vmul.f32 %v6400, %v6467
  %v6625 = vmul.f32 %v6401, %v6472
  %v6626 = vmul.f32 %v6402, %v6477
  %v6627 = vmul.f32 %v6403, %v6482
  %v6628 = vmul.f32 %v6404, %v6487
  %v6629 = vmul.f32 %v6405, %v6492
  %v6630 = vmul.f32 %v6406, %v6497
  %v6631 = vmul.f32 %v6407, %v6502
  %v6632 = vmul.f32 %v6408, %v6507
  %v6633 = vmul.f32 %v6409, %v6512
  %v6634 = vmul.f32 %v6410, %v6517
  %v6635 = vmul.f32 %v6411, %v6522
  %v6636 = vmul.f32 %v6412, %v6527
  %v6637 = vmul.f32 %v6413, %v6532
  %v6638 = vmul.f32 %v6414, %v6537
  %v6639 = vmul.f32 %v6415, %v6542
  %v6640 = vmul.f32 %v6416, %v6547
  %v6641 = vmul.f32 %v6417, %v6552
  %v6642 = vmul.f32 %v6418, %v6557
  %v6643 = vmul.f32 %v6419, %v6562
  %v6644 = vmul.f32 %v6420, %v6567
  %v6645 = vmul.f32 %v6421, %v6572
  %v6646 = vmul.f32 %v6422, %v6577
  %v6647 = vmul.f32 %v6423, %v6582
  %v6648 = vmul.f32 %v6424, %v6587
  %v6649 = vmul.f32 %v6425, %v6592
  %v6650 = vmul.f32 %v6426, %v6597
  %v6651 = vmul.f32 %v6427, %v6602
  %v6652 = vmul.f32 %v6428, %v6607
  %v6653 = vmul.f32 %v6429, %v6612
  %v6654 = vmul.f32 %v6430, %v6617
  %v6655 = vmul.f32 %v6431, %v6622
  %v6656 = vld [vmem:[%s101] sm:$0xff]
  %v6657 = vld [vmem:[%s101 + $0x8] sm:$0xff]
  %v6658 = vld [vmem:[%s101 + $0x10] sm:$0xff]
  %v6659 = vld [vmem:[%s101 + $0x18] sm:$0xff]
  %v6660 = vld [vmem:[%s101 + $0x20] sm:$0xff]
  %v6661 = vld [vmem:[%s101 + $0x28] sm:$0xff]
  %v6662 = vld [vmem:[%s101 + $0x30] sm:$0xff]
  %v6663 = vld [vmem:[%s101 + $0x38] sm:$0xff]
  %v6664 = vld [vmem:[%s101 + $0x40] sm:$0xff]
  %v6665 = vld [vmem:[%s101 + $0x48] sm:$0xff]
  %v6666 = vld [vmem:[%s101 + $0x50] sm:$0xff]
  %v6667 = vld [vmem:[%s101 + $0x58] sm:$0xff]
  %v6668 = vld [vmem:[%s101 + $0x60] sm:$0xff]
  %v6669 = vld [vmem:[%s101 + $0x68] sm:$0xff]
  %v6670 = vld [vmem:[%s101 + $0x70] sm:$0xff]
  %v6671 = vld [vmem:[%s101 + $0x78] sm:$0xff]
  %v6672 = vld [vmem:[%s101 + $0x80] sm:$0xff]
  %v6673 = vld [vmem:[%s101 + $0x88] sm:$0xff]
  %v6674 = vld [vmem:[%s101 + $0x90] sm:$0xff]
  %v6675 = vld [vmem:[%s101 + $0x98] sm:$0xff]
  %v6676 = vld [vmem:[%s101 + $0xa0] sm:$0xff]
  %v6677 = vld [vmem:[%s101 + $0xa8] sm:$0xff]
  %v6678 = vld [vmem:[%s101 + $0xb0] sm:$0xff]
  %v6679 = vld [vmem:[%s101 + $0xb8] sm:$0xff]
  %v6680 = vld [vmem:[%s101 + $0xc0] sm:$0xff]
  %v6681 = vld [vmem:[%s101 + $0xc8] sm:$0xff]
  %v6682 = vld [vmem:[%s101 + $0xd0] sm:$0xff]
  %v6683 = vld [vmem:[%s101 + $0xd8] sm:$0xff]
  %v6684 = vld [vmem:[%s101 + $0xe0] sm:$0xff]
  %v6685 = vld [vmem:[%s101 + $0xe8] sm:$0xff]
  %v6686 = vld [vmem:[%s101 + $0xf0] sm:$0xff]
  %v6687 = vld [vmem:[%s101 + $0xf8] sm:$0xff]
  %6689 = vset.pattern.permute.xlu0 0
  %6690 = vperm.xlu0 %6689, %v6656
  %v6691 = vpop.permute.xlu0 %6690
  %6694 = vset.pattern.permute.xlu0 0
  %6695 = vperm.xlu0 %6694, %v6657
  %v6696 = vpop.permute.xlu0 %6695
  %6699 = vset.pattern.permute.xlu0 0
  %6700 = vperm.xlu0 %6699, %v6658
  %v6701 = vpop.permute.xlu0 %6700
  %6704 = vset.pattern.permute.xlu0 0
  %6705 = vperm.xlu0 %6704, %v6659
  %v6706 = vpop.permute.xlu0 %6705
  %6709 = vset.pattern.permute.xlu0 0
  %6710 = vperm.xlu0 %6709, %v6660
  %v6711 = vpop.permute.xlu0 %6710
  %6714 = vset.pattern.permute.xlu0 0
  %6715 = vperm.xlu0 %6714, %v6661
  %v6716 = vpop.permute.xlu0 %6715
  %6719 = vset.pattern.permute.xlu0 0
  %6720 = vperm.xlu0 %6719, %v6662
  %v6721 = vpop.permute.xlu0 %6720
  %6724 = vset.pattern.permute.xlu0 0
  %6725 = vperm.xlu0 %6724, %v6663
  %v6726 = vpop.permute.xlu0 %6725
  %6729 = vset.pattern.permute.xlu0 0
  %6730 = vperm.xlu0 %6729, %v6664
  %v6731 = vpop.permute.xlu0 %6730
  %6734 = vset.pattern.permute.xlu0 0
  %6735 = vperm.xlu0 %6734, %v6665
  %v6736 = vpop.permute.xlu0 %6735
  %6739 = vset.pattern.permute.xlu0 0
  %6740 = vperm.xlu0 %6739, %v6666
  %v6741 = vpop.permute.xlu0 %6740
  %6744 = vset.pattern.permute.xlu0 0
  %6745 = vperm.xlu0 %6744, %v6667
  %v6746 = vpop.permute.xlu0 %6745
  %6749 = vset.pattern.permute.xlu0 0
  %6750 = vperm.xlu0 %6749, %v6668
  %v6751 = vpop.permute.xlu0 %6750
  %6754 = vset.pattern.permute.xlu0 0
  %6755 = vperm.xlu0 %6754, %v6669
  %v6756 = vpop.permute.xlu0 %6755
  %6759 = vset.pattern.permute.xlu0 0
  %6760 = vperm.xlu0 %6759, %v6670
  %v6761 = vpop.permute.xlu0 %6760
  %6764 = vset.pattern.permute.xlu0 0
  %6765 = vperm.xlu0 %6764, %v6671
  %v6766 = vpop.permute.xlu0 %6765
  %6769 = vset.pattern.permute.xlu0 0
  %6770 = vperm.xlu0 %6769, %v6672
  %v6771 = vpop.permute.xlu0 %6770
  %6774 = vset.pattern.permute.xlu0 0
  %6775 = vperm.xlu0 %6774, %v6673
  %v6776 = vpop.permute.xlu0 %6775
  %6779 = vset.pattern.permute.xlu0 0
  %6780 = vperm.xlu0 %6779, %v6674
  %v6781 = vpop.permute.xlu0 %6780
  %6784 = vset.pattern.permute.xlu0 0
  %6785 = vperm.xlu0 %6784, %v6675
  %v6786 = vpop.permute.xlu0 %6785
  %6789 = vset.pattern.permute.xlu0 0
  %6790 = vperm.xlu0 %6789, %v6676
  %v6791 = vpop.permute.xlu0 %6790
  %6794 = vset.pattern.permute.xlu0 0
  %6795 = vperm.xlu0 %6794, %v6677
  %v6796 = vpop.permute.xlu0 %6795
  %6799 = vset.pattern.permute.xlu0 0
  %6800 = vperm.xlu0 %6799, %v6678
  %v6801 = vpop.permute.xlu0 %6800
  %6804 = vset.pattern.permute.xlu0 0
  %6805 = vperm.xlu0 %6804, %v6679
  %v6806 = vpop.permute.xlu0 %6805
  %6809 = vset.pattern.permute.xlu0 0
  %6810 = vperm.xlu0 %6809, %v6680
  %v6811 = vpop.permute.xlu0 %6810
  %6814 = vset.pattern.permute.xlu0 0
  %6815 = vperm.xlu0 %6814, %v6681
  %v6816 = vpop.permute.xlu0 %6815
  %6819 = vset.pattern.permute.xlu0 0
  %6820 = vperm.xlu0 %6819, %v6682
  %v6821 = vpop.permute.xlu0 %6820
  %6824 = vset.pattern.permute.xlu0 0
  %6825 = vperm.xlu0 %6824, %v6683
  %v6826 = vpop.permute.xlu0 %6825
  %6829 = vset.pattern.permute.xlu0 0
  %6830 = vperm.xlu0 %6829, %v6684
  %v6831 = vpop.permute.xlu0 %6830
  %6834 = vset.pattern.permute.xlu0 0
  %6835 = vperm.xlu0 %6834, %v6685
  %v6836 = vpop.permute.xlu0 %6835
  %6839 = vset.pattern.permute.xlu0 0
  %6840 = vperm.xlu0 %6839, %v6686
  %v6841 = vpop.permute.xlu0 %6840
  %6844 = vset.pattern.permute.xlu0 0
  %6845 = vperm.xlu0 %6844, %v6687
  %v6846 = vpop.permute.xlu0 %6845
  %v6848 = vadd.f32 %v6624, %v6691
  %v6849 = vadd.f32 %v6625, %v6696
  %v6850 = vadd.f32 %v6626, %v6701
  %v6851 = vadd.f32 %v6627, %v6706
  %v6852 = vadd.f32 %v6628, %v6711
  %v6853 = vadd.f32 %v6629, %v6716
  %v6854 = vadd.f32 %v6630, %v6721
  %v6855 = vadd.f32 %v6631, %v6726
  %v6856 = vadd.f32 %v6632, %v6731
  %v6857 = vadd.f32 %v6633, %v6736
  %v6858 = vadd.f32 %v6634, %v6741
  %v6859 = vadd.f32 %v6635, %v6746
  %v6860 = vadd.f32 %v6636, %v6751
  %v6861 = vadd.f32 %v6637, %v6756
  %v6862 = vadd.f32 %v6638, %v6761
  %v6863 = vadd.f32 %v6639, %v6766
  %v6864 = vadd.f32 %v6640, %v6771
  %v6865 = vadd.f32 %v6641, %v6776
  %v6866 = vadd.f32 %v6642, %v6781
  %v6867 = vadd.f32 %v6643, %v6786
  %v6868 = vadd.f32 %v6644, %v6791
  %v6869 = vadd.f32 %v6645, %v6796
  %v6870 = vadd.f32 %v6646, %v6801
  %v6871 = vadd.f32 %v6647, %v6806
  %v6872 = vadd.f32 %v6648, %v6811
  %v6873 = vadd.f32 %v6649, %v6816
  %v6874 = vadd.f32 %v6650, %v6821
  %v6875 = vadd.f32 %v6651, %v6826
  %v6876 = vadd.f32 %v6652, %v6831
  %v6877 = vadd.f32 %v6653, %v6836
  %v6878 = vadd.f32 %v6654, %v6841
  %v6879 = vadd.f32 %v6655, %v6846
  %v6880 = vmax.f32 %v6848, 0.0
  %v6881 = vmax.f32 %v6849, 0.0
  %v6882 = vmax.f32 %v6850, 0.0
  %v6883 = vmax.f32 %v6851, 0.0
  %v6884 = vmax.f32 %v6852, 0.0
  %v6885 = vmax.f32 %v6853, 0.0
  %v6886 = vmax.f32 %v6854, 0.0
  %v6887 = vmax.f32 %v6855, 0.0
  %v6888 = vmax.f32 %v6856, 0.0
  %v6889 = vmax.f32 %v6857, 0.0
  %v6890 = vmax.f32 %v6858, 0.0
  %v6891 = vmax.f32 %v6859, 0.0
  %v6892 = vmax.f32 %v6860, 0.0
  %v6893 = vmax.f32 %v6861, 0.0
  %v6894 = vmax.f32 %v6862, 0.0
  %v6895 = vmax.f32 %v6863, 0.0
  %v6896 = vmax.f32 %v6864, 0.0
  %v6897 = vmax.f32 %v6865, 0.0
  %v6898 = vmax.f32 %v6866, 0.0
  %v6899 = vmax.f32 %v6867, 0.0
  %v6900 = vmax.f32 %v6868, 0.0
  %v6901 = vmax.f32 %v6869, 0.0
  %v6902 = vmax.f32 %v6870, 0.0
  %v6903 = vmax.f32 %v6871, 0.0
  %v6904 = vmax.f32 %v6872, 0.0
  %v6905 = vmax.f32 %v6873, 0.0
  %v6906 = vmax.f32 %v6874, 0.0
  %v6907 = vmax.f32 %v6875, 0.0
  %v6908 = vmax.f32 %v6876, 0.0
  %v6909 = vmax.f32 %v6877, 0.0
  %v6910 = vmax.f32 %v6878, 0.0
  %v6911 = vmax.f32 %v6879, 0.0
  %v6912 = vld [vmem:[%s103] sm:$0xff]
  %v6913 = vld [vmem:[%s103 + $0x8] sm:$0x11]
  %v6914 = vpack.c.bf16 %v6881, %v6880
  %v6915 = vpack.c.bf16 %v6883, %v6882
  %v6916 = vpack.c.bf16 %v6885, %v6884
  %v6917 = vpack.c.bf16 %v6887, %v6886
  %v6918 = vpack.c.bf16 %v6889, %v6888
  %v6919 = vpack.c.bf16 %v6891, %v6890
  %v6920 = vpack.c.bf16 %v6893, %v6892
  %v6921 = vpack.c.bf16 %v6895, %v6894
  %v6922 = vpack.c.bf16 %v6897, %v6896
  %v6923 = vpack.c.bf16 %v6899, %v6898
  %v6924 = vpack.c.bf16 %v6901, %v6900
  %v6925 = vpack.c.bf16 %v6903, %v6902
  %v6926 = vpack.c.bf16 %v6905, %v6904
  %v6927 = vpack.c.bf16 %v6907, %v6906
  %v6928 = vpack.c.bf16 %v6909, %v6908
  %v6929 = vpack.c.bf16 %v6911, %v6910
  %v6932 = vunpack.c.l.b16 %v6912
  %v6933 = vunpack.c.h.b16 %v6912
  %v6934 = vunpack.c.l.b16 %v6913
  %v6935 = vunpack.c.h.b16 %v6913
  %v6936 = vpack.c.b16 %v6934, %v6932
  %v6937 = vpack.c.b16 %v6935, %v6933
  %6940 = vmatprep.subr.bf16.mxu0 0
  %6941 = vmatpush1.bf16.msra.mxu0 %v6921
  %6942 = vmatprep.subr.bf16.mxu0 0
  %6943 = vmatpush1.bf16.msra.mxu0 %v6920
  %6944 = vmatprep.subr.bf16.mxu0 0
  %6945 = vmatpush1.bf16.msra.mxu0 %v6919
  %6946 = vmatprep.subr.bf16.mxu0 0
  %6947 = vmatpush1.bf16.msra.mxu0 %v6918
  %6948 = vmatprep.subr.bf16.mxu0 0
  %6949 = vmatpush1.bf16.msra.mxu0 %v6917
  %6950 = vmatprep.subr.bf16.mxu0 0
  %6951 = vmatpush1.bf16.msra.mxu0 %v6916
  %6952 = vmatprep.subr.bf16.mxu0 0
  %6953 = vmatpush1.bf16.msra.mxu0 %v6915
  %6954 = vmatprep.subr.bf16.mxu0 0
  %6955 = vmatpush1.bf16.msra.mxu0 %v6914
  %6956 = vmatprep.subr.bf16.mxu0 0
  %6957 = vmatpush2.bf16.msra.mxu0 %v6929
  %6958 = vmatprep.subr.bf16.mxu0 0
  %6959 = vmatpush2.bf16.msra.mxu0 %v6928
  %6960 = vmatprep.subr.bf16.mxu0 0
  %6961 = vmatpush2.bf16.msra.mxu0 %v6927
  %6962 = vmatprep.subr.bf16.mxu0 0
  %6963 = vmatpush2.bf16.msra.mxu0 %v6926
  %6964 = vmatprep.subr.bf16.mxu0 0
  %6965 = vmatpush2.bf16.msra.mxu0 %v6925
  %6966 = vmatprep.subr.bf16.mxu0 0
  %6967 = vmatpush2.bf16.msra.mxu0 %v6924
  %6968 = vmatprep.subr.bf16.mxu0 0
  %6969 = vmatpush2.bf16.msra.mxu0 %v6923
  %6970 = vmatprep.subr.bf16.mxu0 0
  %6971 = vmatpush2.bf16.msra.mxu0 %v6922
  %6972 = vmatprep.mubr.bf16.mxu0 %v6937
  %6973 = vmatmul.mubr.bf16.gmra.mxu0 %v6936
  %v6974 = vpop.f32.mrf.mxu0
  %v6975 = vadd.f32 0.0, %v6974
  %v6976 = vpop.f32.mrf.mxu0
  %v6977 = vpop.f32.mrf.mxu0
  %v6978 = vadd.f32 0.0, %v6977
  %v6979 = vpop.f32.mrf.mxu0
  %6980 = vdwg.mxu0
  %v6981 = vld [vmem:[%s5] sm:$0xff]
  %v6982 = vld [vmem:[%s5 + $0x8] sm:$0xff]
  %v6983 = vld [vmem:[%s5 + $0x10] sm:$0xff]
  %v6984 = vld [vmem:[%s5 + $0x18] sm:$0xff]
  %v6985 = vld [vmem:[%s5 + $0x20] sm:$0xff]
  %v6986 = vld [vmem:[%s5 + $0x28] sm:$0xff]
  %v6987 = vld [vmem:[%s5 + $0x30] sm:$0xff]
  %v6988 = vld [vmem:[%s5 + $0x38] sm:$0xff]
  %v6989 = vld [vmem:[%s5 + $0x40] sm:$0xff]
  %v6990 = vld [vmem:[%s5 + $0x48] sm:$0xff]
  %v6991 = vld [vmem:[%s5 + $0x50] sm:$0xff]
  %v6992 = vld [vmem:[%s5 + $0x58] sm:$0xff]
  %v6993 = vld [vmem:[%s5 + $0x60] sm:$0xff]
  %v6994 = vld [vmem:[%s5 + $0x68] sm:$0xff]
  %v6995 = vld [vmem:[%s5 + $0x70] sm:$0xff]
  %v6996 = vld [vmem:[%s5 + $0x78] sm:$0xff]
  %v6997 = vld [vmem:[%s105] sm:$0xff]
  %v6998 = vld [vmem:[%s105 + $0x8] sm:$0x3]
  %7000 = vset.pattern.permute.xlu0 0
  %7001 = vperm.xlu0 %7000, %v6997
  %v7002 = vpop.permute.xlu0 %7001
  %7005 = vset.pattern.permute.xlu0 0
  %7006 = vperm.xlu0 %7005, %v6998
  %v7007 = vpop.permute.xlu0 %7006
  %7009 = vmatprep.subr.mxu0 0.0
  %7010 = vmatpush1.msra.mxu0 %v6996
  %7011 = vmatprep.subr.mxu0 0.0
  %7012 = vmatpush1.msra.mxu0 %v6995
  %7013 = vmatprep.subr.mxu0 0.0
  %7014 = vmatpush1.msra.mxu0 %v6994
  %7015 = vmatprep.subr.mxu0 0.0
  %7016 = vmatpush1.msra.mxu0 %v6993
  %7017 = vmatprep.subr.mxu0 0.0
  %7018 = vmatpush1.msra.mxu0 %v6992
  %7019 = vmatprep.subr.mxu0 0.0
  %7020 = vmatpush1.msra.mxu0 %v6991
  %7021 = vmatprep.subr.mxu0 0.0
  %7022 = vmatpush1.msra.mxu0 %v6990
  %7023 = vmatprep.subr.mxu0 0.0
  %7024 = vmatpush1.msra.mxu0 %v6989
  %7025 = vmatprep.subr.mxu0 0.0
  %7026 = vmatpush1.msra.mxu0 %v6988
  %7027 = vmatprep.subr.mxu0 0.0
  %7028 = vmatpush1.msra.mxu0 %v6987
  %7029 = vmatprep.subr.mxu0 0.0
  %7030 = vmatpush1.msra.mxu0 %v6986
  %7031 = vmatprep.subr.mxu0 0.0
  %7032 = vmatpush1.msra.mxu0 %v6985
  %7033 = vmatprep.subr.mxu0 0.0
  %7034 = vmatpush1.msra.mxu0 %v6984
  %7035 = vmatprep.subr.mxu0 0.0
  %7036 = vmatpush1.msra.mxu0 %v6983
  %7037 = vmatprep.subr.mxu0 0.0
  %7038 = vmatpush1.msra.mxu0 %v6982
  %7039 = vmatprep.subr.mxu0 0.0
  %7040 = vmatpush1.msra.mxu0 %v6981
  %7041 = vmatprep.subr.mxu0 0.0
  %7042 = vmatpush2.msra.mxu0 0.0
  %7043 = vmatprep.subr.mxu0 0.0
  %7044 = vmatpush2.msra.mxu0 0.0
  %7045 = vmatprep.subr.mxu0 0.0
  %7046 = vmatpush2.msra.mxu0 0.0
  %7047 = vmatprep.subr.mxu0 0.0
  %7048 = vmatpush2.msra.mxu0 0.0
  %7049 = vmatprep.subr.mxu0 0.0
  %7050 = vmatpush2.msra.mxu0 0.0
  %7051 = vmatprep.subr.mxu0 0.0
  %7052 = vmatpush2.msra.mxu0 0.0
  %7053 = vmatprep.subr.mxu0 0.0
  %7054 = vmatpush2.msra.mxu0 0.0
  %7055 = vmatprep.subr.mxu0 0.0
  %7056 = vmatpush2.msra.mxu0 0.0
  %7057 = vmatprep.subr.mxu0 0.0
  %7058 = vmatpush2.msra.mxu0 0.0
  %7059 = vmatprep.subr.mxu0 0.0
  %7060 = vmatpush2.msra.mxu0 0.0
  %7061 = vmatprep.subr.mxu0 0.0
  %7062 = vmatpush2.msra.mxu0 0.0
  %7063 = vmatprep.subr.mxu0 0.0
  %7064 = vmatpush2.msra.mxu0 0.0
  %7065 = vmatprep.subr.mxu0 0.0
  %7066 = vmatpush2.msra.mxu0 0.0
  %7067 = vmatprep.subr.mxu0 0.0
  %7068 = vmatpush2.msra.mxu0 0.0
  %7069 = vmatprep.subr.mxu0 0.0
  %7070 = vmatpush2.msra.mxu0 0.0
  %7071 = vmatprep.subr.mxu0 0.0
  %7072 = vmatpush2.msra.mxu0 0.0
  %7073 = vmatprep.mubr.f32.mxu0 0.0
  %7074 = vmatmul.mubr.f32.gmra.mxu0 %v6975
  %v7075 = vpop.f32.mrf.mxu0
  %v7076 = vadd.f32 %v7002, %v7075
  %v7077 = vpop.f32.mrf.mxu0
  %7078 = vmatprep.mubr.f32.mxu0 0.0
  %7079 = vmatmul.mubr.f32.gmra.mxu0 %v6978
  %v7080 = vpop.f32.mrf.mxu0
  %v7081 = vadd.f32 %v7007, %v7080
  %v7082 = vpop.f32.mrf.mxu0
  %7083 = vdwg.mxu0
  %vm7084 = vcmask 15360
  %7085 = vst.msk [vmem:[%s107] sm:$0xff] %vm7084, %v7076
  %vm7086 = vcmask 9216
  %7087 = vst.msk [vmem:[%s107 + $0x8] sm:$0x3] %vm7086, %v7081
  // Predicated region
  $region214: #{forward.1} parent=0 // pred_check
    _
  $region215: #{forward.1} parent=0 // pred_check_branch
    %7089 = sbr.rel (0) target = $region217
  $region216: #{forward.1} parent=0 // pred_region
    _
  $region217: #{forward.1} parent=0 // pred_fallthru
    _
  // Predicated region
  $region218: #{forward.1} parent=0 // pred_check
    _
  $region219: #{forward.1} parent=0 // pred_check_branch
    %7091 = sbr.rel (0) target = $region221
  $region220: #{forward.1} parent=0 // pred_region
    _
  $region221: #{forward.1} parent=0 // pred_fallthru
    _

</llo_original>
